<compile_context>
chip_gen: v7x
topology: tpu7x:2x2x1
jax: 0.10.0
libtpu: 0.0.40
codegen_flags: <defaults>
</compile_context>

<pallas_src>
import functools

import numpy as np
import jax
import jax.numpy as jnp
from jax.experimental import pallas as pl
from jax.experimental.pallas import tpu as pltpu

_EPS = 1e-5
_EXPANSION = 4
_MXU_DTYPE = jnp.bfloat16       # MXU operand dtype; accumulation stays f32.

_BUDGET_CACHE = None


def _budgets():
    """(row_tile_cap, vmem_limit_bytes), generation-dependent."""
    global _BUDGET_CACHE
    if _BUDGET_CACHE is None:
        row_cap, vmem_lim = 512, 48 * 1024 * 1024          # v7x-safe defaults
        try:
            vmem = int(pltpu.get_tpu_info().vmem_capacity_bytes)
            if vmem >= 100 * 1024 * 1024:                   # v5e / v6e: 128 MiB
                row_cap, vmem_lim = 1024, 96 * 1024 * 1024
        except Exception:
            pass
        _BUDGET_CACHE = (row_cap, vmem_lim)
    return _BUDGET_CACHE


def _vmem_limit():
    return _budgets()[1]


def _pick_tile(m):
    """Largest row tile <= cap dividing m exactly, preferring multiples of 8."""
    cap = _budgets()[0]
    best = None
    for d in range(min(cap, m), 0, -1):
        if m % d == 0:
            if d % 8 == 0:
                return d
            if best is None:
                best = d
    return best if best is not None else m


def _round_up(a, b):
    return -(-a // b) * b


# ----------------------------- Pallas kernels ------------------------------ #

def _stats_kernel(x_ref, s_ref, sq_ref):
    """Per-channel partial sum / sum-of-squares of one row tile."""
    x = x_ref[...]
    s_ref[0] = jnp.sum(x, axis=0, keepdims=True)
    sq_ref[0] = jnp.sum(x * x, axis=0, keepdims=True)


def _make_stage1_proj_kernel(planes):
    """a1 = relu(bn1(x)); [t1 | shortcut] = a1 @ [w1 | wsc]; partial stats(t1)."""
    def kernel(x_ref, scale_ref, shift_ref, w_ref, t1_ref, sc_ref, s_ref, sq_ref):
        a1 = jnp.maximum(x_ref[...] * scale_ref[...] + shift_ref[...], 0.0)
        y = jnp.dot(a1.astype(_MXU_DTYPE), w_ref[...],
                    preferred_element_type=jnp.float32)
        t1 = y[:, :planes]
        t1_ref[...] = t1
        sc_ref[...] = y[:, planes:]
        s_ref[0] = jnp.sum(t1, axis=0, keepdims=True)
        sq_ref[0] = jnp.sum(t1 * t1, axis=0, keepdims=True)
    return kernel


def _stage1_id_kernel(x_ref, scale_ref, shift_ref, w_ref, t1_ref, s_ref, sq_ref):
    """a1 = relu(bn1(x)); t1 = a1 @ w1; partial stats(t1).  No shortcut write:
    the identity residual is recomputed from x inside the final kernel."""
    a1 = jnp.maximum(x_ref[...] * scale_ref[...] + shift_ref[...], 0.0)
    t1 = jnp.dot(a1.astype(_MXU_DTYPE), w_ref[...],
                 preferred_element_type=jnp.float32)
    t1_ref[...] = t1
    s_ref[0] = jnp.sum(t1, axis=0, keepdims=True)
    sq_ref[0] = jnp.sum(t1 * t1, axis=0, keepdims=True)


def _stage3_proj_kernel(t2_ref, scale_ref, shift_ref, w_ref, sc_ref, o_ref):
    """out = relu(bn3(t2)) @ w3 + projected shortcut."""
    a3 = jnp.maximum(t2_ref[...] * scale_ref[...] + shift_ref[...], 0.0)
    o_ref[...] = jnp.dot(a3.astype(_MXU_DTYPE), w_ref[...],
                         preferred_element_type=jnp.float32) + sc_ref[...]


def _stage3_id_kernel(t2_ref, scale3_ref, shift3_ref, w_ref,
                      x_ref, scale1_ref, shift1_ref, o_ref):
    """out = relu(bn3(t2)) @ w3 + relu(bn1(x))  (identity shortcut, cin==cout).
    Recomputing relu(bn1(x)) here avoids an [M, cin] HBM round-trip."""
    a3 = jnp.maximum(t2_ref[...] * scale3_ref[...] + shift3_ref[...], 0.0)
    res = jnp.maximum(x_ref[...] * scale1_ref[...] + shift1_ref[...], 0.0)
    o_ref[...] = jnp.dot(a3.astype(_MXU_DTYPE), w_ref[...],
                         preferred_element_type=jnp.float32) + res


def _make_conv3x3_kernel(h, w, cp_in, cp_out):
    """Fused relu(bn2) + 3x3/pad=1 conv (stride 1) on one image, plus partial
    stats of the conv output.  Flattened [h*w, C] layout with a zero-halo VMEM
    scratch; the 3 kw taps of each kh are channel-concatenated in VMEM so the
    conv is 3 MXU matmuls with K = 3*cp_in, accumulated in place."""
    hw = h * w
    halo = _round_up(w + 1, 8)          # covers every tap offset, 8-aligned
    pad_rows = hw + 2 * halo

    def kernel(t1_ref, scale_ref, shift_ref, w2_ref, mask_ref,
               t2_ref, s_ref, sq_ref, pad_ref, cat_ref):
        # Zero only the halo rows; redone per step so the kernel stays correct
        # when the image axis is sharded across TensorCores ('parallel').
        pad_ref[0:halo, :] = jnp.zeros((halo, cp_in), jnp.float32)
        pad_ref[halo + hw:pad_rows, :] = jnp.zeros((halo, cp_in), jnp.float32)
        # Fused bn2 + relu; the interior is fully overwritten every image.
        a2 = jnp.maximum(t1_ref[0] * scale_ref[...] + shift_ref[...], 0.0)
        pad_ref[halo:halo + hw, :] = a2
        ml = mask_ref[0]                # (hw,1): zero where image col == 0
        mr = mask_ref[1]                # (hw,1): zero where image col == w-1
        for t, dh in enumerate((-1, 0, 1)):
            base = halo + dh * w
            cat_ref[:, 0:cp_in] = (
                pad_ref[pl.ds(base - 1, hw), :] * ml).astype(_MXU_DTYPE)
            cat_ref[:, cp_in:2 * cp_in] = (
                pad_ref[pl.ds(base, hw), :]).astype(_MXU_DTYPE)
            cat_ref[:, 2 * cp_in:3 * cp_in] = (
                pad_ref[pl.ds(base + 1, hw), :] * mr).astype(_MXU_DTYPE)
            part = jnp.dot(cat_ref[...], w2_ref[t],
                           preferred_element_type=jnp.float32)
            if t == 0:
                t2_ref[0] = part        # accumulate in place into the output
            else:
                t2_ref[0] += part
        t2 = t2_ref[0]
        s_ref[0] = jnp.sum(t2, axis=0, keepdims=True)
        sq_ref[0] = jnp.sum(t2 * t2, axis=0, keepdims=True)

    return kernel, pad_rows


# ------------------------------ Pallas wrappers ----------------------------- #

def _stat_specs(nt, c):
    shape = (jax.ShapeDtypeStruct((nt, 1, c), jnp.float32),) * 2
    spec = pl.BlockSpec((1, 1, c), lambda i: (i, 0, 0))
    return shape, (spec, spec)


def channel_stats(x):
    """Per-channel sum / sum-of-squares (per-tile partials reduced in XLA)."""
    m, c = x.shape
    tm = _pick_tile(m)
    nt = m // tm
    stat_shape, stat_specs = _stat_specs(nt, c)
    s, sq = pl.pallas_call(
        _stats_kernel,
        out_shape=stat_shape,
        grid=(nt,),
        in_specs=[pl.BlockSpec((tm, c), lambda i: (i, 0))],
        out_specs=stat_specs,
        compiler_params=pltpu.CompilerParams(
            dimension_semantics=("parallel",),
            vmem_limit_bytes=_vmem_limit()),
    )(x)
    return jnp.sum(s, axis=0), jnp.sum(sq, axis=0)


def stage1_fused(x, scale1, shift1, w1_mat, wsc_mat):
    """relu(bn1(x)) -> conv1 (and fused projection shortcut), + stats of t1."""
    m, cin = x.shape
    planes = w1_mat.shape[1]
    tm = _pick_tile(m)
    nt = m // tm
    stat_shape, stat_specs = _stat_specs(nt, planes)
    if wsc_mat is None:
        kernel = _stage1_id_kernel
        w = w1_mat.astype(_MXU_DTYPE)
        out_shape = (jax.ShapeDtypeStruct((m, planes), jnp.float32),) + stat_shape
        out_specs = (pl.BlockSpec((tm, planes), lambda i: (i, 0)),) + stat_specs
    else:
        csc = wsc_mat.shape[1]
        kernel = _make_stage1_proj_kernel(planes)
        # One wide matmul -> better MXU N-fill and a lane-denser output slab.
        w = jnp.concatenate([w1_mat, wsc_mat], axis=1).astype(_MXU_DTYPE)
        out_shape = (jax.ShapeDtypeStruct((m, planes), jnp.float32),
                     jax.ShapeDtypeStruct((m, csc), jnp.float32)) + stat_shape
        out_specs = (pl.BlockSpec((tm, planes), lambda i: (i, 0)),
                     pl.BlockSpec((tm, csc), lambda i: (i, 0))) + stat_specs
    cw = w.shape[1]
    # TODO(synk): for very wide cin/cout, single-buffer the resident weight
    # spec (pl.Buffered(1)) or split cin over a K grid axis to protect v7x VMEM.
    res = pl.pallas_call(
        kernel,
        out_shape=out_shape,
        grid=(nt,),
        in_specs=[pl.BlockSpec((tm, cin), lambda i: (i, 0)),
                  pl.BlockSpec((1, cin), lambda i: (0, 0)),
                  pl.BlockSpec((1, cin), lambda i: (0, 0)),
                  pl.BlockSpec((cin, cw), lambda i: (0, 0))],
        out_specs=out_specs,
        compiler_params=pltpu.CompilerParams(
            dimension_semantics=("parallel",),
            vmem_limit_bytes=_vmem_limit()),
    )(x, scale1, shift1, w)
    if wsc_mat is None:
        t1, s, sq = res
        sc = None
    else:
        t1, sc, s, sq = res
    return t1, sc, jnp.sum(s, axis=0), jnp.sum(sq, axis=0)


def conv3x3_fused(t1_img, scale2, shift2, w2_dh, masks, h, w):
    """relu(bn2) + 3x3/pad=1/stride=1 conv per image, + partial stats of t2."""
    n, hw, cp = t1_img.shape
    cp_out = w2_dh.shape[2]
    kernel, pad_rows = _make_conv3x3_kernel(h, w, cp, cp_out)
    stat_shape, stat_specs = _stat_specs(n, cp_out)
    # TODO(synk): for large hw*planes, tile over row groups with a +/-1-row halo
    # (manual DMA) instead of whole images, to bound VMEM and expose overlap.
    t2, s, sq = pl.pallas_call(
        kernel,
        out_shape=(jax.ShapeDtypeStruct((n, hw, cp_out), jnp.float32),) + stat_shape,
        grid=(n,),
        in_specs=[pl.BlockSpec((1, hw, cp), lambda i: (i, 0, 0)),
                  pl.BlockSpec((1, cp), lambda i: (0, 0)),
                  pl.BlockSpec((1, cp), lambda i: (0, 0)),
                  pl.BlockSpec((3, 3 * cp, cp_out), lambda i: (0, 0, 0)),
                  pl.BlockSpec((2, hw, 1), lambda i: (0, 0, 0))],
        out_specs=(pl.BlockSpec((1, hw, cp_out), lambda i: (i, 0, 0)),) + stat_specs,
        scratch_shapes=[pltpu.VMEM((pad_rows, cp), jnp.float32),
                        pltpu.VMEM((hw, 3 * cp), _MXU_DTYPE)],
        compiler_params=pltpu.CompilerParams(
            dimension_semantics=("parallel",),
            vmem_limit_bytes=_vmem_limit()),
    )(t1_img, scale2, shift2, w2_dh.astype(_MXU_DTYPE), masks)
    return t2, jnp.sum(s, axis=0), jnp.sum(sq, axis=0)


def stage3_proj(t2, scale3, shift3, w3_mat, shortcut):
    m, planes = t2.shape
    cout = w3_mat.shape[1]
    tm = _pick_tile(m)
    return pl.pallas_call(
        _stage3_proj_kernel,
        out_shape=jax.ShapeDtypeStruct((m, cout), jnp.float32),
        grid=(m // tm,),
        in_specs=[pl.BlockSpec((tm, planes), lambda i: (i, 0)),
                  pl.BlockSpec((1, planes), lambda i: (0, 0)),
                  pl.BlockSpec((1, planes), lambda i: (0, 0)),
                  pl.BlockSpec((planes, cout), lambda i: (0, 0)),
                  pl.BlockSpec((tm, cout), lambda i: (i, 0))],
        out_specs=pl.BlockSpec((tm, cout), lambda i: (i, 0)),
        compiler_params=pltpu.CompilerParams(
            dimension_semantics=("parallel",),
            vmem_limit_bytes=_vmem_limit()),
    )(t2, scale3, shift3, w3_mat.astype(_MXU_DTYPE), shortcut)


def stage3_identity(t2, scale3, shift3, w3_mat, x, scale1, shift1):
    m, planes = t2.shape
    cout = w3_mat.shape[1]
    cin = x.shape[1]            # == cout in the identity-shortcut case
    tm = _pick_tile(m)
    return pl.pallas_call(
        _stage3_id_kernel,
        out_shape=jax.ShapeDtypeStruct((m, cout), jnp.float32),
        grid=(m // tm,),
        in_specs=[pl.BlockSpec((tm, planes), lambda i: (i, 0)),
                  pl.BlockSpec((1, planes), lambda i: (0, 0)),
                  pl.BlockSpec((1, planes), lambda i: (0, 0)),
                  pl.BlockSpec((planes, cout), lambda i: (0, 0)),
                  pl.BlockSpec((tm, cin), lambda i: (i, 0)),
                  pl.BlockSpec((1, cin), lambda i: (0, 0)),
                  pl.BlockSpec((1, cin), lambda i: (0, 0))],
        out_specs=pl.BlockSpec((tm, cout), lambda i: (i, 0)),
        compiler_params=pltpu.CompilerParams(
            dimension_semantics=("parallel",),
            vmem_limit_bytes=_vmem_limit()),
    )(t2, scale3, shift3, w3_mat.astype(_MXU_DTYPE), x, scale1, shift1)


# --------------------------- module-level forward --------------------------- #

def _fold_bn(s, sq, count, gamma, beta):
    """Training-mode BatchNorm folded to per-channel scale/shift (biased var).
    NOTE: E[x^2]-mean^2 can cancel for very large M / large-mean channels;
    switch to centered/compensated accumulation if parity matters there."""
    mean = s / count
    var = sq / count - mean * mean
    scale = gamma / jnp.sqrt(var + _EPS)
    shift = beta - mean * scale
    return scale.reshape(1, -1), shift.reshape(1, -1)


def _make_lr_masks(h, w):
    hw = h * w
    col = np.arange(hw) % w
    ml = (col != 0).astype(np.float32)        # kill dw=-1 wrap at image col 0
    mr = (col != w - 1).astype(np.float32)    # kill dw=+1 wrap at image col w-1
    return jnp.asarray(np.stack([ml, mr], axis=0).reshape(2, hw, 1))


def _im2col_3x3(x_nhwc, stride):
    # XLA-level fallback, only used for stride > 1.
    n, h, w, c = x_nhwc.shape
    xp = jnp.pad(x_nhwc, ((0, 0), (1, 1), (1, 1), (0, 0)))
    hout = (h + 2 - 3) // stride + 1
    wout = (w + 2 - 3) // stride + 1
    cols = []
    for kh in range(3):
        for kw in range(3):
            cols.append(xp[:, kh:kh + stride * (hout - 1) + 1:stride,
                           kw:kw + stride * (wout - 1) + 1:stride, :])
    patches = jnp.concatenate(cols, axis=-1)
    return patches.reshape(n * hout * wout, 9 * c), hout, wout


@functools.partial(jax.jit, static_argnames=("stride",))
def preact_bottleneck_forward(x_nchw, params, stride=1):
    """Exact forward of PreActBottleneck (training-mode BN), fused Pallas kernels."""
    n, cin, h, w = x_nchw.shape
    planes = params["w1"].shape[0]
    cout = _EXPANSION * planes
    m = n * h * w
    has_sc = (stride != 1) or (cin != cout)

    # TODO(synk): fuse this NCHW->NHWC transpose with the x-stats pass (or keep
    # activations NHWC across blocks) to drop one full HBM pass over x.
    x = jnp.transpose(x_nchw, (0, 2, 3, 1)).reshape(m, cin)   # NHWC, [M, C]

    # Batch stats of x (needed before bn1 can be folded).
    s1, sq1 = channel_stats(x)
    scale1, shift1 = _fold_bn(s1, sq1, float(m), params["g1"], params["b1"])

    w1_mat = params["w1"][:, :, 0, 0].T                       # [cin, planes]

    # Fused relu(bn1(x)) -> conv1 (+ fused shortcut conv) (+ stats of t1).
    if stride == 1 and has_sc:
        wsc_mat = params["wsc"][:, :, 0, 0].T                 # [cin, cout]
        t1, shortcut, s2, sq2 = stage1_fused(x, scale1, shift1, w1_mat, wsc_mat)
    else:
        t1, _, s2, sq2 = stage1_fused(x, scale1, shift1, w1_mat, None)
        if stride != 1:
            # TODO(synk): stride>1 shortcut subsample + strided 3x3 conv use XLA
            # glue (strided slice / im2col) instead of the fused Pallas path.
            x_img = x.reshape(n, h, w, cin)[:, ::stride, ::stride, :]
            a1_sub = jnp.maximum(
                x_img * scale1.reshape(1, 1, 1, cin)
                + shift1.reshape(1, 1, 1, cin), 0.0)
            shortcut = a1_sub.reshape(-1, cin) @ params["wsc"][:, :, 0, 0].T
        else:
            shortcut = None      # identity: recomputed inside stage3_identity
    scale2, shift2 = _fold_bn(s2, sq2, float(m), params["g2"], params["b2"])

    # Fused relu(bn2(t1)) -> 3x3 conv (+ stats of t2); no HBM im2col.
    w2_kw = jnp.transpose(params["w2"], (2, 3, 1, 0))         # [kh, kw, ci, co]
    if stride == 1:
        hout, wout = h, w
        w2_dh = w2_kw.reshape(3, 3 * planes, planes)          # fold kw into K
        t2_img, s3, sq3 = conv3x3_fused(t1.reshape(n, h * w, planes),
                                        scale2, shift2, w2_dh,
                                        _make_lr_masks(h, w), h, w)
        t2 = t2_img.reshape(m, planes)
    else:
        a2 = jnp.maximum(t1 * scale2 + shift2, 0.0)
        patches, hout, wout = _im2col_3x3(a2.reshape(n, h, w, planes), stride)
        t2 = patches @ w2_kw.reshape(9 * planes, planes)
        s3, sq3 = channel_stats(t2)
    m_out = n * hout * wout
    scale3, shift3 = _fold_bn(s3, sq3, float(m_out), params["g3"], params["b3"])

    # Fused relu(bn3(t2)) -> conv3 + residual add.
    w3_mat = params["w3"][:, :, 0, 0].T                       # [planes, cout]
    if stride == 1 and not has_sc:
        out = stage3_identity(t2, scale3, shift3, w3_mat, x, scale1, shift1)
    else:
        out = stage3_proj(t2, scale3, shift3, w3_mat, shortcut)

    out = out.reshape(n, hout, wout, cout)
    return jnp.transpose(out, (0, 3, 1, 2))                   # back to NCHW


# ------------------------------ JAX reference ------------------------------- #

def _ref_forward(x, params, stride=1):
    def bn(t, g, b):
        mean = t.mean(axis=(0, 2, 3), keepdims=True)
        var = t.var(axis=(0, 2, 3), keepdims=True)
        return (t - mean) / jnp.sqrt(var + _EPS) * g.reshape(1, -1, 1, 1) \
            + b.reshape(1, -1, 1, 1)

    def conv(t, wgt, s=1, p=0):
        return jax.lax.conv_general_dilated(
            t, wgt, (s, s), [(p, p), (p, p)],
            dimension_numbers=("NCHW", "OIHW", "NCHW"))

    cin = x.shape[1]
    planes = params["w1"].shape[0]
    cout = _EXPANSION * planes
    out = jax.nn.relu(bn(x, params["g1"], params["b1"]))
    if stride != 1 or cin != cout:
        shortcut = conv(out, params["wsc"], stride, 0)
    else:
        shortcut = out
    out = conv(out, params["w1"])
    out = conv(jax.nn.relu(bn(out, params["g2"], params["b2"])), params["w2"], stride, 1)
    out = conv(jax.nn.relu(bn(out, params["g3"], params["b3"])), params["w3"])
    return out + shortcut


# ---------------------------------- main ------------------------------------ #

def _make_params(key, in_planes, planes):
    cout = _EXPANSION * planes
    ks = jax.random.split(key, 10)
    return {
        "g1": 1.0 + 0.1 * jax.random.normal(ks[0], (in_planes,), jnp.float32),
        "b1": 0.1 * jax.random.normal(ks[1], (in_planes,), jnp.float32),
        "g2": 1.0 + 0.1 * jax.random.normal(ks[2], (planes,), jnp.float32),
        "b2": 0.1 * jax.random.normal(ks[3], (planes,), jnp.float32),
        "g3": 1.0 + 0.1 * jax.random.normal(ks[4], (planes,), jnp.float32),
        "b3": 0.1 * jax.random.normal(ks[5], (planes,), jnp.float32),
        "w1": 0.1 * jax.random.normal(ks[6], (planes, in_planes, 1, 1), jnp.float32),
        "w2": 0.1 * jax.random.normal(ks[7], (planes, planes, 3, 3), jnp.float32),
        "w3": 0.1 * jax.random.normal(ks[8], (cout, planes, 1, 1), jnp.float32),
        "wsc": 0.1 * jax.random.normal(ks[9], (cout, in_planes, 1, 1), jnp.float32),
    }


if __name__ == "__main__":
    N, H, W = 2, 16, 16
    configs = [
        ("projection-shortcut", 4, 4, 1),   # in_planes != 4*planes -> conv shortcut
        ("identity-shortcut", 16, 4, 1),    # in_planes == 4*planes -> identity
    ]
    key = jax.random.PRNGKey(0)
    for name, in_planes, planes, stride in configs:
        kp, kx, key = jax.random.split(key, 3)
        params = _make_params(kp, in_planes, planes)
        x = jax.random.normal(kx, (N, in_planes, H, W), jnp.float32)
        out = jax.block_until_ready(
            preact_bottleneck_forward(x, params, stride=stride))
        ref = jax.block_until_ready(_ref_forward(x, params, stride=stride))
        # bf16 MXU operands (f32 accumulation) -> slightly looser tolerance.
        np.testing.assert_allclose(np.asarray(out), np.asarray(ref),
                                   rtol=2e-2, atol=2e-2)
    print("KERNEL_OK")
</pallas_src>

<mosaic_0001>
module attributes {stable_mosaic.version = 11 : i64} {
  func.func @_stats_kernel(%arg0: i32, %arg1: memref<512x4xf32, #tpu.memory_space<vmem>>, %arg2: memref<1x1x4xf32, #tpu.memory_space<vmem>>, %arg3: memref<1x1x4xf32, #tpu.memory_space<vmem>>) attributes {dimension_semantics = [#tpu.dimension_semantics<parallel>], iteration_bounds = array<i64: 1>, scalar_prefetch = 0 : i64, scratch_operands = 0 : i64, tpu.core_type = #tpu.core_type<tc>, window_params = [{transform_indices = @transform_0, window_bounds = array<i64: 512, 4>}, {transform_indices = @transform_1, window_bounds = array<i64: 1, 1, 4>}, {transform_indices = @transform_2, window_bounds = array<i64: 1, 1, 4>}]} {
    %c0 = arith.constant 0 : index
    %c0_0 = arith.constant 0 : index
    %0 = vector.load %arg1[%c0, %c0_0] : memref<512x4xf32, #tpu.memory_space<vmem>>, vector<512x4xf32>
    %cst = arith.constant dense<0.000000e+00> : vector<4xf32>
    %1 = vector.multi_reduction <add>, %0, %cst [0] : vector<512x4xf32> to vector<4xf32>
    %2 = vector.shape_cast %1 : vector<4xf32> to vector<1x4xf32>
    %c0_1 = arith.constant 0 : index
    %c0_2 = arith.constant 0 : index
    %c0_3 = arith.constant 0 : index
    %3 = vector.load %arg2[%c0_1, %c0_2, %c0_3] : memref<1x1x4xf32, #tpu.memory_space<vmem>>, vector<1x1x4xf32>
    %4 = vector.shape_cast %3 : vector<1x1x4xf32> to vector<1x4xf32>
    %5 = vector.shape_cast %2 : vector<1x4xf32> to vector<1x1x4xf32>
    tpu.vector_store %arg2[%c0_1, %c0_2, %c0_3], %5 {strides = array<i32>} : memref<1x1x4xf32, #tpu.memory_space<vmem>>, vector<1x1x4xf32>,
    %6 = arith.mulf %0, %0 : vector<512x4xf32>
    %cst_4 = arith.constant dense<0.000000e+00> : vector<4xf32>
    %7 = vector.multi_reduction <add>, %6, %cst_4 [0] : vector<512x4xf32> to vector<4xf32>
    %8 = vector.shape_cast %7 : vector<4xf32> to vector<1x4xf32>
    %c0_5 = arith.constant 0 : index
    %c0_6 = arith.constant 0 : index
    %c0_7 = arith.constant 0 : index
    %9 = vector.load %arg3[%c0_5, %c0_6, %c0_7] : memref<1x1x4xf32, #tpu.memory_space<vmem>>, vector<1x1x4xf32>
    %10 = vector.shape_cast %9 : vector<1x1x4xf32> to vector<1x4xf32>
    %11 = vector.shape_cast %8 : vector<1x4xf32> to vector<1x1x4xf32>
    tpu.vector_store %arg3[%c0_5, %c0_6, %c0_7], %11 {strides = array<i32>} : memref<1x1x4xf32, #tpu.memory_space<vmem>>, vector<1x1x4xf32>,
    return
  }
  func.func @transform_0(%arg0: i32) -> (i32, i32) {
    %c0_i32 = arith.constant 0 : i32
    %c0_i32_0 = arith.constant 0 : i32
    return %arg0, %c0_i32 : i32, i32
  }
  func.func @transform_1(%arg0: i32) -> (i32, i32, i32) {
    %c0_i32 = arith.constant 0 : i32
    %c0_i32_0 = arith.constant 0 : i32
    %c0_i32_1 = arith.constant 0 : i32
    return %arg0, %c0_i32, %c0_i32_0 : i32, i32, i32
  }
  func.func @transform_2(%arg0: i32) -> (i32, i32, i32) {
    %c0_i32 = arith.constant 0 : i32
    %c0_i32_0 = arith.constant 0 : i32
    %c0_i32_1 = arith.constant 0 : i32
    return %arg0, %c0_i32, %c0_i32_0 : i32, i32, i32
  }
}

module attributes {stable_mosaic.version = 11 : i64} {
  func.func @_stage3_proj_kernel(%arg0: i32, %arg1: memref<512x4xf32, #tpu.memory_space<vmem>>, %arg2: memref<1x4xf32, #tpu.memory_space<vmem>>, %arg3: memref<1x4xf32, #tpu.memory_space<vmem>>, %arg4: memref<4x16xbf16, #tpu.memory_space<vmem>>, %arg5: memref<512x16xf32, #tpu.memory_space<vmem>>, %arg6: memref<512x16xf32, #tpu.memory_space<vmem>>) attributes {dimension_semantics = [#tpu.dimension_semantics<parallel>], iteration_bounds = array<i64: 1>, scalar_prefetch = 0 : i64, scratch_operands = 0 : i64, tpu.core_type = #tpu.core_type<tc>, window_params = [{transform_indices = @transform_0, window_bounds = array<i64: 512, 4>}, {pipeline_mode = #tpu.pipeline_mode<synchronous>, transform_indices = @transform_1, window_bounds = array<i64: 1, 4>}, {pipeline_mode = #tpu.pipeline_mode<synchronous>, transform_indices = @transform_2, window_bounds = array<i64: 1, 4>}, {pipeline_mode = #tpu.pipeline_mode<synchronous>, transform_indices = @transform_3, window_bounds = array<i64: 4, 16>}, {transform_indices = @transform_4, window_bounds = array<i64: 512, 16>}, {transform_indices = @transform_5, window_bounds = array<i64: 512, 16>}]} {
    %c0 = arith.constant 0 : index
    %c0_0 = arith.constant 0 : index
    %0 = vector.load %arg1[%c0, %c0_0] : memref<512x4xf32, #tpu.memory_space<vmem>>, vector<512x4xf32>
    %c0_1 = arith.constant 0 : index
    %c0_2 = arith.constant 0 : index
    %1 = vector.load %arg2[%c0_1, %c0_2] : memref<1x4xf32, #tpu.memory_space<vmem>>, vector<1x4xf32>
    %2 = vector.broadcast %1 : vector<1x4xf32> to vector<512x4xf32>
    %3 = arith.mulf %0, %2 : vector<512x4xf32>
    %c0_3 = arith.constant 0 : index
    %c0_4 = arith.constant 0 : index
    %4 = vector.load %arg3[%c0_3, %c0_4] : memref<1x4xf32, #tpu.memory_space<vmem>>, vector<1x4xf32>
    %5 = vector.broadcast %4 : vector<1x4xf32> to vector<512x4xf32>
    %6 = arith.addf %3, %5 : vector<512x4xf32>
    %cst = arith.constant 0.000000e+00 : f32
    %7 = vector.broadcast %cst : f32 to vector<512x4xf32>
    %8 = arith.maximumf %6, %7 : vector<512x4xf32>
    %9 = arith.truncf %8 : vector<512x4xf32> to vector<512x4xbf16>
    %c0_5 = arith.constant 0 : index
    %c0_6 = arith.constant 0 : index
    %10 = vector.load %arg4[%c0_5, %c0_6] : memref<4x16xbf16, #tpu.memory_space<vmem>>, vector<4x16xbf16>
    %cst_7 = arith.constant dense<0.000000e+00> : vector<512x16xf32>
    %11 = tpu.matmul %9, %10, %cst_7 {dimension_numbers = #tpu.dot_dimension_numbers<[1], [0], [0], [1], [0, 0, 1, 1], [], []>} : vector<512x4xbf16>, vector<4x16xbf16>, vector<512x16xf32> -> vector<512x16xf32>
    %c0_8 = arith.constant 0 : index
    %c0_9 = arith.constant 0 : index
    %12 = vector.load %arg5[%c0_8, %c0_9] : memref<512x16xf32, #tpu.memory_space<vmem>>, vector<512x16xf32>
    %13 = arith.addf %11, %12 : vector<512x16xf32>
    %c0_10 = arith.constant 0 : index
    %c0_11 = arith.constant 0 : index
    %14 = vector.load %arg6[%c0_10, %c0_11] : memref<512x16xf32, #tpu.memory_space<vmem>>, vector<512x16xf32>
    tpu.vector_store %arg6[%c0_10, %c0_11], %13 {strides = array<i32>} : memref<512x16xf32, #tpu.memory_space<vmem>>, vector<512x16xf32>,
    return
  }
  func.func @transform_0(%arg0: i32) -> (i32, i32) {
    %c0_i32 = arith.constant 0 : i32
    %c0_i32_0 = arith.constant 0 : i32
    return %arg0, %c0_i32 : i32, i32
  }
  func.func @transform_1(%arg0: i32) -> (i32, i32) {
    %c0_i32 = arith.constant 0 : i32
    %c0_i32_0 = arith.constant 0 : i32
    %c0_i32_1 = arith.constant 0 : i32
    return %c0_i32, %c0_i32_0 : i32, i32
  }
  func.func @transform_2(%arg0: i32) -> (i32, i32) {
    %c0_i32 = arith.constant 0 : i32
    %c0_i32_0 = arith.constant 0 : i32
    %c0_i32_1 = arith.constant 0 : i32
    return %c0_i32, %c0_i32_0 : i32, i32
  }
  func.func @transform_3(%arg0: i32) -> (i32, i32) {
    %c0_i32 = arith.constant 0 : i32
    %c0_i32_0 = arith.constant 0 : i32
    %c0_i32_1 = arith.constant 0 : i32
    return %c0_i32, %c0_i32_0 : i32, i32
  }
  func.func @transform_4(%arg0: i32) -> (i32, i32) {
    %c0_i32 = arith.constant 0 : i32
    %c0_i32_0 = arith.constant 0 : i32
    return %arg0, %c0_i32 : i32, i32
  }
  func.func @transform_5(%arg0: i32) -> (i32, i32) {
    %c0_i32 = arith.constant 0 : i32
    %c0_i32_0 = arith.constant 0 : i32
    return %arg0, %c0_i32 : i32, i32
  }
}

module attributes {stable_mosaic.version = 11 : i64} {
  func.func @kernel(%arg0: i32, %arg1: memref<512x4xf32, #tpu.memory_space<vmem>>, %arg2: memref<1x4xf32, #tpu.memory_space<vmem>>, %arg3: memref<1x4xf32, #tpu.memory_space<vmem>>, %arg4: memref<4x20xbf16, #tpu.memory_space<vmem>>, %arg5: memref<512x4xf32, #tpu.memory_space<vmem>>, %arg6: memref<512x16xf32, #tpu.memory_space<vmem>>, %arg7: memref<1x1x4xf32, #tpu.memory_space<vmem>>, %arg8: memref<1x1x4xf32, #tpu.memory_space<vmem>>) attributes {dimension_semantics = [#tpu.dimension_semantics<parallel>], iteration_bounds = array<i64: 1>, scalar_prefetch = 0 : i64, scratch_operands = 0 : i64, tpu.core_type = #tpu.core_type<tc>, window_params = [{transform_indices = @transform_0, window_bounds = array<i64: 512, 4>}, {pipeline_mode = #tpu.pipeline_mode<synchronous>, transform_indices = @transform_1, window_bounds = array<i64: 1, 4>}, {pipeline_mode = #tpu.pipeline_mode<synchronous>, transform_indices = @transform_2, window_bounds = array<i64: 1, 4>}, {pipeline_mode = #tpu.pipeline_mode<synchronous>, transform_indices = @transform_3, window_bounds = array<i64: 4, 20>}, {transform_indices = @transform_4, window_bounds = array<i64: 512, 4>}, {transform_indices = @transform_5, window_bounds = array<i64: 512, 16>}, {transform_indices = @transform_6, window_bounds = array<i64: 1, 1, 4>}, {transform_indices = @transform_7, window_bounds = array<i64: 1, 1, 4>}]} {
    %c0 = arith.constant 0 : index
    %c0_0 = arith.constant 0 : index
    %0 = vector.load %arg1[%c0, %c0_0] : memref<512x4xf32, #tpu.memory_space<vmem>>, vector<512x4xf32>
    %c0_1 = arith.constant 0 : index
    %c0_2 = arith.constant 0 : index
    %1 = vector.load %arg2[%c0_1, %c0_2] : memref<1x4xf32, #tpu.memory_space<vmem>>, vector<1x4xf32>
    %2 = vector.broadcast %1 : vector<1x4xf32> to vector<512x4xf32>
    %3 = arith.mulf %0, %2 : vector<512x4xf32>
    %c0_3 = arith.constant 0 : index
    %c0_4 = arith.constant 0 : index
    %4 = vector.load %arg3[%c0_3, %c0_4] : memref<1x4xf32, #tpu.memory_space<vmem>>, vector<1x4xf32>
    %5 = vector.broadcast %4 : vector<1x4xf32> to vector<512x4xf32>
    %6 = arith.addf %3, %5 : vector<512x4xf32>
    %cst = arith.constant 0.000000e+00 : f32
    %7 = vector.broadcast %cst : f32 to vector<512x4xf32>
    %8 = arith.maximumf %6, %7 : vector<512x4xf32>
    %9 = arith.truncf %8 : vector<512x4xf32> to vector<512x4xbf16>
    %c0_5 = arith.constant 0 : index
    %c0_6 = arith.constant 0 : index
    %10 = vector.load %arg4[%c0_5, %c0_6] : memref<4x20xbf16, #tpu.memory_space<vmem>>, vector<4x20xbf16>
    %cst_7 = arith.constant dense<0.000000e+00> : vector<512x20xf32>
    %11 = tpu.matmul %9, %10, %cst_7 {dimension_numbers = #tpu.dot_dimension_numbers<[1], [0], [0], [1], [0, 0, 1, 1], [], []>} : vector<512x4xbf16>, vector<4x20xbf16>, vector<512x20xf32> -> vector<512x20xf32>
    %12 = vector.extract_strided_slice %11 {offsets = [0, 0], sizes = [512, 4], strides = [1, 1]} : vector<512x20xf32> to vector<512x4xf32>
    %c0_8 = arith.constant 0 : index
    %c0_9 = arith.constant 0 : index
    %13 = vector.load %arg5[%c0_8, %c0_9] : memref<512x4xf32, #tpu.memory_space<vmem>>, vector<512x4xf32>
    tpu.vector_store %arg5[%c0_8, %c0_9], %12 {strides = array<i32>} : memref<512x4xf32, #tpu.memory_space<vmem>>, vector<512x4xf32>,
    %14 = vector.extract_strided_slice %11 {offsets = [0, 4], sizes = [512, 16], strides = [1, 1]} : vector<512x20xf32> to vector<512x16xf32>
    %c0_10 = arith.constant 0 : index
    %c0_11 = arith.constant 0 : index
    %15 = vector.load %arg6[%c0_10, %c0_11] : memref<512x16xf32, #tpu.memory_space<vmem>>, vector<512x16xf32>
    tpu.vector_store %arg6[%c0_10, %c0_11], %14 {strides = array<i32>} : memref<512x16xf32, #tpu.memory_space<vmem>>, vector<512x16xf32>,
    %cst_12 = arith.constant dense<0.000000e+00> : vector<4xf32>
    %16 = vector.multi_reduction <add>, %12, %cst_12 [0] : vector<512x4xf32> to vector<4xf32>
    %17 = vector.shape_cast %16 : vector<4xf32> to vector<1x4xf32>
    %c0_13 = arith.constant 0 : index
    %c0_14 = arith.constant 0 : index
    %c0_15 = arith.constant 0 : index
    %18 = vector.load %arg7[%c0_13, %c0_14, %c0_15] : memref<1x1x4xf32, #tpu.memory_space<vmem>>, vector<1x1x4xf32>
    %19 = vector.shape_cast %18 : vector<1x1x4xf32> to vector<1x4xf32>
    %20 = vector.shape_cast %17 : vector<1x4xf32> to vector<1x1x4xf32>
    tpu.vector_store %arg7[%c0_13, %c0_14, %c0_15], %20 {strides = array<i32>} : memref<1x1x4xf32, #tpu.memory_space<vmem>>, vector<1x1x4xf32>,
    %21 = arith.mulf %12, %12 : vector<512x4xf32>
    %cst_16 = arith.constant dense<0.000000e+00> : vector<4xf32>
    %22 = vector.multi_reduction <add>, %21, %cst_16 [0] : vector<512x4xf32> to vector<4xf32>
    %23 = vector.shape_cast %22 : vector<4xf32> to vector<1x4xf32>
    %c0_17 = arith.constant 0 : index
    %c0_18 = arith.constant 0 : index
    %c0_19 = arith.constant 0 : index
    %24 = vector.load %arg8[%c0_17, %c0_18, %c0_19] : memref<1x1x4xf32, #tpu.memory_space<vmem>>, vector<1x1x4xf32>
    %25 = vector.shape_cast %24 : vector<1x1x4xf32> to vector<1x4xf32>
    %26 = vector.shape_cast %23 : vector<1x4xf32> to vector<1x1x4xf32>
    tpu.vector_store %arg8[%c0_17, %c0_18, %c0_19], %26 {strides = array<i32>} : memref<1x1x4xf32, #tpu.memory_space<vmem>>, vector<1x1x4xf32>,
    return
  }
  func.func @transform_0(%arg0: i32) -> (i32, i32) {
    %c0_i32 = arith.constant 0 : i32
    %c0_i32_0 = arith.constant 0 : i32
    return %arg0, %c0_i32 : i32, i32
  }
  func.func @transform_1(%arg0: i32) -> (i32, i32) {
    %c0_i32 = arith.constant 0 : i32
    %c0_i32_0 = arith.constant 0 : i32
    %c0_i32_1 = arith.constant 0 : i32
    return %c0_i32, %c0_i32_0 : i32, i32
  }
  func.func @transform_2(%arg0: i32) -> (i32, i32) {
    %c0_i32 = arith.constant 0 : i32
    %c0_i32_0 = arith.constant 0 : i32
    %c0_i32_1 = arith.constant 0 : i32
    return %c0_i32, %c0_i32_0 : i32, i32
  }
  func.func @transform_3(%arg0: i32) -> (i32, i32) {
    %c0_i32 = arith.constant 0 : i32
    %c0_i32_0 = arith.constant 0 : i32
    %c0_i32_1 = arith.constant 0 : i32
    return %c0_i32, %c0_i32_0 : i32, i32
  }
  func.func @transform_4(%arg0: i32) -> (i32, i32) {
    %c0_i32 = arith.constant 0 : i32
    %c0_i32_0 = arith.constant 0 : i32
    return %arg0, %c0_i32 : i32, i32
  }
  func.func @transform_5(%arg0: i32) -> (i32, i32) {
    %c0_i32 = arith.constant 0 : i32
    %c0_i32_0 = arith.constant 0 : i32
    return %arg0, %c0_i32 : i32, i32
  }
  func.func @transform_6(%arg0: i32) -> (i32, i32, i32) {
    %c0_i32 = arith.constant 0 : i32
    %c0_i32_0 = arith.constant 0 : i32
    %c0_i32_1 = arith.constant 0 : i32
    return %arg0, %c0_i32, %c0_i32_0 : i32, i32, i32
  }
  func.func @transform_7(%arg0: i32) -> (i32, i32, i32) {
    %c0_i32 = arith.constant 0 : i32
    %c0_i32_0 = arith.constant 0 : i32
    %c0_i32_1 = arith.constant 0 : i32
    return %arg0, %c0_i32, %c0_i32_0 : i32, i32, i32
  }
}

module attributes {stable_mosaic.version = 11 : i64} {
  func.func @kernel(%arg0: i32, %arg1: memref<1x256x4xf32, #tpu.memory_space<vmem>>, %arg2: memref<1x4xf32, #tpu.memory_space<vmem>>, %arg3: memref<1x4xf32, #tpu.memory_space<vmem>>, %arg4: memref<3x12x4xbf16, #tpu.memory_space<vmem>>, %arg5: memref<2x256x1xf32, #tpu.memory_space<vmem>>, %arg6: memref<1x256x4xf32, #tpu.memory_space<vmem>>, %arg7: memref<1x1x4xf32, #tpu.memory_space<vmem>>, %arg8: memref<1x1x4xf32, #tpu.memory_space<vmem>>, %arg9: memref<304x4xf32, #tpu.memory_space<vmem>>, %arg10: memref<256x12xbf16, #tpu.memory_space<vmem>>) attributes {dimension_semantics = [#tpu.dimension_semantics<parallel>], iteration_bounds = array<i64: 2>, scalar_prefetch = 0 : i64, scratch_operands = 2 : i64, tpu.core_type = #tpu.core_type<tc>, window_params = [{transform_indices = @transform_0, window_bounds = array<i64: 1, 256, 4>}, {pipeline_mode = #tpu.pipeline_mode<synchronous>, transform_indices = @transform_1, window_bounds = array<i64: 1, 4>}, {pipeline_mode = #tpu.pipeline_mode<synchronous>, transform_indices = @transform_2, window_bounds = array<i64: 1, 4>}, {pipeline_mode = #tpu.pipeline_mode<synchronous>, transform_indices = @transform_3, window_bounds = array<i64: 3, 12, 4>}, {pipeline_mode = #tpu.pipeline_mode<synchronous>, transform_indices = @transform_4, window_bounds = array<i64: 2, 256, 1>}, {transform_indices = @transform_5, window_bounds = array<i64: 1, 256, 4>}, {transform_indices = @transform_6, window_bounds = array<i64: 1, 1, 4>}, {transform_indices = @transform_7, window_bounds = array<i64: 1, 1, 4>}]} {
    %cst = arith.constant 0.000000e+00 : f32
    %0 = vector.broadcast %cst : f32 to vector<24x4xf32>
    %c0 = arith.constant 0 : index
    %c0_0 = arith.constant 0 : index
    %1 = vector.load %arg9[%c0, %c0_0] : memref<304x4xf32, #tpu.memory_space<vmem>>, vector<24x4xf32>
    tpu.vector_store %arg9[%c0, %c0_0], %0 {strides = array<i32>} : memref<304x4xf32, #tpu.memory_space<vmem>>, vector<24x4xf32>,
    %cst_1 = arith.constant 0.000000e+00 : f32
    %2 = vector.broadcast %cst_1 : f32 to vector<24x4xf32>
    %c280 = arith.constant 280 : index
    %c0_2 = arith.constant 0 : index
    %3 = vector.load %arg9[%c280, %c0_2] : memref<304x4xf32, #tpu.memory_space<vmem>>, vector<24x4xf32>
    tpu.vector_store %arg9[%c280, %c0_2], %2 {strides = array<i32>} : memref<304x4xf32, #tpu.memory_space<vmem>>, vector<24x4xf32>,
    %c0_3 = arith.constant 0 : index
    %c0_4 = arith.constant 0 : index
    %c0_5 = arith.constant 0 : index
    %4 = vector.load %arg1[%c0_3, %c0_4, %c0_5] : memref<1x256x4xf32, #tpu.memory_space<vmem>>, vector<1x256x4xf32>
    %5 = vector.shape_cast %4 : vector<1x256x4xf32> to vector<256x4xf32>
    %c0_6 = arith.constant 0 : index
    %c0_7 = arith.constant 0 : index
    %6 = vector.load %arg2[%c0_6, %c0_7] : memref<1x4xf32, #tpu.memory_space<vmem>>, vector<1x4xf32>
    %7 = vector.broadcast %6 : vector<1x4xf32> to vector<256x4xf32>
    %8 = arith.mulf %5, %7 : vector<256x4xf32>
    %c0_8 = arith.constant 0 : index
    %c0_9 = arith.constant 0 : index
    %9 = vector.load %arg3[%c0_8, %c0_9] : memref<1x4xf32, #tpu.memory_space<vmem>>, vector<1x4xf32>
    %10 = vector.broadcast %9 : vector<1x4xf32> to vector<256x4xf32>
    %11 = arith.addf %8, %10 : vector<256x4xf32>
    %cst_10 = arith.constant 0.000000e+00 : f32
    %12 = vector.broadcast %cst_10 : f32 to vector<256x4xf32>
    %13 = arith.maximumf %11, %12 : vector<256x4xf32>
    %c24 = arith.constant 24 : index
    %c0_11 = arith.constant 0 : index
    %14 = vector.load %arg9[%c24, %c0_11] : memref<304x4xf32, #tpu.memory_space<vmem>>, vector<256x4xf32>
    tpu.vector_store %arg9[%c24, %c0_11], %13 {strides = array<i32>} : memref<304x4xf32, #tpu.memory_space<vmem>>, vector<256x4xf32>,
    %c0_12 = arith.constant 0 : index
    %c0_13 = arith.constant 0 : index
    %c0_14 = arith.constant 0 : index
    %15 = vector.load %arg5[%c0_12, %c0_13, %c0_14] : memref<2x256x1xf32, #tpu.memory_space<vmem>>, vector<1x256x1xf32>
    %16 = vector.shape_cast %15 : vector<1x256x1xf32> to vector<256x1xf32>
    %c1 = arith.constant 1 : index
    %c0_15 = arith.constant 0 : index
    %c0_16 = arith.constant 0 : index
    %17 = vector.load %arg5[%c1, %c0_15, %c0_16] : memref<2x256x1xf32, #tpu.memory_space<vmem>>, vector<1x256x1xf32>
    %18 = vector.shape_cast %17 : vector<1x256x1xf32> to vector<256x1xf32>
    %c7 = arith.constant 7 : index
    %c0_17 = arith.constant 0 : index
    %19 = vector.load %arg9[%c7, %c0_17] : memref<304x4xf32, #tpu.memory_space<vmem>>, vector<256x4xf32>
    %20 = vector.broadcast %16 : vector<256x1xf32> to vector<256x4xf32>
    %21 = arith.mulf %19, %20 : vector<256x4xf32>
    %22 = arith.truncf %21 : vector<256x4xf32> to vector<256x4xbf16>
    %c0_18 = arith.constant 0 : index
    %c0_19 = arith.constant 0 : index
    %23 = vector.load %arg10[%c0_18, %c0_19] : memref<256x12xbf16, #tpu.memory_space<vmem>>, vector<256x4xbf16>
    tpu.vector_store %arg10[%c0_18, %c0_19], %22 {strides = array<i32>} : memref<256x12xbf16, #tpu.memory_space<vmem>>, vector<256x4xbf16>,
    %c8 = arith.constant 8 : index
    %c0_20 = arith.constant 0 : index
    %24 = vector.load %arg9[%c8, %c0_20] : memref<304x4xf32, #tpu.memory_space<vmem>>, vector<256x4xf32>
    %25 = arith.truncf %24 : vector<256x4xf32> to vector<256x4xbf16>
    %c0_21 = arith.constant 0 : index
    %c4 = arith.constant 4 : index
    %26 = vector.load %arg10[%c0_21, %c4] : memref<256x12xbf16, #tpu.memory_space<vmem>>, vector<256x4xbf16>
    tpu.vector_store %arg10[%c0_21, %c4], %25 {strides = array<i32>} : memref<256x12xbf16, #tpu.memory_space<vmem>>, vector<256x4xbf16>,
    %c9 = arith.constant 9 : index
    %c0_22 = arith.constant 0 : index
    %27 = vector.load %arg9[%c9, %c0_22] : memref<304x4xf32, #tpu.memory_space<vmem>>, vector<256x4xf32>
    %28 = vector.broadcast %18 : vector<256x1xf32> to vector<256x4xf32>
    %29 = arith.mulf %27, %28 : vector<256x4xf32>
    %30 = arith.truncf %29 : vector<256x4xf32> to vector<256x4xbf16>
    %c0_23 = arith.constant 0 : index
    %c8_24 = arith.constant 8 : index
    %31 = vector.load %arg10[%c0_23, %c8_24] : memref<256x12xbf16, #tpu.memory_space<vmem>>, vector<256x4xbf16>
    tpu.vector_store %arg10[%c0_23, %c8_24], %30 {strides = array<i32>} : memref<256x12xbf16, #tpu.memory_space<vmem>>, vector<256x4xbf16>,
    %c0_25 = arith.constant 0 : index
    %c0_26 = arith.constant 0 : index
    %32 = vector.load %arg10[%c0_25, %c0_26] : memref<256x12xbf16, #tpu.memory_space<vmem>>, vector<256x12xbf16>
    %c0_27 = arith.constant 0 : index
    %c0_28 = arith.constant 0 : index
    %c0_29 = arith.constant 0 : index
    %33 = vector.load %arg4[%c0_27, %c0_28, %c0_29] : memref<3x12x4xbf16, #tpu.memory_space<vmem>>, vector<1x12x4xbf16>
    %34 = vector.shape_cast %33 : vector<1x12x4xbf16> to vector<12x4xbf16>
    %cst_30 = arith.constant dense<0.000000e+00> : vector<256x4xf32>
    %35 = tpu.matmul %32, %34, %cst_30 {dimension_numbers = #tpu.dot_dimension_numbers<[1], [0], [0], [1], [0, 0, 1, 1], [], []>} : vector<256x12xbf16>, vector<12x4xbf16>, vector<256x4xf32> -> vector<256x4xf32>
    %c0_31 = arith.constant 0 : index
    %c0_32 = arith.constant 0 : index
    %c0_33 = arith.constant 0 : index
    %36 = vector.load %arg6[%c0_31, %c0_32, %c0_33] : memref<1x256x4xf32, #tpu.memory_space<vmem>>, vector<1x256x4xf32>
    %37 = vector.shape_cast %36 : vector<1x256x4xf32> to vector<256x4xf32>
    %38 = vector.shape_cast %35 : vector<256x4xf32> to vector<1x256x4xf32>
    tpu.vector_store %arg6[%c0_31, %c0_32, %c0_33], %38 {strides = array<i32>} : memref<1x256x4xf32, #tpu.memory_space<vmem>>, vector<1x256x4xf32>,
    %c23 = arith.constant 23 : index
    %c0_34 = arith.constant 0 : index
    %39 = vector.load %arg9[%c23, %c0_34] : memref<304x4xf32, #tpu.memory_space<vmem>>, vector<256x4xf32>
    %40 = vector.broadcast %16 : vector<256x1xf32> to vector<256x4xf32>
    %41 = arith.mulf %39, %40 : vector<256x4xf32>
    %42 = arith.truncf %41 : vector<256x4xf32> to vector<256x4xbf16>
    %c0_35 = arith.constant 0 : index
    %c0_36 = arith.constant 0 : index
    %43 = vector.load %arg10[%c0_35, %c0_36] : memref<256x12xbf16, #tpu.memory_space<vmem>>, vector<256x4xbf16>
    tpu.vector_store %arg10[%c0_35, %c0_36], %42 {strides = array<i32>} : memref<256x12xbf16, #tpu.memory_space<vmem>>, vector<256x4xbf16>,
    %c24_37 = arith.constant 24 : index
    %c0_38 = arith.constant 0 : index
    %44 = vector.load %arg9[%c24_37, %c0_38] : memref<304x4xf32, #tpu.memory_space<vmem>>, vector<256x4xf32>
    %45 = arith.truncf %44 : vector<256x4xf32> to vector<256x4xbf16>
    %c0_39 = arith.constant 0 : index
    %c4_40 = arith.constant 4 : index
    %46 = vector.load %arg10[%c0_39, %c4_40] : memref<256x12xbf16, #tpu.memory_space<vmem>>, vector<256x4xbf16>
    tpu.vector_store %arg10[%c0_39, %c4_40], %45 {strides = array<i32>} : memref<256x12xbf16, #tpu.memory_space<vmem>>, vector<256x4xbf16>,
    %c25 = arith.constant 25 : index
    %c0_41 = arith.constant 0 : index
    %47 = vector.load %arg9[%c25, %c0_41] : memref<304x4xf32, #tpu.memory_space<vmem>>, vector<256x4xf32>
    %48 = vector.broadcast %18 : vector<256x1xf32> to vector<256x4xf32>
    %49 = arith.mulf %47, %48 : vector<256x4xf32>
    %50 = arith.truncf %49 : vector<256x4xf32> to vector<256x4xbf16>
    %c0_42 = arith.constant 0 : index
    %c8_43 = arith.constant 8 : index
    %51 = vector.load %arg10[%c0_42, %c8_43] : memref<256x12xbf16, #tpu.memory_space<vmem>>, vector<256x4xbf16>
    tpu.vector_store %arg10[%c0_42, %c8_43], %50 {strides = array<i32>} : memref<256x12xbf16, #tpu.memory_space<vmem>>, vector<256x4xbf16>,
    %c0_44 = arith.constant 0 : index
    %c0_45 = arith.constant 0 : index
    %52 = vector.load %arg10[%c0_44, %c0_45] : memref<256x12xbf16, #tpu.memory_space<vmem>>, vector<256x12xbf16>
    %c1_46 = arith.constant 1 : index
    %c0_47 = arith.constant 0 : index
    %c0_48 = arith.constant 0 : index
    %53 = vector.load %arg4[%c1_46, %c0_47, %c0_48] : memref<3x12x4xbf16, #tpu.memory_space<vmem>>, vector<1x12x4xbf16>
    %54 = vector.shape_cast %53 : vector<1x12x4xbf16> to vector<12x4xbf16>
    %cst_49 = arith.constant dense<0.000000e+00> : vector<256x4xf32>
    %55 = tpu.matmul %52, %54, %cst_49 {dimension_numbers = #tpu.dot_dimension_numbers<[1], [0], [0], [1], [0, 0, 1, 1], [], []>} : vector<256x12xbf16>, vector<12x4xbf16>, vector<256x4xf32> -> vector<256x4xf32>
    %c0_50 = arith.constant 0 : index
    %c0_51 = arith.constant 0 : index
    %c0_52 = arith.constant 0 : index
    %56 = vector.load %arg6[%c0_50, %c0_51, %c0_52] : memref<1x256x4xf32, #tpu.memory_space<vmem>>, vector<1x256x4xf32>
    %57 = vector.shape_cast %56 : vector<1x256x4xf32> to vector<256x4xf32>
    %58 = arith.addf %57, %55 : vector<256x4xf32>
    %c0_53 = arith.constant 0 : index
    %c0_54 = arith.constant 0 : index
    %c0_55 = arith.constant 0 : index
    %59 = vector.load %arg6[%c0_53, %c0_54, %c0_55] : memref<1x256x4xf32, #tpu.memory_space<vmem>>, vector<1x256x4xf32>
    %60 = vector.shape_cast %59 : vector<1x256x4xf32> to vector<256x4xf32>
    %61 = vector.shape_cast %58 : vector<256x4xf32> to vector<1x256x4xf32>
    tpu.vector_store %arg6[%c0_53, %c0_54, %c0_55], %61 {strides = array<i32>} : memref<1x256x4xf32, #tpu.memory_space<vmem>>, vector<1x256x4xf32>,
    %c39 = arith.constant 39 : index
    %c0_56 = arith.constant 0 : index
    %62 = vector.load %arg9[%c39, %c0_56] : memref<304x4xf32, #tpu.memory_space<vmem>>, vector<256x4xf32>
    %63 = vector.broadcast %16 : vector<256x1xf32> to vector<256x4xf32>
    %64 = arith.mulf %62, %63 : vector<256x4xf32>
    %65 = arith.truncf %64 : vector<256x4xf32> to vector<256x4xbf16>
    %c0_57 = arith.constant 0 : index
    %c0_58 = arith.constant 0 : index
    %66 = vector.load %arg10[%c0_57, %c0_58] : memref<256x12xbf16, #tpu.memory_space<vmem>>, vector<256x4xbf16>
    tpu.vector_store %arg10[%c0_57, %c0_58], %65 {strides = array<i32>} : memref<256x12xbf16, #tpu.memory_space<vmem>>, vector<256x4xbf16>,
    %c40 = arith.constant 40 : index
    %c0_59 = arith.constant 0 : index
    %67 = vector.load %arg9[%c40, %c0_59] : memref<304x4xf32, #tpu.memory_space<vmem>>, vector<256x4xf32>
    %68 = arith.truncf %67 : vector<256x4xf32> to vector<256x4xbf16>
    %c0_60 = arith.constant 0 : index
    %c4_61 = arith.constant 4 : index
    %69 = vector.load %arg10[%c0_60, %c4_61] : memref<256x12xbf16, #tpu.memory_space<vmem>>, vector<256x4xbf16>
    tpu.vector_store %arg10[%c0_60, %c4_61], %68 {strides = array<i32>} : memref<256x12xbf16, #tpu.memory_space<vmem>>, vector<256x4xbf16>,
    %c41 = arith.constant 41 : index
    %c0_62 = arith.constant 0 : index
    %70 = vector.load %arg9[%c41, %c0_62] : memref<304x4xf32, #tpu.memory_space<vmem>>, vector<256x4xf32>
    %71 = vector.broadcast %18 : vector<256x1xf32> to vector<256x4xf32>
    %72 = arith.mulf %70, %71 : vector<256x4xf32>
    %73 = arith.truncf %72 : vector<256x4xf32> to vector<256x4xbf16>
    %c0_63 = arith.constant 0 : index
    %c8_64 = arith.constant 8 : index
    %74 = vector.load %arg10[%c0_63, %c8_64] : memref<256x12xbf16, #tpu.memory_space<vmem>>, vector<256x4xbf16>
    tpu.vector_store %arg10[%c0_63, %c8_64], %73 {strides = array<i32>} : memref<256x12xbf16, #tpu.memory_space<vmem>>, vector<256x4xbf16>,
    %c0_65 = arith.constant 0 : index
    %c0_66 = arith.constant 0 : index
    %75 = vector.load %arg10[%c0_65, %c0_66] : memref<256x12xbf16, #tpu.memory_space<vmem>>, vector<256x12xbf16>
    %c2 = arith.constant 2 : index
    %c0_67 = arith.constant 0 : index
    %c0_68 = arith.constant 0 : index
    %76 = vector.load %arg4[%c2, %c0_67, %c0_68] : memref<3x12x4xbf16, #tpu.memory_space<vmem>>, vector<1x12x4xbf16>
    %77 = vector.shape_cast %76 : vector<1x12x4xbf16> to vector<12x4xbf16>
    %cst_69 = arith.constant dense<0.000000e+00> : vector<256x4xf32>
    %78 = tpu.matmul %75, %77, %cst_69 {dimension_numbers = #tpu.dot_dimension_numbers<[1], [0], [0], [1], [0, 0, 1, 1], [], []>} : vector<256x12xbf16>, vector<12x4xbf16>, vector<256x4xf32> -> vector<256x4xf32>
    %c0_70 = arith.constant 0 : index
    %c0_71 = arith.constant 0 : index
    %c0_72 = arith.constant 0 : index
    %79 = vector.load %arg6[%c0_70, %c0_71, %c0_72] : memref<1x256x4xf32, #tpu.memory_space<vmem>>, vector<1x256x4xf32>
    %80 = vector.shape_cast %79 : vector<1x256x4xf32> to vector<256x4xf32>
    %81 = arith.addf %80, %78 : vector<256x4xf32>
    %c0_73 = arith.constant 0 : index
    %c0_74 = arith.constant 0 : index
    %c0_75 = arith.constant 0 : index
    %82 = vector.load %arg6[%c0_73, %c0_74, %c0_75] : memref<1x256x4xf32, #tpu.memory_space<vmem>>, vector<1x256x4xf32>
    %83 = vector.shape_cast %82 : vector<1x256x4xf32> to vector<256x4xf32>
    %84 = vector.shape_cast %81 : vector<256x4xf32> to vector<1x256x4xf32>
    tpu.vector_store %arg6[%c0_73, %c0_74, %c0_75], %84 {strides = array<i32>} : memref<1x256x4xf32, #tpu.memory_space<vmem>>, vector<1x256x4xf32>,
    %c0_76 = arith.constant 0 : index
    %c0_77 = arith.constant 0 : index
    %c0_78 = arith.constant 0 : index
    %85 = vector.load %arg6[%c0_76, %c0_77, %c0_78] : memref<1x256x4xf32, #tpu.memory_space<vmem>>, vector<1x256x4xf32>
    %86 = vector.shape_cast %85 : vector<1x256x4xf32> to vector<256x4xf32>
    %cst_79 = arith.constant dense<0.000000e+00> : vector<4xf32>
    %87 = vector.multi_reduction <add>, %86, %cst_79 [0] : vector<256x4xf32> to vector<4xf32>
    %88 = vector.shape_cast %87 : vector<4xf32> to vector<1x4xf32>
    %c0_80 = arith.constant 0 : index
    %c0_81 = arith.constant 0 : index
    %c0_82 = arith.constant 0 : index
    %89 = vector.load %arg7[%c0_80, %c0_81, %c0_82] : memref<1x1x4xf32, #tpu.memory_space<vmem>>, vector<1x1x4xf32>
    %90 = vector.shape_cast %89 : vector<1x1x4xf32> to vector<1x4xf32>
    %91 = vector.shape_cast %88 : vector<1x4xf32> to vector<1x1x4xf32>
    tpu.vector_store %arg7[%c0_80, %c0_81, %c0_82], %91 {strides = array<i32>} : memref<1x1x4xf32, #tpu.memory_space<vmem>>, vector<1x1x4xf32>,
    %92 = arith.mulf %86, %86 : vector<256x4xf32>
    %cst_83 = arith.constant dense<0.000000e+00> : vector<4xf32>
    %93 = vector.multi_reduction <add>, %92, %cst_83 [0] : vector<256x4xf32> to vector<4xf32>
    %94 = vector.shape_cast %93 : vector<4xf32> to vector<1x4xf32>
    %c0_84 = arith.constant 0 : index
    %c0_85 = arith.constant 0 : index
    %c0_86 = arith.constant 0 : index
    %95 = vector.load %arg8[%c0_84, %c0_85, %c0_86] : memref<1x1x4xf32, #tpu.memory_space<vmem>>, vector<1x1x4xf32>
    %96 = vector.shape_cast %95 : vector<1x1x4xf32> to vector<1x4xf32>
    %97 = vector.shape_cast %94 : vector<1x4xf32> to vector<1x1x4xf32>
    tpu.vector_store %arg8[%c0_84, %c0_85, %c0_86], %97 {strides = array<i32>} : memref<1x1x4xf32, #tpu.memory_space<vmem>>, vector<1x1x4xf32>,
    return
  }
  func.func @transform_0(%arg0: i32) -> (i32, i32, i32) {
    %c0_i32 = arith.constant 0 : i32
    %c0_i32_0 = arith.constant 0 : i32
    %c0_i32_1 = arith.constant 0 : i32
    return %arg0, %c0_i32, %c0_i32_0 : i32, i32, i32
  }
  func.func @transform_1(%arg0: i32) -> (i32, i32) {
    %c0_i32 = arith.constant 0 : i32
    %c0_i32_0 = arith.constant 0 : i32
    %c0_i32_1 = arith.constant 0 : i32
    return %c0_i32, %c0_i32_0 : i32, i32
  }
  func.func @transform_2(%arg0: i32) -> (i32, i32) {
    %c0_i32 = arith.constant 0 : i32
    %c0_i32_0 = arith.constant 0 : i32
    %c0_i32_1 = arith.constant 0 : i32
    return %c0_i32, %c0_i32_0 : i32, i32
  }
  func.func @transform_3(%arg0: i32) -> (i32, i32, i32) {
    %c0_i32 = arith.constant 0 : i32
    %c0_i32_0 = arith.constant 0 : i32
    %c0_i32_1 = arith.constant 0 : i32
    %c0_i32_2 = arith.constant 0 : i32
    return %c0_i32, %c0_i32_0, %c0_i32_1 : i32, i32, i32
  }
  func.func @transform_4(%arg0: i32) -> (i32, i32, i32) {
    %c0_i32 = arith.constant 0 : i32
    %c0_i32_0 = arith.constant 0 : i32
    %c0_i32_1 = arith.constant 0 : i32
    %c0_i32_2 = arith.constant 0 : i32
    return %c0_i32, %c0_i32_0, %c0_i32_1 : i32, i32, i32
  }
  func.func @transform_5(%arg0: i32) -> (i32, i32, i32) {
    %c0_i32 = arith.constant 0 : i32
    %c0_i32_0 = arith.constant 0 : i32
    %c0_i32_1 = arith.constant 0 : i32
    return %arg0, %c0_i32, %c0_i32_0 : i32, i32, i32
  }
  func.func @transform_6(%arg0: i32) -> (i32, i32, i32) {
    %c0_i32 = arith.constant 0 : i32
    %c0_i32_0 = arith.constant 0 : i32
    %c0_i32_1 = arith.constant 0 : i32
    return %arg0, %c0_i32, %c0_i32_0 : i32, i32, i32
  }
  func.func @transform_7(%arg0: i32) -> (i32, i32, i32) {
    %c0_i32 = arith.constant 0 : i32
    %c0_i32_0 = arith.constant 0 : i32
    %c0_i32_1 = arith.constant 0 : i32
    return %arg0, %c0_i32, %c0_i32_0 : i32, i32, i32
  }
}

</mosaic_0001>

<llo_original>
// kernel: preact_bottleneck_forward.4
$region0: #{preact_bottleneck_forward.4}
  #allocation0 [shape = 'u32[]', space=smem, size = 0x4, offset = 0x4, fixed_abs, tag = 'smem constant byte address 0x4 - core index']
  #allocation1 [shape = 'u32[144,128]{1,0:T(1,128)}', space=vmem, size = 0x12000, scoped, tag = 'internal scratch']
  %s0 = inlined_call_operand.vmem [shape: f32[512,4], index: 0, kind: input, shape index: {}]
  %s1 = inlined_call_operand.vmem [shape: f32[1,1,4], index: 1, kind: output, shape index: {0}]
  %s2 = inlined_call_operand.vmem [shape: f32[1,1,4], index: 2, kind: output, shape index: {1}]
  %3 = xla_tuple %s1, %s2
  %s4 = sld [smem:[#allocation0]]
  $region22: #{preact_bottleneck_forward.4} parent=0
    _
  %s6 = ssub.s32 1, %s4
  %s7 = scalar_select 0, %s6, %s4
  // Predicated region
  $region2: #{preact_bottleneck_forward.4} parent=0 // pred_check
    _
  $region3: #{preact_bottleneck_forward.4} parent=0 // pred_check_branch
    %9 = sbr.rel (0) target = $region5
  $region4: #{preact_bottleneck_forward.4} parent=0 // pred_region
    _
  $region5: #{preact_bottleneck_forward.4} parent=0 // pred_fallthru
    _
  %v10 = vld [vmem:[%s0] sm:$0xff]
  %v11 = vld [vmem:[%s0 + $0x8] sm:$0xff]
  %v12 = vld [vmem:[%s0 + $0x10] sm:$0xff]
  %v13 = vld [vmem:[%s0 + $0x18] sm:$0xff]
  %v14 = vld [vmem:[%s0 + $0x20] sm:$0xff]
  %v15 = vld [vmem:[%s0 + $0x28] sm:$0xff]
  %v16 = vld [vmem:[%s0 + $0x30] sm:$0xff]
  %v17 = vld [vmem:[%s0 + $0x38] sm:$0xff]
  %v18 = vld [vmem:[%s0 + $0x40] sm:$0xff]
  %v19 = vld [vmem:[%s0 + $0x48] sm:$0xff]
  %v20 = vld [vmem:[%s0 + $0x50] sm:$0xff]
  %v21 = vld [vmem:[%s0 + $0x58] sm:$0xff]
  %v22 = vld [vmem:[%s0 + $0x60] sm:$0xff]
  %v23 = vld [vmem:[%s0 + $0x68] sm:$0xff]
  %v24 = vld [vmem:[%s0 + $0x70] sm:$0xff]
  %v25 = vld [vmem:[%s0 + $0x78] sm:$0xff]
  %v26 = vld [vmem:[%s0 + $0x80] sm:$0xff]
  %v27 = vld [vmem:[%s0 + $0x88] sm:$0xff]
  %v28 = vld [vmem:[%s0 + $0x90] sm:$0xff]
  %v29 = vld [vmem:[%s0 + $0x98] sm:$0xff]
  %v30 = vld [vmem:[%s0 + $0xa0] sm:$0xff]
  %v31 = vld [vmem:[%s0 + $0xa8] sm:$0xff]
  %v32 = vld [vmem:[%s0 + $0xb0] sm:$0xff]
  %v33 = vld [vmem:[%s0 + $0xb8] sm:$0xff]
  %v34 = vld [vmem:[%s0 + $0xc0] sm:$0xff]
  %v35 = vld [vmem:[%s0 + $0xc8] sm:$0xff]
  %v36 = vld [vmem:[%s0 + $0xd0] sm:$0xff]
  %v37 = vld [vmem:[%s0 + $0xd8] sm:$0xff]
  %v38 = vld [vmem:[%s0 + $0xe0] sm:$0xff]
  %v39 = vld [vmem:[%s0 + $0xe8] sm:$0xff]
  %v40 = vld [vmem:[%s0 + $0xf0] sm:$0xff]
  %v41 = vld [vmem:[%s0 + $0xf8] sm:$0xff]
  %v42 = vld [vmem:[%s0 + $0x100] sm:$0xff]
  %v43 = vld [vmem:[%s0 + $0x108] sm:$0xff]
  %v44 = vld [vmem:[%s0 + $0x110] sm:$0xff]
  %v45 = vld [vmem:[%s0 + $0x118] sm:$0xff]
  %v46 = vld [vmem:[%s0 + $0x120] sm:$0xff]
  %v47 = vld [vmem:[%s0 + $0x128] sm:$0xff]
  %v48 = vld [vmem:[%s0 + $0x130] sm:$0xff]
  %v49 = vld [vmem:[%s0 + $0x138] sm:$0xff]
  %v50 = vld [vmem:[%s0 + $0x140] sm:$0xff]
  %v51 = vld [vmem:[%s0 + $0x148] sm:$0xff]
  %v52 = vld [vmem:[%s0 + $0x150] sm:$0xff]
  %v53 = vld [vmem:[%s0 + $0x158] sm:$0xff]
  %v54 = vld [vmem:[%s0 + $0x160] sm:$0xff]
  %v55 = vld [vmem:[%s0 + $0x168] sm:$0xff]
  %v56 = vld [vmem:[%s0 + $0x170] sm:$0xff]
  %v57 = vld [vmem:[%s0 + $0x178] sm:$0xff]
  %v58 = vld [vmem:[%s0 + $0x180] sm:$0xff]
  %v59 = vld [vmem:[%s0 + $0x188] sm:$0xff]
  %v60 = vld [vmem:[%s0 + $0x190] sm:$0xff]
  %v61 = vld [vmem:[%s0 + $0x198] sm:$0xff]
  %v62 = vld [vmem:[%s0 + $0x1a0] sm:$0xff]
  %v63 = vld [vmem:[%s0 + $0x1a8] sm:$0xff]
  %v64 = vld [vmem:[%s0 + $0x1b0] sm:$0xff]
  %v65 = vld [vmem:[%s0 + $0x1b8] sm:$0xff]
  %v66 = vld [vmem:[%s0 + $0x1c0] sm:$0xff]
  %v67 = vld [vmem:[%s0 + $0x1c8] sm:$0xff]
  %v68 = vld [vmem:[%s0 + $0x1d0] sm:$0xff]
  %v69 = vld [vmem:[%s0 + $0x1d8] sm:$0xff]
  %v70 = vld [vmem:[%s0 + $0x1e0] sm:$0xff]
  %v71 = vld [vmem:[%s0 + $0x1e8] sm:$0xff]
  %v72 = vld [vmem:[%s0 + $0x1f0] sm:$0xff]
  %v73 = vld [vmem:[%s0 + $0x1f8] sm:$0xff]
  %vm74 = vcmask 31744
  %v75 = vsel %vm74, %v10, 0.0
  %v76 = vsel %vm74, %v11, 0.0
  %v77 = vadd.f32 %v75, %v76
  %v78 = vsel %vm74, %v12, 0.0
  %v79 = vadd.f32 %v77, %v78
  %v80 = vsel %vm74, %v13, 0.0
  %v81 = vadd.f32 %v79, %v80
  %v82 = vsel %vm74, %v14, 0.0
  %v83 = vadd.f32 %v81, %v82
  %v84 = vsel %vm74, %v15, 0.0
  %v85 = vadd.f32 %v83, %v84
  %v86 = vsel %vm74, %v16, 0.0
  %v87 = vadd.f32 %v85, %v86
  %v88 = vsel %vm74, %v17, 0.0
  %v89 = vadd.f32 %v87, %v88
  %v90 = vsel %vm74, %v18, 0.0
  %v91 = vadd.f32 %v89, %v90
  %v92 = vsel %vm74, %v19, 0.0
  %v93 = vadd.f32 %v91, %v92
  %v94 = vsel %vm74, %v20, 0.0
  %v95 = vadd.f32 %v93, %v94
  %v96 = vsel %vm74, %v21, 0.0
  %v97 = vadd.f32 %v95, %v96
  %v98 = vsel %vm74, %v22, 0.0
  %v99 = vadd.f32 %v97, %v98
  %v100 = vsel %vm74, %v23, 0.0
  %v101 = vadd.f32 %v99, %v100
  %v102 = vsel %vm74, %v24, 0.0
  %v103 = vadd.f32 %v101, %v102
  %v104 = vsel %vm74, %v25, 0.0
  %v105 = vadd.f32 %v103, %v104
  %v106 = vsel %vm74, %v26, 0.0
  %v107 = vadd.f32 %v105, %v106
  %v108 = vsel %vm74, %v27, 0.0
  %v109 = vadd.f32 %v107, %v108
  %v110 = vsel %vm74, %v28, 0.0
  %v111 = vadd.f32 %v109, %v110
  %v112 = vsel %vm74, %v29, 0.0
  %v113 = vadd.f32 %v111, %v112
  %v114 = vsel %vm74, %v30, 0.0
  %v115 = vadd.f32 %v113, %v114
  %v116 = vsel %vm74, %v31, 0.0
  %v117 = vadd.f32 %v115, %v116
  %v118 = vsel %vm74, %v32, 0.0
  %v119 = vadd.f32 %v117, %v118
  %v120 = vsel %vm74, %v33, 0.0
  %v121 = vadd.f32 %v119, %v120
  %v122 = vsel %vm74, %v34, 0.0
  %v123 = vadd.f32 %v121, %v122
  %v124 = vsel %vm74, %v35, 0.0
  %v125 = vadd.f32 %v123, %v124
  %v126 = vsel %vm74, %v36, 0.0
  %v127 = vadd.f32 %v125, %v126
  %v128 = vsel %vm74, %v37, 0.0
  %v129 = vadd.f32 %v127, %v128
  %v130 = vsel %vm74, %v38, 0.0
  %v131 = vadd.f32 %v129, %v130
  %v132 = vsel %vm74, %v39, 0.0
  %v133 = vadd.f32 %v131, %v132
  %v134 = vsel %vm74, %v40, 0.0
  %v135 = vadd.f32 %v133, %v134
  %v136 = vsel %vm74, %v41, 0.0
  %v137 = vadd.f32 %v135, %v136
  %v138 = vsel %vm74, %v42, 0.0
  %v139 = vadd.f32 %v137, %v138
  %v140 = vsel %vm74, %v43, 0.0
  %v141 = vadd.f32 %v139, %v140
  %v142 = vsel %vm74, %v44, 0.0
  %v143 = vadd.f32 %v141, %v142
  %v144 = vsel %vm74, %v45, 0.0
  %v145 = vadd.f32 %v143, %v144
  %v146 = vsel %vm74, %v46, 0.0
  %v147 = vadd.f32 %v145, %v146
  %v148 = vsel %vm74, %v47, 0.0
  %v149 = vadd.f32 %v147, %v148
  %v150 = vsel %vm74, %v48, 0.0
  %v151 = vadd.f32 %v149, %v150
  %v152 = vsel %vm74, %v49, 0.0
  %v153 = vadd.f32 %v151, %v152
  %v154 = vsel %vm74, %v50, 0.0
  %v155 = vadd.f32 %v153, %v154
  %v156 = vsel %vm74, %v51, 0.0
  %v157 = vadd.f32 %v155, %v156
  %v158 = vsel %vm74, %v52, 0.0
  %v159 = vadd.f32 %v157, %v158
  %v160 = vsel %vm74, %v53, 0.0
  %v161 = vadd.f32 %v159, %v160
  %v162 = vsel %vm74, %v54, 0.0
  %v163 = vadd.f32 %v161, %v162
  %v164 = vsel %vm74, %v55, 0.0
  %v165 = vadd.f32 %v163, %v164
  %v166 = vsel %vm74, %v56, 0.0
  %v167 = vadd.f32 %v165, %v166
  %v168 = vsel %vm74, %v57, 0.0
  %v169 = vadd.f32 %v167, %v168
  %v170 = vsel %vm74, %v58, 0.0
  %v171 = vadd.f32 %v169, %v170
  %v172 = vsel %vm74, %v59, 0.0
  %v173 = vadd.f32 %v171, %v172
  %v174 = vsel %vm74, %v60, 0.0
  %v175 = vadd.f32 %v173, %v174
  %v176 = vsel %vm74, %v61, 0.0
  %v177 = vadd.f32 %v175, %v176
  %v178 = vsel %vm74, %v62, 0.0
  %v179 = vadd.f32 %v177, %v178
  %v180 = vsel %vm74, %v63, 0.0
  %v181 = vadd.f32 %v179, %v180
  %v182 = vsel %vm74, %v64, 0.0
  %v183 = vadd.f32 %v181, %v182
  %v184 = vsel %vm74, %v65, 0.0
  %v185 = vadd.f32 %v183, %v184
  %v186 = vsel %vm74, %v66, 0.0
  %v187 = vadd.f32 %v185, %v186
  %v188 = vsel %vm74, %v67, 0.0
  %v189 = vadd.f32 %v187, %v188
  %v190 = vsel %vm74, %v68, 0.0
  %v191 = vadd.f32 %v189, %v190
  %v192 = vsel %vm74, %v69, 0.0
  %v193 = vadd.f32 %v191, %v192
  %v194 = vsel %vm74, %v70, 0.0
  %v195 = vadd.f32 %v193, %v194
  %v196 = vsel %vm74, %v71, 0.0
  %v197 = vadd.f32 %v195, %v196
  %v198 = vsel %vm74, %v72, 0.0
  %v199 = vadd.f32 %v197, %v198
  %v200 = vsel %vm74, %v73, 0.0
  %v201 = vadd.f32 %v199, %v200
  %v202 = vrot.slane %v201, 4
  %v203 = vadd.f32 %v201, %v202
  %v204 = vrot.slane %v203, 2
  %v205 = vadd.f32 %v203, %v204
  %v206 = vrot.slane %v205, 1
  %v207 = vadd.f32 %v205, %v206
  %vm208 = vcmask 24576
  %209 = vst.msk [vmem:[%s1] sm:$0x1] %vm208, %v207
  %v210 = vmul.f32 %v10, %v10
  %v211 = vmul.f32 %v11, %v11
  %v212 = vmul.f32 %v12, %v12
  %v213 = vmul.f32 %v13, %v13
  %v214 = vmul.f32 %v14, %v14
  %v215 = vmul.f32 %v15, %v15
  %v216 = vmul.f32 %v16, %v16
  %v217 = vmul.f32 %v17, %v17
  %v218 = vmul.f32 %v18, %v18
  %v219 = vmul.f32 %v19, %v19
  %v220 = vmul.f32 %v20, %v20
  %v221 = vmul.f32 %v21, %v21
  %v222 = vmul.f32 %v22, %v22
  %v223 = vmul.f32 %v23, %v23
  %v224 = vmul.f32 %v24, %v24
  %v225 = vmul.f32 %v25, %v25
  %v226 = vmul.f32 %v26, %v26
  %v227 = vmul.f32 %v27, %v27
  %v228 = vmul.f32 %v28, %v28
  %v229 = vmul.f32 %v29, %v29
  %v230 = vmul.f32 %v30, %v30
  %v231 = vmul.f32 %v31, %v31
  %v232 = vmul.f32 %v32, %v32
  %v233 = vmul.f32 %v33, %v33
  %v234 = vmul.f32 %v34, %v34
  %v235 = vmul.f32 %v35, %v35
  %v236 = vmul.f32 %v36, %v36
  %v237 = vmul.f32 %v37, %v37
  %v238 = vmul.f32 %v38, %v38
  %v239 = vmul.f32 %v39, %v39
  %v240 = vmul.f32 %v40, %v40
  %v241 = vmul.f32 %v41, %v41
  %v242 = vmul.f32 %v42, %v42
  %v243 = vmul.f32 %v43, %v43
  %v244 = vmul.f32 %v44, %v44
  %v245 = vmul.f32 %v45, %v45
  %v246 = vmul.f32 %v46, %v46
  %v247 = vmul.f32 %v47, %v47
  %v248 = vmul.f32 %v48, %v48
  %v249 = vmul.f32 %v49, %v49
  %v250 = vmul.f32 %v50, %v50
  %v251 = vmul.f32 %v51, %v51
  %v252 = vmul.f32 %v52, %v52
  %v253 = vmul.f32 %v53, %v53
  %v254 = vmul.f32 %v54, %v54
  %v255 = vmul.f32 %v55, %v55
  %v256 = vmul.f32 %v56, %v56
  %v257 = vmul.f32 %v57, %v57
  %v258 = vmul.f32 %v58, %v58
  %v259 = vmul.f32 %v59, %v59
  %v260 = vmul.f32 %v60, %v60
  %v261 = vmul.f32 %v61, %v61
  %v262 = vmul.f32 %v62, %v62
  %v263 = vmul.f32 %v63, %v63
  %v264 = vmul.f32 %v64, %v64
  %v265 = vmul.f32 %v65, %v65
  %v266 = vmul.f32 %v66, %v66
  %v267 = vmul.f32 %v67, %v67
  %v268 = vmul.f32 %v68, %v68
  %v269 = vmul.f32 %v69, %v69
  %v270 = vmul.f32 %v70, %v70
  %v271 = vmul.f32 %v71, %v71
  %v272 = vmul.f32 %v72, %v72
  %v273 = vmul.f32 %v73, %v73
  %v274 = vsel %vm74, %v210, 0.0
  %v275 = vsel %vm74, %v211, 0.0
  %v276 = vadd.f32 %v274, %v275
  %v277 = vsel %vm74, %v212, 0.0
  %v278 = vadd.f32 %v276, %v277
  %v279 = vsel %vm74, %v213, 0.0
  %v280 = vadd.f32 %v278, %v279
  %v281 = vsel %vm74, %v214, 0.0
  %v282 = vadd.f32 %v280, %v281
  %v283 = vsel %vm74, %v215, 0.0
  %v284 = vadd.f32 %v282, %v283
  %v285 = vsel %vm74, %v216, 0.0
  %v286 = vadd.f32 %v284, %v285
  %v287 = vsel %vm74, %v217, 0.0
  %v288 = vadd.f32 %v286, %v287
  %v289 = vsel %vm74, %v218, 0.0
  %v290 = vadd.f32 %v288, %v289
  %v291 = vsel %vm74, %v219, 0.0
  %v292 = vadd.f32 %v290, %v291
  %v293 = vsel %vm74, %v220, 0.0
  %v294 = vadd.f32 %v292, %v293
  %v295 = vsel %vm74, %v221, 0.0
  %v296 = vadd.f32 %v294, %v295
  %v297 = vsel %vm74, %v222, 0.0
  %v298 = vadd.f32 %v296, %v297
  %v299 = vsel %vm74, %v223, 0.0
  %v300 = vadd.f32 %v298, %v299
  %v301 = vsel %vm74, %v224, 0.0
  %v302 = vadd.f32 %v300, %v301
  %v303 = vsel %vm74, %v225, 0.0
  %v304 = vadd.f32 %v302, %v303
  %v305 = vsel %vm74, %v226, 0.0
  %v306 = vadd.f32 %v304, %v305
  %v307 = vsel %vm74, %v227, 0.0
  %v308 = vadd.f32 %v306, %v307
  %v309 = vsel %vm74, %v228, 0.0
  %v310 = vadd.f32 %v308, %v309
  %v311 = vsel %vm74, %v229, 0.0
  %v312 = vadd.f32 %v310, %v311
  %v313 = vsel %vm74, %v230, 0.0
  %v314 = vadd.f32 %v312, %v313
  %v315 = vsel %vm74, %v231, 0.0
  %v316 = vadd.f32 %v314, %v315
  %v317 = vsel %vm74, %v232, 0.0
  %v318 = vadd.f32 %v316, %v317
  %v319 = vsel %vm74, %v233, 0.0
  %v320 = vadd.f32 %v318, %v319
  %v321 = vsel %vm74, %v234, 0.0
  %v322 = vadd.f32 %v320, %v321
  %v323 = vsel %vm74, %v235, 0.0
  %v324 = vadd.f32 %v322, %v323
  %v325 = vsel %vm74, %v236, 0.0
  %v326 = vadd.f32 %v324, %v325
  %v327 = vsel %vm74, %v237, 0.0
  %v328 = vadd.f32 %v326, %v327
  %v329 = vsel %vm74, %v238, 0.0
  %v330 = vadd.f32 %v328, %v329
  %v331 = vsel %vm74, %v239, 0.0
  %v332 = vadd.f32 %v330, %v331
  %v333 = vsel %vm74, %v240, 0.0
  %v334 = vadd.f32 %v332, %v333
  %v335 = vsel %vm74, %v241, 0.0
  %v336 = vadd.f32 %v334, %v335
  %v337 = vsel %vm74, %v242, 0.0
  %v338 = vadd.f32 %v336, %v337
  %v339 = vsel %vm74, %v243, 0.0
  %v340 = vadd.f32 %v338, %v339
  %v341 = vsel %vm74, %v244, 0.0
  %v342 = vadd.f32 %v340, %v341
  %v343 = vsel %vm74, %v245, 0.0
  %v344 = vadd.f32 %v342, %v343
  %v345 = vsel %vm74, %v246, 0.0
  %v346 = vadd.f32 %v344, %v345
  %v347 = vsel %vm74, %v247, 0.0
  %v348 = vadd.f32 %v346, %v347
  %v349 = vsel %vm74, %v248, 0.0
  %v350 = vadd.f32 %v348, %v349
  %v351 = vsel %vm74, %v249, 0.0
  %v352 = vadd.f32 %v350, %v351
  %v353 = vsel %vm74, %v250, 0.0
  %v354 = vadd.f32 %v352, %v353
  %v355 = vsel %vm74, %v251, 0.0
  %v356 = vadd.f32 %v354, %v355
  %v357 = vsel %vm74, %v252, 0.0
  %v358 = vadd.f32 %v356, %v357
  %v359 = vsel %vm74, %v253, 0.0
  %v360 = vadd.f32 %v358, %v359
  %v361 = vsel %vm74, %v254, 0.0
  %v362 = vadd.f32 %v360, %v361
  %v363 = vsel %vm74, %v255, 0.0
  %v364 = vadd.f32 %v362, %v363
  %v365 = vsel %vm74, %v256, 0.0
  %v366 = vadd.f32 %v364, %v365
  %v367 = vsel %vm74, %v257, 0.0
  %v368 = vadd.f32 %v366, %v367
  %v369 = vsel %vm74, %v258, 0.0
  %v370 = vadd.f32 %v368, %v369
  %v371 = vsel %vm74, %v259, 0.0
  %v372 = vadd.f32 %v370, %v371
  %v373 = vsel %vm74, %v260, 0.0
  %v374 = vadd.f32 %v372, %v373
  %v375 = vsel %vm74, %v261, 0.0
  %v376 = vadd.f32 %v374, %v375
  %v377 = vsel %vm74, %v262, 0.0
  %v378 = vadd.f32 %v376, %v377
  %v379 = vsel %vm74, %v263, 0.0
  %v380 = vadd.f32 %v378, %v379
  %v381 = vsel %vm74, %v264, 0.0
  %v382 = vadd.f32 %v380, %v381
  %v383 = vsel %vm74, %v265, 0.0
  %v384 = vadd.f32 %v382, %v383
  %v385 = vsel %vm74, %v266, 0.0
  %v386 = vadd.f32 %v384, %v385
  %v387 = vsel %vm74, %v267, 0.0
  %v388 = vadd.f32 %v386, %v387
  %v389 = vsel %vm74, %v268, 0.0
  %v390 = vadd.f32 %v388, %v389
  %v391 = vsel %vm74, %v269, 0.0
  %v392 = vadd.f32 %v390, %v391
  %v393 = vsel %vm74, %v270, 0.0
  %v394 = vadd.f32 %v392, %v393
  %v395 = vsel %vm74, %v271, 0.0
  %v396 = vadd.f32 %v394, %v395
  %v397 = vsel %vm74, %v272, 0.0
  %v398 = vadd.f32 %v396, %v397
  %v399 = vsel %vm74, %v273, 0.0
  %v400 = vadd.f32 %v398, %v399
  %v401 = vrot.slane %v400, 4
  %v402 = vadd.f32 %v400, %v401
  %v403 = vrot.slane %v402, 2
  %v404 = vadd.f32 %v402, %v403
  %v405 = vrot.slane %v404, 1
  %v406 = vadd.f32 %v404, %v405
  %407 = vst.msk [vmem:[%s2] sm:$0x1] %vm208, %v406
  // Predicated region
  $region6: #{preact_bottleneck_forward.4} parent=0 // pred_check
    _
  $region7: #{preact_bottleneck_forward.4} parent=0 // pred_check_branch
    %409 = sbr.rel (0) target = $region9
  $region8: #{preact_bottleneck_forward.4} parent=0 // pred_region
    _
  $region9: #{preact_bottleneck_forward.4} parent=0 // pred_fallthru
    _
  // Predicated region
  $region10: #{preact_bottleneck_forward.4} parent=0 // pred_check
    _
  $region11: #{preact_bottleneck_forward.4} parent=0 // pred_check_branch
    %411 = sbr.rel (0) target = $region13
  $region12: #{preact_bottleneck_forward.4} parent=0 // pred_region
    _
  $region13: #{preact_bottleneck_forward.4} parent=0 // pred_fallthru
    _
  // Predicated region
  $region14: #{preact_bottleneck_forward.4} parent=0 // pred_check
    _
  $region15: #{preact_bottleneck_forward.4} parent=0 // pred_check_branch
    %413 = sbr.rel (0) target = $region17
  $region16: #{preact_bottleneck_forward.4} parent=0 // pred_region
    _
  $region17: #{preact_bottleneck_forward.4} parent=0 // pred_fallthru
    _
  // Predicated region
  $region18: #{preact_bottleneck_forward.4} parent=0 // pred_check
    _
  $region19: #{preact_bottleneck_forward.4} parent=0 // pred_check_branch
    %415 = sbr.rel (0) target = $region21
  $region20: #{preact_bottleneck_forward.4} parent=0 // pred_region
    _
  $region21: #{preact_bottleneck_forward.4} parent=0 // pred_fallthru
    _

// kernel: preact_bottleneck_forward.7
$region0: #{preact_bottleneck_forward.7}
  #allocation0 [shape = 'u32[]', space=smem, size = 0x4, offset = 0x4, fixed_abs, tag = 'smem constant byte address 0x4 - core index']
  #allocation1 [shape = 'u32[144,128]{1,0:T(1,128)}', space=vmem, size = 0x12000, scoped, tag = 'internal scratch']
  %s0 = inlined_call_operand.vmem [shape: f32[512,4], index: 0, kind: input, shape index: {}]
  %s1 = inlined_call_operand.vmem [shape: f32[1,4], index: 1, kind: input, shape index: {}]
  %s2 = inlined_call_operand.vmem [shape: f32[1,4], index: 2, kind: input, shape index: {}]
  %s3 = inlined_call_operand.vmem [shape: bf16[4,16], index: 3, kind: input, shape index: {}]
  %s4 = inlined_call_operand.vmem [shape: f32[512,16], index: 4, kind: input, shape index: {}]
  %s5 = inlined_call_operand.vmem [shape: f32[512,16], index: 5, kind: output, shape index: {}]
  %s6 = sld [smem:[#allocation0]]
  $region30: #{preact_bottleneck_forward.7} parent=0
    _
  %s8 = ssub.s32 1, %s6
  %s9 = scalar_select 0, %s8, %s6
  // Predicated region
  $region2: #{preact_bottleneck_forward.7} parent=0 // pred_check
    _
  $region3: #{preact_bottleneck_forward.7} parent=0 // pred_check_branch
    %11 = sbr.rel (0) target = $region5
  $region4: #{preact_bottleneck_forward.7} parent=0 // pred_region
    _
  $region5: #{preact_bottleneck_forward.7} parent=0 // pred_fallthru
    _
  // Predicated region
  $region6: #{preact_bottleneck_forward.7} parent=0 // pred_check
    _
  $region7: #{preact_bottleneck_forward.7} parent=0 // pred_check_branch
    %13 = sbr.rel (0) target = $region9
  $region8: #{preact_bottleneck_forward.7} parent=0 // pred_region
    _
  $region9: #{preact_bottleneck_forward.7} parent=0 // pred_fallthru
    _
  // Predicated region
  $region10: #{preact_bottleneck_forward.7} parent=0 // pred_check
    _
  $region11: #{preact_bottleneck_forward.7} parent=0 // pred_check_branch
    %15 = sbr.rel (0) target = $region13
  $region12: #{preact_bottleneck_forward.7} parent=0 // pred_region
    _
  $region13: #{preact_bottleneck_forward.7} parent=0 // pred_fallthru
    _
  // Predicated region
  $region14: #{preact_bottleneck_forward.7} parent=0 // pred_check
    _
  $region15: #{preact_bottleneck_forward.7} parent=0 // pred_check_branch
    %17 = sbr.rel (0) target = $region17
  $region16: #{preact_bottleneck_forward.7} parent=0 // pred_region
    _
  $region17: #{preact_bottleneck_forward.7} parent=0 // pred_fallthru
    _
  // Predicated region
  $region18: #{preact_bottleneck_forward.7} parent=0 // pred_check
    _
  $region19: #{preact_bottleneck_forward.7} parent=0 // pred_check_branch
    %19 = sbr.rel (0) target = $region21
  $region20: #{preact_bottleneck_forward.7} parent=0 // pred_region
    _
  $region21: #{preact_bottleneck_forward.7} parent=0 // pred_fallthru
    _
  %v21 = vld [vmem:[%s0] sm:$0xff]
  %v22 = vld [vmem:[%s0 + $0x8] sm:$0xff]
  %v23 = vld [vmem:[%s0 + $0x10] sm:$0xff]
  %v24 = vld [vmem:[%s0 + $0x18] sm:$0xff]
  %v25 = vld [vmem:[%s0 + $0x20] sm:$0xff]
  %v26 = vld [vmem:[%s0 + $0x28] sm:$0xff]
  %v27 = vld [vmem:[%s0 + $0x30] sm:$0xff]
  %v28 = vld [vmem:[%s0 + $0x38] sm:$0xff]
  %v29 = vld [vmem:[%s0 + $0x40] sm:$0xff]
  %v30 = vld [vmem:[%s0 + $0x48] sm:$0xff]
  %v31 = vld [vmem:[%s0 + $0x50] sm:$0xff]
  %v32 = vld [vmem:[%s0 + $0x58] sm:$0xff]
  %v33 = vld [vmem:[%s0 + $0x60] sm:$0xff]
  %v34 = vld [vmem:[%s0 + $0x68] sm:$0xff]
  %v35 = vld [vmem:[%s0 + $0x70] sm:$0xff]
  %v36 = vld [vmem:[%s0 + $0x78] sm:$0xff]
  %v37 = vld [vmem:[%s0 + $0x80] sm:$0xff]
  %v38 = vld [vmem:[%s0 + $0x88] sm:$0xff]
  %v39 = vld [vmem:[%s0 + $0x90] sm:$0xff]
  %v40 = vld [vmem:[%s0 + $0x98] sm:$0xff]
  %v41 = vld [vmem:[%s0 + $0xa0] sm:$0xff]
  %v42 = vld [vmem:[%s0 + $0xa8] sm:$0xff]
  %v43 = vld [vmem:[%s0 + $0xb0] sm:$0xff]
  %v44 = vld [vmem:[%s0 + $0xb8] sm:$0xff]
  %v45 = vld [vmem:[%s0 + $0xc0] sm:$0xff]
  %v46 = vld [vmem:[%s0 + $0xc8] sm:$0xff]
  %v47 = vld [vmem:[%s0 + $0xd0] sm:$0xff]
  %v48 = vld [vmem:[%s0 + $0xd8] sm:$0xff]
  %v49 = vld [vmem:[%s0 + $0xe0] sm:$0xff]
  %v50 = vld [vmem:[%s0 + $0xe8] sm:$0xff]
  %v51 = vld [vmem:[%s0 + $0xf0] sm:$0xff]
  %v52 = vld [vmem:[%s0 + $0xf8] sm:$0xff]
  %v53 = vld [vmem:[%s0 + $0x100] sm:$0xff]
  %v54 = vld [vmem:[%s0 + $0x108] sm:$0xff]
  %v55 = vld [vmem:[%s0 + $0x110] sm:$0xff]
  %v56 = vld [vmem:[%s0 + $0x118] sm:$0xff]
  %v57 = vld [vmem:[%s0 + $0x120] sm:$0xff]
  %v58 = vld [vmem:[%s0 + $0x128] sm:$0xff]
  %v59 = vld [vmem:[%s0 + $0x130] sm:$0xff]
  %v60 = vld [vmem:[%s0 + $0x138] sm:$0xff]
  %v61 = vld [vmem:[%s0 + $0x140] sm:$0xff]
  %v62 = vld [vmem:[%s0 + $0x148] sm:$0xff]
  %v63 = vld [vmem:[%s0 + $0x150] sm:$0xff]
  %v64 = vld [vmem:[%s0 + $0x158] sm:$0xff]
  %v65 = vld [vmem:[%s0 + $0x160] sm:$0xff]
  %v66 = vld [vmem:[%s0 + $0x168] sm:$0xff]
  %v67 = vld [vmem:[%s0 + $0x170] sm:$0xff]
  %v68 = vld [vmem:[%s0 + $0x178] sm:$0xff]
  %v69 = vld [vmem:[%s0 + $0x180] sm:$0xff]
  %v70 = vld [vmem:[%s0 + $0x188] sm:$0xff]
  %v71 = vld [vmem:[%s0 + $0x190] sm:$0xff]
  %v72 = vld [vmem:[%s0 + $0x198] sm:$0xff]
  %v73 = vld [vmem:[%s0 + $0x1a0] sm:$0xff]
  %v74 = vld [vmem:[%s0 + $0x1a8] sm:$0xff]
  %v75 = vld [vmem:[%s0 + $0x1b0] sm:$0xff]
  %v76 = vld [vmem:[%s0 + $0x1b8] sm:$0xff]
  %v77 = vld [vmem:[%s0 + $0x1c0] sm:$0xff]
  %v78 = vld [vmem:[%s0 + $0x1c8] sm:$0xff]
  %v79 = vld [vmem:[%s0 + $0x1d0] sm:$0xff]
  %v80 = vld [vmem:[%s0 + $0x1d8] sm:$0xff]
  %v81 = vld [vmem:[%s0 + $0x1e0] sm:$0xff]
  %v82 = vld [vmem:[%s0 + $0x1e8] sm:$0xff]
  %v83 = vld [vmem:[%s0 + $0x1f0] sm:$0xff]
  %v84 = vld [vmem:[%s0 + $0x1f8] sm:$0xff]
  %v85 = vld [vmem:[%s1] sm:$0x1]
  %v87 = vlaneseq
  %v88 = vshrl.u32 %v87, 7
  %v89 = vsub.s32 0, %v88
  %v90 = vrot.slane %v85, %v89
  %v92 = vmul.f32 %v21, %v90
  %v93 = vmul.f32 %v22, %v90
  %v94 = vmul.f32 %v23, %v90
  %v95 = vmul.f32 %v24, %v90
  %v96 = vmul.f32 %v25, %v90
  %v97 = vmul.f32 %v26, %v90
  %v98 = vmul.f32 %v27, %v90
  %v99 = vmul.f32 %v28, %v90
  %v100 = vmul.f32 %v29, %v90
  %v101 = vmul.f32 %v30, %v90
  %v102 = vmul.f32 %v31, %v90
  %v103 = vmul.f32 %v32, %v90
  %v104 = vmul.f32 %v33, %v90
  %v105 = vmul.f32 %v34, %v90
  %v106 = vmul.f32 %v35, %v90
  %v107 = vmul.f32 %v36, %v90
  %v108 = vmul.f32 %v37, %v90
  %v109 = vmul.f32 %v38, %v90
  %v110 = vmul.f32 %v39, %v90
  %v111 = vmul.f32 %v40, %v90
  %v112 = vmul.f32 %v41, %v90
  %v113 = vmul.f32 %v42, %v90
  %v114 = vmul.f32 %v43, %v90
  %v115 = vmul.f32 %v44, %v90
  %v116 = vmul.f32 %v45, %v90
  %v117 = vmul.f32 %v46, %v90
  %v118 = vmul.f32 %v47, %v90
  %v119 = vmul.f32 %v48, %v90
  %v120 = vmul.f32 %v49, %v90
  %v121 = vmul.f32 %v50, %v90
  %v122 = vmul.f32 %v51, %v90
  %v123 = vmul.f32 %v52, %v90
  %v124 = vmul.f32 %v53, %v90
  %v125 = vmul.f32 %v54, %v90
  %v126 = vmul.f32 %v55, %v90
  %v127 = vmul.f32 %v56, %v90
  %v128 = vmul.f32 %v57, %v90
  %v129 = vmul.f32 %v58, %v90
  %v130 = vmul.f32 %v59, %v90
  %v131 = vmul.f32 %v60, %v90
  %v132 = vmul.f32 %v61, %v90
  %v133 = vmul.f32 %v62, %v90
  %v134 = vmul.f32 %v63, %v90
  %v135 = vmul.f32 %v64, %v90
  %v136 = vmul.f32 %v65, %v90
  %v137 = vmul.f32 %v66, %v90
  %v138 = vmul.f32 %v67, %v90
  %v139 = vmul.f32 %v68, %v90
  %v140 = vmul.f32 %v69, %v90
  %v141 = vmul.f32 %v70, %v90
  %v142 = vmul.f32 %v71, %v90
  %v143 = vmul.f32 %v72, %v90
  %v144 = vmul.f32 %v73, %v90
  %v145 = vmul.f32 %v74, %v90
  %v146 = vmul.f32 %v75, %v90
  %v147 = vmul.f32 %v76, %v90
  %v148 = vmul.f32 %v77, %v90
  %v149 = vmul.f32 %v78, %v90
  %v150 = vmul.f32 %v79, %v90
  %v151 = vmul.f32 %v80, %v90
  %v152 = vmul.f32 %v81, %v90
  %v153 = vmul.f32 %v82, %v90
  %v154 = vmul.f32 %v83, %v90
  %v155 = vmul.f32 %v84, %v90
  %v156 = vld [vmem:[%s2] sm:$0x1]
  %v158 = vlaneseq
  %v159 = vshrl.u32 %v158, 7
  %v160 = vsub.s32 0, %v159
  %v161 = vrot.slane %v156, %v160
  %v163 = vadd.f32 %v92, %v161
  %v164 = vadd.f32 %v93, %v161
  %v165 = vadd.f32 %v94, %v161
  %v166 = vadd.f32 %v95, %v161
  %v167 = vadd.f32 %v96, %v161
  %v168 = vadd.f32 %v97, %v161
  %v169 = vadd.f32 %v98, %v161
  %v170 = vadd.f32 %v99, %v161
  %v171 = vadd.f32 %v100, %v161
  %v172 = vadd.f32 %v101, %v161
  %v173 = vadd.f32 %v102, %v161
  %v174 = vadd.f32 %v103, %v161
  %v175 = vadd.f32 %v104, %v161
  %v176 = vadd.f32 %v105, %v161
  %v177 = vadd.f32 %v106, %v161
  %v178 = vadd.f32 %v107, %v161
  %v179 = vadd.f32 %v108, %v161
  %v180 = vadd.f32 %v109, %v161
  %v181 = vadd.f32 %v110, %v161
  %v182 = vadd.f32 %v111, %v161
  %v183 = vadd.f32 %v112, %v161
  %v184 = vadd.f32 %v113, %v161
  %v185 = vadd.f32 %v114, %v161
  %v186 = vadd.f32 %v115, %v161
  %v187 = vadd.f32 %v116, %v161
  %v188 = vadd.f32 %v117, %v161
  %v189 = vadd.f32 %v118, %v161
  %v190 = vadd.f32 %v119, %v161
  %v191 = vadd.f32 %v120, %v161
  %v192 = vadd.f32 %v121, %v161
  %v193 = vadd.f32 %v122, %v161
  %v194 = vadd.f32 %v123, %v161
  %v195 = vadd.f32 %v124, %v161
  %v196 = vadd.f32 %v125, %v161
  %v197 = vadd.f32 %v126, %v161
  %v198 = vadd.f32 %v127, %v161
  %v199 = vadd.f32 %v128, %v161
  %v200 = vadd.f32 %v129, %v161
  %v201 = vadd.f32 %v130, %v161
  %v202 = vadd.f32 %v131, %v161
  %v203 = vadd.f32 %v132, %v161
  %v204 = vadd.f32 %v133, %v161
  %v205 = vadd.f32 %v134, %v161
  %v206 = vadd.f32 %v135, %v161
  %v207 = vadd.f32 %v136, %v161
  %v208 = vadd.f32 %v137, %v161
  %v209 = vadd.f32 %v138, %v161
  %v210 = vadd.f32 %v139, %v161
  %v211 = vadd.f32 %v140, %v161
  %v212 = vadd.f32 %v141, %v161
  %v213 = vadd.f32 %v142, %v161
  %v214 = vadd.f32 %v143, %v161
  %v215 = vadd.f32 %v144, %v161
  %v216 = vadd.f32 %v145, %v161
  %v217 = vadd.f32 %v146, %v161
  %v218 = vadd.f32 %v147, %v161
  %v219 = vadd.f32 %v148, %v161
  %v220 = vadd.f32 %v149, %v161
  %v221 = vadd.f32 %v150, %v161
  %v222 = vadd.f32 %v151, %v161
  %v223 = vadd.f32 %v152, %v161
  %v224 = vadd.f32 %v153, %v161
  %v225 = vadd.f32 %v154, %v161
  %v226 = vadd.f32 %v155, %v161
  %v227 = vmax.f32 %v163, 0.0
  %v228 = vmax.f32 %v164, 0.0
  %v229 = vmax.f32 %v165, 0.0
  %v230 = vmax.f32 %v166, 0.0
  %v231 = vmax.f32 %v167, 0.0
  %v232 = vmax.f32 %v168, 0.0
  %v233 = vmax.f32 %v169, 0.0
  %v234 = vmax.f32 %v170, 0.0
  %v235 = vmax.f32 %v171, 0.0
  %v236 = vmax.f32 %v172, 0.0
  %v237 = vmax.f32 %v173, 0.0
  %v238 = vmax.f32 %v174, 0.0
  %v239 = vmax.f32 %v175, 0.0
  %v240 = vmax.f32 %v176, 0.0
  %v241 = vmax.f32 %v177, 0.0
  %v242 = vmax.f32 %v178, 0.0
  %v243 = vmax.f32 %v179, 0.0
  %v244 = vmax.f32 %v180, 0.0
  %v245 = vmax.f32 %v181, 0.0
  %v246 = vmax.f32 %v182, 0.0
  %v247 = vmax.f32 %v183, 0.0
  %v248 = vmax.f32 %v184, 0.0
  %v249 = vmax.f32 %v185, 0.0
  %v250 = vmax.f32 %v186, 0.0
  %v251 = vmax.f32 %v187, 0.0
  %v252 = vmax.f32 %v188, 0.0
  %v253 = vmax.f32 %v189, 0.0
  %v254 = vmax.f32 %v190, 0.0
  %v255 = vmax.f32 %v191, 0.0
  %v256 = vmax.f32 %v192, 0.0
  %v257 = vmax.f32 %v193, 0.0
  %v258 = vmax.f32 %v194, 0.0
  %v259 = vmax.f32 %v195, 0.0
  %v260 = vmax.f32 %v196, 0.0
  %v261 = vmax.f32 %v197, 0.0
  %v262 = vmax.f32 %v198, 0.0
  %v263 = vmax.f32 %v199, 0.0
  %v264 = vmax.f32 %v200, 0.0
  %v265 = vmax.f32 %v201, 0.0
  %v266 = vmax.f32 %v202, 0.0
  %v267 = vmax.f32 %v203, 0.0
  %v268 = vmax.f32 %v204, 0.0
  %v269 = vmax.f32 %v205, 0.0
  %v270 = vmax.f32 %v206, 0.0
  %v271 = vmax.f32 %v207, 0.0
  %v272 = vmax.f32 %v208, 0.0
  %v273 = vmax.f32 %v209, 0.0
  %v274 = vmax.f32 %v210, 0.0
  %v275 = vmax.f32 %v211, 0.0
  %v276 = vmax.f32 %v212, 0.0
  %v277 = vmax.f32 %v213, 0.0
  %v278 = vmax.f32 %v214, 0.0
  %v279 = vmax.f32 %v215, 0.0
  %v280 = vmax.f32 %v216, 0.0
  %v281 = vmax.f32 %v217, 0.0
  %v282 = vmax.f32 %v218, 0.0
  %v283 = vmax.f32 %v219, 0.0
  %v284 = vmax.f32 %v220, 0.0
  %v285 = vmax.f32 %v221, 0.0
  %v286 = vmax.f32 %v222, 0.0
  %v287 = vmax.f32 %v223, 0.0
  %v288 = vmax.f32 %v224, 0.0
  %v289 = vmax.f32 %v225, 0.0
  %v290 = vmax.f32 %v226, 0.0
  %v291 = vpack.c.bf16 %v228, %v227
  %v292 = vpack.c.bf16 %v230, %v229
  %v293 = vpack.c.bf16 %v232, %v231
  %v294 = vpack.c.bf16 %v234, %v233
  %v295 = vpack.c.bf16 %v236, %v235
  %v296 = vpack.c.bf16 %v238, %v237
  %v297 = vpack.c.bf16 %v240, %v239
  %v298 = vpack.c.bf16 %v242, %v241
  %v299 = vpack.c.bf16 %v244, %v243
  %v300 = vpack.c.bf16 %v246, %v245
  %v301 = vpack.c.bf16 %v248, %v247
  %v302 = vpack.c.bf16 %v250, %v249
  %v303 = vpack.c.bf16 %v252, %v251
  %v304 = vpack.c.bf16 %v254, %v253
  %v305 = vpack.c.bf16 %v256, %v255
  %v306 = vpack.c.bf16 %v258, %v257
  %v307 = vpack.c.bf16 %v260, %v259
  %v308 = vpack.c.bf16 %v262, %v261
  %v309 = vpack.c.bf16 %v264, %v263
  %v310 = vpack.c.bf16 %v266, %v265
  %v311 = vpack.c.bf16 %v268, %v267
  %v312 = vpack.c.bf16 %v270, %v269
  %v313 = vpack.c.bf16 %v272, %v271
  %v314 = vpack.c.bf16 %v274, %v273
  %v315 = vpack.c.bf16 %v276, %v275
  %v316 = vpack.c.bf16 %v278, %v277
  %v317 = vpack.c.bf16 %v280, %v279
  %v318 = vpack.c.bf16 %v282, %v281
  %v319 = vpack.c.bf16 %v284, %v283
  %v320 = vpack.c.bf16 %v286, %v285
  %v321 = vpack.c.bf16 %v288, %v287
  %v322 = vpack.c.bf16 %v290, %v289
  %v323 = vld [vmem:[%s3] sm:$0x3]
  %v324 = vld [vmem:[%s4] sm:$0xff]
  %v325 = vld [vmem:[%s4 + $0x8] sm:$0xff]
  %v326 = vld [vmem:[%s4 + $0x10] sm:$0xff]
  %v327 = vld [vmem:[%s4 + $0x18] sm:$0xff]
  %v328 = vld [vmem:[%s4 + $0x20] sm:$0xff]
  %v329 = vld [vmem:[%s4 + $0x28] sm:$0xff]
  %v330 = vld [vmem:[%s4 + $0x30] sm:$0xff]
  %v331 = vld [vmem:[%s4 + $0x38] sm:$0xff]
  %v332 = vld [vmem:[%s4 + $0x40] sm:$0xff]
  %v333 = vld [vmem:[%s4 + $0x48] sm:$0xff]
  %v334 = vld [vmem:[%s4 + $0x50] sm:$0xff]
  %v335 = vld [vmem:[%s4 + $0x58] sm:$0xff]
  %v336 = vld [vmem:[%s4 + $0x60] sm:$0xff]
  %v337 = vld [vmem:[%s4 + $0x68] sm:$0xff]
  %v338 = vld [vmem:[%s4 + $0x70] sm:$0xff]
  %v339 = vld [vmem:[%s4 + $0x78] sm:$0xff]
  %v340 = vld [vmem:[%s4 + $0x80] sm:$0xff]
  %v341 = vld [vmem:[%s4 + $0x88] sm:$0xff]
  %v342 = vld [vmem:[%s4 + $0x90] sm:$0xff]
  %v343 = vld [vmem:[%s4 + $0x98] sm:$0xff]
  %v344 = vld [vmem:[%s4 + $0xa0] sm:$0xff]
  %v345 = vld [vmem:[%s4 + $0xa8] sm:$0xff]
  %v346 = vld [vmem:[%s4 + $0xb0] sm:$0xff]
  %v347 = vld [vmem:[%s4 + $0xb8] sm:$0xff]
  %v348 = vld [vmem:[%s4 + $0xc0] sm:$0xff]
  %v349 = vld [vmem:[%s4 + $0xc8] sm:$0xff]
  %v350 = vld [vmem:[%s4 + $0xd0] sm:$0xff]
  %v351 = vld [vmem:[%s4 + $0xd8] sm:$0xff]
  %v352 = vld [vmem:[%s4 + $0xe0] sm:$0xff]
  %v353 = vld [vmem:[%s4 + $0xe8] sm:$0xff]
  %v354 = vld [vmem:[%s4 + $0xf0] sm:$0xff]
  %v355 = vld [vmem:[%s4 + $0xf8] sm:$0xff]
  %v356 = vld [vmem:[%s4 + $0x100] sm:$0xff]
  %v357 = vld [vmem:[%s4 + $0x108] sm:$0xff]
  %v358 = vld [vmem:[%s4 + $0x110] sm:$0xff]
  %v359 = vld [vmem:[%s4 + $0x118] sm:$0xff]
  %v360 = vld [vmem:[%s4 + $0x120] sm:$0xff]
  %v361 = vld [vmem:[%s4 + $0x128] sm:$0xff]
  %v362 = vld [vmem:[%s4 + $0x130] sm:$0xff]
  %v363 = vld [vmem:[%s4 + $0x138] sm:$0xff]
  %v364 = vld [vmem:[%s4 + $0x140] sm:$0xff]
  %v365 = vld [vmem:[%s4 + $0x148] sm:$0xff]
  %v366 = vld [vmem:[%s4 + $0x150] sm:$0xff]
  %v367 = vld [vmem:[%s4 + $0x158] sm:$0xff]
  %v368 = vld [vmem:[%s4 + $0x160] sm:$0xff]
  %v369 = vld [vmem:[%s4 + $0x168] sm:$0xff]
  %v370 = vld [vmem:[%s4 + $0x170] sm:$0xff]
  %v371 = vld [vmem:[%s4 + $0x178] sm:$0xff]
  %v372 = vld [vmem:[%s4 + $0x180] sm:$0xff]
  %v373 = vld [vmem:[%s4 + $0x188] sm:$0xff]
  %v374 = vld [vmem:[%s4 + $0x190] sm:$0xff]
  %v375 = vld [vmem:[%s4 + $0x198] sm:$0xff]
  %v376 = vld [vmem:[%s4 + $0x1a0] sm:$0xff]
  %v377 = vld [vmem:[%s4 + $0x1a8] sm:$0xff]
  %v378 = vld [vmem:[%s4 + $0x1b0] sm:$0xff]
  %v379 = vld [vmem:[%s4 + $0x1b8] sm:$0xff]
  %v380 = vld [vmem:[%s4 + $0x1c0] sm:$0xff]
  %v381 = vld [vmem:[%s4 + $0x1c8] sm:$0xff]
  %v382 = vld [vmem:[%s4 + $0x1d0] sm:$0xff]
  %v383 = vld [vmem:[%s4 + $0x1d8] sm:$0xff]
  %v384 = vld [vmem:[%s4 + $0x1e0] sm:$0xff]
  %v385 = vld [vmem:[%s4 + $0x1e8] sm:$0xff]
  %v386 = vld [vmem:[%s4 + $0x1f0] sm:$0xff]
  %v387 = vld [vmem:[%s4 + $0x1f8] sm:$0xff]
  %vm388 = vcmask 31744
  %v390 = vsel %vm388, %v291, 0
  %v393 = vsel %vm388, %v292, 0
  %v396 = vsel %vm388, %v293, 0
  %v399 = vsel %vm388, %v294, 0
  %v402 = vsel %vm388, %v295, 0
  %v405 = vsel %vm388, %v296, 0
  %v408 = vsel %vm388, %v297, 0
  %v411 = vsel %vm388, %v298, 0
  %v414 = vsel %vm388, %v299, 0
  %v417 = vsel %vm388, %v300, 0
  %v420 = vsel %vm388, %v301, 0
  %v423 = vsel %vm388, %v302, 0
  %v426 = vsel %vm388, %v303, 0
  %v429 = vsel %vm388, %v304, 0
  %v432 = vsel %vm388, %v305, 0
  %v435 = vsel %vm388, %v306, 0
  %v438 = vsel %vm388, %v307, 0
  %v441 = vsel %vm388, %v308, 0
  %v444 = vsel %vm388, %v309, 0
  %v447 = vsel %vm388, %v310, 0
  %v450 = vsel %vm388, %v311, 0
  %v453 = vsel %vm388, %v312, 0
  %v456 = vsel %vm388, %v313, 0
  %v459 = vsel %vm388, %v314, 0
  %v462 = vsel %vm388, %v315, 0
  %v465 = vsel %vm388, %v316, 0
  %v468 = vsel %vm388, %v317, 0
  %v471 = vsel %vm388, %v318, 0
  %v474 = vsel %vm388, %v319, 0
  %v477 = vsel %vm388, %v320, 0
  %v480 = vsel %vm388, %v321, 0
  %v483 = vsel %vm388, %v322, 0
  %vm485 = vcmask 1041408
  %v487 = vsel %vm485, %v323, 0
  %489 = vmatprep.subr.bf16.mxu0 0
  %490 = vmatpush1.bf16.msra.mxu0 %v487
  %491 = vmatprep.subr.bf16.mxu0 0
  %492 = vmatpush1.bf16.msra.mxu0 0
  %493 = vmatprep.subr.bf16.mxu0 0
  %494 = vmatpush1.bf16.msra.mxu0 0
  %495 = vmatprep.subr.bf16.mxu0 0
  %496 = vmatpush1.bf16.msra.mxu0 0
  %497 = vmatprep.subr.bf16.mxu0 0
  %498 = vmatpush1.bf16.msra.mxu0 0
  %499 = vmatprep.subr.bf16.mxu0 0
  %500 = vmatpush1.bf16.msra.mxu0 0
  %501 = vmatprep.subr.bf16.mxu0 0
  %502 = vmatpush1.bf16.msra.mxu0 0
  %503 = vmatprep.subr.bf16.mxu0 0
  %504 = vmatpush1.bf16.msra.mxu0 0
  %505 = vmatprep.subr.bf16.mxu0 0
  %506 = vmatpush1.bf16.msra.mxu0 0
  %507 = vmatprep.subr.bf16.mxu0 0
  %508 = vmatpush1.bf16.msra.mxu0 0
  %509 = vmatprep.subr.bf16.mxu0 0
  %510 = vmatpush1.bf16.msra.mxu0 0
  %511 = vmatprep.subr.bf16.mxu0 0
  %512 = vmatpush1.bf16.msra.mxu0 0
  %513 = vmatprep.subr.bf16.mxu0 0
  %514 = vmatpush1.bf16.msra.mxu0 0
  %515 = vmatprep.subr.bf16.mxu0 0
  %516 = vmatpush1.bf16.msra.mxu0 0
  %517 = vmatprep.subr.bf16.mxu0 0
  %518 = vmatpush1.bf16.msra.mxu0 0
  %519 = vmatprep.subr.bf16.mxu0 0
  %520 = vmatpush1.bf16.msra.mxu0 0
  %521 = vmatprep.mubr.bf16.mxu0 0
  %522 = vmatmul.mubr.bf16.gmra.mrb[0].mxu0 %v390
  %v523 = vpop.f32.mrb[0].mxu0
  %v524 = vadd.f32 %v324, %v523
  %v525 = vpop.f32.mrb[0].mxu0
  %v526 = vpop.f32.mrb[0].mxu0
  %v527 = vadd.f32 %v325, %v526
  %v528 = vpop.f32.mrb[0].mxu0
  %529 = vmatprep.mubr.bf16.mxu0 0
  %530 = vmatmul.mubr.bf16.gmra.mrb[0].mxu0 %v393
  %v531 = vpop.f32.mrb[0].mxu0
  %v532 = vadd.f32 %v326, %v531
  %v533 = vpop.f32.mrb[0].mxu0
  %v534 = vpop.f32.mrb[0].mxu0
  %v535 = vadd.f32 %v327, %v534
  %v536 = vpop.f32.mrb[0].mxu0
  %537 = vmatprep.mubr.bf16.mxu0 0
  %538 = vmatmul.mubr.bf16.gmra.mrb[0].mxu0 %v396
  %v539 = vpop.f32.mrb[0].mxu0
  %v540 = vadd.f32 %v328, %v539
  %v541 = vpop.f32.mrb[0].mxu0
  %v542 = vpop.f32.mrb[0].mxu0
  %v543 = vadd.f32 %v329, %v542
  %v544 = vpop.f32.mrb[0].mxu0
  %545 = vmatprep.mubr.bf16.mxu0 0
  %546 = vmatmul.mubr.bf16.gmra.mrb[0].mxu0 %v399
  %v547 = vpop.f32.mrb[0].mxu0
  %v548 = vadd.f32 %v330, %v547
  %v549 = vpop.f32.mrb[0].mxu0
  %v550 = vpop.f32.mrb[0].mxu0
  %v551 = vadd.f32 %v331, %v550
  %v552 = vpop.f32.mrb[0].mxu0
  %553 = vmatprep.mubr.bf16.mxu0 0
  %554 = vmatmul.mubr.bf16.gmra.mrb[0].mxu0 %v402
  %v555 = vpop.f32.mrb[0].mxu0
  %v556 = vadd.f32 %v332, %v555
  %v557 = vpop.f32.mrb[0].mxu0
  %v558 = vpop.f32.mrb[0].mxu0
  %v559 = vadd.f32 %v333, %v558
  %v560 = vpop.f32.mrb[0].mxu0
  %561 = vmatprep.mubr.bf16.mxu0 0
  %562 = vmatmul.mubr.bf16.gmra.mrb[0].mxu0 %v405
  %v563 = vpop.f32.mrb[0].mxu0
  %v564 = vadd.f32 %v334, %v563
  %v565 = vpop.f32.mrb[0].mxu0
  %v566 = vpop.f32.mrb[0].mxu0
  %v567 = vadd.f32 %v335, %v566
  %v568 = vpop.f32.mrb[0].mxu0
  %569 = vmatprep.mubr.bf16.mxu0 0
  %570 = vmatmul.mubr.bf16.gmra.mrb[0].mxu0 %v408
  %v571 = vpop.f32.mrb[0].mxu0
  %v572 = vadd.f32 %v336, %v571
  %v573 = vpop.f32.mrb[0].mxu0
  %v574 = vpop.f32.mrb[0].mxu0
  %v575 = vadd.f32 %v337, %v574
  %v576 = vpop.f32.mrb[0].mxu0
  %577 = vmatprep.mubr.bf16.mxu0 0
  %578 = vmatmul.mubr.bf16.gmra.mrb[0].mxu0 %v411
  %v579 = vpop.f32.mrb[0].mxu0
  %v580 = vadd.f32 %v338, %v579
  %v581 = vpop.f32.mrb[0].mxu0
  %v582 = vpop.f32.mrb[0].mxu0
  %v583 = vadd.f32 %v339, %v582
  %v584 = vpop.f32.mrb[0].mxu0
  %585 = vmatprep.mubr.bf16.mxu0 0
  %586 = vmatmul.mubr.bf16.gmra.mrb[0].mxu0 %v414
  %v587 = vpop.f32.mrb[0].mxu0
  %v588 = vadd.f32 %v340, %v587
  %v589 = vpop.f32.mrb[0].mxu0
  %v590 = vpop.f32.mrb[0].mxu0
  %v591 = vadd.f32 %v341, %v590
  %v592 = vpop.f32.mrb[0].mxu0
  %593 = vmatprep.mubr.bf16.mxu0 0
  %594 = vmatmul.mubr.bf16.gmra.mrb[0].mxu0 %v417
  %v595 = vpop.f32.mrb[0].mxu0
  %v596 = vadd.f32 %v342, %v595
  %v597 = vpop.f32.mrb[0].mxu0
  %v598 = vpop.f32.mrb[0].mxu0
  %v599 = vadd.f32 %v343, %v598
  %v600 = vpop.f32.mrb[0].mxu0
  %601 = vmatprep.mubr.bf16.mxu0 0
  %602 = vmatmul.mubr.bf16.gmra.mrb[0].mxu0 %v420
  %v603 = vpop.f32.mrb[0].mxu0
  %v604 = vadd.f32 %v344, %v603
  %v605 = vpop.f32.mrb[0].mxu0
  %v606 = vpop.f32.mrb[0].mxu0
  %v607 = vadd.f32 %v345, %v606
  %v608 = vpop.f32.mrb[0].mxu0
  %609 = vmatprep.mubr.bf16.mxu0 0
  %610 = vmatmul.mubr.bf16.gmra.mrb[0].mxu0 %v423
  %v611 = vpop.f32.mrb[0].mxu0
  %v612 = vadd.f32 %v346, %v611
  %v613 = vpop.f32.mrb[0].mxu0
  %v614 = vpop.f32.mrb[0].mxu0
  %v615 = vadd.f32 %v347, %v614
  %v616 = vpop.f32.mrb[0].mxu0
  %617 = vmatprep.mubr.bf16.mxu0 0
  %618 = vmatmul.mubr.bf16.gmra.mrb[0].mxu0 %v426
  %v619 = vpop.f32.mrb[0].mxu0
  %v620 = vadd.f32 %v348, %v619
  %v621 = vpop.f32.mrb[0].mxu0
  %v622 = vpop.f32.mrb[0].mxu0
  %v623 = vadd.f32 %v349, %v622
  %v624 = vpop.f32.mrb[0].mxu0
  %625 = vmatprep.mubr.bf16.mxu0 0
  %626 = vmatmul.mubr.bf16.gmra.mrb[0].mxu0 %v429
  %v627 = vpop.f32.mrb[0].mxu0
  %v628 = vadd.f32 %v350, %v627
  %v629 = vpop.f32.mrb[0].mxu0
  %v630 = vpop.f32.mrb[0].mxu0
  %v631 = vadd.f32 %v351, %v630
  %v632 = vpop.f32.mrb[0].mxu0
  %633 = vmatprep.mubr.bf16.mxu0 0
  %634 = vmatmul.mubr.bf16.gmra.mrb[0].mxu0 %v432
  %v635 = vpop.f32.mrb[0].mxu0
  %v636 = vadd.f32 %v352, %v635
  %v637 = vpop.f32.mrb[0].mxu0
  %v638 = vpop.f32.mrb[0].mxu0
  %v639 = vadd.f32 %v353, %v638
  %v640 = vpop.f32.mrb[0].mxu0
  %641 = vmatprep.mubr.bf16.mxu0 0
  %642 = vmatmul.mubr.bf16.gmra.mrb[0].mxu0 %v435
  %v643 = vpop.f32.mrb[0].mxu0
  %v644 = vadd.f32 %v354, %v643
  %v645 = vpop.f32.mrb[0].mxu0
  %v646 = vpop.f32.mrb[0].mxu0
  %v647 = vadd.f32 %v355, %v646
  %v648 = vpop.f32.mrb[0].mxu0
  %649 = vmatprep.mubr.bf16.mxu0 0
  %650 = vmatmul.mubr.bf16.gmra.mrb[0].mxu0 %v438
  %v651 = vpop.f32.mrb[0].mxu0
  %v652 = vadd.f32 %v356, %v651
  %v653 = vpop.f32.mrb[0].mxu0
  %v654 = vpop.f32.mrb[0].mxu0
  %v655 = vadd.f32 %v357, %v654
  %v656 = vpop.f32.mrb[0].mxu0
  %657 = vmatprep.mubr.bf16.mxu0 0
  %658 = vmatmul.mubr.bf16.gmra.mrb[0].mxu0 %v441
  %v659 = vpop.f32.mrb[0].mxu0
  %v660 = vadd.f32 %v358, %v659
  %v661 = vpop.f32.mrb[0].mxu0
  %v662 = vpop.f32.mrb[0].mxu0
  %v663 = vadd.f32 %v359, %v662
  %v664 = vpop.f32.mrb[0].mxu0
  %665 = vmatprep.mubr.bf16.mxu0 0
  %666 = vmatmul.mubr.bf16.gmra.mrb[0].mxu0 %v444
  %v667 = vpop.f32.mrb[0].mxu0
  %v668 = vadd.f32 %v360, %v667
  %v669 = vpop.f32.mrb[0].mxu0
  %v670 = vpop.f32.mrb[0].mxu0
  %v671 = vadd.f32 %v361, %v670
  %v672 = vpop.f32.mrb[0].mxu0
  %673 = vmatprep.mubr.bf16.mxu0 0
  %674 = vmatmul.mubr.bf16.gmra.mrb[0].mxu0 %v447
  %v675 = vpop.f32.mrb[0].mxu0
  %v676 = vadd.f32 %v362, %v675
  %v677 = vpop.f32.mrb[0].mxu0
  %v678 = vpop.f32.mrb[0].mxu0
  %v679 = vadd.f32 %v363, %v678
  %v680 = vpop.f32.mrb[0].mxu0
  %681 = vmatprep.mubr.bf16.mxu0 0
  %682 = vmatmul.mubr.bf16.gmra.mrb[0].mxu0 %v450
  %v683 = vpop.f32.mrb[0].mxu0
  %v684 = vadd.f32 %v364, %v683
  %v685 = vpop.f32.mrb[0].mxu0
  %v686 = vpop.f32.mrb[0].mxu0
  %v687 = vadd.f32 %v365, %v686
  %v688 = vpop.f32.mrb[0].mxu0
  %689 = vmatprep.mubr.bf16.mxu0 0
  %690 = vmatmul.mubr.bf16.gmra.mrb[0].mxu0 %v453
  %v691 = vpop.f32.mrb[0].mxu0
  %v692 = vadd.f32 %v366, %v691
  %v693 = vpop.f32.mrb[0].mxu0
  %v694 = vpop.f32.mrb[0].mxu0
  %v695 = vadd.f32 %v367, %v694
  %v696 = vpop.f32.mrb[0].mxu0
  %697 = vmatprep.mubr.bf16.mxu0 0
  %698 = vmatmul.mubr.bf16.gmra.mrb[0].mxu0 %v456
  %v699 = vpop.f32.mrb[0].mxu0
  %v700 = vadd.f32 %v368, %v699
  %v701 = vpop.f32.mrb[0].mxu0
  %v702 = vpop.f32.mrb[0].mxu0
  %v703 = vadd.f32 %v369, %v702
  %v704 = vpop.f32.mrb[0].mxu0
  %705 = vmatprep.mubr.bf16.mxu0 0
  %706 = vmatmul.mubr.bf16.gmra.mrb[0].mxu0 %v459
  %v707 = vpop.f32.mrb[0].mxu0
  %v708 = vadd.f32 %v370, %v707
  %v709 = vpop.f32.mrb[0].mxu0
  %v710 = vpop.f32.mrb[0].mxu0
  %v711 = vadd.f32 %v371, %v710
  %v712 = vpop.f32.mrb[0].mxu0
  %713 = vmatprep.mubr.bf16.mxu0 0
  %714 = vmatmul.mubr.bf16.gmra.mrb[0].mxu0 %v462
  %v715 = vpop.f32.mrb[0].mxu0
  %v716 = vadd.f32 %v372, %v715
  %v717 = vpop.f32.mrb[0].mxu0
  %v718 = vpop.f32.mrb[0].mxu0
  %v719 = vadd.f32 %v373, %v718
  %v720 = vpop.f32.mrb[0].mxu0
  %721 = vmatprep.mubr.bf16.mxu0 0
  %722 = vmatmul.mubr.bf16.gmra.mrb[0].mxu0 %v465
  %v723 = vpop.f32.mrb[0].mxu0
  %v724 = vadd.f32 %v374, %v723
  %v725 = vpop.f32.mrb[0].mxu0
  %v726 = vpop.f32.mrb[0].mxu0
  %v727 = vadd.f32 %v375, %v726
  %v728 = vpop.f32.mrb[0].mxu0
  %729 = vmatprep.mubr.bf16.mxu0 0
  %730 = vmatmul.mubr.bf16.gmra.mrb[0].mxu0 %v468
  %v731 = vpop.f32.mrb[0].mxu0
  %v732 = vadd.f32 %v376, %v731
  %v733 = vpop.f32.mrb[0].mxu0
  %v734 = vpop.f32.mrb[0].mxu0
  %v735 = vadd.f32 %v377, %v734
  %v736 = vpop.f32.mrb[0].mxu0
  %737 = vmatprep.mubr.bf16.mxu0 0
  %738 = vmatmul.mubr.bf16.gmra.mrb[0].mxu0 %v471
  %v739 = vpop.f32.mrb[0].mxu0
  %v740 = vadd.f32 %v378, %v739
  %v741 = vpop.f32.mrb[0].mxu0
  %v742 = vpop.f32.mrb[0].mxu0
  %v743 = vadd.f32 %v379, %v742
  %v744 = vpop.f32.mrb[0].mxu0
  %745 = vmatprep.mubr.bf16.mxu0 0
  %746 = vmatmul.mubr.bf16.gmra.mrb[0].mxu0 %v474
  %v747 = vpop.f32.mrb[0].mxu0
  %v748 = vadd.f32 %v380, %v747
  %v749 = vpop.f32.mrb[0].mxu0
  %v750 = vpop.f32.mrb[0].mxu0
  %v751 = vadd.f32 %v381, %v750
  %v752 = vpop.f32.mrb[0].mxu0
  %753 = vmatprep.mubr.bf16.mxu0 0
  %754 = vmatmul.mubr.bf16.gmra.mrb[0].mxu0 %v477
  %v755 = vpop.f32.mrb[0].mxu0
  %v756 = vadd.f32 %v382, %v755
  %v757 = vpop.f32.mrb[0].mxu0
  %v758 = vpop.f32.mrb[0].mxu0
  %v759 = vadd.f32 %v383, %v758
  %v760 = vpop.f32.mrb[0].mxu0
  %761 = vmatprep.mubr.bf16.mxu0 0
  %762 = vmatmul.mubr.bf16.gmra.mrb[0].mxu0 %v480
  %v763 = vpop.f32.mrb[0].mxu0
  %v764 = vadd.f32 %v384, %v763
  %v765 = vpop.f32.mrb[0].mxu0
  %v766 = vpop.f32.mrb[0].mxu0
  %v767 = vadd.f32 %v385, %v766
  %v768 = vpop.f32.mrb[0].mxu0
  %769 = vmatprep.mubr.bf16.mxu0 0
  %770 = vmatmul.mubr.bf16.gmra.mrb[0].mxu0 %v483
  %v771 = vpop.f32.mrb[0].mxu0
  %v772 = vadd.f32 %v386, %v771
  %v773 = vpop.f32.mrb[0].mxu0
  %v774 = vpop.f32.mrb[0].mxu0
  %v775 = vadd.f32 %v387, %v774
  %v776 = vpop.f32.mrb[0].mxu0
  %777 = vdwg.mxu0
  %vm778 = vcmask 130048
  %779 = vst.msk [vmem:[%s5] sm:$0xff] %vm778, %v524
  %780 = vst.msk [vmem:[%s5 + $0x8] sm:$0xff] %vm778, %v527
  %781 = vst.msk [vmem:[%s5 + $0x10] sm:$0xff] %vm778, %v532
  %782 = vst.msk [vmem:[%s5 + $0x18] sm:$0xff] %vm778, %v535
  %783 = vst.msk [vmem:[%s5 + $0x20] sm:$0xff] %vm778, %v540
  %784 = vst.msk [vmem:[%s5 + $0x28] sm:$0xff] %vm778, %v543
  %785 = vst.msk [vmem:[%s5 + $0x30] sm:$0xff] %vm778, %v548
  %786 = vst.msk [vmem:[%s5 + $0x38] sm:$0xff] %vm778, %v551
  %787 = vst.msk [vmem:[%s5 + $0x40] sm:$0xff] %vm778, %v556
  %788 = vst.msk [vmem:[%s5 + $0x48] sm:$0xff] %vm778, %v559
  %789 = vst.msk [vmem:[%s5 + $0x50] sm:$0xff] %vm778, %v564
  %790 = vst.msk [vmem:[%s5 + $0x58] sm:$0xff] %vm778, %v567
  %791 = vst.msk [vmem:[%s5 + $0x60] sm:$0xff] %vm778, %v572
  %792 = vst.msk [vmem:[%s5 + $0x68] sm:$0xff] %vm778, %v575
  %793 = vst.msk [vmem:[%s5 + $0x70] sm:$0xff] %vm778, %v580
  %794 = vst.msk [vmem:[%s5 + $0x78] sm:$0xff] %vm778, %v583
  %795 = vst.msk [vmem:[%s5 + $0x80] sm:$0xff] %vm778, %v588
  %796 = vst.msk [vmem:[%s5 + $0x88] sm:$0xff] %vm778, %v591
  %797 = vst.msk [vmem:[%s5 + $0x90] sm:$0xff] %vm778, %v596
  %798 = vst.msk [vmem:[%s5 + $0x98] sm:$0xff] %vm778, %v599
  %799 = vst.msk [vmem:[%s5 + $0xa0] sm:$0xff] %vm778, %v604
  %800 = vst.msk [vmem:[%s5 + $0xa8] sm:$0xff] %vm778, %v607
  %801 = vst.msk [vmem:[%s5 + $0xb0] sm:$0xff] %vm778, %v612
  %802 = vst.msk [vmem:[%s5 + $0xb8] sm:$0xff] %vm778, %v615
  %803 = vst.msk [vmem:[%s5 + $0xc0] sm:$0xff] %vm778, %v620
  %804 = vst.msk [vmem:[%s5 + $0xc8] sm:$0xff] %vm778, %v623
  %805 = vst.msk [vmem:[%s5 + $0xd0] sm:$0xff] %vm778, %v628
  %806 = vst.msk [vmem:[%s5 + $0xd8] sm:$0xff] %vm778, %v631
  %807 = vst.msk [vmem:[%s5 + $0xe0] sm:$0xff] %vm778, %v636
  %808 = vst.msk [vmem:[%s5 + $0xe8] sm:$0xff] %vm778, %v639
  %809 = vst.msk [vmem:[%s5 + $0xf0] sm:$0xff] %vm778, %v644
  %810 = vst.msk [vmem:[%s5 + $0xf8] sm:$0xff] %vm778, %v647
  %811 = vst.msk [vmem:[%s5 + $0x100] sm:$0xff] %vm778, %v652
  %812 = vst.msk [vmem:[%s5 + $0x108] sm:$0xff] %vm778, %v655
  %813 = vst.msk [vmem:[%s5 + $0x110] sm:$0xff] %vm778, %v660
  %814 = vst.msk [vmem:[%s5 + $0x118] sm:$0xff] %vm778, %v663
  %815 = vst.msk [vmem:[%s5 + $0x120] sm:$0xff] %vm778, %v668
  %816 = vst.msk [vmem:[%s5 + $0x128] sm:$0xff] %vm778, %v671
  %817 = vst.msk [vmem:[%s5 + $0x130] sm:$0xff] %vm778, %v676
  %818 = vst.msk [vmem:[%s5 + $0x138] sm:$0xff] %vm778, %v679
  %819 = vst.msk [vmem:[%s5 + $0x140] sm:$0xff] %vm778, %v684
  %820 = vst.msk [vmem:[%s5 + $0x148] sm:$0xff] %vm778, %v687
  %821 = vst.msk [vmem:[%s5 + $0x150] sm:$0xff] %vm778, %v692
  %822 = vst.msk [vmem:[%s5 + $0x158] sm:$0xff] %vm778, %v695
  %823 = vst.msk [vmem:[%s5 + $0x160] sm:$0xff] %vm778, %v700
  %824 = vst.msk [vmem:[%s5 + $0x168] sm:$0xff] %vm778, %v703
  %825 = vst.msk [vmem:[%s5 + $0x170] sm:$0xff] %vm778, %v708
  %826 = vst.msk [vmem:[%s5 + $0x178] sm:$0xff] %vm778, %v711
  %827 = vst.msk [vmem:[%s5 + $0x180] sm:$0xff] %vm778, %v716
  %828 = vst.msk [vmem:[%s5 + $0x188] sm:$0xff] %vm778, %v719
  %829 = vst.msk [vmem:[%s5 + $0x190] sm:$0xff] %vm778, %v724
  %830 = vst.msk [vmem:[%s5 + $0x198] sm:$0xff] %vm778, %v727
  %831 = vst.msk [vmem:[%s5 + $0x1a0] sm:$0xff] %vm778, %v732
  %832 = vst.msk [vmem:[%s5 + $0x1a8] sm:$0xff] %vm778, %v735
  %833 = vst.msk [vmem:[%s5 + $0x1b0] sm:$0xff] %vm778, %v740
  %834 = vst.msk [vmem:[%s5 + $0x1b8] sm:$0xff] %vm778, %v743
  %835 = vst.msk [vmem:[%s5 + $0x1c0] sm:$0xff] %vm778, %v748
  %836 = vst.msk [vmem:[%s5 + $0x1c8] sm:$0xff] %vm778, %v751
  %837 = vst.msk [vmem:[%s5 + $0x1d0] sm:$0xff] %vm778, %v756
  %838 = vst.msk [vmem:[%s5 + $0x1d8] sm:$0xff] %vm778, %v759
  %839 = vst.msk [vmem:[%s5 + $0x1e0] sm:$0xff] %vm778, %v764
  %840 = vst.msk [vmem:[%s5 + $0x1e8] sm:$0xff] %vm778, %v767
  %841 = vst.msk [vmem:[%s5 + $0x1f0] sm:$0xff] %vm778, %v772
  %842 = vst.msk [vmem:[%s5 + $0x1f8] sm:$0xff] %vm778, %v775
  // Predicated region
  $region22: #{preact_bottleneck_forward.7} parent=0 // pred_check
    _
  $region23: #{preact_bottleneck_forward.7} parent=0 // pred_check_branch
    %844 = sbr.rel (0) target = $region25
  $region24: #{preact_bottleneck_forward.7} parent=0 // pred_region
    _
  $region25: #{preact_bottleneck_forward.7} parent=0 // pred_fallthru
    _
  // Predicated region
  $region26: #{preact_bottleneck_forward.7} parent=0 // pred_check
    _
  $region27: #{preact_bottleneck_forward.7} parent=0 // pred_check_branch
    %846 = sbr.rel (0) target = $region29
  $region28: #{preact_bottleneck_forward.7} parent=0 // pred_region
    _
  $region29: #{preact_bottleneck_forward.7} parent=0 // pred_fallthru
    _

// kernel: preact_bottleneck_forward.5
$region0: #{preact_bottleneck_forward.5}
  #allocation0 [shape = 'u32[]', space=smem, size = 0x4, offset = 0x4, fixed_abs, tag = 'smem constant byte address 0x4 - core index']
  #allocation1 [shape = 'u32[144,128]{1,0:T(1,128)}', space=vmem, size = 0x12000, scoped, tag = 'internal scratch']
  %s0 = inlined_call_operand.vmem [shape: f32[512,4], index: 0, kind: input, shape index: {}]
  %s1 = inlined_call_operand.vmem [shape: f32[1,4], index: 1, kind: input, shape index: {}]
  %s2 = inlined_call_operand.vmem [shape: f32[1,4], index: 2, kind: input, shape index: {}]
  %s3 = inlined_call_operand.vmem [shape: bf16[4,20], index: 3, kind: input, shape index: {}]
  %s4 = inlined_call_operand.vmem [shape: f32[512,4], index: 4, kind: output, shape index: {0}]
  %s5 = inlined_call_operand.vmem [shape: f32[512,16], index: 5, kind: output, shape index: {1}]
  %s6 = inlined_call_operand.vmem [shape: f32[1,1,4], index: 6, kind: output, shape index: {2}]
  %s7 = inlined_call_operand.vmem [shape: f32[1,1,4], index: 7, kind: output, shape index: {3}]
  %8 = xla_tuple %s4, %s5, %s6, %s7
  %s9 = sld [smem:[#allocation0]]
  $region50: #{preact_bottleneck_forward.5} parent=0
    _
  %s11 = ssub.s32 1, %s9
  %s12 = scalar_select 0, %s11, %s9
  // Predicated region
  $region2: #{preact_bottleneck_forward.5} parent=0 // pred_check
    _
  $region3: #{preact_bottleneck_forward.5} parent=0 // pred_check_branch
    %14 = sbr.rel (0) target = $region5
  $region4: #{preact_bottleneck_forward.5} parent=0 // pred_region
    _
  $region5: #{preact_bottleneck_forward.5} parent=0 // pred_fallthru
    _
  // Predicated region
  $region6: #{preact_bottleneck_forward.5} parent=0 // pred_check
    _
  $region7: #{preact_bottleneck_forward.5} parent=0 // pred_check_branch
    %16 = sbr.rel (0) target = $region9
  $region8: #{preact_bottleneck_forward.5} parent=0 // pred_region
    _
  $region9: #{preact_bottleneck_forward.5} parent=0 // pred_fallthru
    _
  // Predicated region
  $region10: #{preact_bottleneck_forward.5} parent=0 // pred_check
    _
  $region11: #{preact_bottleneck_forward.5} parent=0 // pred_check_branch
    %18 = sbr.rel (0) target = $region13
  $region12: #{preact_bottleneck_forward.5} parent=0 // pred_region
    _
  $region13: #{preact_bottleneck_forward.5} parent=0 // pred_fallthru
    _
  // Predicated region
  $region14: #{preact_bottleneck_forward.5} parent=0 // pred_check
    _
  $region15: #{preact_bottleneck_forward.5} parent=0 // pred_check_branch
    %20 = sbr.rel (0) target = $region17
  $region16: #{preact_bottleneck_forward.5} parent=0 // pred_region
    _
  $region17: #{preact_bottleneck_forward.5} parent=0 // pred_fallthru
    _
  %v22 = vld [vmem:[%s0] sm:$0xff]
  %v23 = vld [vmem:[%s0 + $0x8] sm:$0xff]
  %v24 = vld [vmem:[%s0 + $0x10] sm:$0xff]
  %v25 = vld [vmem:[%s0 + $0x18] sm:$0xff]
  %v26 = vld [vmem:[%s0 + $0x20] sm:$0xff]
  %v27 = vld [vmem:[%s0 + $0x28] sm:$0xff]
  %v28 = vld [vmem:[%s0 + $0x30] sm:$0xff]
  %v29 = vld [vmem:[%s0 + $0x38] sm:$0xff]
  %v30 = vld [vmem:[%s0 + $0x40] sm:$0xff]
  %v31 = vld [vmem:[%s0 + $0x48] sm:$0xff]
  %v32 = vld [vmem:[%s0 + $0x50] sm:$0xff]
  %v33 = vld [vmem:[%s0 + $0x58] sm:$0xff]
  %v34 = vld [vmem:[%s0 + $0x60] sm:$0xff]
  %v35 = vld [vmem:[%s0 + $0x68] sm:$0xff]
  %v36 = vld [vmem:[%s0 + $0x70] sm:$0xff]
  %v37 = vld [vmem:[%s0 + $0x78] sm:$0xff]
  %v38 = vld [vmem:[%s0 + $0x80] sm:$0xff]
  %v39 = vld [vmem:[%s0 + $0x88] sm:$0xff]
  %v40 = vld [vmem:[%s0 + $0x90] sm:$0xff]
  %v41 = vld [vmem:[%s0 + $0x98] sm:$0xff]
  %v42 = vld [vmem:[%s0 + $0xa0] sm:$0xff]
  %v43 = vld [vmem:[%s0 + $0xa8] sm:$0xff]
  %v44 = vld [vmem:[%s0 + $0xb0] sm:$0xff]
  %v45 = vld [vmem:[%s0 + $0xb8] sm:$0xff]
  %v46 = vld [vmem:[%s0 + $0xc0] sm:$0xff]
  %v47 = vld [vmem:[%s0 + $0xc8] sm:$0xff]
  %v48 = vld [vmem:[%s0 + $0xd0] sm:$0xff]
  %v49 = vld [vmem:[%s0 + $0xd8] sm:$0xff]
  %v50 = vld [vmem:[%s0 + $0xe0] sm:$0xff]
  %v51 = vld [vmem:[%s0 + $0xe8] sm:$0xff]
  %v52 = vld [vmem:[%s0 + $0xf0] sm:$0xff]
  %v53 = vld [vmem:[%s0 + $0xf8] sm:$0xff]
  %v54 = vld [vmem:[%s0 + $0x100] sm:$0xff]
  %v55 = vld [vmem:[%s0 + $0x108] sm:$0xff]
  %v56 = vld [vmem:[%s0 + $0x110] sm:$0xff]
  %v57 = vld [vmem:[%s0 + $0x118] sm:$0xff]
  %v58 = vld [vmem:[%s0 + $0x120] sm:$0xff]
  %v59 = vld [vmem:[%s0 + $0x128] sm:$0xff]
  %v60 = vld [vmem:[%s0 + $0x130] sm:$0xff]
  %v61 = vld [vmem:[%s0 + $0x138] sm:$0xff]
  %v62 = vld [vmem:[%s0 + $0x140] sm:$0xff]
  %v63 = vld [vmem:[%s0 + $0x148] sm:$0xff]
  %v64 = vld [vmem:[%s0 + $0x150] sm:$0xff]
  %v65 = vld [vmem:[%s0 + $0x158] sm:$0xff]
  %v66 = vld [vmem:[%s0 + $0x160] sm:$0xff]
  %v67 = vld [vmem:[%s0 + $0x168] sm:$0xff]
  %v68 = vld [vmem:[%s0 + $0x170] sm:$0xff]
  %v69 = vld [vmem:[%s0 + $0x178] sm:$0xff]
  %v70 = vld [vmem:[%s0 + $0x180] sm:$0xff]
  %v71 = vld [vmem:[%s0 + $0x188] sm:$0xff]
  %v72 = vld [vmem:[%s0 + $0x190] sm:$0xff]
  %v73 = vld [vmem:[%s0 + $0x198] sm:$0xff]
  %v74 = vld [vmem:[%s0 + $0x1a0] sm:$0xff]
  %v75 = vld [vmem:[%s0 + $0x1a8] sm:$0xff]
  %v76 = vld [vmem:[%s0 + $0x1b0] sm:$0xff]
  %v77 = vld [vmem:[%s0 + $0x1b8] sm:$0xff]
  %v78 = vld [vmem:[%s0 + $0x1c0] sm:$0xff]
  %v79 = vld [vmem:[%s0 + $0x1c8] sm:$0xff]
  %v80 = vld [vmem:[%s0 + $0x1d0] sm:$0xff]
  %v81 = vld [vmem:[%s0 + $0x1d8] sm:$0xff]
  %v82 = vld [vmem:[%s0 + $0x1e0] sm:$0xff]
  %v83 = vld [vmem:[%s0 + $0x1e8] sm:$0xff]
  %v84 = vld [vmem:[%s0 + $0x1f0] sm:$0xff]
  %v85 = vld [vmem:[%s0 + $0x1f8] sm:$0xff]
  %v86 = vld [vmem:[%s1] sm:$0x1]
  %v88 = vlaneseq
  %v89 = vshrl.u32 %v88, 7
  %v90 = vsub.s32 0, %v89
  %v91 = vrot.slane %v86, %v90
  %v93 = vmul.f32 %v22, %v91
  %v94 = vmul.f32 %v23, %v91
  %v95 = vmul.f32 %v24, %v91
  %v96 = vmul.f32 %v25, %v91
  %v97 = vmul.f32 %v26, %v91
  %v98 = vmul.f32 %v27, %v91
  %v99 = vmul.f32 %v28, %v91
  %v100 = vmul.f32 %v29, %v91
  %v101 = vmul.f32 %v30, %v91
  %v102 = vmul.f32 %v31, %v91
  %v103 = vmul.f32 %v32, %v91
  %v104 = vmul.f32 %v33, %v91
  %v105 = vmul.f32 %v34, %v91
  %v106 = vmul.f32 %v35, %v91
  %v107 = vmul.f32 %v36, %v91
  %v108 = vmul.f32 %v37, %v91
  %v109 = vmul.f32 %v38, %v91
  %v110 = vmul.f32 %v39, %v91
  %v111 = vmul.f32 %v40, %v91
  %v112 = vmul.f32 %v41, %v91
  %v113 = vmul.f32 %v42, %v91
  %v114 = vmul.f32 %v43, %v91
  %v115 = vmul.f32 %v44, %v91
  %v116 = vmul.f32 %v45, %v91
  %v117 = vmul.f32 %v46, %v91
  %v118 = vmul.f32 %v47, %v91
  %v119 = vmul.f32 %v48, %v91
  %v120 = vmul.f32 %v49, %v91
  %v121 = vmul.f32 %v50, %v91
  %v122 = vmul.f32 %v51, %v91
  %v123 = vmul.f32 %v52, %v91
  %v124 = vmul.f32 %v53, %v91
  %v125 = vmul.f32 %v54, %v91
  %v126 = vmul.f32 %v55, %v91
  %v127 = vmul.f32 %v56, %v91
  %v128 = vmul.f32 %v57, %v91
  %v129 = vmul.f32 %v58, %v91
  %v130 = vmul.f32 %v59, %v91
  %v131 = vmul.f32 %v60, %v91
  %v132 = vmul.f32 %v61, %v91
  %v133 = vmul.f32 %v62, %v91
  %v134 = vmul.f32 %v63, %v91
  %v135 = vmul.f32 %v64, %v91
  %v136 = vmul.f32 %v65, %v91
  %v137 = vmul.f32 %v66, %v91
  %v138 = vmul.f32 %v67, %v91
  %v139 = vmul.f32 %v68, %v91
  %v140 = vmul.f32 %v69, %v91
  %v141 = vmul.f32 %v70, %v91
  %v142 = vmul.f32 %v71, %v91
  %v143 = vmul.f32 %v72, %v91
  %v144 = vmul.f32 %v73, %v91
  %v145 = vmul.f32 %v74, %v91
  %v146 = vmul.f32 %v75, %v91
  %v147 = vmul.f32 %v76, %v91
  %v148 = vmul.f32 %v77, %v91
  %v149 = vmul.f32 %v78, %v91
  %v150 = vmul.f32 %v79, %v91
  %v151 = vmul.f32 %v80, %v91
  %v152 = vmul.f32 %v81, %v91
  %v153 = vmul.f32 %v82, %v91
  %v154 = vmul.f32 %v83, %v91
  %v155 = vmul.f32 %v84, %v91
  %v156 = vmul.f32 %v85, %v91
  %v157 = vld [vmem:[%s2] sm:$0x1]
  %v159 = vlaneseq
  %v160 = vshrl.u32 %v159, 7
  %v161 = vsub.s32 0, %v160
  %v162 = vrot.slane %v157, %v161
  %v164 = vadd.f32 %v93, %v162
  %v165 = vadd.f32 %v94, %v162
  %v166 = vadd.f32 %v95, %v162
  %v167 = vadd.f32 %v96, %v162
  %v168 = vadd.f32 %v97, %v162
  %v169 = vadd.f32 %v98, %v162
  %v170 = vadd.f32 %v99, %v162
  %v171 = vadd.f32 %v100, %v162
  %v172 = vadd.f32 %v101, %v162
  %v173 = vadd.f32 %v102, %v162
  %v174 = vadd.f32 %v103, %v162
  %v175 = vadd.f32 %v104, %v162
  %v176 = vadd.f32 %v105, %v162
  %v177 = vadd.f32 %v106, %v162
  %v178 = vadd.f32 %v107, %v162
  %v179 = vadd.f32 %v108, %v162
  %v180 = vadd.f32 %v109, %v162
  %v181 = vadd.f32 %v110, %v162
  %v182 = vadd.f32 %v111, %v162
  %v183 = vadd.f32 %v112, %v162
  %v184 = vadd.f32 %v113, %v162
  %v185 = vadd.f32 %v114, %v162
  %v186 = vadd.f32 %v115, %v162
  %v187 = vadd.f32 %v116, %v162
  %v188 = vadd.f32 %v117, %v162
  %v189 = vadd.f32 %v118, %v162
  %v190 = vadd.f32 %v119, %v162
  %v191 = vadd.f32 %v120, %v162
  %v192 = vadd.f32 %v121, %v162
  %v193 = vadd.f32 %v122, %v162
  %v194 = vadd.f32 %v123, %v162
  %v195 = vadd.f32 %v124, %v162
  %v196 = vadd.f32 %v125, %v162
  %v197 = vadd.f32 %v126, %v162
  %v198 = vadd.f32 %v127, %v162
  %v199 = vadd.f32 %v128, %v162
  %v200 = vadd.f32 %v129, %v162
  %v201 = vadd.f32 %v130, %v162
  %v202 = vadd.f32 %v131, %v162
  %v203 = vadd.f32 %v132, %v162
  %v204 = vadd.f32 %v133, %v162
  %v205 = vadd.f32 %v134, %v162
  %v206 = vadd.f32 %v135, %v162
  %v207 = vadd.f32 %v136, %v162
  %v208 = vadd.f32 %v137, %v162
  %v209 = vadd.f32 %v138, %v162
  %v210 = vadd.f32 %v139, %v162
  %v211 = vadd.f32 %v140, %v162
  %v212 = vadd.f32 %v141, %v162
  %v213 = vadd.f32 %v142, %v162
  %v214 = vadd.f32 %v143, %v162
  %v215 = vadd.f32 %v144, %v162
  %v216 = vadd.f32 %v145, %v162
  %v217 = vadd.f32 %v146, %v162
  %v218 = vadd.f32 %v147, %v162
  %v219 = vadd.f32 %v148, %v162
  %v220 = vadd.f32 %v149, %v162
  %v221 = vadd.f32 %v150, %v162
  %v222 = vadd.f32 %v151, %v162
  %v223 = vadd.f32 %v152, %v162
  %v224 = vadd.f32 %v153, %v162
  %v225 = vadd.f32 %v154, %v162
  %v226 = vadd.f32 %v155, %v162
  %v227 = vadd.f32 %v156, %v162
  %v228 = vmax.f32 %v164, 0.0
  %v229 = vmax.f32 %v165, 0.0
  %v230 = vmax.f32 %v166, 0.0
  %v231 = vmax.f32 %v167, 0.0
  %v232 = vmax.f32 %v168, 0.0
  %v233 = vmax.f32 %v169, 0.0
  %v234 = vmax.f32 %v170, 0.0
  %v235 = vmax.f32 %v171, 0.0
  %v236 = vmax.f32 %v172, 0.0
  %v237 = vmax.f32 %v173, 0.0
  %v238 = vmax.f32 %v174, 0.0
  %v239 = vmax.f32 %v175, 0.0
  %v240 = vmax.f32 %v176, 0.0
  %v241 = vmax.f32 %v177, 0.0
  %v242 = vmax.f32 %v178, 0.0
  %v243 = vmax.f32 %v179, 0.0
  %v244 = vmax.f32 %v180, 0.0
  %v245 = vmax.f32 %v181, 0.0
  %v246 = vmax.f32 %v182, 0.0
  %v247 = vmax.f32 %v183, 0.0
  %v248 = vmax.f32 %v184, 0.0
  %v249 = vmax.f32 %v185, 0.0
  %v250 = vmax.f32 %v186, 0.0
  %v251 = vmax.f32 %v187, 0.0
  %v252 = vmax.f32 %v188, 0.0
  %v253 = vmax.f32 %v189, 0.0
  %v254 = vmax.f32 %v190, 0.0
  %v255 = vmax.f32 %v191, 0.0
  %v256 = vmax.f32 %v192, 0.0
  %v257 = vmax.f32 %v193, 0.0
  %v258 = vmax.f32 %v194, 0.0
  %v259 = vmax.f32 %v195, 0.0
  %v260 = vmax.f32 %v196, 0.0
  %v261 = vmax.f32 %v197, 0.0
  %v262 = vmax.f32 %v198, 0.0
  %v263 = vmax.f32 %v199, 0.0
  %v264 = vmax.f32 %v200, 0.0
  %v265 = vmax.f32 %v201, 0.0
  %v266 = vmax.f32 %v202, 0.0
  %v267 = vmax.f32 %v203, 0.0
  %v268 = vmax.f32 %v204, 0.0
  %v269 = vmax.f32 %v205, 0.0
  %v270 = vmax.f32 %v206, 0.0
  %v271 = vmax.f32 %v207, 0.0
  %v272 = vmax.f32 %v208, 0.0
  %v273 = vmax.f32 %v209, 0.0
  %v274 = vmax.f32 %v210, 0.0
  %v275 = vmax.f32 %v211, 0.0
  %v276 = vmax.f32 %v212, 0.0
  %v277 = vmax.f32 %v213, 0.0
  %v278 = vmax.f32 %v214, 0.0
  %v279 = vmax.f32 %v215, 0.0
  %v280 = vmax.f32 %v216, 0.0
  %v281 = vmax.f32 %v217, 0.0
  %v282 = vmax.f32 %v218, 0.0
  %v283 = vmax.f32 %v219, 0.0
  %v284 = vmax.f32 %v220, 0.0
  %v285 = vmax.f32 %v221, 0.0
  %v286 = vmax.f32 %v222, 0.0
  %v287 = vmax.f32 %v223, 0.0
  %v288 = vmax.f32 %v224, 0.0
  %v289 = vmax.f32 %v225, 0.0
  %v290 = vmax.f32 %v226, 0.0
  %v291 = vmax.f32 %v227, 0.0
  %v292 = vpack.c.bf16 %v229, %v228
  %v293 = vpack.c.bf16 %v231, %v230
  %v294 = vpack.c.bf16 %v233, %v232
  %v295 = vpack.c.bf16 %v235, %v234
  %v296 = vpack.c.bf16 %v237, %v236
  %v297 = vpack.c.bf16 %v239, %v238
  %v298 = vpack.c.bf16 %v241, %v240
  %v299 = vpack.c.bf16 %v243, %v242
  %v300 = vpack.c.bf16 %v245, %v244
  %v301 = vpack.c.bf16 %v247, %v246
  %v302 = vpack.c.bf16 %v249, %v248
  %v303 = vpack.c.bf16 %v251, %v250
  %v304 = vpack.c.bf16 %v253, %v252
  %v305 = vpack.c.bf16 %v255, %v254
  %v306 = vpack.c.bf16 %v257, %v256
  %v307 = vpack.c.bf16 %v259, %v258
  %v308 = vpack.c.bf16 %v261, %v260
  %v309 = vpack.c.bf16 %v263, %v262
  %v310 = vpack.c.bf16 %v265, %v264
  %v311 = vpack.c.bf16 %v267, %v266
  %v312 = vpack.c.bf16 %v269, %v268
  %v313 = vpack.c.bf16 %v271, %v270
  %v314 = vpack.c.bf16 %v273, %v272
  %v315 = vpack.c.bf16 %v275, %v274
  %v316 = vpack.c.bf16 %v277, %v276
  %v317 = vpack.c.bf16 %v279, %v278
  %v318 = vpack.c.bf16 %v281, %v280
  %v319 = vpack.c.bf16 %v283, %v282
  %v320 = vpack.c.bf16 %v285, %v284
  %v321 = vpack.c.bf16 %v287, %v286
  %v322 = vpack.c.bf16 %v289, %v288
  %v323 = vpack.c.bf16 %v291, %v290
  %v324 = vld [vmem:[%s3] sm:$0x3]
  %vm325 = vcmask 31744
  %v327 = vsel %vm325, %v292, 0
  %v330 = vsel %vm325, %v293, 0
  %v333 = vsel %vm325, %v294, 0
  %v336 = vsel %vm325, %v295, 0
  %v339 = vsel %vm325, %v296, 0
  %v342 = vsel %vm325, %v297, 0
  %v345 = vsel %vm325, %v298, 0
  %v348 = vsel %vm325, %v299, 0
  %v351 = vsel %vm325, %v300, 0
  %v354 = vsel %vm325, %v301, 0
  %v357 = vsel %vm325, %v302, 0
  %v360 = vsel %vm325, %v303, 0
  %v363 = vsel %vm325, %v304, 0
  %v366 = vsel %vm325, %v305, 0
  %v369 = vsel %vm325, %v306, 0
  %v372 = vsel %vm325, %v307, 0
  %v375 = vsel %vm325, %v308, 0
  %v378 = vsel %vm325, %v309, 0
  %v381 = vsel %vm325, %v310, 0
  %v384 = vsel %vm325, %v311, 0
  %v387 = vsel %vm325, %v312, 0
  %v390 = vsel %vm325, %v313, 0
  %v393 = vsel %vm325, %v314, 0
  %v396 = vsel %vm325, %v315, 0
  %v399 = vsel %vm325, %v316, 0
  %v402 = vsel %vm325, %v317, 0
  %v405 = vsel %vm325, %v318, 0
  %v408 = vsel %vm325, %v319, 0
  %v411 = vsel %vm325, %v320, 0
  %v414 = vsel %vm325, %v321, 0
  %v417 = vsel %vm325, %v322, 0
  %v420 = vsel %vm325, %v323, 0
  %vm422 = vcmask 1041408
  %v424 = vsel %vm422, %v324, 0
  %426 = vmatprep.subr.bf16.mxu0 0
  %427 = vmatpush1.bf16.msra.mxu0 %v424
  %428 = vmatprep.subr.bf16.mxu0 0
  %429 = vmatpush1.bf16.msra.mxu0 0
  %430 = vmatprep.subr.bf16.mxu0 0
  %431 = vmatpush1.bf16.msra.mxu0 0
  %432 = vmatprep.subr.bf16.mxu0 0
  %433 = vmatpush1.bf16.msra.mxu0 0
  %434 = vmatprep.subr.bf16.mxu0 0
  %435 = vmatpush1.bf16.msra.mxu0 0
  %436 = vmatprep.subr.bf16.mxu0 0
  %437 = vmatpush1.bf16.msra.mxu0 0
  %438 = vmatprep.subr.bf16.mxu0 0
  %439 = vmatpush1.bf16.msra.mxu0 0
  %440 = vmatprep.subr.bf16.mxu0 0
  %441 = vmatpush1.bf16.msra.mxu0 0
  %442 = vmatprep.subr.bf16.mxu0 0
  %443 = vmatpush1.bf16.msra.mxu0 0
  %444 = vmatprep.subr.bf16.mxu0 0
  %445 = vmatpush1.bf16.msra.mxu0 0
  %446 = vmatprep.subr.bf16.mxu0 0
  %447 = vmatpush1.bf16.msra.mxu0 0
  %448 = vmatprep.subr.bf16.mxu0 0
  %449 = vmatpush1.bf16.msra.mxu0 0
  %450 = vmatprep.subr.bf16.mxu0 0
  %451 = vmatpush1.bf16.msra.mxu0 0
  %452 = vmatprep.subr.bf16.mxu0 0
  %453 = vmatpush1.bf16.msra.mxu0 0
  %454 = vmatprep.subr.bf16.mxu0 0
  %455 = vmatpush1.bf16.msra.mxu0 0
  %456 = vmatprep.subr.bf16.mxu0 0
  %457 = vmatpush1.bf16.msra.mxu0 0
  %458 = vmatprep.mubr.bf16.mxu0 0
  %459 = vmatmul.mubr.bf16.gmra.mrb[0].mxu0 %v327
  %v460 = vpop.f32.mrb[0].mxu0
  %v461 = vadd.f32 0.0, %v460
  %v462 = vpop.f32.mrb[0].mxu0
  %v463 = vpop.f32.mrb[0].mxu0
  %v464 = vadd.f32 0.0, %v463
  %v465 = vpop.f32.mrb[0].mxu0
  %466 = vmatprep.mubr.bf16.mxu0 0
  %467 = vmatmul.mubr.bf16.gmra.mrb[0].mxu0 %v330
  %v468 = vpop.f32.mrb[0].mxu0
  %v469 = vadd.f32 0.0, %v468
  %v470 = vpop.f32.mrb[0].mxu0
  %v471 = vpop.f32.mrb[0].mxu0
  %v472 = vadd.f32 0.0, %v471
  %v473 = vpop.f32.mrb[0].mxu0
  %474 = vmatprep.mubr.bf16.mxu0 0
  %475 = vmatmul.mubr.bf16.gmra.mrb[0].mxu0 %v333
  %v476 = vpop.f32.mrb[0].mxu0
  %v477 = vadd.f32 0.0, %v476
  %v478 = vpop.f32.mrb[0].mxu0
  %v479 = vpop.f32.mrb[0].mxu0
  %v480 = vadd.f32 0.0, %v479
  %v481 = vpop.f32.mrb[0].mxu0
  %482 = vmatprep.mubr.bf16.mxu0 0
  %483 = vmatmul.mubr.bf16.gmra.mrb[0].mxu0 %v336
  %v484 = vpop.f32.mrb[0].mxu0
  %v485 = vadd.f32 0.0, %v484
  %v486 = vpop.f32.mrb[0].mxu0
  %v487 = vpop.f32.mrb[0].mxu0
  %v488 = vadd.f32 0.0, %v487
  %v489 = vpop.f32.mrb[0].mxu0
  %490 = vmatprep.mubr.bf16.mxu0 0
  %491 = vmatmul.mubr.bf16.gmra.mrb[0].mxu0 %v339
  %v492 = vpop.f32.mrb[0].mxu0
  %v493 = vadd.f32 0.0, %v492
  %v494 = vpop.f32.mrb[0].mxu0
  %v495 = vpop.f32.mrb[0].mxu0
  %v496 = vadd.f32 0.0, %v495
  %v497 = vpop.f32.mrb[0].mxu0
  %498 = vmatprep.mubr.bf16.mxu0 0
  %499 = vmatmul.mubr.bf16.gmra.mrb[0].mxu0 %v342
  %v500 = vpop.f32.mrb[0].mxu0
  %v501 = vadd.f32 0.0, %v500
  %v502 = vpop.f32.mrb[0].mxu0
  %v503 = vpop.f32.mrb[0].mxu0
  %v504 = vadd.f32 0.0, %v503
  %v505 = vpop.f32.mrb[0].mxu0
  %506 = vmatprep.mubr.bf16.mxu0 0
  %507 = vmatmul.mubr.bf16.gmra.mrb[0].mxu0 %v345
  %v508 = vpop.f32.mrb[0].mxu0
  %v509 = vadd.f32 0.0, %v508
  %v510 = vpop.f32.mrb[0].mxu0
  %v511 = vpop.f32.mrb[0].mxu0
  %v512 = vadd.f32 0.0, %v511
  %v513 = vpop.f32.mrb[0].mxu0
  %514 = vmatprep.mubr.bf16.mxu0 0
  %515 = vmatmul.mubr.bf16.gmra.mrb[0].mxu0 %v348
  %v516 = vpop.f32.mrb[0].mxu0
  %v517 = vadd.f32 0.0, %v516
  %v518 = vpop.f32.mrb[0].mxu0
  %v519 = vpop.f32.mrb[0].mxu0
  %v520 = vadd.f32 0.0, %v519
  %v521 = vpop.f32.mrb[0].mxu0
  %522 = vmatprep.mubr.bf16.mxu0 0
  %523 = vmatmul.mubr.bf16.gmra.mrb[0].mxu0 %v351
  %v524 = vpop.f32.mrb[0].mxu0
  %v525 = vadd.f32 0.0, %v524
  %v526 = vpop.f32.mrb[0].mxu0
  %v527 = vpop.f32.mrb[0].mxu0
  %v528 = vadd.f32 0.0, %v527
  %v529 = vpop.f32.mrb[0].mxu0
  %530 = vmatprep.mubr.bf16.mxu0 0
  %531 = vmatmul.mubr.bf16.gmra.mrb[0].mxu0 %v354
  %v532 = vpop.f32.mrb[0].mxu0
  %v533 = vadd.f32 0.0, %v532
  %v534 = vpop.f32.mrb[0].mxu0
  %v535 = vpop.f32.mrb[0].mxu0
  %v536 = vadd.f32 0.0, %v535
  %v537 = vpop.f32.mrb[0].mxu0
  %538 = vmatprep.mubr.bf16.mxu0 0
  %539 = vmatmul.mubr.bf16.gmra.mrb[0].mxu0 %v357
  %v540 = vpop.f32.mrb[0].mxu0
  %v541 = vadd.f32 0.0, %v540
  %v542 = vpop.f32.mrb[0].mxu0
  %v543 = vpop.f32.mrb[0].mxu0
  %v544 = vadd.f32 0.0, %v543
  %v545 = vpop.f32.mrb[0].mxu0
  %546 = vmatprep.mubr.bf16.mxu0 0
  %547 = vmatmul.mubr.bf16.gmra.mrb[0].mxu0 %v360
  %v548 = vpop.f32.mrb[0].mxu0
  %v549 = vadd.f32 0.0, %v548
  %v550 = vpop.f32.mrb[0].mxu0
  %v551 = vpop.f32.mrb[0].mxu0
  %v552 = vadd.f32 0.0, %v551
  %v553 = vpop.f32.mrb[0].mxu0
  %554 = vmatprep.mubr.bf16.mxu0 0
  %555 = vmatmul.mubr.bf16.gmra.mrb[0].mxu0 %v363
  %v556 = vpop.f32.mrb[0].mxu0
  %v557 = vadd.f32 0.0, %v556
  %v558 = vpop.f32.mrb[0].mxu0
  %v559 = vpop.f32.mrb[0].mxu0
  %v560 = vadd.f32 0.0, %v559
  %v561 = vpop.f32.mrb[0].mxu0
  %562 = vmatprep.mubr.bf16.mxu0 0
  %563 = vmatmul.mubr.bf16.gmra.mrb[0].mxu0 %v366
  %v564 = vpop.f32.mrb[0].mxu0
  %v565 = vadd.f32 0.0, %v564
  %v566 = vpop.f32.mrb[0].mxu0
  %v567 = vpop.f32.mrb[0].mxu0
  %v568 = vadd.f32 0.0, %v567
  %v569 = vpop.f32.mrb[0].mxu0
  %570 = vmatprep.mubr.bf16.mxu0 0
  %571 = vmatmul.mubr.bf16.gmra.mrb[0].mxu0 %v369
  %v572 = vpop.f32.mrb[0].mxu0
  %v573 = vadd.f32 0.0, %v572
  %v574 = vpop.f32.mrb[0].mxu0
  %v575 = vpop.f32.mrb[0].mxu0
  %v576 = vadd.f32 0.0, %v575
  %v577 = vpop.f32.mrb[0].mxu0
  %578 = vmatprep.mubr.bf16.mxu0 0
  %579 = vmatmul.mubr.bf16.gmra.mrb[0].mxu0 %v372
  %v580 = vpop.f32.mrb[0].mxu0
  %v581 = vadd.f32 0.0, %v580
  %v582 = vpop.f32.mrb[0].mxu0
  %v583 = vpop.f32.mrb[0].mxu0
  %v584 = vadd.f32 0.0, %v583
  %v585 = vpop.f32.mrb[0].mxu0
  %586 = vmatprep.mubr.bf16.mxu0 0
  %587 = vmatmul.mubr.bf16.gmra.mrb[0].mxu0 %v375
  %v588 = vpop.f32.mrb[0].mxu0
  %v589 = vadd.f32 0.0, %v588
  %v590 = vpop.f32.mrb[0].mxu0
  %v591 = vpop.f32.mrb[0].mxu0
  %v592 = vadd.f32 0.0, %v591
  %v593 = vpop.f32.mrb[0].mxu0
  %594 = vmatprep.mubr.bf16.mxu0 0
  %595 = vmatmul.mubr.bf16.gmra.mrb[0].mxu0 %v378
  %v596 = vpop.f32.mrb[0].mxu0
  %v597 = vadd.f32 0.0, %v596
  %v598 = vpop.f32.mrb[0].mxu0
  %v599 = vpop.f32.mrb[0].mxu0
  %v600 = vadd.f32 0.0, %v599
  %v601 = vpop.f32.mrb[0].mxu0
  %602 = vmatprep.mubr.bf16.mxu0 0
  %603 = vmatmul.mubr.bf16.gmra.mrb[0].mxu0 %v381
  %v604 = vpop.f32.mrb[0].mxu0
  %v605 = vadd.f32 0.0, %v604
  %v606 = vpop.f32.mrb[0].mxu0
  %v607 = vpop.f32.mrb[0].mxu0
  %v608 = vadd.f32 0.0, %v607
  %v609 = vpop.f32.mrb[0].mxu0
  %610 = vmatprep.mubr.bf16.mxu0 0
  %611 = vmatmul.mubr.bf16.gmra.mrb[0].mxu0 %v384
  %v612 = vpop.f32.mrb[0].mxu0
  %v613 = vadd.f32 0.0, %v612
  %v614 = vpop.f32.mrb[0].mxu0
  %v615 = vpop.f32.mrb[0].mxu0
  %v616 = vadd.f32 0.0, %v615
  %v617 = vpop.f32.mrb[0].mxu0
  %618 = vmatprep.mubr.bf16.mxu0 0
  %619 = vmatmul.mubr.bf16.gmra.mrb[0].mxu0 %v387
  %v620 = vpop.f32.mrb[0].mxu0
  %v621 = vadd.f32 0.0, %v620
  %v622 = vpop.f32.mrb[0].mxu0
  %v623 = vpop.f32.mrb[0].mxu0
  %v624 = vadd.f32 0.0, %v623
  %v625 = vpop.f32.mrb[0].mxu0
  %626 = vmatprep.mubr.bf16.mxu0 0
  %627 = vmatmul.mubr.bf16.gmra.mrb[0].mxu0 %v390
  %v628 = vpop.f32.mrb[0].mxu0
  %v629 = vadd.f32 0.0, %v628
  %v630 = vpop.f32.mrb[0].mxu0
  %v631 = vpop.f32.mrb[0].mxu0
  %v632 = vadd.f32 0.0, %v631
  %v633 = vpop.f32.mrb[0].mxu0
  %634 = vmatprep.mubr.bf16.mxu0 0
  %635 = vmatmul.mubr.bf16.gmra.mrb[0].mxu0 %v393
  %v636 = vpop.f32.mrb[0].mxu0
  %v637 = vadd.f32 0.0, %v636
  %v638 = vpop.f32.mrb[0].mxu0
  %v639 = vpop.f32.mrb[0].mxu0
  %v640 = vadd.f32 0.0, %v639
  %v641 = vpop.f32.mrb[0].mxu0
  %642 = vmatprep.mubr.bf16.mxu0 0
  %643 = vmatmul.mubr.bf16.gmra.mrb[0].mxu0 %v396
  %v644 = vpop.f32.mrb[0].mxu0
  %v645 = vadd.f32 0.0, %v644
  %v646 = vpop.f32.mrb[0].mxu0
  %v647 = vpop.f32.mrb[0].mxu0
  %v648 = vadd.f32 0.0, %v647
  %v649 = vpop.f32.mrb[0].mxu0
  %650 = vmatprep.mubr.bf16.mxu0 0
  %651 = vmatmul.mubr.bf16.gmra.mrb[0].mxu0 %v399
  %v652 = vpop.f32.mrb[0].mxu0
  %v653 = vadd.f32 0.0, %v652
  %v654 = vpop.f32.mrb[0].mxu0
  %v655 = vpop.f32.mrb[0].mxu0
  %v656 = vadd.f32 0.0, %v655
  %v657 = vpop.f32.mrb[0].mxu0
  %658 = vmatprep.mubr.bf16.mxu0 0
  %659 = vmatmul.mubr.bf16.gmra.mrb[0].mxu0 %v402
  %v660 = vpop.f32.mrb[0].mxu0
  %v661 = vadd.f32 0.0, %v660
  %v662 = vpop.f32.mrb[0].mxu0
  %v663 = vpop.f32.mrb[0].mxu0
  %v664 = vadd.f32 0.0, %v663
  %v665 = vpop.f32.mrb[0].mxu0
  %666 = vmatprep.mubr.bf16.mxu0 0
  %667 = vmatmul.mubr.bf16.gmra.mrb[0].mxu0 %v405
  %v668 = vpop.f32.mrb[0].mxu0
  %v669 = vadd.f32 0.0, %v668
  %v670 = vpop.f32.mrb[0].mxu0
  %v671 = vpop.f32.mrb[0].mxu0
  %v672 = vadd.f32 0.0, %v671
  %v673 = vpop.f32.mrb[0].mxu0
  %674 = vmatprep.mubr.bf16.mxu0 0
  %675 = vmatmul.mubr.bf16.gmra.mrb[0].mxu0 %v408
  %v676 = vpop.f32.mrb[0].mxu0
  %v677 = vadd.f32 0.0, %v676
  %v678 = vpop.f32.mrb[0].mxu0
  %v679 = vpop.f32.mrb[0].mxu0
  %v680 = vadd.f32 0.0, %v679
  %v681 = vpop.f32.mrb[0].mxu0
  %682 = vmatprep.mubr.bf16.mxu0 0
  %683 = vmatmul.mubr.bf16.gmra.mrb[0].mxu0 %v411
  %v684 = vpop.f32.mrb[0].mxu0
  %v685 = vadd.f32 0.0, %v684
  %v686 = vpop.f32.mrb[0].mxu0
  %v687 = vpop.f32.mrb[0].mxu0
  %v688 = vadd.f32 0.0, %v687
  %v689 = vpop.f32.mrb[0].mxu0
  %690 = vmatprep.mubr.bf16.mxu0 0
  %691 = vmatmul.mubr.bf16.gmra.mrb[0].mxu0 %v414
  %v692 = vpop.f32.mrb[0].mxu0
  %v693 = vadd.f32 0.0, %v692
  %v694 = vpop.f32.mrb[0].mxu0
  %v695 = vpop.f32.mrb[0].mxu0
  %v696 = vadd.f32 0.0, %v695
  %v697 = vpop.f32.mrb[0].mxu0
  %698 = vmatprep.mubr.bf16.mxu0 0
  %699 = vmatmul.mubr.bf16.gmra.mrb[0].mxu0 %v417
  %v700 = vpop.f32.mrb[0].mxu0
  %v701 = vadd.f32 0.0, %v700
  %v702 = vpop.f32.mrb[0].mxu0
  %v703 = vpop.f32.mrb[0].mxu0
  %v704 = vadd.f32 0.0, %v703
  %v705 = vpop.f32.mrb[0].mxu0
  %706 = vmatprep.mubr.bf16.mxu0 0
  %707 = vmatmul.mubr.bf16.gmra.mrb[0].mxu0 %v420
  %v708 = vpop.f32.mrb[0].mxu0
  %v709 = vadd.f32 0.0, %v708
  %v710 = vpop.f32.mrb[0].mxu0
  %v711 = vpop.f32.mrb[0].mxu0
  %v712 = vadd.f32 0.0, %v711
  %v713 = vpop.f32.mrb[0].mxu0
  %714 = vdwg.mxu0
  %715 = vst.msk [vmem:[%s4] sm:$0xff] %vm325, %v461
  %716 = vst.msk [vmem:[%s4 + $0x8] sm:$0xff] %vm325, %v464
  %717 = vst.msk [vmem:[%s4 + $0x10] sm:$0xff] %vm325, %v469
  %718 = vst.msk [vmem:[%s4 + $0x18] sm:$0xff] %vm325, %v472
  %719 = vst.msk [vmem:[%s4 + $0x20] sm:$0xff] %vm325, %v477
  %720 = vst.msk [vmem:[%s4 + $0x28] sm:$0xff] %vm325, %v480
  %721 = vst.msk [vmem:[%s4 + $0x30] sm:$0xff] %vm325, %v485
  %722 = vst.msk [vmem:[%s4 + $0x38] sm:$0xff] %vm325, %v488
  %723 = vst.msk [vmem:[%s4 + $0x40] sm:$0xff] %vm325, %v493
  %724 = vst.msk [vmem:[%s4 + $0x48] sm:$0xff] %vm325, %v496
  %725 = vst.msk [vmem:[%s4 + $0x50] sm:$0xff] %vm325, %v501
  %726 = vst.msk [vmem:[%s4 + $0x58] sm:$0xff] %vm325, %v504
  %727 = vst.msk [vmem:[%s4 + $0x60] sm:$0xff] %vm325, %v509
  %728 = vst.msk [vmem:[%s4 + $0x68] sm:$0xff] %vm325, %v512
  %729 = vst.msk [vmem:[%s4 + $0x70] sm:$0xff] %vm325, %v517
  %730 = vst.msk [vmem:[%s4 + $0x78] sm:$0xff] %vm325, %v520
  %731 = vst.msk [vmem:[%s4 + $0x80] sm:$0xff] %vm325, %v525
  %732 = vst.msk [vmem:[%s4 + $0x88] sm:$0xff] %vm325, %v528
  %733 = vst.msk [vmem:[%s4 + $0x90] sm:$0xff] %vm325, %v533
  %734 = vst.msk [vmem:[%s4 + $0x98] sm:$0xff] %vm325, %v536
  %735 = vst.msk [vmem:[%s4 + $0xa0] sm:$0xff] %vm325, %v541
  %736 = vst.msk [vmem:[%s4 + $0xa8] sm:$0xff] %vm325, %v544
  %737 = vst.msk [vmem:[%s4 + $0xb0] sm:$0xff] %vm325, %v549
  %738 = vst.msk [vmem:[%s4 + $0xb8] sm:$0xff] %vm325, %v552
  %739 = vst.msk [vmem:[%s4 + $0xc0] sm:$0xff] %vm325, %v557
  %740 = vst.msk [vmem:[%s4 + $0xc8] sm:$0xff] %vm325, %v560
  %741 = vst.msk [vmem:[%s4 + $0xd0] sm:$0xff] %vm325, %v565
  %742 = vst.msk [vmem:[%s4 + $0xd8] sm:$0xff] %vm325, %v568
  %743 = vst.msk [vmem:[%s4 + $0xe0] sm:$0xff] %vm325, %v573
  %744 = vst.msk [vmem:[%s4 + $0xe8] sm:$0xff] %vm325, %v576
  %745 = vst.msk [vmem:[%s4 + $0xf0] sm:$0xff] %vm325, %v581
  %746 = vst.msk [vmem:[%s4 + $0xf8] sm:$0xff] %vm325, %v584
  %747 = vst.msk [vmem:[%s4 + $0x100] sm:$0xff] %vm325, %v589
  %748 = vst.msk [vmem:[%s4 + $0x108] sm:$0xff] %vm325, %v592
  %749 = vst.msk [vmem:[%s4 + $0x110] sm:$0xff] %vm325, %v597
  %750 = vst.msk [vmem:[%s4 + $0x118] sm:$0xff] %vm325, %v600
  %751 = vst.msk [vmem:[%s4 + $0x120] sm:$0xff] %vm325, %v605
  %752 = vst.msk [vmem:[%s4 + $0x128] sm:$0xff] %vm325, %v608
  %753 = vst.msk [vmem:[%s4 + $0x130] sm:$0xff] %vm325, %v613
  %754 = vst.msk [vmem:[%s4 + $0x138] sm:$0xff] %vm325, %v616
  %755 = vst.msk [vmem:[%s4 + $0x140] sm:$0xff] %vm325, %v621
  %756 = vst.msk [vmem:[%s4 + $0x148] sm:$0xff] %vm325, %v624
  %757 = vst.msk [vmem:[%s4 + $0x150] sm:$0xff] %vm325, %v629
  %758 = vst.msk [vmem:[%s4 + $0x158] sm:$0xff] %vm325, %v632
  %759 = vst.msk [vmem:[%s4 + $0x160] sm:$0xff] %vm325, %v637
  %760 = vst.msk [vmem:[%s4 + $0x168] sm:$0xff] %vm325, %v640
  %761 = vst.msk [vmem:[%s4 + $0x170] sm:$0xff] %vm325, %v645
  %762 = vst.msk [vmem:[%s4 + $0x178] sm:$0xff] %vm325, %v648
  %763 = vst.msk [vmem:[%s4 + $0x180] sm:$0xff] %vm325, %v653
  %764 = vst.msk [vmem:[%s4 + $0x188] sm:$0xff] %vm325, %v656
  %765 = vst.msk [vmem:[%s4 + $0x190] sm:$0xff] %vm325, %v661
  %766 = vst.msk [vmem:[%s4 + $0x198] sm:$0xff] %vm325, %v664
  %767 = vst.msk [vmem:[%s4 + $0x1a0] sm:$0xff] %vm325, %v669
  %768 = vst.msk [vmem:[%s4 + $0x1a8] sm:$0xff] %vm325, %v672
  %769 = vst.msk [vmem:[%s4 + $0x1b0] sm:$0xff] %vm325, %v677
  %770 = vst.msk [vmem:[%s4 + $0x1b8] sm:$0xff] %vm325, %v680
  %771 = vst.msk [vmem:[%s4 + $0x1c0] sm:$0xff] %vm325, %v685
  %772 = vst.msk [vmem:[%s4 + $0x1c8] sm:$0xff] %vm325, %v688
  %773 = vst.msk [vmem:[%s4 + $0x1d0] sm:$0xff] %vm325, %v693
  %774 = vst.msk [vmem:[%s4 + $0x1d8] sm:$0xff] %vm325, %v696
  %775 = vst.msk [vmem:[%s4 + $0x1e0] sm:$0xff] %vm325, %v701
  %776 = vst.msk [vmem:[%s4 + $0x1e8] sm:$0xff] %vm325, %v704
  %777 = vst.msk [vmem:[%s4 + $0x1f0] sm:$0xff] %vm325, %v709
  %778 = vst.msk [vmem:[%s4 + $0x1f8] sm:$0xff] %vm325, %v712
  %843 = vrot.lane.b32.xlu0 %v461, 124
  %v844 = vpop.permute.xlu0 %843
  %845 = vrot.lane.b32.xlu0 %v464, 124
  %v846 = vpop.permute.xlu0 %845
  %847 = vrot.lane.b32.xlu0 %v469, 124
  %v848 = vpop.permute.xlu0 %847
  %849 = vrot.lane.b32.xlu0 %v472, 124
  %v850 = vpop.permute.xlu0 %849
  %851 = vrot.lane.b32.xlu0 %v477, 124
  %v852 = vpop.permute.xlu0 %851
  %853 = vrot.lane.b32.xlu0 %v480, 124
  %v854 = vpop.permute.xlu0 %853
  %855 = vrot.lane.b32.xlu0 %v485, 124
  %v856 = vpop.permute.xlu0 %855
  %857 = vrot.lane.b32.xlu0 %v488, 124
  %v858 = vpop.permute.xlu0 %857
  %859 = vrot.lane.b32.xlu0 %v493, 124
  %v860 = vpop.permute.xlu0 %859
  %861 = vrot.lane.b32.xlu0 %v496, 124
  %v862 = vpop.permute.xlu0 %861
  %863 = vrot.lane.b32.xlu0 %v501, 124
  %v864 = vpop.permute.xlu0 %863
  %865 = vrot.lane.b32.xlu0 %v504, 124
  %v866 = vpop.permute.xlu0 %865
  %867 = vrot.lane.b32.xlu0 %v509, 124
  %v868 = vpop.permute.xlu0 %867
  %869 = vrot.lane.b32.xlu0 %v512, 124
  %v870 = vpop.permute.xlu0 %869
  %871 = vrot.lane.b32.xlu0 %v517, 124
  %v872 = vpop.permute.xlu0 %871
  %873 = vrot.lane.b32.xlu0 %v520, 124
  %v874 = vpop.permute.xlu0 %873
  %875 = vrot.lane.b32.xlu0 %v525, 124
  %v876 = vpop.permute.xlu0 %875
  %877 = vrot.lane.b32.xlu0 %v528, 124
  %v878 = vpop.permute.xlu0 %877
  %879 = vrot.lane.b32.xlu0 %v533, 124
  %v880 = vpop.permute.xlu0 %879
  %881 = vrot.lane.b32.xlu0 %v536, 124
  %v882 = vpop.permute.xlu0 %881
  %883 = vrot.lane.b32.xlu0 %v541, 124
  %v884 = vpop.permute.xlu0 %883
  %885 = vrot.lane.b32.xlu0 %v544, 124
  %v886 = vpop.permute.xlu0 %885
  %887 = vrot.lane.b32.xlu0 %v549, 124
  %v888 = vpop.permute.xlu0 %887
  %889 = vrot.lane.b32.xlu0 %v552, 124
  %v890 = vpop.permute.xlu0 %889
  %891 = vrot.lane.b32.xlu0 %v557, 124
  %v892 = vpop.permute.xlu0 %891
  %893 = vrot.lane.b32.xlu0 %v560, 124
  %v894 = vpop.permute.xlu0 %893
  %895 = vrot.lane.b32.xlu0 %v565, 124
  %v896 = vpop.permute.xlu0 %895
  %897 = vrot.lane.b32.xlu0 %v568, 124
  %v898 = vpop.permute.xlu0 %897
  %899 = vrot.lane.b32.xlu0 %v573, 124
  %v900 = vpop.permute.xlu0 %899
  %901 = vrot.lane.b32.xlu0 %v576, 124
  %v902 = vpop.permute.xlu0 %901
  %903 = vrot.lane.b32.xlu0 %v581, 124
  %v904 = vpop.permute.xlu0 %903
  %905 = vrot.lane.b32.xlu0 %v584, 124
  %v906 = vpop.permute.xlu0 %905
  %907 = vrot.lane.b32.xlu0 %v589, 124
  %v908 = vpop.permute.xlu0 %907
  %909 = vrot.lane.b32.xlu0 %v592, 124
  %v910 = vpop.permute.xlu0 %909
  %911 = vrot.lane.b32.xlu0 %v597, 124
  %v912 = vpop.permute.xlu0 %911
  %913 = vrot.lane.b32.xlu0 %v600, 124
  %v914 = vpop.permute.xlu0 %913
  %915 = vrot.lane.b32.xlu0 %v605, 124
  %v916 = vpop.permute.xlu0 %915
  %917 = vrot.lane.b32.xlu0 %v608, 124
  %v918 = vpop.permute.xlu0 %917
  %919 = vrot.lane.b32.xlu0 %v613, 124
  %v920 = vpop.permute.xlu0 %919
  %921 = vrot.lane.b32.xlu0 %v616, 124
  %v922 = vpop.permute.xlu0 %921
  %923 = vrot.lane.b32.xlu0 %v621, 124
  %v924 = vpop.permute.xlu0 %923
  %925 = vrot.lane.b32.xlu0 %v624, 124
  %v926 = vpop.permute.xlu0 %925
  %927 = vrot.lane.b32.xlu0 %v629, 124
  %v928 = vpop.permute.xlu0 %927
  %929 = vrot.lane.b32.xlu0 %v632, 124
  %v930 = vpop.permute.xlu0 %929
  %931 = vrot.lane.b32.xlu0 %v637, 124
  %v932 = vpop.permute.xlu0 %931
  %933 = vrot.lane.b32.xlu0 %v640, 124
  %v934 = vpop.permute.xlu0 %933
  %935 = vrot.lane.b32.xlu0 %v645, 124
  %v936 = vpop.permute.xlu0 %935
  %937 = vrot.lane.b32.xlu0 %v648, 124
  %v938 = vpop.permute.xlu0 %937
  %939 = vrot.lane.b32.xlu0 %v653, 124
  %v940 = vpop.permute.xlu0 %939
  %941 = vrot.lane.b32.xlu0 %v656, 124
  %v942 = vpop.permute.xlu0 %941
  %943 = vrot.lane.b32.xlu0 %v661, 124
  %v944 = vpop.permute.xlu0 %943
  %945 = vrot.lane.b32.xlu0 %v664, 124
  %v946 = vpop.permute.xlu0 %945
  %947 = vrot.lane.b32.xlu0 %v669, 124
  %v948 = vpop.permute.xlu0 %947
  %949 = vrot.lane.b32.xlu0 %v672, 124
  %v950 = vpop.permute.xlu0 %949
  %951 = vrot.lane.b32.xlu0 %v677, 124
  %v952 = vpop.permute.xlu0 %951
  %953 = vrot.lane.b32.xlu0 %v680, 124
  %v954 = vpop.permute.xlu0 %953
  %955 = vrot.lane.b32.xlu0 %v685, 124
  %v956 = vpop.permute.xlu0 %955
  %957 = vrot.lane.b32.xlu0 %v688, 124
  %v958 = vpop.permute.xlu0 %957
  %959 = vrot.lane.b32.xlu0 %v693, 124
  %v960 = vpop.permute.xlu0 %959
  %961 = vrot.lane.b32.xlu0 %v696, 124
  %v962 = vpop.permute.xlu0 %961
  %963 = vrot.lane.b32.xlu0 %v701, 124
  %v964 = vpop.permute.xlu0 %963
  %965 = vrot.lane.b32.xlu0 %v704, 124
  %v966 = vpop.permute.xlu0 %965
  %967 = vrot.lane.b32.xlu0 %v709, 124
  %v968 = vpop.permute.xlu0 %967
  %969 = vrot.lane.b32.xlu0 %v712, 124
  %v970 = vpop.permute.xlu0 %969
  %vm1035 = vcmask 130048
  %1036 = vst.msk [vmem:[%s5] sm:$0xff] %vm1035, %v844
  %1037 = vst.msk [vmem:[%s5 + $0x8] sm:$0xff] %vm1035, %v846
  %1038 = vst.msk [vmem:[%s5 + $0x10] sm:$0xff] %vm1035, %v848
  %1039 = vst.msk [vmem:[%s5 + $0x18] sm:$0xff] %vm1035, %v850
  %1040 = vst.msk [vmem:[%s5 + $0x20] sm:$0xff] %vm1035, %v852
  %1041 = vst.msk [vmem:[%s5 + $0x28] sm:$0xff] %vm1035, %v854
  %1042 = vst.msk [vmem:[%s5 + $0x30] sm:$0xff] %vm1035, %v856
  %1043 = vst.msk [vmem:[%s5 + $0x38] sm:$0xff] %vm1035, %v858
  %1044 = vst.msk [vmem:[%s5 + $0x40] sm:$0xff] %vm1035, %v860
  %1045 = vst.msk [vmem:[%s5 + $0x48] sm:$0xff] %vm1035, %v862
  %1046 = vst.msk [vmem:[%s5 + $0x50] sm:$0xff] %vm1035, %v864
  %1047 = vst.msk [vmem:[%s5 + $0x58] sm:$0xff] %vm1035, %v866
  %1048 = vst.msk [vmem:[%s5 + $0x60] sm:$0xff] %vm1035, %v868
  %1049 = vst.msk [vmem:[%s5 + $0x68] sm:$0xff] %vm1035, %v870
  %1050 = vst.msk [vmem:[%s5 + $0x70] sm:$0xff] %vm1035, %v872
  %1051 = vst.msk [vmem:[%s5 + $0x78] sm:$0xff] %vm1035, %v874
  %1052 = vst.msk [vmem:[%s5 + $0x80] sm:$0xff] %vm1035, %v876
  %1053 = vst.msk [vmem:[%s5 + $0x88] sm:$0xff] %vm1035, %v878
  %1054 = vst.msk [vmem:[%s5 + $0x90] sm:$0xff] %vm1035, %v880
  %1055 = vst.msk [vmem:[%s5 + $0x98] sm:$0xff] %vm1035, %v882
  %1056 = vst.msk [vmem:[%s5 + $0xa0] sm:$0xff] %vm1035, %v884
  %1057 = vst.msk [vmem:[%s5 + $0xa8] sm:$0xff] %vm1035, %v886
  %1058 = vst.msk [vmem:[%s5 + $0xb0] sm:$0xff] %vm1035, %v888
  %1059 = vst.msk [vmem:[%s5 + $0xb8] sm:$0xff] %vm1035, %v890
  %1060 = vst.msk [vmem:[%s5 + $0xc0] sm:$0xff] %vm1035, %v892
  %1061 = vst.msk [vmem:[%s5 + $0xc8] sm:$0xff] %vm1035, %v894
  %1062 = vst.msk [vmem:[%s5 + $0xd0] sm:$0xff] %vm1035, %v896
  %1063 = vst.msk [vmem:[%s5 + $0xd8] sm:$0xff] %vm1035, %v898
  %1064 = vst.msk [vmem:[%s5 + $0xe0] sm:$0xff] %vm1035, %v900
  %1065 = vst.msk [vmem:[%s5 + $0xe8] sm:$0xff] %vm1035, %v902
  %1066 = vst.msk [vmem:[%s5 + $0xf0] sm:$0xff] %vm1035, %v904
  %1067 = vst.msk [vmem:[%s5 + $0xf8] sm:$0xff] %vm1035, %v906
  %1068 = vst.msk [vmem:[%s5 + $0x100] sm:$0xff] %vm1035, %v908
  %1069 = vst.msk [vmem:[%s5 + $0x108] sm:$0xff] %vm1035, %v910
  %1070 = vst.msk [vmem:[%s5 + $0x110] sm:$0xff] %vm1035, %v912
  %1071 = vst.msk [vmem:[%s5 + $0x118] sm:$0xff] %vm1035, %v914
  %1072 = vst.msk [vmem:[%s5 + $0x120] sm:$0xff] %vm1035, %v916
  %1073 = vst.msk [vmem:[%s5 + $0x128] sm:$0xff] %vm1035, %v918
  %1074 = vst.msk [vmem:[%s5 + $0x130] sm:$0xff] %vm1035, %v920
  %1075 = vst.msk [vmem:[%s5 + $0x138] sm:$0xff] %vm1035, %v922
  %1076 = vst.msk [vmem:[%s5 + $0x140] sm:$0xff] %vm1035, %v924
  %1077 = vst.msk [vmem:[%s5 + $0x148] sm:$0xff] %vm1035, %v926
  %1078 = vst.msk [vmem:[%s5 + $0x150] sm:$0xff] %vm1035, %v928
  %1079 = vst.msk [vmem:[%s5 + $0x158] sm:$0xff] %vm1035, %v930
  %1080 = vst.msk [vmem:[%s5 + $0x160] sm:$0xff] %vm1035, %v932
  %1081 = vst.msk [vmem:[%s5 + $0x168] sm:$0xff] %vm1035, %v934
  %1082 = vst.msk [vmem:[%s5 + $0x170] sm:$0xff] %vm1035, %v936
  %1083 = vst.msk [vmem:[%s5 + $0x178] sm:$0xff] %vm1035, %v938
  %1084 = vst.msk [vmem:[%s5 + $0x180] sm:$0xff] %vm1035, %v940
  %1085 = vst.msk [vmem:[%s5 + $0x188] sm:$0xff] %vm1035, %v942
  %1086 = vst.msk [vmem:[%s5 + $0x190] sm:$0xff] %vm1035, %v944
  %1087 = vst.msk [vmem:[%s5 + $0x198] sm:$0xff] %vm1035, %v946
  %1088 = vst.msk [vmem:[%s5 + $0x1a0] sm:$0xff] %vm1035, %v948
  %1089 = vst.msk [vmem:[%s5 + $0x1a8] sm:$0xff] %vm1035, %v950
  %1090 = vst.msk [vmem:[%s5 + $0x1b0] sm:$0xff] %vm1035, %v952
  %1091 = vst.msk [vmem:[%s5 + $0x1b8] sm:$0xff] %vm1035, %v954
  %1092 = vst.msk [vmem:[%s5 + $0x1c0] sm:$0xff] %vm1035, %v956
  %1093 = vst.msk [vmem:[%s5 + $0x1c8] sm:$0xff] %vm1035, %v958
  %1094 = vst.msk [vmem:[%s5 + $0x1d0] sm:$0xff] %vm1035, %v960
  %1095 = vst.msk [vmem:[%s5 + $0x1d8] sm:$0xff] %vm1035, %v962
  %1096 = vst.msk [vmem:[%s5 + $0x1e0] sm:$0xff] %vm1035, %v964
  %1097 = vst.msk [vmem:[%s5 + $0x1e8] sm:$0xff] %vm1035, %v966
  %1098 = vst.msk [vmem:[%s5 + $0x1f0] sm:$0xff] %vm1035, %v968
  %1099 = vst.msk [vmem:[%s5 + $0x1f8] sm:$0xff] %vm1035, %v970
  %v1100 = vsel %vm325, %v461, 0.0
  %v1101 = vsel %vm325, %v464, 0.0
  %v1102 = vadd.f32 %v1100, %v1101
  %v1103 = vsel %vm325, %v469, 0.0
  %v1104 = vadd.f32 %v1102, %v1103
  %v1105 = vsel %vm325, %v472, 0.0
  %v1106 = vadd.f32 %v1104, %v1105
  %v1107 = vsel %vm325, %v477, 0.0
  %v1108 = vadd.f32 %v1106, %v1107
  %v1109 = vsel %vm325, %v480, 0.0
  %v1110 = vadd.f32 %v1108, %v1109
  %v1111 = vsel %vm325, %v485, 0.0
  %v1112 = vadd.f32 %v1110, %v1111
  %v1113 = vsel %vm325, %v488, 0.0
  %v1114 = vadd.f32 %v1112, %v1113
  %v1115 = vsel %vm325, %v493, 0.0
  %v1116 = vadd.f32 %v1114, %v1115
  %v1117 = vsel %vm325, %v496, 0.0
  %v1118 = vadd.f32 %v1116, %v1117
  %v1119 = vsel %vm325, %v501, 0.0
  %v1120 = vadd.f32 %v1118, %v1119
  %v1121 = vsel %vm325, %v504, 0.0
  %v1122 = vadd.f32 %v1120, %v1121
  %v1123 = vsel %vm325, %v509, 0.0
  %v1124 = vadd.f32 %v1122, %v1123
  %v1125 = vsel %vm325, %v512, 0.0
  %v1126 = vadd.f32 %v1124, %v1125
  %v1127 = vsel %vm325, %v517, 0.0
  %v1128 = vadd.f32 %v1126, %v1127
  %v1129 = vsel %vm325, %v520, 0.0
  %v1130 = vadd.f32 %v1128, %v1129
  %v1131 = vsel %vm325, %v525, 0.0
  %v1132 = vadd.f32 %v1130, %v1131
  %v1133 = vsel %vm325, %v528, 0.0
  %v1134 = vadd.f32 %v1132, %v1133
  %v1135 = vsel %vm325, %v533, 0.0
  %v1136 = vadd.f32 %v1134, %v1135
  %v1137 = vsel %vm325, %v536, 0.0
  %v1138 = vadd.f32 %v1136, %v1137
  %v1139 = vsel %vm325, %v541, 0.0
  %v1140 = vadd.f32 %v1138, %v1139
  %v1141 = vsel %vm325, %v544, 0.0
  %v1142 = vadd.f32 %v1140, %v1141
  %v1143 = vsel %vm325, %v549, 0.0
  %v1144 = vadd.f32 %v1142, %v1143
  %v1145 = vsel %vm325, %v552, 0.0
  %v1146 = vadd.f32 %v1144, %v1145
  %v1147 = vsel %vm325, %v557, 0.0
  %v1148 = vadd.f32 %v1146, %v1147
  %v1149 = vsel %vm325, %v560, 0.0
  %v1150 = vadd.f32 %v1148, %v1149
  %v1151 = vsel %vm325, %v565, 0.0
  %v1152 = vadd.f32 %v1150, %v1151
  %v1153 = vsel %vm325, %v568, 0.0
  %v1154 = vadd.f32 %v1152, %v1153
  %v1155 = vsel %vm325, %v573, 0.0
  %v1156 = vadd.f32 %v1154, %v1155
  %v1157 = vsel %vm325, %v576, 0.0
  %v1158 = vadd.f32 %v1156, %v1157
  %v1159 = vsel %vm325, %v581, 0.0
  %v1160 = vadd.f32 %v1158, %v1159
  %v1161 = vsel %vm325, %v584, 0.0
  %v1162 = vadd.f32 %v1160, %v1161
  %v1163 = vsel %vm325, %v589, 0.0
  %v1164 = vadd.f32 %v1162, %v1163
  %v1165 = vsel %vm325, %v592, 0.0
  %v1166 = vadd.f32 %v1164, %v1165
  %v1167 = vsel %vm325, %v597, 0.0
  %v1168 = vadd.f32 %v1166, %v1167
  %v1169 = vsel %vm325, %v600, 0.0
  %v1170 = vadd.f32 %v1168, %v1169
  %v1171 = vsel %vm325, %v605, 0.0
  %v1172 = vadd.f32 %v1170, %v1171
  %v1173 = vsel %vm325, %v608, 0.0
  %v1174 = vadd.f32 %v1172, %v1173
  %v1175 = vsel %vm325, %v613, 0.0
  %v1176 = vadd.f32 %v1174, %v1175
  %v1177 = vsel %vm325, %v616, 0.0
  %v1178 = vadd.f32 %v1176, %v1177
  %v1179 = vsel %vm325, %v621, 0.0
  %v1180 = vadd.f32 %v1178, %v1179
  %v1181 = vsel %vm325, %v624, 0.0
  %v1182 = vadd.f32 %v1180, %v1181
  %v1183 = vsel %vm325, %v629, 0.0
  %v1184 = vadd.f32 %v1182, %v1183
  %v1185 = vsel %vm325, %v632, 0.0
  %v1186 = vadd.f32 %v1184, %v1185
  %v1187 = vsel %vm325, %v637, 0.0
  %v1188 = vadd.f32 %v1186, %v1187
  %v1189 = vsel %vm325, %v640, 0.0
  %v1190 = vadd.f32 %v1188, %v1189
  %v1191 = vsel %vm325, %v645, 0.0
  %v1192 = vadd.f32 %v1190, %v1191
  %v1193 = vsel %vm325, %v648, 0.0
  %v1194 = vadd.f32 %v1192, %v1193
  %v1195 = vsel %vm325, %v653, 0.0
  %v1196 = vadd.f32 %v1194, %v1195
  %v1197 = vsel %vm325, %v656, 0.0
  %v1198 = vadd.f32 %v1196, %v1197
  %v1199 = vsel %vm325, %v661, 0.0
  %v1200 = vadd.f32 %v1198, %v1199
  %v1201 = vsel %vm325, %v664, 0.0
  %v1202 = vadd.f32 %v1200, %v1201
  %v1203 = vsel %vm325, %v669, 0.0
  %v1204 = vadd.f32 %v1202, %v1203
  %v1205 = vsel %vm325, %v672, 0.0
  %v1206 = vadd.f32 %v1204, %v1205
  %v1207 = vsel %vm325, %v677, 0.0
  %v1208 = vadd.f32 %v1206, %v1207
  %v1209 = vsel %vm325, %v680, 0.0
  %v1210 = vadd.f32 %v1208, %v1209
  %v1211 = vsel %vm325, %v685, 0.0
  %v1212 = vadd.f32 %v1210, %v1211
  %v1213 = vsel %vm325, %v688, 0.0
  %v1214 = vadd.f32 %v1212, %v1213
  %v1215 = vsel %vm325, %v693, 0.0
  %v1216 = vadd.f32 %v1214, %v1215
  %v1217 = vsel %vm325, %v696, 0.0
  %v1218 = vadd.f32 %v1216, %v1217
  %v1219 = vsel %vm325, %v701, 0.0
  %v1220 = vadd.f32 %v1218, %v1219
  %v1221 = vsel %vm325, %v704, 0.0
  %v1222 = vadd.f32 %v1220, %v1221
  %v1223 = vsel %vm325, %v709, 0.0
  %v1224 = vadd.f32 %v1222, %v1223
  %v1225 = vsel %vm325, %v712, 0.0
  %v1226 = vadd.f32 %v1224, %v1225
  %v1227 = vrot.slane %v1226, 4
  %v1228 = vadd.f32 %v1226, %v1227
  %v1229 = vrot.slane %v1228, 2
  %v1230 = vadd.f32 %v1228, %v1229
  %v1231 = vrot.slane %v1230, 1
  %v1232 = vadd.f32 %v1230, %v1231
  %vm1233 = vcmask 24576
  %1234 = vst.msk [vmem:[%s6] sm:$0x1] %vm1233, %v1232
  %v1235 = vmul.f32 %v461, %v461
  %v1236 = vmul.f32 %v464, %v464
  %v1237 = vmul.f32 %v469, %v469
  %v1238 = vmul.f32 %v472, %v472
  %v1239 = vmul.f32 %v477, %v477
  %v1240 = vmul.f32 %v480, %v480
  %v1241 = vmul.f32 %v485, %v485
  %v1242 = vmul.f32 %v488, %v488
  %v1243 = vmul.f32 %v493, %v493
  %v1244 = vmul.f32 %v496, %v496
  %v1245 = vmul.f32 %v501, %v501
  %v1246 = vmul.f32 %v504, %v504
  %v1247 = vmul.f32 %v509, %v509
  %v1248 = vmul.f32 %v512, %v512
  %v1249 = vmul.f32 %v517, %v517
  %v1250 = vmul.f32 %v520, %v520
  %v1251 = vmul.f32 %v525, %v525
  %v1252 = vmul.f32 %v528, %v528
  %v1253 = vmul.f32 %v533, %v533
  %v1254 = vmul.f32 %v536, %v536
  %v1255 = vmul.f32 %v541, %v541
  %v1256 = vmul.f32 %v544, %v544
  %v1257 = vmul.f32 %v549, %v549
  %v1258 = vmul.f32 %v552, %v552
  %v1259 = vmul.f32 %v557, %v557
  %v1260 = vmul.f32 %v560, %v560
  %v1261 = vmul.f32 %v565, %v565
  %v1262 = vmul.f32 %v568, %v568
  %v1263 = vmul.f32 %v573, %v573
  %v1264 = vmul.f32 %v576, %v576
  %v1265 = vmul.f32 %v581, %v581
  %v1266 = vmul.f32 %v584, %v584
  %v1267 = vmul.f32 %v589, %v589
  %v1268 = vmul.f32 %v592, %v592
  %v1269 = vmul.f32 %v597, %v597
  %v1270 = vmul.f32 %v600, %v600
  %v1271 = vmul.f32 %v605, %v605
  %v1272 = vmul.f32 %v608, %v608
  %v1273 = vmul.f32 %v613, %v613
  %v1274 = vmul.f32 %v616, %v616
  %v1275 = vmul.f32 %v621, %v621
  %v1276 = vmul.f32 %v624, %v624
  %v1277 = vmul.f32 %v629, %v629
  %v1278 = vmul.f32 %v632, %v632
  %v1279 = vmul.f32 %v637, %v637
  %v1280 = vmul.f32 %v640, %v640
  %v1281 = vmul.f32 %v645, %v645
  %v1282 = vmul.f32 %v648, %v648
  %v1283 = vmul.f32 %v653, %v653
  %v1284 = vmul.f32 %v656, %v656
  %v1285 = vmul.f32 %v661, %v661
  %v1286 = vmul.f32 %v664, %v664
  %v1287 = vmul.f32 %v669, %v669
  %v1288 = vmul.f32 %v672, %v672
  %v1289 = vmul.f32 %v677, %v677
  %v1290 = vmul.f32 %v680, %v680
  %v1291 = vmul.f32 %v685, %v685
  %v1292 = vmul.f32 %v688, %v688
  %v1293 = vmul.f32 %v693, %v693
  %v1294 = vmul.f32 %v696, %v696
  %v1295 = vmul.f32 %v701, %v701
  %v1296 = vmul.f32 %v704, %v704
  %v1297 = vmul.f32 %v709, %v709
  %v1298 = vmul.f32 %v712, %v712
  %v1299 = vsel %vm325, %v1235, 0.0
  %v1300 = vsel %vm325, %v1236, 0.0
  %v1301 = vadd.f32 %v1299, %v1300
  %v1302 = vsel %vm325, %v1237, 0.0
  %v1303 = vadd.f32 %v1301, %v1302
  %v1304 = vsel %vm325, %v1238, 0.0
  %v1305 = vadd.f32 %v1303, %v1304
  %v1306 = vsel %vm325, %v1239, 0.0
  %v1307 = vadd.f32 %v1305, %v1306
  %v1308 = vsel %vm325, %v1240, 0.0
  %v1309 = vadd.f32 %v1307, %v1308
  %v1310 = vsel %vm325, %v1241, 0.0
  %v1311 = vadd.f32 %v1309, %v1310
  %v1312 = vsel %vm325, %v1242, 0.0
  %v1313 = vadd.f32 %v1311, %v1312
  %v1314 = vsel %vm325, %v1243, 0.0
  %v1315 = vadd.f32 %v1313, %v1314
  %v1316 = vsel %vm325, %v1244, 0.0
  %v1317 = vadd.f32 %v1315, %v1316
  %v1318 = vsel %vm325, %v1245, 0.0
  %v1319 = vadd.f32 %v1317, %v1318
  %v1320 = vsel %vm325, %v1246, 0.0
  %v1321 = vadd.f32 %v1319, %v1320
  %v1322 = vsel %vm325, %v1247, 0.0
  %v1323 = vadd.f32 %v1321, %v1322
  %v1324 = vsel %vm325, %v1248, 0.0
  %v1325 = vadd.f32 %v1323, %v1324
  %v1326 = vsel %vm325, %v1249, 0.0
  %v1327 = vadd.f32 %v1325, %v1326
  %v1328 = vsel %vm325, %v1250, 0.0
  %v1329 = vadd.f32 %v1327, %v1328
  %v1330 = vsel %vm325, %v1251, 0.0
  %v1331 = vadd.f32 %v1329, %v1330
  %v1332 = vsel %vm325, %v1252, 0.0
  %v1333 = vadd.f32 %v1331, %v1332
  %v1334 = vsel %vm325, %v1253, 0.0
  %v1335 = vadd.f32 %v1333, %v1334
  %v1336 = vsel %vm325, %v1254, 0.0
  %v1337 = vadd.f32 %v1335, %v1336
  %v1338 = vsel %vm325, %v1255, 0.0
  %v1339 = vadd.f32 %v1337, %v1338
  %v1340 = vsel %vm325, %v1256, 0.0
  %v1341 = vadd.f32 %v1339, %v1340
  %v1342 = vsel %vm325, %v1257, 0.0
  %v1343 = vadd.f32 %v1341, %v1342
  %v1344 = vsel %vm325, %v1258, 0.0
  %v1345 = vadd.f32 %v1343, %v1344
  %v1346 = vsel %vm325, %v1259, 0.0
  %v1347 = vadd.f32 %v1345, %v1346
  %v1348 = vsel %vm325, %v1260, 0.0
  %v1349 = vadd.f32 %v1347, %v1348
  %v1350 = vsel %vm325, %v1261, 0.0
  %v1351 = vadd.f32 %v1349, %v1350
  %v1352 = vsel %vm325, %v1262, 0.0
  %v1353 = vadd.f32 %v1351, %v1352
  %v1354 = vsel %vm325, %v1263, 0.0
  %v1355 = vadd.f32 %v1353, %v1354
  %v1356 = vsel %vm325, %v1264, 0.0
  %v1357 = vadd.f32 %v1355, %v1356
  %v1358 = vsel %vm325, %v1265, 0.0
  %v1359 = vadd.f32 %v1357, %v1358
  %v1360 = vsel %vm325, %v1266, 0.0
  %v1361 = vadd.f32 %v1359, %v1360
  %v1362 = vsel %vm325, %v1267, 0.0
  %v1363 = vadd.f32 %v1361, %v1362
  %v1364 = vsel %vm325, %v1268, 0.0
  %v1365 = vadd.f32 %v1363, %v1364
  %v1366 = vsel %vm325, %v1269, 0.0
  %v1367 = vadd.f32 %v1365, %v1366
  %v1368 = vsel %vm325, %v1270, 0.0
  %v1369 = vadd.f32 %v1367, %v1368
  %v1370 = vsel %vm325, %v1271, 0.0
  %v1371 = vadd.f32 %v1369, %v1370
  %v1372 = vsel %vm325, %v1272, 0.0
  %v1373 = vadd.f32 %v1371, %v1372
  %v1374 = vsel %vm325, %v1273, 0.0
  %v1375 = vadd.f32 %v1373, %v1374
  %v1376 = vsel %vm325, %v1274, 0.0
  %v1377 = vadd.f32 %v1375, %v1376
  %v1378 = vsel %vm325, %v1275, 0.0
  %v1379 = vadd.f32 %v1377, %v1378
  %v1380 = vsel %vm325, %v1276, 0.0
  %v1381 = vadd.f32 %v1379, %v1380
  %v1382 = vsel %vm325, %v1277, 0.0
  %v1383 = vadd.f32 %v1381, %v1382
  %v1384 = vsel %vm325, %v1278, 0.0
  %v1385 = vadd.f32 %v1383, %v1384
  %v1386 = vsel %vm325, %v1279, 0.0
  %v1387 = vadd.f32 %v1385, %v1386
  %v1388 = vsel %vm325, %v1280, 0.0
  %v1389 = vadd.f32 %v1387, %v1388
  %v1390 = vsel %vm325, %v1281, 0.0
  %v1391 = vadd.f32 %v1389, %v1390
  %v1392 = vsel %vm325, %v1282, 0.0
  %v1393 = vadd.f32 %v1391, %v1392
  %v1394 = vsel %vm325, %v1283, 0.0
  %v1395 = vadd.f32 %v1393, %v1394
  %v1396 = vsel %vm325, %v1284, 0.0
  %v1397 = vadd.f32 %v1395, %v1396
  %v1398 = vsel %vm325, %v1285, 0.0
  %v1399 = vadd.f32 %v1397, %v1398
  %v1400 = vsel %vm325, %v1286, 0.0
  %v1401 = vadd.f32 %v1399, %v1400
  %v1402 = vsel %vm325, %v1287, 0.0
  %v1403 = vadd.f32 %v1401, %v1402
  %v1404 = vsel %vm325, %v1288, 0.0
  %v1405 = vadd.f32 %v1403, %v1404
  %v1406 = vsel %vm325, %v1289, 0.0
  %v1407 = vadd.f32 %v1405, %v1406
  %v1408 = vsel %vm325, %v1290, 0.0
  %v1409 = vadd.f32 %v1407, %v1408
  %v1410 = vsel %vm325, %v1291, 0.0
  %v1411 = vadd.f32 %v1409, %v1410
  %v1412 = vsel %vm325, %v1292, 0.0
  %v1413 = vadd.f32 %v1411, %v1412
  %v1414 = vsel %vm325, %v1293, 0.0
  %v1415 = vadd.f32 %v1413, %v1414
  %v1416 = vsel %vm325, %v1294, 0.0
  %v1417 = vadd.f32 %v1415, %v1416
  %v1418 = vsel %vm325, %v1295, 0.0
  %v1419 = vadd.f32 %v1417, %v1418
  %v1420 = vsel %vm325, %v1296, 0.0
  %v1421 = vadd.f32 %v1419, %v1420
  %v1422 = vsel %vm325, %v1297, 0.0
  %v1423 = vadd.f32 %v1421, %v1422
  %v1424 = vsel %vm325, %v1298, 0.0
  %v1425 = vadd.f32 %v1423, %v1424
  %v1426 = vrot.slane %v1425, 4
  %v1427 = vadd.f32 %v1425, %v1426
  %v1428 = vrot.slane %v1427, 2
  %v1429 = vadd.f32 %v1427, %v1428
  %v1430 = vrot.slane %v1429, 1
  %v1431 = vadd.f32 %v1429, %v1430
  %1432 = vst.msk [vmem:[%s7] sm:$0x1] %vm1233, %v1431
  // Predicated region
  $region18: #{preact_bottleneck_forward.5} parent=0 // pred_check
    _
  $region19: #{preact_bottleneck_forward.5} parent=0 // pred_check_branch
    %1434 = sbr.rel (0) target = $region21
  $region20: #{preact_bottleneck_forward.5} parent=0 // pred_region
    _
  $region21: #{preact_bottleneck_forward.5} parent=0 // pred_fallthru
    _
  // Predicated region
  $region22: #{preact_bottleneck_forward.5} parent=0 // pred_check
    _
  $region23: #{preact_bottleneck_forward.5} parent=0 // pred_check_branch
    %1436 = sbr.rel (0) target = $region25
  $region24: #{preact_bottleneck_forward.5} parent=0 // pred_region
    _
  $region25: #{preact_bottleneck_forward.5} parent=0 // pred_fallthru
    _
  // Predicated region
  $region26: #{preact_bottleneck_forward.5} parent=0 // pred_check
    _
  $region27: #{preact_bottleneck_forward.5} parent=0 // pred_check_branch
    %1438 = sbr.rel (0) target = $region29
  $region28: #{preact_bottleneck_forward.5} parent=0 // pred_region
    _
  $region29: #{preact_bottleneck_forward.5} parent=0 // pred_fallthru
    _
  // Predicated region
  $region30: #{preact_bottleneck_forward.5} parent=0 // pred_check
    _
  $region31: #{preact_bottleneck_forward.5} parent=0 // pred_check_branch
    %1440 = sbr.rel (0) target = $region33
  $region32: #{preact_bottleneck_forward.5} parent=0 // pred_region
    _
  $region33: #{preact_bottleneck_forward.5} parent=0 // pred_fallthru
    _
  // Predicated region
  $region34: #{preact_bottleneck_forward.5} parent=0 // pred_check
    _
  $region35: #{preact_bottleneck_forward.5} parent=0 // pred_check_branch
    %1442 = sbr.rel (0) target = $region37
  $region36: #{preact_bottleneck_forward.5} parent=0 // pred_region
    _
  $region37: #{preact_bottleneck_forward.5} parent=0 // pred_fallthru
    _
  // Predicated region
  $region38: #{preact_bottleneck_forward.5} parent=0 // pred_check
    _
  $region39: #{preact_bottleneck_forward.5} parent=0 // pred_check_branch
    %1444 = sbr.rel (0) target = $region41
  $region40: #{preact_bottleneck_forward.5} parent=0 // pred_region
    _
  $region41: #{preact_bottleneck_forward.5} parent=0 // pred_fallthru
    _
  // Predicated region
  $region42: #{preact_bottleneck_forward.5} parent=0 // pred_check
    _
  $region43: #{preact_bottleneck_forward.5} parent=0 // pred_check_branch
    %1446 = sbr.rel (0) target = $region45
  $region44: #{preact_bottleneck_forward.5} parent=0 // pred_region
    _
  $region45: #{preact_bottleneck_forward.5} parent=0 // pred_fallthru
    _
  // Predicated region
  $region46: #{preact_bottleneck_forward.5} parent=0 // pred_check
    _
  $region47: #{preact_bottleneck_forward.5} parent=0 // pred_check_branch
    %1448 = sbr.rel (0) target = $region49
  $region48: #{preact_bottleneck_forward.5} parent=0 // pred_region
    _
  $region49: #{preact_bottleneck_forward.5} parent=0 // pred_fallthru
    _

// kernel: preact_bottleneck_forward.6
$region0: #{preact_bottleneck_forward.6}
  #allocation0 [shape = 'u32[]', space=smem, size = 0x4, offset = 0x4, fixed_abs, tag = 'smem constant byte address 0x4 - core index']
  #allocation1 [shape = 'u32[144,128]{1,0:T(1,128)}', space=vmem, size = 0x12000, scoped, tag = 'internal scratch']
  #allocation2 [shape = 'f32[304,4]{1,0:T(8,128)}', space=vmem, size = 0x26000, scoped, tag = 'scratch operand']
  #allocation3 [shape = 'bf16[256,12]{1,0:T(16,128)(2,1)}', space=vmem, size = 0x10000, scoped, tag = 'scratch operand']
  %s0 = inlined_call_operand.vmem [shape: f32[2,256,4], index: 0, kind: input, shape index: {}]
  %s1 = inlined_call_operand.vmem [shape: f32[1,4], index: 1, kind: input, shape index: {}]
  %s2 = inlined_call_operand.vmem [shape: f32[1,4], index: 2, kind: input, shape index: {}]
  %s3 = inlined_call_operand.vmem [shape: bf16[3,12,4], index: 3, kind: input, shape index: {}]
  %s4 = inlined_call_operand.vmem [shape: f32[2,256,1], index: 4, kind: input, shape index: {}]
  %s5 = inlined_call_operand.vmem [shape: f32[2,256,4], index: 5, kind: output, shape index: {0}]
  %s6 = inlined_call_operand.vmem [shape: f32[2,1,4], index: 6, kind: output, shape index: {1}]
  %s7 = inlined_call_operand.vmem [shape: f32[2,1,4], index: 7, kind: output, shape index: {2}]
  %8 = xla_tuple %s5, %s6, %s7
  %s9 = sld [smem:[#allocation0]]
  $region69: #{preact_bottleneck_forward.6} parent=0
    _
  %s11 = ssub.s32 1, %s9
  %s12 = scalar_select 0, %s11, %s9
  loop: start=0, step=1, limit=4
  $region2: #{preact_bottleneck_forward.6} parent=0 // loop_pre_header
    _
  $region3: #{preact_bottleneck_forward.6} parent=0 // loop_header
    %s14 = sphi 0, %s18
    %p15 = scmp.ge.s32.totalorder %s14, 4
    %s24 = sphi 0, %s26
    %s27 = sphi 0, %s24
    %s28 = sphi 0, %s27
    %s44 = sphi 0, %s28
    %s48 = sphi 0, %s48
    %s50 = sphi 0, %s48
    %s51 = sphi 0, %s50
    %s65 = sphi 0, %s51
    %s69 = sphi 0, %s69
    %s71 = sphi 0, %s69
    %s72 = sphi 0, %s71
    %s86 = sphi 0, %s72
    %s90 = sphi 0, %s90
    %s92 = sphi 0, %s90
    %s93 = sphi 0, %s92
    %s107 = sphi 0, %s93
    %s111 = sphi 0, %s111
    %s113 = sphi 0, %s111
    %s114 = sphi 0, %s113
    %s128 = sphi 0, %s114
    %s134 = sphi 0, %s136
    %s137 = sphi 0, %s134
    %s138 = sphi 0, %s137
    %s154 = sphi 0, %s138
    %s160 = sphi 0, %s162
    %s163 = sphi 0, %s160
    %s164 = sphi 0, %s163
    %s180 = sphi 0, %s164
    %s186 = sphi 0, %s188
    %s189 = sphi 0, %s186
    %s190 = sphi 0, %s189
    %s206 = sphi 0, %s190
  $region4: #{preact_bottleneck_forward.6} parent=0 // loop_header_branch
    %17 = sbr.rel (%p15) target = $region8
  $region5: #{preact_bottleneck_forward.6} parent=0 // loop_body
    %s19 = ssub.s32 %s14, 1
    %s20 = ssub.s32 %s14, 2
    %s21 = sadd.s32 %s14, 1
    %s22 = ssub.s32 %s14, %s21
    %p23 = scmp.eq.s32.totalorder %s22, 0
    %s25 = sadd.s32 %s24, 1
    %s26 = scalar_select %p23, %s24, %s25
    %p29 = pneg %p23
    %p30 = scmp.eq.s32.totalorder %s14, 1
    %p31 = por %p29, %p30
    %p32 = scmp.ne.s32.totalorder %s24, %s27
    %p33 = scmp.eq.s32.totalorder %s14, 0
    %p34 = por %p32, %p33
    %p35 = scmp.ne.s32.totalorder %s24, %s27
    %p36 = scmp.eq.s32.totalorder %s19, 1
    %p37 = por %p35, %p36
    %p38 = scmp.ne.s32.totalorder %s27, %s28
    %p39 = scmp.eq.s32.totalorder %s19, 0
    %p40 = por %p38, %p39
    %p41 = scmp.ne.s32.totalorder %s27, %s28
    %p42 = scmp.eq.s32.totalorder %s20, 1
    %p43 = por %p41, %p42
    %p45 = scmp.ne.s32.totalorder %s28, %s44
    %p46 = scmp.eq.s32.totalorder %s20, 0
    %p47 = por %p45, %p46
    %s49 = sadd.s32 %s48, 1
    %p52 = scmp.eq.s32.totalorder %s14, 1
    %p53 = scmp.ne.s32.totalorder %s48, %s50
    %p54 = scmp.eq.s32.totalorder %s14, 0
    %p55 = por %p53, %p54
    %p56 = scmp.ne.s32.totalorder %s48, %s50
    %p57 = scmp.eq.s32.totalorder %s19, 1
    %p58 = por %p56, %p57
    %p59 = scmp.ne.s32.totalorder %s50, %s51
    %p60 = scmp.eq.s32.totalorder %s19, 0
    %p61 = por %p59, %p60
    %p62 = scmp.ne.s32.totalorder %s50, %s51
    %p63 = scmp.eq.s32.totalorder %s20, 1
    %p64 = por %p62, %p63
    %p66 = scmp.ne.s32.totalorder %s51, %s65
    %p67 = scmp.eq.s32.totalorder %s20, 0
    %p68 = por %p66, %p67
    %s70 = sadd.s32 %s69, 1
    %p73 = scmp.eq.s32.totalorder %s14, 1
    %p74 = scmp.ne.s32.totalorder %s69, %s71
    %p75 = scmp.eq.s32.totalorder %s14, 0
    %p76 = por %p74, %p75
    %p77 = scmp.ne.s32.totalorder %s69, %s71
    %p78 = scmp.eq.s32.totalorder %s19, 1
    %p79 = por %p77, %p78
    %p80 = scmp.ne.s32.totalorder %s71, %s72
    %p81 = scmp.eq.s32.totalorder %s19, 0
    %p82 = por %p80, %p81
    %p83 = scmp.ne.s32.totalorder %s71, %s72
    %p84 = scmp.eq.s32.totalorder %s20, 1
    %p85 = por %p83, %p84
    %p87 = scmp.ne.s32.totalorder %s72, %s86
    %p88 = scmp.eq.s32.totalorder %s20, 0
    %p89 = por %p87, %p88
    %s91 = sadd.s32 %s90, 1
    %p94 = scmp.eq.s32.totalorder %s14, 1
    %p95 = scmp.ne.s32.totalorder %s90, %s92
    %p96 = scmp.eq.s32.totalorder %s14, 0
    %p97 = por %p95, %p96
    %p98 = scmp.ne.s32.totalorder %s90, %s92
    %p99 = scmp.eq.s32.totalorder %s19, 1
    %p100 = por %p98, %p99
    %p101 = scmp.ne.s32.totalorder %s92, %s93
    %p102 = scmp.eq.s32.totalorder %s19, 0
    %p103 = por %p101, %p102
    %p104 = scmp.ne.s32.totalorder %s92, %s93
    %p105 = scmp.eq.s32.totalorder %s20, 1
    %p106 = por %p104, %p105
    %p108 = scmp.ne.s32.totalorder %s93, %s107
    %p109 = scmp.eq.s32.totalorder %s20, 0
    %p110 = por %p108, %p109
    %s112 = sadd.s32 %s111, 1
    %p115 = scmp.eq.s32.totalorder %s14, 1
    %p116 = scmp.ne.s32.totalorder %s111, %s113
    %p117 = scmp.eq.s32.totalorder %s14, 0
    %p118 = por %p116, %p117
    %p119 = scmp.ne.s32.totalorder %s111, %s113
    %p120 = scmp.eq.s32.totalorder %s19, 1
    %p121 = por %p119, %p120
    %p122 = scmp.ne.s32.totalorder %s113, %s114
    %p123 = scmp.eq.s32.totalorder %s19, 0
    %p124 = por %p122, %p123
    %p125 = scmp.ne.s32.totalorder %s113, %s114
    %p126 = scmp.eq.s32.totalorder %s20, 1
    %p127 = por %p125, %p126
    %p129 = scmp.ne.s32.totalorder %s114, %s128
    %p130 = scmp.eq.s32.totalorder %s20, 0
    %p131 = por %p129, %p130
    %s132 = ssub.s32 %s14, %s21
    %p133 = scmp.eq.s32.totalorder %s132, 0
    %s135 = sadd.s32 %s134, 1
    %s136 = scalar_select %p133, %s134, %s135
    %p139 = pneg %p133
    %p140 = scmp.eq.s32.totalorder %s14, 1
    %p141 = por %p139, %p140
    %p142 = scmp.ne.s32.totalorder %s134, %s137
    %p143 = scmp.eq.s32.totalorder %s14, 0
    %p144 = por %p142, %p143
    %p145 = scmp.ne.s32.totalorder %s134, %s137
    %p146 = scmp.eq.s32.totalorder %s19, 1
    %p147 = por %p145, %p146
    %p148 = scmp.ne.s32.totalorder %s137, %s138
    %p149 = scmp.eq.s32.totalorder %s19, 0
    %p150 = por %p148, %p149
    %p151 = scmp.ne.s32.totalorder %s137, %s138
    %p152 = scmp.eq.s32.totalorder %s20, 1
    %p153 = por %p151, %p152
    %p155 = scmp.ne.s32.totalorder %s138, %s154
    %p156 = scmp.eq.s32.totalorder %s20, 0
    %p157 = por %p155, %p156
    %s158 = ssub.s32 %s14, %s21
    %p159 = scmp.eq.s32.totalorder %s158, 0
    %s161 = sadd.s32 %s160, 1
    %s162 = scalar_select %p159, %s160, %s161
    %p165 = pneg %p159
    %p166 = scmp.eq.s32.totalorder %s14, 1
    %p167 = por %p165, %p166
    %p168 = scmp.ne.s32.totalorder %s160, %s163
    %p169 = scmp.eq.s32.totalorder %s14, 0
    %p170 = por %p168, %p169
    %p171 = scmp.ne.s32.totalorder %s160, %s163
    %p172 = scmp.eq.s32.totalorder %s19, 1
    %p173 = por %p171, %p172
    %p174 = scmp.ne.s32.totalorder %s163, %s164
    %p175 = scmp.eq.s32.totalorder %s19, 0
    %p176 = por %p174, %p175
    %p177 = scmp.ne.s32.totalorder %s163, %s164
    %p178 = scmp.eq.s32.totalorder %s20, 1
    %p179 = por %p177, %p178
    %p181 = scmp.ne.s32.totalorder %s164, %s180
    %p182 = scmp.eq.s32.totalorder %s20, 0
    %p183 = por %p181, %p182
    %s184 = ssub.s32 %s14, %s21
    %p185 = scmp.eq.s32.totalorder %s184, 0
    %s187 = sadd.s32 %s186, 1
    %s188 = scalar_select %p185, %s186, %s187
    %p191 = pneg %p185
    %p192 = scmp.eq.s32.totalorder %s14, 1
    %p193 = por %p191, %p192
    %p194 = scmp.ne.s32.totalorder %s186, %s189
    %p195 = scmp.eq.s32.totalorder %s14, 0
    %p196 = por %p194, %p195
    %p197 = scmp.ne.s32.totalorder %s186, %s189
    %p198 = scmp.eq.s32.totalorder %s19, 1
    %p199 = por %p197, %p198
    %p200 = scmp.ne.s32.totalorder %s189, %s190
    %p201 = scmp.eq.s32.totalorder %s19, 0
    %p202 = por %p200, %p201
    %p203 = scmp.ne.s32.totalorder %s189, %s190
    %p204 = scmp.eq.s32.totalorder %s20, 1
    %p205 = por %p203, %p204
    %p207 = scmp.ne.s32.totalorder %s190, %s206
    %p208 = scmp.eq.s32.totalorder %s20, 0
    %p209 = por %p207, %p208
    %p210 = scmp.le.s32.totalorder 1, %s14
    %p211 = scmp.lt.s32.totalorder %s14, 3
    %p212 = pnand %p210, %p211
    %p213 = pneg %p212
    // Predicated region
    $region9: #{preact_bottleneck_forward.6} parent=5 // pred_check
      _
    $region10: #{preact_bottleneck_forward.6} parent=5 // pred_check_branch
      %215 = sbr.rel (%p212) target = $region12
    $region11: #{preact_bottleneck_forward.6} parent=5 // pred_region
      %s216 = ssub.s32 %s14, 1
      // Predicated region
      $region13: #{preact_bottleneck_forward.6} parent=11 // pred_check
        %p217 = pneg %p61
      $region14: #{preact_bottleneck_forward.6} parent=11 // pred_check_branch
        %219 = sbr.rel (%p217) target = $region16
      $region15: #{preact_bottleneck_forward.6} parent=11 // pred_region
        _
      $region16: #{preact_bottleneck_forward.6} parent=11 // pred_fallthru
        _
      // Predicated region
      $region17: #{preact_bottleneck_forward.6} parent=11 // pred_check
        %p220 = pneg %p82
      $region18: #{preact_bottleneck_forward.6} parent=11 // pred_check_branch
        %222 = sbr.rel (%p220) target = $region20
      $region19: #{preact_bottleneck_forward.6} parent=11 // pred_region
        _
      $region20: #{preact_bottleneck_forward.6} parent=11 // pred_fallthru
        _
      // Predicated region
      $region21: #{preact_bottleneck_forward.6} parent=11 // pred_check
        %p223 = pneg %p103
      $region22: #{preact_bottleneck_forward.6} parent=11 // pred_check_branch
        %225 = sbr.rel (%p223) target = $region24
      $region23: #{preact_bottleneck_forward.6} parent=11 // pred_region
        _
      $region24: #{preact_bottleneck_forward.6} parent=11 // pred_fallthru
        _
      // Predicated region
      $region25: #{preact_bottleneck_forward.6} parent=11 // pred_check
        %p226 = pneg %p124
      $region26: #{preact_bottleneck_forward.6} parent=11 // pred_check_branch
        %228 = sbr.rel (%p226) target = $region28
      $region27: #{preact_bottleneck_forward.6} parent=11 // pred_region
        _
      $region28: #{preact_bottleneck_forward.6} parent=11 // pred_fallthru
        _
    $region12: #{preact_bottleneck_forward.6} parent=5 // pred_fallthru
      _
    %p229 = scmp.lt.s32.totalorder %s14, 2
    // Predicated region
    $region29: #{preact_bottleneck_forward.6} parent=5 // pred_check
      %p230 = pneg %p229
    $region30: #{preact_bottleneck_forward.6} parent=5 // pred_check_branch
      %232 = sbr.rel (%p230) target = $region32
    $region31: #{preact_bottleneck_forward.6} parent=5 // pred_region
      // Predicated region
      $region33: #{preact_bottleneck_forward.6} parent=31 // pred_check
        %p233 = pneg %p34
      $region34: #{preact_bottleneck_forward.6} parent=31 // pred_check_branch
        %235 = sbr.rel (%p233) target = $region36
      $region35: #{preact_bottleneck_forward.6} parent=31 // pred_region
        %p236 = scmp.lt.s32.totalorder %s14, 1
        %s237 = scalar_select %p236, %s14, 1
        %s238 = smul.addr %s237, 32
        %s239 = smul.addr %s238, 8
        %s240 = scalar_lea.vmem %s0, %s239
      $region36: #{preact_bottleneck_forward.6} parent=31 // pred_fallthru
        _
    $region32: #{preact_bottleneck_forward.6} parent=5 // pred_fallthru
      _
    %p241 = scmp.le.s32.totalorder 1, %s14
    %p242 = scmp.lt.s32.totalorder %s14, 3
    %p243 = pnand %p241, %p242
    %p244 = pneg %p243
    // Predicated region
    $region37: #{preact_bottleneck_forward.6} parent=5 // pred_check
      _
    $region38: #{preact_bottleneck_forward.6} parent=5 // pred_check_branch
      %246 = sbr.rel (%p243) target = $region40
    $region39: #{preact_bottleneck_forward.6} parent=5 // pred_region
      %s247 = ssub.s32 %s14, 1
      %p248 = scmp.lt.s32.totalorder %s19, 1
      %s249 = scalar_select %p248, %s19, 1
      %s250 = smul.addr %s249, 32
      %s251 = smul.addr %s250, 8
      %s252 = scalar_lea.vmem %s0, %s251
      %p253 = pneg %p40
      %p254 = pneg %p37
      %p255 = pneg %p61
      %p256 = pneg %p58
      %p257 = pneg %p82
      %p258 = pneg %p79
      %p259 = pneg %p103
      %p260 = pneg %p100
      %p261 = pneg %p124
      %p262 = pneg %p121
      %p263 = pneg %p150
      %p264 = pneg %p147
      %p265 = scmp.lt.s32.totalorder %s19, 1
      %s266 = scalar_select %p265, %s19, 1
      %s267 = smul.addr %s266, 32
      %s268 = smul.addr %s267, 8
      %s269 = scalar_lea.vmem %s5, %s268
      %p270 = pneg %p176
      %p271 = pneg %p173
      %p272 = scmp.lt.s32.totalorder %s19, 1
      %s273 = scalar_select %p272, %s19, 1
      %s274 = scalar_lea.vmem %s6, %s273
      %p275 = pneg %p202
      %p276 = pneg %p199
      %p277 = scmp.lt.s32.totalorder %s19, 1
      %s278 = scalar_select %p277, %s19, 1
      %s279 = scalar_lea.vmem %s7, %s278
      %p280 = scmp.lt.s32.totalorder %s19, 1
      %s281 = scalar_select %p280, %s19, 1
      %s282 = smul.addr %s281, 32
      %s283 = smul.addr %s282, 8
      %s284 = scalar_lea.vmem %s0, %s283
      %p285 = scmp.lt.s32.totalorder %s19, 1
      %s286 = scalar_select %p285, %s19, 1
      %s287 = smul.addr %s286, 32
      %s288 = smul.addr %s287, 8
      %s289 = scalar_lea.vmem %s5, %s288
      %p290 = scmp.lt.s32.totalorder %s19, 1
      %s291 = scalar_select %p290, %s19, 1
      %s292 = scalar_lea.vmem %s6, %s291
      %p293 = scmp.lt.s32.totalorder %s19, 1
      %s294 = scalar_select %p293, %s19, 1
      %s295 = scalar_lea.vmem %s7, %s294
      %vm297 = vcmask 31744
      %298 = vst.msk [vmem:[#allocation2] sm:$0xff] %vm297, 0.0
      %299 = vst.msk [vmem:[#allocation2 + $0x8] sm:$0xff] %vm297, 0.0
      %300 = vst.msk [vmem:[#allocation2 + $0x10] sm:$0xff] %vm297, 0.0
      %301 = vst.msk [vmem:[#allocation2 + $0x118] sm:$0xff] %vm297, 0.0
      %302 = vst.msk [vmem:[#allocation2 + $0x120] sm:$0xff] %vm297, 0.0
      %303 = vst.msk [vmem:[#allocation2 + $0x128] sm:$0xff] %vm297, 0.0
      %v304 = vld [vmem:[%s284] sm:$0xff]
      %v305 = vld [vmem:[%s284 + $0x8] sm:$0xff]
      %v306 = vld [vmem:[%s284 + $0x10] sm:$0xff]
      %v307 = vld [vmem:[%s284 + $0x18] sm:$0xff]
      %v308 = vld [vmem:[%s284 + $0x20] sm:$0xff]
      %v309 = vld [vmem:[%s284 + $0x28] sm:$0xff]
      %v310 = vld [vmem:[%s284 + $0x30] sm:$0xff]
      %v311 = vld [vmem:[%s284 + $0x38] sm:$0xff]
      %v312 = vld [vmem:[%s284 + $0x40] sm:$0xff]
      %v313 = vld [vmem:[%s284 + $0x48] sm:$0xff]
      %v314 = vld [vmem:[%s284 + $0x50] sm:$0xff]
      %v315 = vld [vmem:[%s284 + $0x58] sm:$0xff]
      %v316 = vld [vmem:[%s284 + $0x60] sm:$0xff]
      %v317 = vld [vmem:[%s284 + $0x68] sm:$0xff]
      %v318 = vld [vmem:[%s284 + $0x70] sm:$0xff]
      %v319 = vld [vmem:[%s284 + $0x78] sm:$0xff]
      %v320 = vld [vmem:[%s284 + $0x80] sm:$0xff]
      %v321 = vld [vmem:[%s284 + $0x88] sm:$0xff]
      %v322 = vld [vmem:[%s284 + $0x90] sm:$0xff]
      %v323 = vld [vmem:[%s284 + $0x98] sm:$0xff]
      %v324 = vld [vmem:[%s284 + $0xa0] sm:$0xff]
      %v325 = vld [vmem:[%s284 + $0xa8] sm:$0xff]
      %v326 = vld [vmem:[%s284 + $0xb0] sm:$0xff]
      %v327 = vld [vmem:[%s284 + $0xb8] sm:$0xff]
      %v328 = vld [vmem:[%s284 + $0xc0] sm:$0xff]
      %v329 = vld [vmem:[%s284 + $0xc8] sm:$0xff]
      %v330 = vld [vmem:[%s284 + $0xd0] sm:$0xff]
      %v331 = vld [vmem:[%s284 + $0xd8] sm:$0xff]
      %v332 = vld [vmem:[%s284 + $0xe0] sm:$0xff]
      %v333 = vld [vmem:[%s284 + $0xe8] sm:$0xff]
      %v334 = vld [vmem:[%s284 + $0xf0] sm:$0xff]
      %v335 = vld [vmem:[%s284 + $0xf8] sm:$0xff]
      %v336 = vld [vmem:[%s1] sm:$0x1]
      %v338 = vlaneseq
      %v339 = vshrl.u32 %v338, 7
      %v340 = vsub.s32 0, %v339
      %v341 = vrot.slane %v336, %v340
      %v343 = vmul.f32 %v304, %v341
      %v344 = vmul.f32 %v305, %v341
      %v345 = vmul.f32 %v306, %v341
      %v346 = vmul.f32 %v307, %v341
      %v347 = vmul.f32 %v308, %v341
      %v348 = vmul.f32 %v309, %v341
      %v349 = vmul.f32 %v310, %v341
      %v350 = vmul.f32 %v311, %v341
      %v351 = vmul.f32 %v312, %v341
      %v352 = vmul.f32 %v313, %v341
      %v353 = vmul.f32 %v314, %v341
      %v354 = vmul.f32 %v315, %v341
      %v355 = vmul.f32 %v316, %v341
      %v356 = vmul.f32 %v317, %v341
      %v357 = vmul.f32 %v318, %v341
      %v358 = vmul.f32 %v319, %v341
      %v359 = vmul.f32 %v320, %v341
      %v360 = vmul.f32 %v321, %v341
      %v361 = vmul.f32 %v322, %v341
      %v362 = vmul.f32 %v323, %v341
      %v363 = vmul.f32 %v324, %v341
      %v364 = vmul.f32 %v325, %v341
      %v365 = vmul.f32 %v326, %v341
      %v366 = vmul.f32 %v327, %v341
      %v367 = vmul.f32 %v328, %v341
      %v368 = vmul.f32 %v329, %v341
      %v369 = vmul.f32 %v330, %v341
      %v370 = vmul.f32 %v331, %v341
      %v371 = vmul.f32 %v332, %v341
      %v372 = vmul.f32 %v333, %v341
      %v373 = vmul.f32 %v334, %v341
      %v374 = vmul.f32 %v335, %v341
      %v375 = vld [vmem:[%s2] sm:$0x1]
      %v377 = vlaneseq
      %v378 = vshrl.u32 %v377, 7
      %v379 = vsub.s32 0, %v378
      %v380 = vrot.slane %v375, %v379
      %v382 = vadd.f32 %v343, %v380
      %v383 = vadd.f32 %v344, %v380
      %v384 = vadd.f32 %v345, %v380
      %v385 = vadd.f32 %v346, %v380
      %v386 = vadd.f32 %v347, %v380
      %v387 = vadd.f32 %v348, %v380
      %v388 = vadd.f32 %v349, %v380
      %v389 = vadd.f32 %v350, %v380
      %v390 = vadd.f32 %v351, %v380
      %v391 = vadd.f32 %v352, %v380
      %v392 = vadd.f32 %v353, %v380
      %v393 = vadd.f32 %v354, %v380
      %v394 = vadd.f32 %v355, %v380
      %v395 = vadd.f32 %v356, %v380
      %v396 = vadd.f32 %v357, %v380
      %v397 = vadd.f32 %v358, %v380
      %v398 = vadd.f32 %v359, %v380
      %v399 = vadd.f32 %v360, %v380
      %v400 = vadd.f32 %v361, %v380
      %v401 = vadd.f32 %v362, %v380
      %v402 = vadd.f32 %v363, %v380
      %v403 = vadd.f32 %v364, %v380
      %v404 = vadd.f32 %v365, %v380
      %v405 = vadd.f32 %v366, %v380
      %v406 = vadd.f32 %v367, %v380
      %v407 = vadd.f32 %v368, %v380
      %v408 = vadd.f32 %v369, %v380
      %v409 = vadd.f32 %v370, %v380
      %v410 = vadd.f32 %v371, %v380
      %v411 = vadd.f32 %v372, %v380
      %v412 = vadd.f32 %v373, %v380
      %v413 = vadd.f32 %v374, %v380
      %v414 = vmax.f32 %v382, 0.0
      %v415 = vmax.f32 %v383, 0.0
      %v416 = vmax.f32 %v384, 0.0
      %v417 = vmax.f32 %v385, 0.0
      %v418 = vmax.f32 %v386, 0.0
      %v419 = vmax.f32 %v387, 0.0
      %v420 = vmax.f32 %v388, 0.0
      %v421 = vmax.f32 %v389, 0.0
      %v422 = vmax.f32 %v390, 0.0
      %v423 = vmax.f32 %v391, 0.0
      %v424 = vmax.f32 %v392, 0.0
      %v425 = vmax.f32 %v393, 0.0
      %v426 = vmax.f32 %v394, 0.0
      %v427 = vmax.f32 %v395, 0.0
      %v428 = vmax.f32 %v396, 0.0
      %v429 = vmax.f32 %v397, 0.0
      %v430 = vmax.f32 %v398, 0.0
      %v431 = vmax.f32 %v399, 0.0
      %v432 = vmax.f32 %v400, 0.0
      %v433 = vmax.f32 %v401, 0.0
      %v434 = vmax.f32 %v402, 0.0
      %v435 = vmax.f32 %v403, 0.0
      %v436 = vmax.f32 %v404, 0.0
      %v437 = vmax.f32 %v405, 0.0
      %v438 = vmax.f32 %v406, 0.0
      %v439 = vmax.f32 %v407, 0.0
      %v440 = vmax.f32 %v408, 0.0
      %v441 = vmax.f32 %v409, 0.0
      %v442 = vmax.f32 %v410, 0.0
      %v443 = vmax.f32 %v411, 0.0
      %v444 = vmax.f32 %v412, 0.0
      %v445 = vmax.f32 %v413, 0.0
      %446 = vst.msk [vmem:[#allocation2 + $0x18] sm:$0xff] %vm297, %v414
      %447 = vst.msk [vmem:[#allocation2 + $0x20] sm:$0xff] %vm297, %v415
      %448 = vst.msk [vmem:[#allocation2 + $0x28] sm:$0xff] %vm297, %v416
      %449 = vst.msk [vmem:[#allocation2 + $0x30] sm:$0xff] %vm297, %v417
      %450 = vst.msk [vmem:[#allocation2 + $0x38] sm:$0xff] %vm297, %v418
      %451 = vst.msk [vmem:[#allocation2 + $0x40] sm:$0xff] %vm297, %v419
      %452 = vst.msk [vmem:[#allocation2 + $0x48] sm:$0xff] %vm297, %v420
      %453 = vst.msk [vmem:[#allocation2 + $0x50] sm:$0xff] %vm297, %v421
      %454 = vst.msk [vmem:[#allocation2 + $0x58] sm:$0xff] %vm297, %v422
      %455 = vst.msk [vmem:[#allocation2 + $0x60] sm:$0xff] %vm297, %v423
      %456 = vst.msk [vmem:[#allocation2 + $0x68] sm:$0xff] %vm297, %v424
      %457 = vst.msk [vmem:[#allocation2 + $0x70] sm:$0xff] %vm297, %v425
      %458 = vst.msk [vmem:[#allocation2 + $0x78] sm:$0xff] %vm297, %v426
      %459 = vst.msk [vmem:[#allocation2 + $0x80] sm:$0xff] %vm297, %v427
      %460 = vst.msk [vmem:[#allocation2 + $0x88] sm:$0xff] %vm297, %v428
      %461 = vst.msk [vmem:[#allocation2 + $0x90] sm:$0xff] %vm297, %v429
      %462 = vst.msk [vmem:[#allocation2 + $0x98] sm:$0xff] %vm297, %v430
      %463 = vst.msk [vmem:[#allocation2 + $0xa0] sm:$0xff] %vm297, %v431
      %464 = vst.msk [vmem:[#allocation2 + $0xa8] sm:$0xff] %vm297, %v432
      %465 = vst.msk [vmem:[#allocation2 + $0xb0] sm:$0xff] %vm297, %v433
      %466 = vst.msk [vmem:[#allocation2 + $0xb8] sm:$0xff] %vm297, %v434
      %467 = vst.msk [vmem:[#allocation2 + $0xc0] sm:$0xff] %vm297, %v435
      %468 = vst.msk [vmem:[#allocation2 + $0xc8] sm:$0xff] %vm297, %v436
      %469 = vst.msk [vmem:[#allocation2 + $0xd0] sm:$0xff] %vm297, %v437
      %470 = vst.msk [vmem:[#allocation2 + $0xd8] sm:$0xff] %vm297, %v438
      %471 = vst.msk [vmem:[#allocation2 + $0xe0] sm:$0xff] %vm297, %v439
      %472 = vst.msk [vmem:[#allocation2 + $0xe8] sm:$0xff] %vm297, %v440
      %473 = vst.msk [vmem:[#allocation2 + $0xf0] sm:$0xff] %vm297, %v441
      %474 = vst.msk [vmem:[#allocation2 + $0xf8] sm:$0xff] %vm297, %v442
      %475 = vst.msk [vmem:[#allocation2 + $0x100] sm:$0xff] %vm297, %v443
      %476 = vst.msk [vmem:[#allocation2 + $0x108] sm:$0xff] %vm297, %v444
      %477 = vst.msk [vmem:[#allocation2 + $0x110] sm:$0xff] %vm297, %v445
      %v478 = vld [vmem:[%s4] sm:$0xff]
      %v479 = vld [vmem:[%s4 + $0x8] sm:$0xff]
      %v480 = vld [vmem:[%s4 + $0x10] sm:$0xff]
      %v481 = vld [vmem:[%s4 + $0x18] sm:$0xff]
      %v482 = vld [vmem:[%s4 + $0x20] sm:$0xff]
      %v483 = vld [vmem:[%s4 + $0x28] sm:$0xff]
      %v484 = vld [vmem:[%s4 + $0x30] sm:$0xff]
      %v485 = vld [vmem:[%s4 + $0x38] sm:$0xff]
      %v486 = vld [vmem:[%s4 + $0x40] sm:$0xff]
      %v487 = vld [vmem:[%s4 + $0x48] sm:$0xff]
      %v488 = vld [vmem:[%s4 + $0x50] sm:$0xff]
      %v489 = vld [vmem:[%s4 + $0x58] sm:$0xff]
      %v490 = vld [vmem:[%s4 + $0x60] sm:$0xff]
      %v491 = vld [vmem:[%s4 + $0x68] sm:$0xff]
      %v492 = vld [vmem:[%s4 + $0x70] sm:$0xff]
      %v493 = vld [vmem:[%s4 + $0x78] sm:$0xff]
      %v494 = vld [vmem:[%s4 + $0x80] sm:$0xff]
      %v495 = vld [vmem:[%s4 + $0x88] sm:$0xff]
      %v496 = vld [vmem:[%s4 + $0x90] sm:$0xff]
      %v497 = vld [vmem:[%s4 + $0x98] sm:$0xff]
      %v498 = vld [vmem:[%s4 + $0xa0] sm:$0xff]
      %v499 = vld [vmem:[%s4 + $0xa8] sm:$0xff]
      %v500 = vld [vmem:[%s4 + $0xb0] sm:$0xff]
      %v501 = vld [vmem:[%s4 + $0xb8] sm:$0xff]
      %v502 = vld [vmem:[%s4 + $0xc0] sm:$0xff]
      %v503 = vld [vmem:[%s4 + $0xc8] sm:$0xff]
      %v504 = vld [vmem:[%s4 + $0xd0] sm:$0xff]
      %v505 = vld [vmem:[%s4 + $0xd8] sm:$0xff]
      %v506 = vld [vmem:[%s4 + $0xe0] sm:$0xff]
      %v507 = vld [vmem:[%s4 + $0xe8] sm:$0xff]
      %v508 = vld [vmem:[%s4 + $0xf0] sm:$0xff]
      %v509 = vld [vmem:[%s4 + $0xf8] sm:$0xff]
      %s510 = scalar_lea.vmem %s4, 256
      %v511 = vld [vmem:[%s510] sm:$0xff]
      %v512 = vld [vmem:[%s510 + $0x8] sm:$0xff]
      %v513 = vld [vmem:[%s510 + $0x10] sm:$0xff]
      %v514 = vld [vmem:[%s510 + $0x18] sm:$0xff]
      %v515 = vld [vmem:[%s510 + $0x20] sm:$0xff]
      %v516 = vld [vmem:[%s510 + $0x28] sm:$0xff]
      %v517 = vld [vmem:[%s510 + $0x30] sm:$0xff]
      %v518 = vld [vmem:[%s510 + $0x38] sm:$0xff]
      %v519 = vld [vmem:[%s510 + $0x40] sm:$0xff]
      %v520 = vld [vmem:[%s510 + $0x48] sm:$0xff]
      %v521 = vld [vmem:[%s510 + $0x50] sm:$0xff]
      %v522 = vld [vmem:[%s510 + $0x58] sm:$0xff]
      %v523 = vld [vmem:[%s510 + $0x60] sm:$0xff]
      %v524 = vld [vmem:[%s510 + $0x68] sm:$0xff]
      %v525 = vld [vmem:[%s510 + $0x70] sm:$0xff]
      %v526 = vld [vmem:[%s510 + $0x78] sm:$0xff]
      %v527 = vld [vmem:[%s510 + $0x80] sm:$0xff]
      %v528 = vld [vmem:[%s510 + $0x88] sm:$0xff]
      %v529 = vld [vmem:[%s510 + $0x90] sm:$0xff]
      %v530 = vld [vmem:[%s510 + $0x98] sm:$0xff]
      %v531 = vld [vmem:[%s510 + $0xa0] sm:$0xff]
      %v532 = vld [vmem:[%s510 + $0xa8] sm:$0xff]
      %v533 = vld [vmem:[%s510 + $0xb0] sm:$0xff]
      %v534 = vld [vmem:[%s510 + $0xb8] sm:$0xff]
      %v535 = vld [vmem:[%s510 + $0xc0] sm:$0xff]
      %v536 = vld [vmem:[%s510 + $0xc8] sm:$0xff]
      %v537 = vld [vmem:[%s510 + $0xd0] sm:$0xff]
      %v538 = vld [vmem:[%s510 + $0xd8] sm:$0xff]
      %v539 = vld [vmem:[%s510 + $0xe0] sm:$0xff]
      %v540 = vld [vmem:[%s510 + $0xe8] sm:$0xff]
      %v541 = vld [vmem:[%s510 + $0xf0] sm:$0xff]
      %v542 = vld [vmem:[%s510 + $0xf8] sm:$0xff]
      %v543 = vld [vmem:[#allocation2 + $0x7] sm:$0xff]
      %v544 = vld [vmem:[#allocation2 + $0xf] sm:$0xff]
      %v545 = vld [vmem:[#allocation2 + $0x17] sm:$0xff]
      %v546 = vld [vmem:[#allocation2 + $0x1f] sm:$0xff]
      %v547 = vld [vmem:[#allocation2 + $0x27] sm:$0xff]
      %v548 = vld [vmem:[#allocation2 + $0x2f] sm:$0xff]
      %v549 = vld [vmem:[#allocation2 + $0x37] sm:$0xff]
      %v550 = vld [vmem:[#allocation2 + $0x3f] sm:$0xff]
      %v551 = vld [vmem:[#allocation2 + $0x47] sm:$0xff]
      %v552 = vld [vmem:[#allocation2 + $0x4f] sm:$0xff]
      %v553 = vld [vmem:[#allocation2 + $0x57] sm:$0xff]
      %v554 = vld [vmem:[#allocation2 + $0x5f] sm:$0xff]
      %v555 = vld [vmem:[#allocation2 + $0x67] sm:$0xff]
      %v556 = vld [vmem:[#allocation2 + $0x6f] sm:$0xff]
      %v557 = vld [vmem:[#allocation2 + $0x77] sm:$0xff]
      %v558 = vld [vmem:[#allocation2 + $0x7f] sm:$0xff]
      %v559 = vld [vmem:[#allocation2 + $0x87] sm:$0xff]
      %v560 = vld [vmem:[#allocation2 + $0x8f] sm:$0xff]
      %v561 = vld [vmem:[#allocation2 + $0x97] sm:$0xff]
      %v562 = vld [vmem:[#allocation2 + $0x9f] sm:$0xff]
      %v563 = vld [vmem:[#allocation2 + $0xa7] sm:$0xff]
      %v564 = vld [vmem:[#allocation2 + $0xaf] sm:$0xff]
      %v565 = vld [vmem:[#allocation2 + $0xb7] sm:$0xff]
      %v566 = vld [vmem:[#allocation2 + $0xbf] sm:$0xff]
      %v567 = vld [vmem:[#allocation2 + $0xc7] sm:$0xff]
      %v568 = vld [vmem:[#allocation2 + $0xcf] sm:$0xff]
      %v569 = vld [vmem:[#allocation2 + $0xd7] sm:$0xff]
      %v570 = vld [vmem:[#allocation2 + $0xdf] sm:$0xff]
      %v571 = vld [vmem:[#allocation2 + $0xe7] sm:$0xff]
      %v572 = vld [vmem:[#allocation2 + $0xef] sm:$0xff]
      %v573 = vld [vmem:[#allocation2 + $0xf7] sm:$0xff]
      %v574 = vld [vmem:[#allocation2 + $0xff] sm:$0xff]
      %576 = vset.pattern.permute.xlu0 0
      %577 = vperm.xlu0 %576, %v478
      %v578 = vpop.permute.xlu0 %577
      %581 = vset.pattern.permute.xlu0 0
      %582 = vperm.xlu0 %581, %v479
      %v583 = vpop.permute.xlu0 %582
      %586 = vset.pattern.permute.xlu0 0
      %587 = vperm.xlu0 %586, %v480
      %v588 = vpop.permute.xlu0 %587
      %591 = vset.pattern.permute.xlu0 0
      %592 = vperm.xlu0 %591, %v481
      %v593 = vpop.permute.xlu0 %592
      %596 = vset.pattern.permute.xlu0 0
      %597 = vperm.xlu0 %596, %v482
      %v598 = vpop.permute.xlu0 %597
      %601 = vset.pattern.permute.xlu0 0
      %602 = vperm.xlu0 %601, %v483
      %v603 = vpop.permute.xlu0 %602
      %606 = vset.pattern.permute.xlu0 0
      %607 = vperm.xlu0 %606, %v484
      %v608 = vpop.permute.xlu0 %607
      %611 = vset.pattern.permute.xlu0 0
      %612 = vperm.xlu0 %611, %v485
      %v613 = vpop.permute.xlu0 %612
      %616 = vset.pattern.permute.xlu0 0
      %617 = vperm.xlu0 %616, %v486
      %v618 = vpop.permute.xlu0 %617
      %621 = vset.pattern.permute.xlu0 0
      %622 = vperm.xlu0 %621, %v487
      %v623 = vpop.permute.xlu0 %622
      %626 = vset.pattern.permute.xlu0 0
      %627 = vperm.xlu0 %626, %v488
      %v628 = vpop.permute.xlu0 %627
      %631 = vset.pattern.permute.xlu0 0
      %632 = vperm.xlu0 %631, %v489
      %v633 = vpop.permute.xlu0 %632
      %636 = vset.pattern.permute.xlu0 0
      %637 = vperm.xlu0 %636, %v490
      %v638 = vpop.permute.xlu0 %637
      %641 = vset.pattern.permute.xlu0 0
      %642 = vperm.xlu0 %641, %v491
      %v643 = vpop.permute.xlu0 %642
      %646 = vset.pattern.permute.xlu0 0
      %647 = vperm.xlu0 %646, %v492
      %v648 = vpop.permute.xlu0 %647
      %651 = vset.pattern.permute.xlu0 0
      %652 = vperm.xlu0 %651, %v493
      %v653 = vpop.permute.xlu0 %652
      %656 = vset.pattern.permute.xlu0 0
      %657 = vperm.xlu0 %656, %v494
      %v658 = vpop.permute.xlu0 %657
      %661 = vset.pattern.permute.xlu0 0
      %662 = vperm.xlu0 %661, %v495
      %v663 = vpop.permute.xlu0 %662
      %666 = vset.pattern.permute.xlu0 0
      %667 = vperm.xlu0 %666, %v496
      %v668 = vpop.permute.xlu0 %667
      %671 = vset.pattern.permute.xlu0 0
      %672 = vperm.xlu0 %671, %v497
      %v673 = vpop.permute.xlu0 %672
      %676 = vset.pattern.permute.xlu0 0
      %677 = vperm.xlu0 %676, %v498
      %v678 = vpop.permute.xlu0 %677
      %681 = vset.pattern.permute.xlu0 0
      %682 = vperm.xlu0 %681, %v499
      %v683 = vpop.permute.xlu0 %682
      %686 = vset.pattern.permute.xlu0 0
      %687 = vperm.xlu0 %686, %v500
      %v688 = vpop.permute.xlu0 %687
      %691 = vset.pattern.permute.xlu0 0
      %692 = vperm.xlu0 %691, %v501
      %v693 = vpop.permute.xlu0 %692
      %696 = vset.pattern.permute.xlu0 0
      %697 = vperm.xlu0 %696, %v502
      %v698 = vpop.permute.xlu0 %697
      %701 = vset.pattern.permute.xlu0 0
      %702 = vperm.xlu0 %701, %v503
      %v703 = vpop.permute.xlu0 %702
      %706 = vset.pattern.permute.xlu0 0
      %707 = vperm.xlu0 %706, %v504
      %v708 = vpop.permute.xlu0 %707
      %711 = vset.pattern.permute.xlu0 0
      %712 = vperm.xlu0 %711, %v505
      %v713 = vpop.permute.xlu0 %712
      %716 = vset.pattern.permute.xlu0 0
      %717 = vperm.xlu0 %716, %v506
      %v718 = vpop.permute.xlu0 %717
      %721 = vset.pattern.permute.xlu0 0
      %722 = vperm.xlu0 %721, %v507
      %v723 = vpop.permute.xlu0 %722
      %726 = vset.pattern.permute.xlu0 0
      %727 = vperm.xlu0 %726, %v508
      %v728 = vpop.permute.xlu0 %727
      %731 = vset.pattern.permute.xlu0 0
      %732 = vperm.xlu0 %731, %v509
      %v733 = vpop.permute.xlu0 %732
      %v735 = vmul.f32 %v543, %v578
      %v736 = vmul.f32 %v544, %v583
      %v737 = vmul.f32 %v545, %v588
      %v738 = vmul.f32 %v546, %v593
      %v739 = vmul.f32 %v547, %v598
      %v740 = vmul.f32 %v548, %v603
      %v741 = vmul.f32 %v549, %v608
      %v742 = vmul.f32 %v550, %v613
      %v743 = vmul.f32 %v551, %v618
      %v744 = vmul.f32 %v552, %v623
      %v745 = vmul.f32 %v553, %v628
      %v746 = vmul.f32 %v554, %v633
      %v747 = vmul.f32 %v555, %v638
      %v748 = vmul.f32 %v556, %v643
      %v749 = vmul.f32 %v557, %v648
      %v750 = vmul.f32 %v558, %v653
      %v751 = vmul.f32 %v559, %v658
      %v752 = vmul.f32 %v560, %v663
      %v753 = vmul.f32 %v561, %v668
      %v754 = vmul.f32 %v562, %v673
      %v755 = vmul.f32 %v563, %v678
      %v756 = vmul.f32 %v564, %v683
      %v757 = vmul.f32 %v565, %v688
      %v758 = vmul.f32 %v566, %v693
      %v759 = vmul.f32 %v567, %v698
      %v760 = vmul.f32 %v568, %v703
      %v761 = vmul.f32 %v569, %v708
      %v762 = vmul.f32 %v570, %v713
      %v763 = vmul.f32 %v571, %v718
      %v764 = vmul.f32 %v572, %v723
      %v765 = vmul.f32 %v573, %v728
      %v766 = vmul.f32 %v574, %v733
      %v767 = vpack.c.bf16 %v736, %v735
      %v768 = vpack.c.bf16 %v738, %v737
      %v769 = vpack.c.bf16 %v740, %v739
      %v770 = vpack.c.bf16 %v742, %v741
      %v771 = vpack.c.bf16 %v744, %v743
      %v772 = vpack.c.bf16 %v746, %v745
      %v773 = vpack.c.bf16 %v748, %v747
      %v774 = vpack.c.bf16 %v750, %v749
      %v775 = vpack.c.bf16 %v752, %v751
      %v776 = vpack.c.bf16 %v754, %v753
      %v777 = vpack.c.bf16 %v756, %v755
      %v778 = vpack.c.bf16 %v758, %v757
      %v779 = vpack.c.bf16 %v760, %v759
      %v780 = vpack.c.bf16 %v762, %v761
      %v781 = vpack.c.bf16 %v764, %v763
      %v782 = vpack.c.bf16 %v766, %v765
      %783 = vst.msk [vmem:[#allocation3] sm:$0xff] %vm297, %v767
      %784 = vst.msk [vmem:[#allocation3 + $0x8] sm:$0xff] %vm297, %v768
      %785 = vst.msk [vmem:[#allocation3 + $0x10] sm:$0xff] %vm297, %v769
      %786 = vst.msk [vmem:[#allocation3 + $0x18] sm:$0xff] %vm297, %v770
      %787 = vst.msk [vmem:[#allocation3 + $0x20] sm:$0xff] %vm297, %v771
      %788 = vst.msk [vmem:[#allocation3 + $0x28] sm:$0xff] %vm297, %v772
      %789 = vst.msk [vmem:[#allocation3 + $0x30] sm:$0xff] %vm297, %v773
      %790 = vst.msk [vmem:[#allocation3 + $0x38] sm:$0xff] %vm297, %v774
      %791 = vst.msk [vmem:[#allocation3 + $0x40] sm:$0xff] %vm297, %v775
      %792 = vst.msk [vmem:[#allocation3 + $0x48] sm:$0xff] %vm297, %v776
      %793 = vst.msk [vmem:[#allocation3 + $0x50] sm:$0xff] %vm297, %v777
      %794 = vst.msk [vmem:[#allocation3 + $0x58] sm:$0xff] %vm297, %v778
      %795 = vst.msk [vmem:[#allocation3 + $0x60] sm:$0xff] %vm297, %v779
      %796 = vst.msk [vmem:[#allocation3 + $0x68] sm:$0xff] %vm297, %v780
      %797 = vst.msk [vmem:[#allocation3 + $0x70] sm:$0xff] %vm297, %v781
      %798 = vst.msk [vmem:[#allocation3 + $0x78] sm:$0xff] %vm297, %v782
      %v799 = vld [vmem:[#allocation2 + $0x8] sm:$0xff]
      %v800 = vld [vmem:[#allocation2 + $0x10] sm:$0xff]
      %v801 = vld [vmem:[#allocation2 + $0x18] sm:$0xff]
      %v802 = vld [vmem:[#allocation2 + $0x20] sm:$0xff]
      %v803 = vld [vmem:[#allocation2 + $0x28] sm:$0xff]
      %v804 = vld [vmem:[#allocation2 + $0x30] sm:$0xff]
      %v805 = vld [vmem:[#allocation2 + $0x38] sm:$0xff]
      %v806 = vld [vmem:[#allocation2 + $0x40] sm:$0xff]
      %v807 = vld [vmem:[#allocation2 + $0x48] sm:$0xff]
      %v808 = vld [vmem:[#allocation2 + $0x50] sm:$0xff]
      %v809 = vld [vmem:[#allocation2 + $0x58] sm:$0xff]
      %v810 = vld [vmem:[#allocation2 + $0x60] sm:$0xff]
      %v811 = vld [vmem:[#allocation2 + $0x68] sm:$0xff]
      %v812 = vld [vmem:[#allocation2 + $0x70] sm:$0xff]
      %v813 = vld [vmem:[#allocation2 + $0x78] sm:$0xff]
      %v814 = vld [vmem:[#allocation2 + $0x80] sm:$0xff]
      %v815 = vld [vmem:[#allocation2 + $0x88] sm:$0xff]
      %v816 = vld [vmem:[#allocation2 + $0x90] sm:$0xff]
      %v817 = vld [vmem:[#allocation2 + $0x98] sm:$0xff]
      %v818 = vld [vmem:[#allocation2 + $0xa0] sm:$0xff]
      %v819 = vld [vmem:[#allocation2 + $0xa8] sm:$0xff]
      %v820 = vld [vmem:[#allocation2 + $0xb0] sm:$0xff]
      %v821 = vld [vmem:[#allocation2 + $0xb8] sm:$0xff]
      %v822 = vld [vmem:[#allocation2 + $0xc0] sm:$0xff]
      %v823 = vld [vmem:[#allocation2 + $0xc8] sm:$0xff]
      %v824 = vld [vmem:[#allocation2 + $0xd0] sm:$0xff]
      %v825 = vld [vmem:[#allocation2 + $0xd8] sm:$0xff]
      %v826 = vld [vmem:[#allocation2 + $0xe0] sm:$0xff]
      %v827 = vld [vmem:[#allocation2 + $0xe8] sm:$0xff]
      %v828 = vld [vmem:[#allocation2 + $0xf0] sm:$0xff]
      %v829 = vld [vmem:[#allocation2 + $0xf8] sm:$0xff]
      %v830 = vld [vmem:[#allocation2 + $0x100] sm:$0xff]
      %v831 = vpack.c.bf16 %v800, %v799
      %v832 = vpack.c.bf16 %v802, %v801
      %v833 = vpack.c.bf16 %v804, %v803
      %v834 = vpack.c.bf16 %v806, %v805
      %v835 = vpack.c.bf16 %v808, %v807
      %v836 = vpack.c.bf16 %v810, %v809
      %v837 = vpack.c.bf16 %v812, %v811
      %v838 = vpack.c.bf16 %v814, %v813
      %v839 = vpack.c.bf16 %v816, %v815
      %v840 = vpack.c.bf16 %v818, %v817
      %v841 = vpack.c.bf16 %v820, %v819
      %v842 = vpack.c.bf16 %v822, %v821
      %v843 = vpack.c.bf16 %v824, %v823
      %v844 = vpack.c.bf16 %v826, %v825
      %v845 = vpack.c.bf16 %v828, %v827
      %v846 = vpack.c.bf16 %v830, %v829
      %863 = vrot.lane.b32.xlu0 %v831, 4
      %v864 = vpop.permute.xlu0 %863
      %865 = vrot.lane.b32.xlu0 %v832, 4
      %v866 = vpop.permute.xlu0 %865
      %867 = vrot.lane.b32.xlu0 %v833, 4
      %v868 = vpop.permute.xlu0 %867
      %869 = vrot.lane.b32.xlu0 %v834, 4
      %v870 = vpop.permute.xlu0 %869
      %871 = vrot.lane.b32.xlu0 %v835, 4
      %v872 = vpop.permute.xlu0 %871
      %873 = vrot.lane.b32.xlu0 %v836, 4
      %v874 = vpop.permute.xlu0 %873
      %875 = vrot.lane.b32.xlu0 %v837, 4
      %v876 = vpop.permute.xlu0 %875
      %877 = vrot.lane.b32.xlu0 %v838, 4
      %v878 = vpop.permute.xlu0 %877
      %879 = vrot.lane.b32.xlu0 %v839, 4
      %v880 = vpop.permute.xlu0 %879
      %881 = vrot.lane.b32.xlu0 %v840, 4
      %v882 = vpop.permute.xlu0 %881
      %883 = vrot.lane.b32.xlu0 %v841, 4
      %v884 = vpop.permute.xlu0 %883
      %885 = vrot.lane.b32.xlu0 %v842, 4
      %v886 = vpop.permute.xlu0 %885
      %887 = vrot.lane.b32.xlu0 %v843, 4
      %v888 = vpop.permute.xlu0 %887
      %889 = vrot.lane.b32.xlu0 %v844, 4
      %v890 = vpop.permute.xlu0 %889
      %891 = vrot.lane.b32.xlu0 %v845, 4
      %v892 = vpop.permute.xlu0 %891
      %893 = vrot.lane.b32.xlu0 %v846, 4
      %v894 = vpop.permute.xlu0 %893
      %vm911 = vcmask 64544
      %912 = vst.msk [vmem:[#allocation3] sm:$0xff] %vm911, %v864
      %913 = vst.msk [vmem:[#allocation3 + $0x8] sm:$0xff] %vm911, %v866
      %914 = vst.msk [vmem:[#allocation3 + $0x10] sm:$0xff] %vm911, %v868
      %915 = vst.msk [vmem:[#allocation3 + $0x18] sm:$0xff] %vm911, %v870
      %916 = vst.msk [vmem:[#allocation3 + $0x20] sm:$0xff] %vm911, %v872
      %917 = vst.msk [vmem:[#allocation3 + $0x28] sm:$0xff] %vm911, %v874
      %918 = vst.msk [vmem:[#allocation3 + $0x30] sm:$0xff] %vm911, %v876
      %919 = vst.msk [vmem:[#allocation3 + $0x38] sm:$0xff] %vm911, %v878
      %920 = vst.msk [vmem:[#allocation3 + $0x40] sm:$0xff] %vm911, %v880
      %921 = vst.msk [vmem:[#allocation3 + $0x48] sm:$0xff] %vm911, %v882
      %922 = vst.msk [vmem:[#allocation3 + $0x50] sm:$0xff] %vm911, %v884
      %923 = vst.msk [vmem:[#allocation3 + $0x58] sm:$0xff] %vm911, %v886
      %924 = vst.msk [vmem:[#allocation3 + $0x60] sm:$0xff] %vm911, %v888
      %925 = vst.msk [vmem:[#allocation3 + $0x68] sm:$0xff] %vm911, %v890
      %926 = vst.msk [vmem:[#allocation3 + $0x70] sm:$0xff] %vm911, %v892
      %927 = vst.msk [vmem:[#allocation3 + $0x78] sm:$0xff] %vm911, %v894
      %v928 = vld [vmem:[#allocation2 + $0x9] sm:$0xff]
      %v929 = vld [vmem:[#allocation2 + $0x11] sm:$0xff]
      %v930 = vld [vmem:[#allocation2 + $0x19] sm:$0xff]
      %v931 = vld [vmem:[#allocation2 + $0x21] sm:$0xff]
      %v932 = vld [vmem:[#allocation2 + $0x29] sm:$0xff]
      %v933 = vld [vmem:[#allocation2 + $0x31] sm:$0xff]
      %v934 = vld [vmem:[#allocation2 + $0x39] sm:$0xff]
      %v935 = vld [vmem:[#allocation2 + $0x41] sm:$0xff]
      %v936 = vld [vmem:[#allocation2 + $0x49] sm:$0xff]
      %v937 = vld [vmem:[#allocation2 + $0x51] sm:$0xff]
      %v938 = vld [vmem:[#allocation2 + $0x59] sm:$0xff]
      %v939 = vld [vmem:[#allocation2 + $0x61] sm:$0xff]
      %v940 = vld [vmem:[#allocation2 + $0x69] sm:$0xff]
      %v941 = vld [vmem:[#allocation2 + $0x71] sm:$0xff]
      %v942 = vld [vmem:[#allocation2 + $0x79] sm:$0xff]
      %v943 = vld [vmem:[#allocation2 + $0x81] sm:$0xff]
      %v944 = vld [vmem:[#allocation2 + $0x89] sm:$0xff]
      %v945 = vld [vmem:[#allocation2 + $0x91] sm:$0xff]
      %v946 = vld [vmem:[#allocation2 + $0x99] sm:$0xff]
      %v947 = vld [vmem:[#allocation2 + $0xa1] sm:$0xff]
      %v948 = vld [vmem:[#allocation2 + $0xa9] sm:$0xff]
      %v949 = vld [vmem:[#allocation2 + $0xb1] sm:$0xff]
      %v950 = vld [vmem:[#allocation2 + $0xb9] sm:$0xff]
      %v951 = vld [vmem:[#allocation2 + $0xc1] sm:$0xff]
      %v952 = vld [vmem:[#allocation2 + $0xc9] sm:$0xff]
      %v953 = vld [vmem:[#allocation2 + $0xd1] sm:$0xff]
      %v954 = vld [vmem:[#allocation2 + $0xd9] sm:$0xff]
      %v955 = vld [vmem:[#allocation2 + $0xe1] sm:$0xff]
      %v956 = vld [vmem:[#allocation2 + $0xe9] sm:$0xff]
      %v957 = vld [vmem:[#allocation2 + $0xf1] sm:$0xff]
      %v958 = vld [vmem:[#allocation2 + $0xf9] sm:$0xff]
      %v959 = vld [vmem:[#allocation2 + $0x101] sm:$0xff]
      %961 = vset.pattern.permute.xlu0 0
      %962 = vperm.xlu0 %961, %v511
      %v963 = vpop.permute.xlu0 %962
      %966 = vset.pattern.permute.xlu0 0
      %967 = vperm.xlu0 %966, %v512
      %v968 = vpop.permute.xlu0 %967
      %971 = vset.pattern.permute.xlu0 0
      %972 = vperm.xlu0 %971, %v513
      %v973 = vpop.permute.xlu0 %972
      %976 = vset.pattern.permute.xlu0 0
      %977 = vperm.xlu0 %976, %v514
      %v978 = vpop.permute.xlu0 %977
      %981 = vset.pattern.permute.xlu0 0
      %982 = vperm.xlu0 %981, %v515
      %v983 = vpop.permute.xlu0 %982
      %986 = vset.pattern.permute.xlu0 0
      %987 = vperm.xlu0 %986, %v516
      %v988 = vpop.permute.xlu0 %987
      %991 = vset.pattern.permute.xlu0 0
      %992 = vperm.xlu0 %991, %v517
      %v993 = vpop.permute.xlu0 %992
      %996 = vset.pattern.permute.xlu0 0
      %997 = vperm.xlu0 %996, %v518
      %v998 = vpop.permute.xlu0 %997
      %1001 = vset.pattern.permute.xlu0 0
      %1002 = vperm.xlu0 %1001, %v519
      %v1003 = vpop.permute.xlu0 %1002
      %1006 = vset.pattern.permute.xlu0 0
      %1007 = vperm.xlu0 %1006, %v520
      %v1008 = vpop.permute.xlu0 %1007
      %1011 = vset.pattern.permute.xlu0 0
      %1012 = vperm.xlu0 %1011, %v521
      %v1013 = vpop.permute.xlu0 %1012
      %1016 = vset.pattern.permute.xlu0 0
      %1017 = vperm.xlu0 %1016, %v522
      %v1018 = vpop.permute.xlu0 %1017
      %1021 = vset.pattern.permute.xlu0 0
      %1022 = vperm.xlu0 %1021, %v523
      %v1023 = vpop.permute.xlu0 %1022
      %1026 = vset.pattern.permute.xlu0 0
      %1027 = vperm.xlu0 %1026, %v524
      %v1028 = vpop.permute.xlu0 %1027
      %1031 = vset.pattern.permute.xlu0 0
      %1032 = vperm.xlu0 %1031, %v525
      %v1033 = vpop.permute.xlu0 %1032
      %1036 = vset.pattern.permute.xlu0 0
      %1037 = vperm.xlu0 %1036, %v526
      %v1038 = vpop.permute.xlu0 %1037
      %1041 = vset.pattern.permute.xlu0 0
      %1042 = vperm.xlu0 %1041, %v527
      %v1043 = vpop.permute.xlu0 %1042
      %1046 = vset.pattern.permute.xlu0 0
      %1047 = vperm.xlu0 %1046, %v528
      %v1048 = vpop.permute.xlu0 %1047
      %1051 = vset.pattern.permute.xlu0 0
      %1052 = vperm.xlu0 %1051, %v529
      %v1053 = vpop.permute.xlu0 %1052
      %1056 = vset.pattern.permute.xlu0 0
      %1057 = vperm.xlu0 %1056, %v530
      %v1058 = vpop.permute.xlu0 %1057
      %1061 = vset.pattern.permute.xlu0 0
      %1062 = vperm.xlu0 %1061, %v531
      %v1063 = vpop.permute.xlu0 %1062
      %1066 = vset.pattern.permute.xlu0 0
      %1067 = vperm.xlu0 %1066, %v532
      %v1068 = vpop.permute.xlu0 %1067
      %1071 = vset.pattern.permute.xlu0 0
      %1072 = vperm.xlu0 %1071, %v533
      %v1073 = vpop.permute.xlu0 %1072
      %1076 = vset.pattern.permute.xlu0 0
      %1077 = vperm.xlu0 %1076, %v534
      %v1078 = vpop.permute.xlu0 %1077
      %1081 = vset.pattern.permute.xlu0 0
      %1082 = vperm.xlu0 %1081, %v535
      %v1083 = vpop.permute.xlu0 %1082
      %1086 = vset.pattern.permute.xlu0 0
      %1087 = vperm.xlu0 %1086, %v536
      %v1088 = vpop.permute.xlu0 %1087
      %1091 = vset.pattern.permute.xlu0 0
      %1092 = vperm.xlu0 %1091, %v537
      %v1093 = vpop.permute.xlu0 %1092
      %1096 = vset.pattern.permute.xlu0 0
      %1097 = vperm.xlu0 %1096, %v538
      %v1098 = vpop.permute.xlu0 %1097
      %1101 = vset.pattern.permute.xlu0 0
      %1102 = vperm.xlu0 %1101, %v539
      %v1103 = vpop.permute.xlu0 %1102
      %1106 = vset.pattern.permute.xlu0 0
      %1107 = vperm.xlu0 %1106, %v540
      %v1108 = vpop.permute.xlu0 %1107
      %1111 = vset.pattern.permute.xlu0 0
      %1112 = vperm.xlu0 %1111, %v541
      %v1113 = vpop.permute.xlu0 %1112
      %1116 = vset.pattern.permute.xlu0 0
      %1117 = vperm.xlu0 %1116, %v542
      %v1118 = vpop.permute.xlu0 %1117
      %v1120 = vmul.f32 %v928, %v963
      %v1121 = vmul.f32 %v929, %v968
      %v1122 = vmul.f32 %v930, %v973
      %v1123 = vmul.f32 %v931, %v978
      %v1124 = vmul.f32 %v932, %v983
      %v1125 = vmul.f32 %v933, %v988
      %v1126 = vmul.f32 %v934, %v993
      %v1127 = vmul.f32 %v935, %v998
      %v1128 = vmul.f32 %v936, %v1003
      %v1129 = vmul.f32 %v937, %v1008
      %v1130 = vmul.f32 %v938, %v1013
      %v1131 = vmul.f32 %v939, %v1018
      %v1132 = vmul.f32 %v940, %v1023
      %v1133 = vmul.f32 %v941, %v1028
      %v1134 = vmul.f32 %v942, %v1033
      %v1135 = vmul.f32 %v943, %v1038
      %v1136 = vmul.f32 %v944, %v1043
      %v1137 = vmul.f32 %v945, %v1048
      %v1138 = vmul.f32 %v946, %v1053
      %v1139 = vmul.f32 %v947, %v1058
      %v1140 = vmul.f32 %v948, %v1063
      %v1141 = vmul.f32 %v949, %v1068
      %v1142 = vmul.f32 %v950, %v1073
      %v1143 = vmul.f32 %v951, %v1078
      %v1144 = vmul.f32 %v952, %v1083
      %v1145 = vmul.f32 %v953, %v1088
      %v1146 = vmul.f32 %v954, %v1093
      %v1147 = vmul.f32 %v955, %v1098
      %v1148 = vmul.f32 %v956, %v1103
      %v1149 = vmul.f32 %v957, %v1108
      %v1150 = vmul.f32 %v958, %v1113
      %v1151 = vmul.f32 %v959, %v1118
      %v1152 = vpack.c.bf16 %v1121, %v1120
      %v1153 = vpack.c.bf16 %v1123, %v1122
      %v1154 = vpack.c.bf16 %v1125, %v1124
      %v1155 = vpack.c.bf16 %v1127, %v1126
      %v1156 = vpack.c.bf16 %v1129, %v1128
      %v1157 = vpack.c.bf16 %v1131, %v1130
      %v1158 = vpack.c.bf16 %v1133, %v1132
      %v1159 = vpack.c.bf16 %v1135, %v1134
      %v1160 = vpack.c.bf16 %v1137, %v1136
      %v1161 = vpack.c.bf16 %v1139, %v1138
      %v1162 = vpack.c.bf16 %v1141, %v1140
      %v1163 = vpack.c.bf16 %v1143, %v1142
      %v1164 = vpack.c.bf16 %v1145, %v1144
      %v1165 = vpack.c.bf16 %v1147, %v1146
      %v1166 = vpack.c.bf16 %v1149, %v1148
      %v1167 = vpack.c.bf16 %v1151, %v1150
      %1184 = vrot.lane.b32.xlu0 %v1152, 8
      %v1185 = vpop.permute.xlu0 %1184
      %1186 = vrot.lane.b32.xlu0 %v1153, 8
      %v1187 = vpop.permute.xlu0 %1186
      %1188 = vrot.lane.b32.xlu0 %v1154, 8
      %v1189 = vpop.permute.xlu0 %1188
      %1190 = vrot.lane.b32.xlu0 %v1155, 8
      %v1191 = vpop.permute.xlu0 %1190
      %1192 = vrot.lane.b32.xlu0 %v1156, 8
      %v1193 = vpop.permute.xlu0 %1192
      %1194 = vrot.lane.b32.xlu0 %v1157, 8
      %v1195 = vpop.permute.xlu0 %1194
      %1196 = vrot.lane.b32.xlu0 %v1158, 8
      %v1197 = vpop.permute.xlu0 %1196
      %1198 = vrot.lane.b32.xlu0 %v1159, 8
      %v1199 = vpop.permute.xlu0 %1198
      %1200 = vrot.lane.b32.xlu0 %v1160, 8
      %v1201 = vpop.permute.xlu0 %1200
      %1202 = vrot.lane.b32.xlu0 %v1161, 8
      %v1203 = vpop.permute.xlu0 %1202
      %1204 = vrot.lane.b32.xlu0 %v1162, 8
      %v1205 = vpop.permute.xlu0 %1204
      %1206 = vrot.lane.b32.xlu0 %v1163, 8
      %v1207 = vpop.permute.xlu0 %1206
      %1208 = vrot.lane.b32.xlu0 %v1164, 8
      %v1209 = vpop.permute.xlu0 %1208
      %1210 = vrot.lane.b32.xlu0 %v1165, 8
      %v1211 = vpop.permute.xlu0 %1210
      %1212 = vrot.lane.b32.xlu0 %v1166, 8
      %v1213 = vpop.permute.xlu0 %1212
      %1214 = vrot.lane.b32.xlu0 %v1167, 8
      %v1215 = vpop.permute.xlu0 %1214
      %vm1232 = vcmask 97344
      %1233 = vst.msk [vmem:[#allocation3] sm:$0xff] %vm1232, %v1185
      %1234 = vst.msk [vmem:[#allocation3 + $0x8] sm:$0xff] %vm1232, %v1187
      %1235 = vst.msk [vmem:[#allocation3 + $0x10] sm:$0xff] %vm1232, %v1189
      %1236 = vst.msk [vmem:[#allocation3 + $0x18] sm:$0xff] %vm1232, %v1191
      %1237 = vst.msk [vmem:[#allocation3 + $0x20] sm:$0xff] %vm1232, %v1193
      %1238 = vst.msk [vmem:[#allocation3 + $0x28] sm:$0xff] %vm1232, %v1195
      %1239 = vst.msk [vmem:[#allocation3 + $0x30] sm:$0xff] %vm1232, %v1197
      %1240 = vst.msk [vmem:[#allocation3 + $0x38] sm:$0xff] %vm1232, %v1199
      %1241 = vst.msk [vmem:[#allocation3 + $0x40] sm:$0xff] %vm1232, %v1201
      %1242 = vst.msk [vmem:[#allocation3 + $0x48] sm:$0xff] %vm1232, %v1203
      %1243 = vst.msk [vmem:[#allocation3 + $0x50] sm:$0xff] %vm1232, %v1205
      %1244 = vst.msk [vmem:[#allocation3 + $0x58] sm:$0xff] %vm1232, %v1207
      %1245 = vst.msk [vmem:[#allocation3 + $0x60] sm:$0xff] %vm1232, %v1209
      %1246 = vst.msk [vmem:[#allocation3 + $0x68] sm:$0xff] %vm1232, %v1211
      %1247 = vst.msk [vmem:[#allocation3 + $0x70] sm:$0xff] %vm1232, %v1213
      %1248 = vst.msk [vmem:[#allocation3 + $0x78] sm:$0xff] %vm1232, %v1215
      %v1249 = vld [vmem:[#allocation3] sm:$0xff]
      %v1250 = vld [vmem:[#allocation3 + $0x8] sm:$0xff]
      %v1251 = vld [vmem:[#allocation3 + $0x10] sm:$0xff]
      %v1252 = vld [vmem:[#allocation3 + $0x18] sm:$0xff]
      %v1253 = vld [vmem:[#allocation3 + $0x20] sm:$0xff]
      %v1254 = vld [vmem:[#allocation3 + $0x28] sm:$0xff]
      %v1255 = vld [vmem:[#allocation3 + $0x30] sm:$0xff]
      %v1256 = vld [vmem:[#allocation3 + $0x38] sm:$0xff]
      %v1257 = vld [vmem:[#allocation3 + $0x40] sm:$0xff]
      %v1258 = vld [vmem:[#allocation3 + $0x48] sm:$0xff]
      %v1259 = vld [vmem:[#allocation3 + $0x50] sm:$0xff]
      %v1260 = vld [vmem:[#allocation3 + $0x58] sm:$0xff]
      %v1261 = vld [vmem:[#allocation3 + $0x60] sm:$0xff]
      %v1262 = vld [vmem:[#allocation3 + $0x68] sm:$0xff]
      %v1263 = vld [vmem:[#allocation3 + $0x70] sm:$0xff]
      %v1264 = vld [vmem:[#allocation3 + $0x78] sm:$0xff]
      %v1265 = vld [vmem:[%s3] sm:$0xf]
      %v1266 = vld [vmem:[%s3 + $0x4] sm:$0x3]
      %v1269 = vunpack.c.l.b16 %v1265
      %v1270 = vunpack.c.l.b16 %v1266
      %v1271 = vpack.c.b16 %v1270, %v1269
      %vm1272 = vcmask 97280
      %v1274 = vsel %vm1272, %v1249, 0
      %v1277 = vsel %vm1272, %v1250, 0
      %v1280 = vsel %vm1272, %v1251, 0
      %v1283 = vsel %vm1272, %v1252, 0
      %v1286 = vsel %vm1272, %v1253, 0
      %v1289 = vsel %vm1272, %v1254, 0
      %v1292 = vsel %vm1272, %v1255, 0
      %v1295 = vsel %vm1272, %v1256, 0
      %v1298 = vsel %vm1272, %v1257, 0
      %v1301 = vsel %vm1272, %v1258, 0
      %v1304 = vsel %vm1272, %v1259, 0
      %v1307 = vsel %vm1272, %v1260, 0
      %v1310 = vsel %vm1272, %v1261, 0
      %v1313 = vsel %vm1272, %v1262, 0
      %v1316 = vsel %vm1272, %v1263, 0
      %v1319 = vsel %vm1272, %v1264, 0
      %vm1321 = vcmask 1045504
      %v1323 = vsel %vm1321, %v1271, 0
      %1325 = vmatprep.subr.bf16.mxu0 0
      %1326 = vmatpush1.bf16.msra.mxu0 %v1323
      %1327 = vmatprep.subr.bf16.mxu0 0
      %1328 = vmatpush1.bf16.msra.mxu0 0
      %1329 = vmatprep.subr.bf16.mxu0 0
      %1330 = vmatpush1.bf16.msra.mxu0 0
      %1331 = vmatprep.subr.bf16.mxu0 0
      %1332 = vmatpush1.bf16.msra.mxu0 0
      %1333 = vmatprep.subr.bf16.mxu0 0
      %1334 = vmatpush1.bf16.msra.mxu0 0
      %1335 = vmatprep.subr.bf16.mxu0 0
      %1336 = vmatpush1.bf16.msra.mxu0 0
      %1337 = vmatprep.subr.bf16.mxu0 0
      %1338 = vmatpush1.bf16.msra.mxu0 0
      %1339 = vmatprep.subr.bf16.mxu0 0
      %1340 = vmatpush1.bf16.msra.mxu0 0
      %1341 = vmatprep.subr.bf16.mxu0 0
      %1342 = vmatpush1.bf16.msra.mxu0 0
      %1343 = vmatprep.subr.bf16.mxu0 0
      %1344 = vmatpush1.bf16.msra.mxu0 0
      %1345 = vmatprep.subr.bf16.mxu0 0
      %1346 = vmatpush1.bf16.msra.mxu0 0
      %1347 = vmatprep.subr.bf16.mxu0 0
      %1348 = vmatpush1.bf16.msra.mxu0 0
      %1349 = vmatprep.subr.bf16.mxu0 0
      %1350 = vmatpush1.bf16.msra.mxu0 0
      %1351 = vmatprep.subr.bf16.mxu0 0
      %1352 = vmatpush1.bf16.msra.mxu0 0
      %1353 = vmatprep.subr.bf16.mxu0 0
      %1354 = vmatpush1.bf16.msra.mxu0 0
      %1355 = vmatprep.subr.bf16.mxu0 0
      %1356 = vmatpush1.bf16.msra.mxu0 0
      %1357 = vmatprep.mubr.bf16.mxu0 0
      %1358 = vmatmul.mubr.bf16.gmra.mrb[0].mxu0 %v1274
      %v1359 = vpop.f32.mrb[0].mxu0
      %v1360 = vadd.f32 0.0, %v1359
      %v1361 = vpop.f32.mrb[0].mxu0
      %v1362 = vpop.f32.mrb[0].mxu0
      %v1363 = vadd.f32 0.0, %v1362
      %v1364 = vpop.f32.mrb[0].mxu0
      %1365 = vmatprep.mubr.bf16.mxu0 0
      %1366 = vmatmul.mubr.bf16.gmra.mrb[0].mxu0 %v1277
      %v1367 = vpop.f32.mrb[0].mxu0
      %v1368 = vadd.f32 0.0, %v1367
      %v1369 = vpop.f32.mrb[0].mxu0
      %v1370 = vpop.f32.mrb[0].mxu0
      %v1371 = vadd.f32 0.0, %v1370
      %v1372 = vpop.f32.mrb[0].mxu0
      %1373 = vmatprep.mubr.bf16.mxu0 0
      %1374 = vmatmul.mubr.bf16.gmra.mrb[0].mxu0 %v1280
      %v1375 = vpop.f32.mrb[0].mxu0
      %v1376 = vadd.f32 0.0, %v1375
      %v1377 = vpop.f32.mrb[0].mxu0
      %v1378 = vpop.f32.mrb[0].mxu0
      %v1379 = vadd.f32 0.0, %v1378
      %v1380 = vpop.f32.mrb[0].mxu0
      %1381 = vmatprep.mubr.bf16.mxu0 0
      %1382 = vmatmul.mubr.bf16.gmra.mrb[0].mxu0 %v1283
      %v1383 = vpop.f32.mrb[0].mxu0
      %v1384 = vadd.f32 0.0, %v1383
      %v1385 = vpop.f32.mrb[0].mxu0
      %v1386 = vpop.f32.mrb[0].mxu0
      %v1387 = vadd.f32 0.0, %v1386
      %v1388 = vpop.f32.mrb[0].mxu0
      %1389 = vmatprep.mubr.bf16.mxu0 0
      %1390 = vmatmul.mubr.bf16.gmra.mrb[0].mxu0 %v1286
      %v1391 = vpop.f32.mrb[0].mxu0
      %v1392 = vadd.f32 0.0, %v1391
      %v1393 = vpop.f32.mrb[0].mxu0
      %v1394 = vpop.f32.mrb[0].mxu0
      %v1395 = vadd.f32 0.0, %v1394
      %v1396 = vpop.f32.mrb[0].mxu0
      %1397 = vmatprep.mubr.bf16.mxu0 0
      %1398 = vmatmul.mubr.bf16.gmra.mrb[0].mxu0 %v1289
      %v1399 = vpop.f32.mrb[0].mxu0
      %v1400 = vadd.f32 0.0, %v1399
      %v1401 = vpop.f32.mrb[0].mxu0
      %v1402 = vpop.f32.mrb[0].mxu0
      %v1403 = vadd.f32 0.0, %v1402
      %v1404 = vpop.f32.mrb[0].mxu0
      %1405 = vmatprep.mubr.bf16.mxu0 0
      %1406 = vmatmul.mubr.bf16.gmra.mrb[0].mxu0 %v1292
      %v1407 = vpop.f32.mrb[0].mxu0
      %v1408 = vadd.f32 0.0, %v1407
      %v1409 = vpop.f32.mrb[0].mxu0
      %v1410 = vpop.f32.mrb[0].mxu0
      %v1411 = vadd.f32 0.0, %v1410
      %v1412 = vpop.f32.mrb[0].mxu0
      %1413 = vmatprep.mubr.bf16.mxu0 0
      %1414 = vmatmul.mubr.bf16.gmra.mrb[0].mxu0 %v1295
      %v1415 = vpop.f32.mrb[0].mxu0
      %v1416 = vadd.f32 0.0, %v1415
      %v1417 = vpop.f32.mrb[0].mxu0
      %v1418 = vpop.f32.mrb[0].mxu0
      %v1419 = vadd.f32 0.0, %v1418
      %v1420 = vpop.f32.mrb[0].mxu0
      %1421 = vmatprep.mubr.bf16.mxu0 0
      %1422 = vmatmul.mubr.bf16.gmra.mrb[0].mxu0 %v1298
      %v1423 = vpop.f32.mrb[0].mxu0
      %v1424 = vadd.f32 0.0, %v1423
      %v1425 = vpop.f32.mrb[0].mxu0
      %v1426 = vpop.f32.mrb[0].mxu0
      %v1427 = vadd.f32 0.0, %v1426
      %v1428 = vpop.f32.mrb[0].mxu0
      %1429 = vmatprep.mubr.bf16.mxu0 0
      %1430 = vmatmul.mubr.bf16.gmra.mrb[0].mxu0 %v1301
      %v1431 = vpop.f32.mrb[0].mxu0
      %v1432 = vadd.f32 0.0, %v1431
      %v1433 = vpop.f32.mrb[0].mxu0
      %v1434 = vpop.f32.mrb[0].mxu0
      %v1435 = vadd.f32 0.0, %v1434
      %v1436 = vpop.f32.mrb[0].mxu0
      %1437 = vmatprep.mubr.bf16.mxu0 0
      %1438 = vmatmul.mubr.bf16.gmra.mrb[0].mxu0 %v1304
      %v1439 = vpop.f32.mrb[0].mxu0
      %v1440 = vadd.f32 0.0, %v1439
      %v1441 = vpop.f32.mrb[0].mxu0
      %v1442 = vpop.f32.mrb[0].mxu0
      %v1443 = vadd.f32 0.0, %v1442
      %v1444 = vpop.f32.mrb[0].mxu0
      %1445 = vmatprep.mubr.bf16.mxu0 0
      %1446 = vmatmul.mubr.bf16.gmra.mrb[0].mxu0 %v1307
      %v1447 = vpop.f32.mrb[0].mxu0
      %v1448 = vadd.f32 0.0, %v1447
      %v1449 = vpop.f32.mrb[0].mxu0
      %v1450 = vpop.f32.mrb[0].mxu0
      %v1451 = vadd.f32 0.0, %v1450
      %v1452 = vpop.f32.mrb[0].mxu0
      %1453 = vmatprep.mubr.bf16.mxu0 0
      %1454 = vmatmul.mubr.bf16.gmra.mrb[0].mxu0 %v1310
      %v1455 = vpop.f32.mrb[0].mxu0
      %v1456 = vadd.f32 0.0, %v1455
      %v1457 = vpop.f32.mrb[0].mxu0
      %v1458 = vpop.f32.mrb[0].mxu0
      %v1459 = vadd.f32 0.0, %v1458
      %v1460 = vpop.f32.mrb[0].mxu0
      %1461 = vmatprep.mubr.bf16.mxu0 0
      %1462 = vmatmul.mubr.bf16.gmra.mrb[0].mxu0 %v1313
      %v1463 = vpop.f32.mrb[0].mxu0
      %v1464 = vadd.f32 0.0, %v1463
      %v1465 = vpop.f32.mrb[0].mxu0
      %v1466 = vpop.f32.mrb[0].mxu0
      %v1467 = vadd.f32 0.0, %v1466
      %v1468 = vpop.f32.mrb[0].mxu0
      %1469 = vmatprep.mubr.bf16.mxu0 0
      %1470 = vmatmul.mubr.bf16.gmra.mrb[0].mxu0 %v1316
      %v1471 = vpop.f32.mrb[0].mxu0
      %v1472 = vadd.f32 0.0, %v1471
      %v1473 = vpop.f32.mrb[0].mxu0
      %v1474 = vpop.f32.mrb[0].mxu0
      %v1475 = vadd.f32 0.0, %v1474
      %v1476 = vpop.f32.mrb[0].mxu0
      %1477 = vmatprep.mubr.bf16.mxu0 0
      %1478 = vmatmul.mubr.bf16.gmra.mrb[0].mxu0 %v1319
      %v1479 = vpop.f32.mrb[0].mxu0
      %v1480 = vadd.f32 0.0, %v1479
      %v1481 = vpop.f32.mrb[0].mxu0
      %v1482 = vpop.f32.mrb[0].mxu0
      %v1483 = vadd.f32 0.0, %v1482
      %v1484 = vpop.f32.mrb[0].mxu0
      %1485 = vdwg.mxu0
      %1486 = vst.msk [vmem:[%s289] sm:$0xff] %vm297, %v1360
      %1487 = vst.msk [vmem:[%s289 + $0x8] sm:$0xff] %vm297, %v1363
      %1488 = vst.msk [vmem:[%s289 + $0x10] sm:$0xff] %vm297, %v1368
      %1489 = vst.msk [vmem:[%s289 + $0x18] sm:$0xff] %vm297, %v1371
      %1490 = vst.msk [vmem:[%s289 + $0x20] sm:$0xff] %vm297, %v1376
      %1491 = vst.msk [vmem:[%s289 + $0x28] sm:$0xff] %vm297, %v1379
      %1492 = vst.msk [vmem:[%s289 + $0x30] sm:$0xff] %vm297, %v1384
      %1493 = vst.msk [vmem:[%s289 + $0x38] sm:$0xff] %vm297, %v1387
      %1494 = vst.msk [vmem:[%s289 + $0x40] sm:$0xff] %vm297, %v1392
      %1495 = vst.msk [vmem:[%s289 + $0x48] sm:$0xff] %vm297, %v1395
      %1496 = vst.msk [vmem:[%s289 + $0x50] sm:$0xff] %vm297, %v1400
      %1497 = vst.msk [vmem:[%s289 + $0x58] sm:$0xff] %vm297, %v1403
      %1498 = vst.msk [vmem:[%s289 + $0x60] sm:$0xff] %vm297, %v1408
      %1499 = vst.msk [vmem:[%s289 + $0x68] sm:$0xff] %vm297, %v1411
      %1500 = vst.msk [vmem:[%s289 + $0x70] sm:$0xff] %vm297, %v1416
      %1501 = vst.msk [vmem:[%s289 + $0x78] sm:$0xff] %vm297, %v1419
      %1502 = vst.msk [vmem:[%s289 + $0x80] sm:$0xff] %vm297, %v1424
      %1503 = vst.msk [vmem:[%s289 + $0x88] sm:$0xff] %vm297, %v1427
      %1504 = vst.msk [vmem:[%s289 + $0x90] sm:$0xff] %vm297, %v1432
      %1505 = vst.msk [vmem:[%s289 + $0x98] sm:$0xff] %vm297, %v1435
      %1506 = vst.msk [vmem:[%s289 + $0xa0] sm:$0xff] %vm297, %v1440
      %1507 = vst.msk [vmem:[%s289 + $0xa8] sm:$0xff] %vm297, %v1443
      %1508 = vst.msk [vmem:[%s289 + $0xb0] sm:$0xff] %vm297, %v1448
      %1509 = vst.msk [vmem:[%s289 + $0xb8] sm:$0xff] %vm297, %v1451
      %1510 = vst.msk [vmem:[%s289 + $0xc0] sm:$0xff] %vm297, %v1456
      %1511 = vst.msk [vmem:[%s289 + $0xc8] sm:$0xff] %vm297, %v1459
      %1512 = vst.msk [vmem:[%s289 + $0xd0] sm:$0xff] %vm297, %v1464
      %1513 = vst.msk [vmem:[%s289 + $0xd8] sm:$0xff] %vm297, %v1467
      %1514 = vst.msk [vmem:[%s289 + $0xe0] sm:$0xff] %vm297, %v1472
      %1515 = vst.msk [vmem:[%s289 + $0xe8] sm:$0xff] %vm297, %v1475
      %1516 = vst.msk [vmem:[%s289 + $0xf0] sm:$0xff] %vm297, %v1480
      %1517 = vst.msk [vmem:[%s289 + $0xf8] sm:$0xff] %vm297, %v1483
      %v1518 = vld [vmem:[#allocation2 + $0x17] sm:$0xff]
      %v1519 = vld [vmem:[#allocation2 + $0x1f] sm:$0xff]
      %v1520 = vld [vmem:[#allocation2 + $0x27] sm:$0xff]
      %v1521 = vld [vmem:[#allocation2 + $0x2f] sm:$0xff]
      %v1522 = vld [vmem:[#allocation2 + $0x37] sm:$0xff]
      %v1523 = vld [vmem:[#allocation2 + $0x3f] sm:$0xff]
      %v1524 = vld [vmem:[#allocation2 + $0x47] sm:$0xff]
      %v1525 = vld [vmem:[#allocation2 + $0x4f] sm:$0xff]
      %v1526 = vld [vmem:[#allocation2 + $0x57] sm:$0xff]
      %v1527 = vld [vmem:[#allocation2 + $0x5f] sm:$0xff]
      %v1528 = vld [vmem:[#allocation2 + $0x67] sm:$0xff]
      %v1529 = vld [vmem:[#allocation2 + $0x6f] sm:$0xff]
      %v1530 = vld [vmem:[#allocation2 + $0x77] sm:$0xff]
      %v1531 = vld [vmem:[#allocation2 + $0x7f] sm:$0xff]
      %v1532 = vld [vmem:[#allocation2 + $0x87] sm:$0xff]
      %v1533 = vld [vmem:[#allocation2 + $0x8f] sm:$0xff]
      %v1534 = vld [vmem:[#allocation2 + $0x97] sm:$0xff]
      %v1535 = vld [vmem:[#allocation2 + $0x9f] sm:$0xff]
      %v1536 = vld [vmem:[#allocation2 + $0xa7] sm:$0xff]
      %v1537 = vld [vmem:[#allocation2 + $0xaf] sm:$0xff]
      %v1538 = vld [vmem:[#allocation2 + $0xb7] sm:$0xff]
      %v1539 = vld [vmem:[#allocation2 + $0xbf] sm:$0xff]
      %v1540 = vld [vmem:[#allocation2 + $0xc7] sm:$0xff]
      %v1541 = vld [vmem:[#allocation2 + $0xcf] sm:$0xff]
      %v1542 = vld [vmem:[#allocation2 + $0xd7] sm:$0xff]
      %v1543 = vld [vmem:[#allocation2 + $0xdf] sm:$0xff]
      %v1544 = vld [vmem:[#allocation2 + $0xe7] sm:$0xff]
      %v1545 = vld [vmem:[#allocation2 + $0xef] sm:$0xff]
      %v1546 = vld [vmem:[#allocation2 + $0xf7] sm:$0xff]
      %v1547 = vld [vmem:[#allocation2 + $0xff] sm:$0xff]
      %v1548 = vld [vmem:[#allocation2 + $0x107] sm:$0xff]
      %v1549 = vld [vmem:[#allocation2 + $0x10f] sm:$0xff]
      %v1550 = vmul.f32 %v1518, %v578
      %v1551 = vmul.f32 %v1519, %v583
      %v1552 = vmul.f32 %v1520, %v588
      %v1553 = vmul.f32 %v1521, %v593
      %v1554 = vmul.f32 %v1522, %v598
      %v1555 = vmul.f32 %v1523, %v603
      %v1556 = vmul.f32 %v1524, %v608
      %v1557 = vmul.f32 %v1525, %v613
      %v1558 = vmul.f32 %v1526, %v618
      %v1559 = vmul.f32 %v1527, %v623
      %v1560 = vmul.f32 %v1528, %v628
      %v1561 = vmul.f32 %v1529, %v633
      %v1562 = vmul.f32 %v1530, %v638
      %v1563 = vmul.f32 %v1531, %v643
      %v1564 = vmul.f32 %v1532, %v648
      %v1565 = vmul.f32 %v1533, %v653
      %v1566 = vmul.f32 %v1534, %v658
      %v1567 = vmul.f32 %v1535, %v663
      %v1568 = vmul.f32 %v1536, %v668
      %v1569 = vmul.f32 %v1537, %v673
      %v1570 = vmul.f32 %v1538, %v678
      %v1571 = vmul.f32 %v1539, %v683
      %v1572 = vmul.f32 %v1540, %v688
      %v1573 = vmul.f32 %v1541, %v693
      %v1574 = vmul.f32 %v1542, %v698
      %v1575 = vmul.f32 %v1543, %v703
      %v1576 = vmul.f32 %v1544, %v708
      %v1577 = vmul.f32 %v1545, %v713
      %v1578 = vmul.f32 %v1546, %v718
      %v1579 = vmul.f32 %v1547, %v723
      %v1580 = vmul.f32 %v1548, %v728
      %v1581 = vmul.f32 %v1549, %v733
      %v1582 = vpack.c.bf16 %v1551, %v1550
      %v1583 = vpack.c.bf16 %v1553, %v1552
      %v1584 = vpack.c.bf16 %v1555, %v1554
      %v1585 = vpack.c.bf16 %v1557, %v1556
      %v1586 = vpack.c.bf16 %v1559, %v1558
      %v1587 = vpack.c.bf16 %v1561, %v1560
      %v1588 = vpack.c.bf16 %v1563, %v1562
      %v1589 = vpack.c.bf16 %v1565, %v1564
      %v1590 = vpack.c.bf16 %v1567, %v1566
      %v1591 = vpack.c.bf16 %v1569, %v1568
      %v1592 = vpack.c.bf16 %v1571, %v1570
      %v1593 = vpack.c.bf16 %v1573, %v1572
      %v1594 = vpack.c.bf16 %v1575, %v1574
      %v1595 = vpack.c.bf16 %v1577, %v1576
      %v1596 = vpack.c.bf16 %v1579, %v1578
      %v1597 = vpack.c.bf16 %v1581, %v1580
      %1598 = vst.msk [vmem:[#allocation3] sm:$0xff] %vm297, %v1582
      %1599 = vst.msk [vmem:[#allocation3 + $0x8] sm:$0xff] %vm297, %v1583
      %1600 = vst.msk [vmem:[#allocation3 + $0x10] sm:$0xff] %vm297, %v1584
      %1601 = vst.msk [vmem:[#allocation3 + $0x18] sm:$0xff] %vm297, %v1585
      %1602 = vst.msk [vmem:[#allocation3 + $0x20] sm:$0xff] %vm297, %v1586
      %1603 = vst.msk [vmem:[#allocation3 + $0x28] sm:$0xff] %vm297, %v1587
      %1604 = vst.msk [vmem:[#allocation3 + $0x30] sm:$0xff] %vm297, %v1588
      %1605 = vst.msk [vmem:[#allocation3 + $0x38] sm:$0xff] %vm297, %v1589
      %1606 = vst.msk [vmem:[#allocation3 + $0x40] sm:$0xff] %vm297, %v1590
      %1607 = vst.msk [vmem:[#allocation3 + $0x48] sm:$0xff] %vm297, %v1591
      %1608 = vst.msk [vmem:[#allocation3 + $0x50] sm:$0xff] %vm297, %v1592
      %1609 = vst.msk [vmem:[#allocation3 + $0x58] sm:$0xff] %vm297, %v1593
      %1610 = vst.msk [vmem:[#allocation3 + $0x60] sm:$0xff] %vm297, %v1594
      %1611 = vst.msk [vmem:[#allocation3 + $0x68] sm:$0xff] %vm297, %v1595
      %1612 = vst.msk [vmem:[#allocation3 + $0x70] sm:$0xff] %vm297, %v1596
      %1613 = vst.msk [vmem:[#allocation3 + $0x78] sm:$0xff] %vm297, %v1597
      %v1614 = vld [vmem:[#allocation2 + $0x18] sm:$0xff]
      %v1615 = vld [vmem:[#allocation2 + $0x20] sm:$0xff]
      %v1616 = vld [vmem:[#allocation2 + $0x28] sm:$0xff]
      %v1617 = vld [vmem:[#allocation2 + $0x30] sm:$0xff]
      %v1618 = vld [vmem:[#allocation2 + $0x38] sm:$0xff]
      %v1619 = vld [vmem:[#allocation2 + $0x40] sm:$0xff]
      %v1620 = vld [vmem:[#allocation2 + $0x48] sm:$0xff]
      %v1621 = vld [vmem:[#allocation2 + $0x50] sm:$0xff]
      %v1622 = vld [vmem:[#allocation2 + $0x58] sm:$0xff]
      %v1623 = vld [vmem:[#allocation2 + $0x60] sm:$0xff]
      %v1624 = vld [vmem:[#allocation2 + $0x68] sm:$0xff]
      %v1625 = vld [vmem:[#allocation2 + $0x70] sm:$0xff]
      %v1626 = vld [vmem:[#allocation2 + $0x78] sm:$0xff]
      %v1627 = vld [vmem:[#allocation2 + $0x80] sm:$0xff]
      %v1628 = vld [vmem:[#allocation2 + $0x88] sm:$0xff]
      %v1629 = vld [vmem:[#allocation2 + $0x90] sm:$0xff]
      %v1630 = vld [vmem:[#allocation2 + $0x98] sm:$0xff]
      %v1631 = vld [vmem:[#allocation2 + $0xa0] sm:$0xff]
      %v1632 = vld [vmem:[#allocation2 + $0xa8] sm:$0xff]
      %v1633 = vld [vmem:[#allocation2 + $0xb0] sm:$0xff]
      %v1634 = vld [vmem:[#allocation2 + $0xb8] sm:$0xff]
      %v1635 = vld [vmem:[#allocation2 + $0xc0] sm:$0xff]
      %v1636 = vld [vmem:[#allocation2 + $0xc8] sm:$0xff]
      %v1637 = vld [vmem:[#allocation2 + $0xd0] sm:$0xff]
      %v1638 = vld [vmem:[#allocation2 + $0xd8] sm:$0xff]
      %v1639 = vld [vmem:[#allocation2 + $0xe0] sm:$0xff]
      %v1640 = vld [vmem:[#allocation2 + $0xe8] sm:$0xff]
      %v1641 = vld [vmem:[#allocation2 + $0xf0] sm:$0xff]
      %v1642 = vld [vmem:[#allocation2 + $0xf8] sm:$0xff]
      %v1643 = vld [vmem:[#allocation2 + $0x100] sm:$0xff]
      %v1644 = vld [vmem:[#allocation2 + $0x108] sm:$0xff]
      %v1645 = vld [vmem:[#allocation2 + $0x110] sm:$0xff]
      %v1646 = vpack.c.bf16 %v1615, %v1614
      %v1647 = vpack.c.bf16 %v1617, %v1616
      %v1648 = vpack.c.bf16 %v1619, %v1618
      %v1649 = vpack.c.bf16 %v1621, %v1620
      %v1650 = vpack.c.bf16 %v1623, %v1622
      %v1651 = vpack.c.bf16 %v1625, %v1624
      %v1652 = vpack.c.bf16 %v1627, %v1626
      %v1653 = vpack.c.bf16 %v1629, %v1628
      %v1654 = vpack.c.bf16 %v1631, %v1630
      %v1655 = vpack.c.bf16 %v1633, %v1632
      %v1656 = vpack.c.bf16 %v1635, %v1634
      %v1657 = vpack.c.bf16 %v1637, %v1636
      %v1658 = vpack.c.bf16 %v1639, %v1638
      %v1659 = vpack.c.bf16 %v1641, %v1640
      %v1660 = vpack.c.bf16 %v1643, %v1642
      %v1661 = vpack.c.bf16 %v1645, %v1644
      %1678 = vrot.lane.b32.xlu0 %v1646, 4
      %v1679 = vpop.permute.xlu0 %1678
      %1680 = vrot.lane.b32.xlu0 %v1647, 4
      %v1681 = vpop.permute.xlu0 %1680
      %1682 = vrot.lane.b32.xlu0 %v1648, 4
      %v1683 = vpop.permute.xlu0 %1682
      %1684 = vrot.lane.b32.xlu0 %v1649, 4
      %v1685 = vpop.permute.xlu0 %1684
      %1686 = vrot.lane.b32.xlu0 %v1650, 4
      %v1687 = vpop.permute.xlu0 %1686
      %1688 = vrot.lane.b32.xlu0 %v1651, 4
      %v1689 = vpop.permute.xlu0 %1688
      %1690 = vrot.lane.b32.xlu0 %v1652, 4
      %v1691 = vpop.permute.xlu0 %1690
      %1692 = vrot.lane.b32.xlu0 %v1653, 4
      %v1693 = vpop.permute.xlu0 %1692
      %1694 = vrot.lane.b32.xlu0 %v1654, 4
      %v1695 = vpop.permute.xlu0 %1694
      %1696 = vrot.lane.b32.xlu0 %v1655, 4
      %v1697 = vpop.permute.xlu0 %1696
      %1698 = vrot.lane.b32.xlu0 %v1656, 4
      %v1699 = vpop.permute.xlu0 %1698
      %1700 = vrot.lane.b32.xlu0 %v1657, 4
      %v1701 = vpop.permute.xlu0 %1700
      %1702 = vrot.lane.b32.xlu0 %v1658, 4
      %v1703 = vpop.permute.xlu0 %1702
      %1704 = vrot.lane.b32.xlu0 %v1659, 4
      %v1705 = vpop.permute.xlu0 %1704
      %1706 = vrot.lane.b32.xlu0 %v1660, 4
      %v1707 = vpop.permute.xlu0 %1706
      %1708 = vrot.lane.b32.xlu0 %v1661, 4
      %v1709 = vpop.permute.xlu0 %1708
      %1726 = vst.msk [vmem:[#allocation3] sm:$0xff] %vm911, %v1679
      %1727 = vst.msk [vmem:[#allocation3 + $0x8] sm:$0xff] %vm911, %v1681
      %1728 = vst.msk [vmem:[#allocation3 + $0x10] sm:$0xff] %vm911, %v1683
      %1729 = vst.msk [vmem:[#allocation3 + $0x18] sm:$0xff] %vm911, %v1685
      %1730 = vst.msk [vmem:[#allocation3 + $0x20] sm:$0xff] %vm911, %v1687
      %1731 = vst.msk [vmem:[#allocation3 + $0x28] sm:$0xff] %vm911, %v1689
      %1732 = vst.msk [vmem:[#allocation3 + $0x30] sm:$0xff] %vm911, %v1691
      %1733 = vst.msk [vmem:[#allocation3 + $0x38] sm:$0xff] %vm911, %v1693
      %1734 = vst.msk [vmem:[#allocation3 + $0x40] sm:$0xff] %vm911, %v1695
      %1735 = vst.msk [vmem:[#allocation3 + $0x48] sm:$0xff] %vm911, %v1697
      %1736 = vst.msk [vmem:[#allocation3 + $0x50] sm:$0xff] %vm911, %v1699
      %1737 = vst.msk [vmem:[#allocation3 + $0x58] sm:$0xff] %vm911, %v1701
      %1738 = vst.msk [vmem:[#allocation3 + $0x60] sm:$0xff] %vm911, %v1703
      %1739 = vst.msk [vmem:[#allocation3 + $0x68] sm:$0xff] %vm911, %v1705
      %1740 = vst.msk [vmem:[#allocation3 + $0x70] sm:$0xff] %vm911, %v1707
      %1741 = vst.msk [vmem:[#allocation3 + $0x78] sm:$0xff] %vm911, %v1709
      %v1742 = vld [vmem:[#allocation2 + $0x19] sm:$0xff]
      %v1743 = vld [vmem:[#allocation2 + $0x21] sm:$0xff]
      %v1744 = vld [vmem:[#allocation2 + $0x29] sm:$0xff]
      %v1745 = vld [vmem:[#allocation2 + $0x31] sm:$0xff]
      %v1746 = vld [vmem:[#allocation2 + $0x39] sm:$0xff]
      %v1747 = vld [vmem:[#allocation2 + $0x41] sm:$0xff]
      %v1748 = vld [vmem:[#allocation2 + $0x49] sm:$0xff]
      %v1749 = vld [vmem:[#allocation2 + $0x51] sm:$0xff]
      %v1750 = vld [vmem:[#allocation2 + $0x59] sm:$0xff]
      %v1751 = vld [vmem:[#allocation2 + $0x61] sm:$0xff]
      %v1752 = vld [vmem:[#allocation2 + $0x69] sm:$0xff]
      %v1753 = vld [vmem:[#allocation2 + $0x71] sm:$0xff]
      %v1754 = vld [vmem:[#allocation2 + $0x79] sm:$0xff]
      %v1755 = vld [vmem:[#allocation2 + $0x81] sm:$0xff]
      %v1756 = vld [vmem:[#allocation2 + $0x89] sm:$0xff]
      %v1757 = vld [vmem:[#allocation2 + $0x91] sm:$0xff]
      %v1758 = vld [vmem:[#allocation2 + $0x99] sm:$0xff]
      %v1759 = vld [vmem:[#allocation2 + $0xa1] sm:$0xff]
      %v1760 = vld [vmem:[#allocation2 + $0xa9] sm:$0xff]
      %v1761 = vld [vmem:[#allocation2 + $0xb1] sm:$0xff]
      %v1762 = vld [vmem:[#allocation2 + $0xb9] sm:$0xff]
      %v1763 = vld [vmem:[#allocation2 + $0xc1] sm:$0xff]
      %v1764 = vld [vmem:[#allocation2 + $0xc9] sm:$0xff]
      %v1765 = vld [vmem:[#allocation2 + $0xd1] sm:$0xff]
      %v1766 = vld [vmem:[#allocation2 + $0xd9] sm:$0xff]
      %v1767 = vld [vmem:[#allocation2 + $0xe1] sm:$0xff]
      %v1768 = vld [vmem:[#allocation2 + $0xe9] sm:$0xff]
      %v1769 = vld [vmem:[#allocation2 + $0xf1] sm:$0xff]
      %v1770 = vld [vmem:[#allocation2 + $0xf9] sm:$0xff]
      %v1771 = vld [vmem:[#allocation2 + $0x101] sm:$0xff]
      %v1772 = vld [vmem:[#allocation2 + $0x109] sm:$0xff]
      %v1773 = vld [vmem:[#allocation2 + $0x111] sm:$0xff]
      %v1774 = vmul.f32 %v1742, %v963
      %v1775 = vmul.f32 %v1743, %v968
      %v1776 = vmul.f32 %v1744, %v973
      %v1777 = vmul.f32 %v1745, %v978
      %v1778 = vmul.f32 %v1746, %v983
      %v1779 = vmul.f32 %v1747, %v988
      %v1780 = vmul.f32 %v1748, %v993
      %v1781 = vmul.f32 %v1749, %v998
      %v1782 = vmul.f32 %v1750, %v1003
      %v1783 = vmul.f32 %v1751, %v1008
      %v1784 = vmul.f32 %v1752, %v1013
      %v1785 = vmul.f32 %v1753, %v1018
      %v1786 = vmul.f32 %v1754, %v1023
      %v1787 = vmul.f32 %v1755, %v1028
      %v1788 = vmul.f32 %v1756, %v1033
      %v1789 = vmul.f32 %v1757, %v1038
      %v1790 = vmul.f32 %v1758, %v1043
      %v1791 = vmul.f32 %v1759, %v1048
      %v1792 = vmul.f32 %v1760, %v1053
      %v1793 = vmul.f32 %v1761, %v1058
      %v1794 = vmul.f32 %v1762, %v1063
      %v1795 = vmul.f32 %v1763, %v1068
      %v1796 = vmul.f32 %v1764, %v1073
      %v1797 = vmul.f32 %v1765, %v1078
      %v1798 = vmul.f32 %v1766, %v1083
      %v1799 = vmul.f32 %v1767, %v1088
      %v1800 = vmul.f32 %v1768, %v1093
      %v1801 = vmul.f32 %v1769, %v1098
      %v1802 = vmul.f32 %v1770, %v1103
      %v1803 = vmul.f32 %v1771, %v1108
      %v1804 = vmul.f32 %v1772, %v1113
      %v1805 = vmul.f32 %v1773, %v1118
      %v1806 = vpack.c.bf16 %v1775, %v1774
      %v1807 = vpack.c.bf16 %v1777, %v1776
      %v1808 = vpack.c.bf16 %v1779, %v1778
      %v1809 = vpack.c.bf16 %v1781, %v1780
      %v1810 = vpack.c.bf16 %v1783, %v1782
      %v1811 = vpack.c.bf16 %v1785, %v1784
      %v1812 = vpack.c.bf16 %v1787, %v1786
      %v1813 = vpack.c.bf16 %v1789, %v1788
      %v1814 = vpack.c.bf16 %v1791, %v1790
      %v1815 = vpack.c.bf16 %v1793, %v1792
      %v1816 = vpack.c.bf16 %v1795, %v1794
      %v1817 = vpack.c.bf16 %v1797, %v1796
      %v1818 = vpack.c.bf16 %v1799, %v1798
      %v1819 = vpack.c.bf16 %v1801, %v1800
      %v1820 = vpack.c.bf16 %v1803, %v1802
      %v1821 = vpack.c.bf16 %v1805, %v1804
      %1838 = vrot.lane.b32.xlu0 %v1806, 8
      %v1839 = vpop.permute.xlu0 %1838
      %1840 = vrot.lane.b32.xlu0 %v1807, 8
      %v1841 = vpop.permute.xlu0 %1840
      %1842 = vrot.lane.b32.xlu0 %v1808, 8
      %v1843 = vpop.permute.xlu0 %1842
      %1844 = vrot.lane.b32.xlu0 %v1809, 8
      %v1845 = vpop.permute.xlu0 %1844
      %1846 = vrot.lane.b32.xlu0 %v1810, 8
      %v1847 = vpop.permute.xlu0 %1846
      %1848 = vrot.lane.b32.xlu0 %v1811, 8
      %v1849 = vpop.permute.xlu0 %1848
      %1850 = vrot.lane.b32.xlu0 %v1812, 8
      %v1851 = vpop.permute.xlu0 %1850
      %1852 = vrot.lane.b32.xlu0 %v1813, 8
      %v1853 = vpop.permute.xlu0 %1852
      %1854 = vrot.lane.b32.xlu0 %v1814, 8
      %v1855 = vpop.permute.xlu0 %1854
      %1856 = vrot.lane.b32.xlu0 %v1815, 8
      %v1857 = vpop.permute.xlu0 %1856
      %1858 = vrot.lane.b32.xlu0 %v1816, 8
      %v1859 = vpop.permute.xlu0 %1858
      %1860 = vrot.lane.b32.xlu0 %v1817, 8
      %v1861 = vpop.permute.xlu0 %1860
      %1862 = vrot.lane.b32.xlu0 %v1818, 8
      %v1863 = vpop.permute.xlu0 %1862
      %1864 = vrot.lane.b32.xlu0 %v1819, 8
      %v1865 = vpop.permute.xlu0 %1864
      %1866 = vrot.lane.b32.xlu0 %v1820, 8
      %v1867 = vpop.permute.xlu0 %1866
      %1868 = vrot.lane.b32.xlu0 %v1821, 8
      %v1869 = vpop.permute.xlu0 %1868
      %1886 = vst.msk [vmem:[#allocation3] sm:$0xff] %vm1232, %v1839
      %1887 = vst.msk [vmem:[#allocation3 + $0x8] sm:$0xff] %vm1232, %v1841
      %1888 = vst.msk [vmem:[#allocation3 + $0x10] sm:$0xff] %vm1232, %v1843
      %1889 = vst.msk [vmem:[#allocation3 + $0x18] sm:$0xff] %vm1232, %v1845
      %1890 = vst.msk [vmem:[#allocation3 + $0x20] sm:$0xff] %vm1232, %v1847
      %1891 = vst.msk [vmem:[#allocation3 + $0x28] sm:$0xff] %vm1232, %v1849
      %1892 = vst.msk [vmem:[#allocation3 + $0x30] sm:$0xff] %vm1232, %v1851
      %1893 = vst.msk [vmem:[#allocation3 + $0x38] sm:$0xff] %vm1232, %v1853
      %1894 = vst.msk [vmem:[#allocation3 + $0x40] sm:$0xff] %vm1232, %v1855
      %1895 = vst.msk [vmem:[#allocation3 + $0x48] sm:$0xff] %vm1232, %v1857
      %1896 = vst.msk [vmem:[#allocation3 + $0x50] sm:$0xff] %vm1232, %v1859
      %1897 = vst.msk [vmem:[#allocation3 + $0x58] sm:$0xff] %vm1232, %v1861
      %1898 = vst.msk [vmem:[#allocation3 + $0x60] sm:$0xff] %vm1232, %v1863
      %1899 = vst.msk [vmem:[#allocation3 + $0x68] sm:$0xff] %vm1232, %v1865
      %1900 = vst.msk [vmem:[#allocation3 + $0x70] sm:$0xff] %vm1232, %v1867
      %1901 = vst.msk [vmem:[#allocation3 + $0x78] sm:$0xff] %vm1232, %v1869
      %v1902 = vld [vmem:[#allocation3] sm:$0xff]
      %v1903 = vld [vmem:[#allocation3 + $0x8] sm:$0xff]
      %v1904 = vld [vmem:[#allocation3 + $0x10] sm:$0xff]
      %v1905 = vld [vmem:[#allocation3 + $0x18] sm:$0xff]
      %v1906 = vld [vmem:[#allocation3 + $0x20] sm:$0xff]
      %v1907 = vld [vmem:[#allocation3 + $0x28] sm:$0xff]
      %v1908 = vld [vmem:[#allocation3 + $0x30] sm:$0xff]
      %v1909 = vld [vmem:[#allocation3 + $0x38] sm:$0xff]
      %v1910 = vld [vmem:[#allocation3 + $0x40] sm:$0xff]
      %v1911 = vld [vmem:[#allocation3 + $0x48] sm:$0xff]
      %v1912 = vld [vmem:[#allocation3 + $0x50] sm:$0xff]
      %v1913 = vld [vmem:[#allocation3 + $0x58] sm:$0xff]
      %v1914 = vld [vmem:[#allocation3 + $0x60] sm:$0xff]
      %v1915 = vld [vmem:[#allocation3 + $0x68] sm:$0xff]
      %v1916 = vld [vmem:[#allocation3 + $0x70] sm:$0xff]
      %v1917 = vld [vmem:[#allocation3 + $0x78] sm:$0xff]
      %s1918 = scalar_lea.vmem %s3, 8
      %v1919 = vld [vmem:[%s1918] sm:$0xf]
      %v1920 = vld [vmem:[%s1918 + $0x4] sm:$0x3]
      %v1923 = vunpack.c.l.b16 %v1919
      %v1924 = vunpack.c.l.b16 %v1920
      %v1925 = vpack.c.b16 %v1924, %v1923
      %v1927 = vsel %vm1272, %v1902, 0
      %v1930 = vsel %vm1272, %v1903, 0
      %v1933 = vsel %vm1272, %v1904, 0
      %v1936 = vsel %vm1272, %v1905, 0
      %v1939 = vsel %vm1272, %v1906, 0
      %v1942 = vsel %vm1272, %v1907, 0
      %v1945 = vsel %vm1272, %v1908, 0
      %v1948 = vsel %vm1272, %v1909, 0
      %v1951 = vsel %vm1272, %v1910, 0
      %v1954 = vsel %vm1272, %v1911, 0
      %v1957 = vsel %vm1272, %v1912, 0
      %v1960 = vsel %vm1272, %v1913, 0
      %v1963 = vsel %vm1272, %v1914, 0
      %v1966 = vsel %vm1272, %v1915, 0
      %v1969 = vsel %vm1272, %v1916, 0
      %v1972 = vsel %vm1272, %v1917, 0
      %v1975 = vsel %vm1321, %v1925, 0
      %1977 = vmatprep.subr.bf16.mxu0 0
      %1978 = vmatpush1.bf16.msra.mxu0 %v1975
      %1979 = vmatprep.subr.bf16.mxu0 0
      %1980 = vmatpush1.bf16.msra.mxu0 0
      %1981 = vmatprep.subr.bf16.mxu0 0
      %1982 = vmatpush1.bf16.msra.mxu0 0
      %1983 = vmatprep.subr.bf16.mxu0 0
      %1984 = vmatpush1.bf16.msra.mxu0 0
      %1985 = vmatprep.subr.bf16.mxu0 0
      %1986 = vmatpush1.bf16.msra.mxu0 0
      %1987 = vmatprep.subr.bf16.mxu0 0
      %1988 = vmatpush1.bf16.msra.mxu0 0
      %1989 = vmatprep.subr.bf16.mxu0 0
      %1990 = vmatpush1.bf16.msra.mxu0 0
      %1991 = vmatprep.subr.bf16.mxu0 0
      %1992 = vmatpush1.bf16.msra.mxu0 0
      %1993 = vmatprep.subr.bf16.mxu0 0
      %1994 = vmatpush1.bf16.msra.mxu0 0
      %1995 = vmatprep.subr.bf16.mxu0 0
      %1996 = vmatpush1.bf16.msra.mxu0 0
      %1997 = vmatprep.subr.bf16.mxu0 0
      %1998 = vmatpush1.bf16.msra.mxu0 0
      %1999 = vmatprep.subr.bf16.mxu0 0
      %2000 = vmatpush1.bf16.msra.mxu0 0
      %2001 = vmatprep.subr.bf16.mxu0 0
      %2002 = vmatpush1.bf16.msra.mxu0 0
      %2003 = vmatprep.subr.bf16.mxu0 0
      %2004 = vmatpush1.bf16.msra.mxu0 0
      %2005 = vmatprep.subr.bf16.mxu0 0
      %2006 = vmatpush1.bf16.msra.mxu0 0
      %2007 = vmatprep.subr.bf16.mxu0 0
      %2008 = vmatpush1.bf16.msra.mxu0 0
      %2009 = vmatprep.mubr.bf16.mxu0 0
      %2010 = vmatmul.mubr.bf16.gmra.mrb[0].mxu0 %v1927
      %v2011 = vpop.f32.mrb[0].mxu0
      %v2012 = vadd.f32 0.0, %v2011
      %v2013 = vpop.f32.mrb[0].mxu0
      %v2014 = vpop.f32.mrb[0].mxu0
      %v2015 = vadd.f32 0.0, %v2014
      %v2016 = vpop.f32.mrb[0].mxu0
      %2017 = vmatprep.mubr.bf16.mxu0 0
      %2018 = vmatmul.mubr.bf16.gmra.mrb[0].mxu0 %v1930
      %v2019 = vpop.f32.mrb[0].mxu0
      %v2020 = vadd.f32 0.0, %v2019
      %v2021 = vpop.f32.mrb[0].mxu0
      %v2022 = vpop.f32.mrb[0].mxu0
      %v2023 = vadd.f32 0.0, %v2022
      %v2024 = vpop.f32.mrb[0].mxu0
      %2025 = vmatprep.mubr.bf16.mxu0 0
      %2026 = vmatmul.mubr.bf16.gmra.mrb[0].mxu0 %v1933
      %v2027 = vpop.f32.mrb[0].mxu0
      %v2028 = vadd.f32 0.0, %v2027
      %v2029 = vpop.f32.mrb[0].mxu0
      %v2030 = vpop.f32.mrb[0].mxu0
      %v2031 = vadd.f32 0.0, %v2030
      %v2032 = vpop.f32.mrb[0].mxu0
      %2033 = vmatprep.mubr.bf16.mxu0 0
      %2034 = vmatmul.mubr.bf16.gmra.mrb[0].mxu0 %v1936
      %v2035 = vpop.f32.mrb[0].mxu0
      %v2036 = vadd.f32 0.0, %v2035
      %v2037 = vpop.f32.mrb[0].mxu0
      %v2038 = vpop.f32.mrb[0].mxu0
      %v2039 = vadd.f32 0.0, %v2038
      %v2040 = vpop.f32.mrb[0].mxu0
      %2041 = vmatprep.mubr.bf16.mxu0 0
      %2042 = vmatmul.mubr.bf16.gmra.mrb[0].mxu0 %v1939
      %v2043 = vpop.f32.mrb[0].mxu0
      %v2044 = vadd.f32 0.0, %v2043
      %v2045 = vpop.f32.mrb[0].mxu0
      %v2046 = vpop.f32.mrb[0].mxu0
      %v2047 = vadd.f32 0.0, %v2046
      %v2048 = vpop.f32.mrb[0].mxu0
      %2049 = vmatprep.mubr.bf16.mxu0 0
      %2050 = vmatmul.mubr.bf16.gmra.mrb[0].mxu0 %v1942
      %v2051 = vpop.f32.mrb[0].mxu0
      %v2052 = vadd.f32 0.0, %v2051
      %v2053 = vpop.f32.mrb[0].mxu0
      %v2054 = vpop.f32.mrb[0].mxu0
      %v2055 = vadd.f32 0.0, %v2054
      %v2056 = vpop.f32.mrb[0].mxu0
      %2057 = vmatprep.mubr.bf16.mxu0 0
      %2058 = vmatmul.mubr.bf16.gmra.mrb[0].mxu0 %v1945
      %v2059 = vpop.f32.mrb[0].mxu0
      %v2060 = vadd.f32 0.0, %v2059
      %v2061 = vpop.f32.mrb[0].mxu0
      %v2062 = vpop.f32.mrb[0].mxu0
      %v2063 = vadd.f32 0.0, %v2062
      %v2064 = vpop.f32.mrb[0].mxu0
      %2065 = vmatprep.mubr.bf16.mxu0 0
      %2066 = vmatmul.mubr.bf16.gmra.mrb[0].mxu0 %v1948
      %v2067 = vpop.f32.mrb[0].mxu0
      %v2068 = vadd.f32 0.0, %v2067
      %v2069 = vpop.f32.mrb[0].mxu0
      %v2070 = vpop.f32.mrb[0].mxu0
      %v2071 = vadd.f32 0.0, %v2070
      %v2072 = vpop.f32.mrb[0].mxu0
      %2073 = vmatprep.mubr.bf16.mxu0 0
      %2074 = vmatmul.mubr.bf16.gmra.mrb[0].mxu0 %v1951
      %v2075 = vpop.f32.mrb[0].mxu0
      %v2076 = vadd.f32 0.0, %v2075
      %v2077 = vpop.f32.mrb[0].mxu0
      %v2078 = vpop.f32.mrb[0].mxu0
      %v2079 = vadd.f32 0.0, %v2078
      %v2080 = vpop.f32.mrb[0].mxu0
      %2081 = vmatprep.mubr.bf16.mxu0 0
      %2082 = vmatmul.mubr.bf16.gmra.mrb[0].mxu0 %v1954
      %v2083 = vpop.f32.mrb[0].mxu0
      %v2084 = vadd.f32 0.0, %v2083
      %v2085 = vpop.f32.mrb[0].mxu0
      %v2086 = vpop.f32.mrb[0].mxu0
      %v2087 = vadd.f32 0.0, %v2086
      %v2088 = vpop.f32.mrb[0].mxu0
      %2089 = vmatprep.mubr.bf16.mxu0 0
      %2090 = vmatmul.mubr.bf16.gmra.mrb[0].mxu0 %v1957
      %v2091 = vpop.f32.mrb[0].mxu0
      %v2092 = vadd.f32 0.0, %v2091
      %v2093 = vpop.f32.mrb[0].mxu0
      %v2094 = vpop.f32.mrb[0].mxu0
      %v2095 = vadd.f32 0.0, %v2094
      %v2096 = vpop.f32.mrb[0].mxu0
      %2097 = vmatprep.mubr.bf16.mxu0 0
      %2098 = vmatmul.mubr.bf16.gmra.mrb[0].mxu0 %v1960
      %v2099 = vpop.f32.mrb[0].mxu0
      %v2100 = vadd.f32 0.0, %v2099
      %v2101 = vpop.f32.mrb[0].mxu0
      %v2102 = vpop.f32.mrb[0].mxu0
      %v2103 = vadd.f32 0.0, %v2102
      %v2104 = vpop.f32.mrb[0].mxu0
      %2105 = vmatprep.mubr.bf16.mxu0 0
      %2106 = vmatmul.mubr.bf16.gmra.mrb[0].mxu0 %v1963
      %v2107 = vpop.f32.mrb[0].mxu0
      %v2108 = vadd.f32 0.0, %v2107
      %v2109 = vpop.f32.mrb[0].mxu0
      %v2110 = vpop.f32.mrb[0].mxu0
      %v2111 = vadd.f32 0.0, %v2110
      %v2112 = vpop.f32.mrb[0].mxu0
      %2113 = vmatprep.mubr.bf16.mxu0 0
      %2114 = vmatmul.mubr.bf16.gmra.mrb[0].mxu0 %v1966
      %v2115 = vpop.f32.mrb[0].mxu0
      %v2116 = vadd.f32 0.0, %v2115
      %v2117 = vpop.f32.mrb[0].mxu0
      %v2118 = vpop.f32.mrb[0].mxu0
      %v2119 = vadd.f32 0.0, %v2118
      %v2120 = vpop.f32.mrb[0].mxu0
      %2121 = vmatprep.mubr.bf16.mxu0 0
      %2122 = vmatmul.mubr.bf16.gmra.mrb[0].mxu0 %v1969
      %v2123 = vpop.f32.mrb[0].mxu0
      %v2124 = vadd.f32 0.0, %v2123
      %v2125 = vpop.f32.mrb[0].mxu0
      %v2126 = vpop.f32.mrb[0].mxu0
      %v2127 = vadd.f32 0.0, %v2126
      %v2128 = vpop.f32.mrb[0].mxu0
      %2129 = vmatprep.mubr.bf16.mxu0 0
      %2130 = vmatmul.mubr.bf16.gmra.mrb[0].mxu0 %v1972
      %v2131 = vpop.f32.mrb[0].mxu0
      %v2132 = vadd.f32 0.0, %v2131
      %v2133 = vpop.f32.mrb[0].mxu0
      %v2134 = vpop.f32.mrb[0].mxu0
      %v2135 = vadd.f32 0.0, %v2134
      %v2136 = vpop.f32.mrb[0].mxu0
      %2137 = vdwg.mxu0
      %v2138 = vld [vmem:[%s289] sm:$0xff]
      %v2139 = vld [vmem:[%s289 + $0x8] sm:$0xff]
      %v2140 = vld [vmem:[%s289 + $0x10] sm:$0xff]
      %v2141 = vld [vmem:[%s289 + $0x18] sm:$0xff]
      %v2142 = vld [vmem:[%s289 + $0x20] sm:$0xff]
      %v2143 = vld [vmem:[%s289 + $0x28] sm:$0xff]
      %v2144 = vld [vmem:[%s289 + $0x30] sm:$0xff]
      %v2145 = vld [vmem:[%s289 + $0x38] sm:$0xff]
      %v2146 = vld [vmem:[%s289 + $0x40] sm:$0xff]
      %v2147 = vld [vmem:[%s289 + $0x48] sm:$0xff]
      %v2148 = vld [vmem:[%s289 + $0x50] sm:$0xff]
      %v2149 = vld [vmem:[%s289 + $0x58] sm:$0xff]
      %v2150 = vld [vmem:[%s289 + $0x60] sm:$0xff]
      %v2151 = vld [vmem:[%s289 + $0x68] sm:$0xff]
      %v2152 = vld [vmem:[%s289 + $0x70] sm:$0xff]
      %v2153 = vld [vmem:[%s289 + $0x78] sm:$0xff]
      %v2154 = vld [vmem:[%s289 + $0x80] sm:$0xff]
      %v2155 = vld [vmem:[%s289 + $0x88] sm:$0xff]
      %v2156 = vld [vmem:[%s289 + $0x90] sm:$0xff]
      %v2157 = vld [vmem:[%s289 + $0x98] sm:$0xff]
      %v2158 = vld [vmem:[%s289 + $0xa0] sm:$0xff]
      %v2159 = vld [vmem:[%s289 + $0xa8] sm:$0xff]
      %v2160 = vld [vmem:[%s289 + $0xb0] sm:$0xff]
      %v2161 = vld [vmem:[%s289 + $0xb8] sm:$0xff]
      %v2162 = vld [vmem:[%s289 + $0xc0] sm:$0xff]
      %v2163 = vld [vmem:[%s289 + $0xc8] sm:$0xff]
      %v2164 = vld [vmem:[%s289 + $0xd0] sm:$0xff]
      %v2165 = vld [vmem:[%s289 + $0xd8] sm:$0xff]
      %v2166 = vld [vmem:[%s289 + $0xe0] sm:$0xff]
      %v2167 = vld [vmem:[%s289 + $0xe8] sm:$0xff]
      %v2168 = vld [vmem:[%s289 + $0xf0] sm:$0xff]
      %v2169 = vld [vmem:[%s289 + $0xf8] sm:$0xff]
      %v2170 = vadd.f32 %v2138, %v2012
      %v2171 = vadd.f32 %v2139, %v2015
      %v2172 = vadd.f32 %v2140, %v2020
      %v2173 = vadd.f32 %v2141, %v2023
      %v2174 = vadd.f32 %v2142, %v2028
      %v2175 = vadd.f32 %v2143, %v2031
      %v2176 = vadd.f32 %v2144, %v2036
      %v2177 = vadd.f32 %v2145, %v2039
      %v2178 = vadd.f32 %v2146, %v2044
      %v2179 = vadd.f32 %v2147, %v2047
      %v2180 = vadd.f32 %v2148, %v2052
      %v2181 = vadd.f32 %v2149, %v2055
      %v2182 = vadd.f32 %v2150, %v2060
      %v2183 = vadd.f32 %v2151, %v2063
      %v2184 = vadd.f32 %v2152, %v2068
      %v2185 = vadd.f32 %v2153, %v2071
      %v2186 = vadd.f32 %v2154, %v2076
      %v2187 = vadd.f32 %v2155, %v2079
      %v2188 = vadd.f32 %v2156, %v2084
      %v2189 = vadd.f32 %v2157, %v2087
      %v2190 = vadd.f32 %v2158, %v2092
      %v2191 = vadd.f32 %v2159, %v2095
      %v2192 = vadd.f32 %v2160, %v2100
      %v2193 = vadd.f32 %v2161, %v2103
      %v2194 = vadd.f32 %v2162, %v2108
      %v2195 = vadd.f32 %v2163, %v2111
      %v2196 = vadd.f32 %v2164, %v2116
      %v2197 = vadd.f32 %v2165, %v2119
      %v2198 = vadd.f32 %v2166, %v2124
      %v2199 = vadd.f32 %v2167, %v2127
      %v2200 = vadd.f32 %v2168, %v2132
      %v2201 = vadd.f32 %v2169, %v2135
      %2202 = vst.msk [vmem:[%s289] sm:$0xff] %vm297, %v2170
      %2203 = vst.msk [vmem:[%s289 + $0x8] sm:$0xff] %vm297, %v2171
      %2204 = vst.msk [vmem:[%s289 + $0x10] sm:$0xff] %vm297, %v2172
      %2205 = vst.msk [vmem:[%s289 + $0x18] sm:$0xff] %vm297, %v2173
      %2206 = vst.msk [vmem:[%s289 + $0x20] sm:$0xff] %vm297, %v2174
      %2207 = vst.msk [vmem:[%s289 + $0x28] sm:$0xff] %vm297, %v2175
      %2208 = vst.msk [vmem:[%s289 + $0x30] sm:$0xff] %vm297, %v2176
      %2209 = vst.msk [vmem:[%s289 + $0x38] sm:$0xff] %vm297, %v2177
      %2210 = vst.msk [vmem:[%s289 + $0x40] sm:$0xff] %vm297, %v2178
      %2211 = vst.msk [vmem:[%s289 + $0x48] sm:$0xff] %vm297, %v2179
      %2212 = vst.msk [vmem:[%s289 + $0x50] sm:$0xff] %vm297, %v2180
      %2213 = vst.msk [vmem:[%s289 + $0x58] sm:$0xff] %vm297, %v2181
      %2214 = vst.msk [vmem:[%s289 + $0x60] sm:$0xff] %vm297, %v2182
      %2215 = vst.msk [vmem:[%s289 + $0x68] sm:$0xff] %vm297, %v2183
      %2216 = vst.msk [vmem:[%s289 + $0x70] sm:$0xff] %vm297, %v2184
      %2217 = vst.msk [vmem:[%s289 + $0x78] sm:$0xff] %vm297, %v2185
      %2218 = vst.msk [vmem:[%s289 + $0x80] sm:$0xff] %vm297, %v2186
      %2219 = vst.msk [vmem:[%s289 + $0x88] sm:$0xff] %vm297, %v2187
      %2220 = vst.msk [vmem:[%s289 + $0x90] sm:$0xff] %vm297, %v2188
      %2221 = vst.msk [vmem:[%s289 + $0x98] sm:$0xff] %vm297, %v2189
      %2222 = vst.msk [vmem:[%s289 + $0xa0] sm:$0xff] %vm297, %v2190
      %2223 = vst.msk [vmem:[%s289 + $0xa8] sm:$0xff] %vm297, %v2191
      %2224 = vst.msk [vmem:[%s289 + $0xb0] sm:$0xff] %vm297, %v2192
      %2225 = vst.msk [vmem:[%s289 + $0xb8] sm:$0xff] %vm297, %v2193
      %2226 = vst.msk [vmem:[%s289 + $0xc0] sm:$0xff] %vm297, %v2194
      %2227 = vst.msk [vmem:[%s289 + $0xc8] sm:$0xff] %vm297, %v2195
      %2228 = vst.msk [vmem:[%s289 + $0xd0] sm:$0xff] %vm297, %v2196
      %2229 = vst.msk [vmem:[%s289 + $0xd8] sm:$0xff] %vm297, %v2197
      %2230 = vst.msk [vmem:[%s289 + $0xe0] sm:$0xff] %vm297, %v2198
      %2231 = vst.msk [vmem:[%s289 + $0xe8] sm:$0xff] %vm297, %v2199
      %2232 = vst.msk [vmem:[%s289 + $0xf0] sm:$0xff] %vm297, %v2200
      %2233 = vst.msk [vmem:[%s289 + $0xf8] sm:$0xff] %vm297, %v2201
      %v2234 = vld [vmem:[#allocation2 + $0x27] sm:$0xff]
      %v2235 = vld [vmem:[#allocation2 + $0x2f] sm:$0xff]
      %v2236 = vld [vmem:[#allocation2 + $0x37] sm:$0xff]
      %v2237 = vld [vmem:[#allocation2 + $0x3f] sm:$0xff]
      %v2238 = vld [vmem:[#allocation2 + $0x47] sm:$0xff]
      %v2239 = vld [vmem:[#allocation2 + $0x4f] sm:$0xff]
      %v2240 = vld [vmem:[#allocation2 + $0x57] sm:$0xff]
      %v2241 = vld [vmem:[#allocation2 + $0x5f] sm:$0xff]
      %v2242 = vld [vmem:[#allocation2 + $0x67] sm:$0xff]
      %v2243 = vld [vmem:[#allocation2 + $0x6f] sm:$0xff]
      %v2244 = vld [vmem:[#allocation2 + $0x77] sm:$0xff]
      %v2245 = vld [vmem:[#allocation2 + $0x7f] sm:$0xff]
      %v2246 = vld [vmem:[#allocation2 + $0x87] sm:$0xff]
      %v2247 = vld [vmem:[#allocation2 + $0x8f] sm:$0xff]
      %v2248 = vld [vmem:[#allocation2 + $0x97] sm:$0xff]
      %v2249 = vld [vmem:[#allocation2 + $0x9f] sm:$0xff]
      %v2250 = vld [vmem:[#allocation2 + $0xa7] sm:$0xff]
      %v2251 = vld [vmem:[#allocation2 + $0xaf] sm:$0xff]
      %v2252 = vld [vmem:[#allocation2 + $0xb7] sm:$0xff]
      %v2253 = vld [vmem:[#allocation2 + $0xbf] sm:$0xff]
      %v2254 = vld [vmem:[#allocation2 + $0xc7] sm:$0xff]
      %v2255 = vld [vmem:[#allocation2 + $0xcf] sm:$0xff]
      %v2256 = vld [vmem:[#allocation2 + $0xd7] sm:$0xff]
      %v2257 = vld [vmem:[#allocation2 + $0xdf] sm:$0xff]
      %v2258 = vld [vmem:[#allocation2 + $0xe7] sm:$0xff]
      %v2259 = vld [vmem:[#allocation2 + $0xef] sm:$0xff]
      %v2260 = vld [vmem:[#allocation2 + $0xf7] sm:$0xff]
      %v2261 = vld [vmem:[#allocation2 + $0xff] sm:$0xff]
      %v2262 = vld [vmem:[#allocation2 + $0x107] sm:$0xff]
      %v2263 = vld [vmem:[#allocation2 + $0x10f] sm:$0xff]
      %v2264 = vld [vmem:[#allocation2 + $0x117] sm:$0xff]
      %v2265 = vld [vmem:[#allocation2 + $0x11f] sm:$0xff]
      %v2266 = vmul.f32 %v2234, %v578
      %v2267 = vmul.f32 %v2235, %v583
      %v2268 = vmul.f32 %v2236, %v588
      %v2269 = vmul.f32 %v2237, %v593
      %v2270 = vmul.f32 %v2238, %v598
      %v2271 = vmul.f32 %v2239, %v603
      %v2272 = vmul.f32 %v2240, %v608
      %v2273 = vmul.f32 %v2241, %v613
      %v2274 = vmul.f32 %v2242, %v618
      %v2275 = vmul.f32 %v2243, %v623
      %v2276 = vmul.f32 %v2244, %v628
      %v2277 = vmul.f32 %v2245, %v633
      %v2278 = vmul.f32 %v2246, %v638
      %v2279 = vmul.f32 %v2247, %v643
      %v2280 = vmul.f32 %v2248, %v648
      %v2281 = vmul.f32 %v2249, %v653
      %v2282 = vmul.f32 %v2250, %v658
      %v2283 = vmul.f32 %v2251, %v663
      %v2284 = vmul.f32 %v2252, %v668
      %v2285 = vmul.f32 %v2253, %v673
      %v2286 = vmul.f32 %v2254, %v678
      %v2287 = vmul.f32 %v2255, %v683
      %v2288 = vmul.f32 %v2256, %v688
      %v2289 = vmul.f32 %v2257, %v693
      %v2290 = vmul.f32 %v2258, %v698
      %v2291 = vmul.f32 %v2259, %v703
      %v2292 = vmul.f32 %v2260, %v708
      %v2293 = vmul.f32 %v2261, %v713
      %v2294 = vmul.f32 %v2262, %v718
      %v2295 = vmul.f32 %v2263, %v723
      %v2296 = vmul.f32 %v2264, %v728
      %v2297 = vmul.f32 %v2265, %v733
      %v2298 = vpack.c.bf16 %v2267, %v2266
      %v2299 = vpack.c.bf16 %v2269, %v2268
      %v2300 = vpack.c.bf16 %v2271, %v2270
      %v2301 = vpack.c.bf16 %v2273, %v2272
      %v2302 = vpack.c.bf16 %v2275, %v2274
      %v2303 = vpack.c.bf16 %v2277, %v2276
      %v2304 = vpack.c.bf16 %v2279, %v2278
      %v2305 = vpack.c.bf16 %v2281, %v2280
      %v2306 = vpack.c.bf16 %v2283, %v2282
      %v2307 = vpack.c.bf16 %v2285, %v2284
      %v2308 = vpack.c.bf16 %v2287, %v2286
      %v2309 = vpack.c.bf16 %v2289, %v2288
      %v2310 = vpack.c.bf16 %v2291, %v2290
      %v2311 = vpack.c.bf16 %v2293, %v2292
      %v2312 = vpack.c.bf16 %v2295, %v2294
      %v2313 = vpack.c.bf16 %v2297, %v2296
      %2314 = vst.msk [vmem:[#allocation3] sm:$0xff] %vm297, %v2298
      %2315 = vst.msk [vmem:[#allocation3 + $0x8] sm:$0xff] %vm297, %v2299
      %2316 = vst.msk [vmem:[#allocation3 + $0x10] sm:$0xff] %vm297, %v2300
      %2317 = vst.msk [vmem:[#allocation3 + $0x18] sm:$0xff] %vm297, %v2301
      %2318 = vst.msk [vmem:[#allocation3 + $0x20] sm:$0xff] %vm297, %v2302
      %2319 = vst.msk [vmem:[#allocation3 + $0x28] sm:$0xff] %vm297, %v2303
      %2320 = vst.msk [vmem:[#allocation3 + $0x30] sm:$0xff] %vm297, %v2304
      %2321 = vst.msk [vmem:[#allocation3 + $0x38] sm:$0xff] %vm297, %v2305
      %2322 = vst.msk [vmem:[#allocation3 + $0x40] sm:$0xff] %vm297, %v2306
      %2323 = vst.msk [vmem:[#allocation3 + $0x48] sm:$0xff] %vm297, %v2307
      %2324 = vst.msk [vmem:[#allocation3 + $0x50] sm:$0xff] %vm297, %v2308
      %2325 = vst.msk [vmem:[#allocation3 + $0x58] sm:$0xff] %vm297, %v2309
      %2326 = vst.msk [vmem:[#allocation3 + $0x60] sm:$0xff] %vm297, %v2310
      %2327 = vst.msk [vmem:[#allocation3 + $0x68] sm:$0xff] %vm297, %v2311
      %2328 = vst.msk [vmem:[#allocation3 + $0x70] sm:$0xff] %vm297, %v2312
      %2329 = vst.msk [vmem:[#allocation3 + $0x78] sm:$0xff] %vm297, %v2313
      %v2330 = vld [vmem:[#allocation2 + $0x28] sm:$0xff]
      %v2331 = vld [vmem:[#allocation2 + $0x30] sm:$0xff]
      %v2332 = vld [vmem:[#allocation2 + $0x38] sm:$0xff]
      %v2333 = vld [vmem:[#allocation2 + $0x40] sm:$0xff]
      %v2334 = vld [vmem:[#allocation2 + $0x48] sm:$0xff]
      %v2335 = vld [vmem:[#allocation2 + $0x50] sm:$0xff]
      %v2336 = vld [vmem:[#allocation2 + $0x58] sm:$0xff]
      %v2337 = vld [vmem:[#allocation2 + $0x60] sm:$0xff]
      %v2338 = vld [vmem:[#allocation2 + $0x68] sm:$0xff]
      %v2339 = vld [vmem:[#allocation2 + $0x70] sm:$0xff]
      %v2340 = vld [vmem:[#allocation2 + $0x78] sm:$0xff]
      %v2341 = vld [vmem:[#allocation2 + $0x80] sm:$0xff]
      %v2342 = vld [vmem:[#allocation2 + $0x88] sm:$0xff]
      %v2343 = vld [vmem:[#allocation2 + $0x90] sm:$0xff]
      %v2344 = vld [vmem:[#allocation2 + $0x98] sm:$0xff]
      %v2345 = vld [vmem:[#allocation2 + $0xa0] sm:$0xff]
      %v2346 = vld [vmem:[#allocation2 + $0xa8] sm:$0xff]
      %v2347 = vld [vmem:[#allocation2 + $0xb0] sm:$0xff]
      %v2348 = vld [vmem:[#allocation2 + $0xb8] sm:$0xff]
      %v2349 = vld [vmem:[#allocation2 + $0xc0] sm:$0xff]
      %v2350 = vld [vmem:[#allocation2 + $0xc8] sm:$0xff]
      %v2351 = vld [vmem:[#allocation2 + $0xd0] sm:$0xff]
      %v2352 = vld [vmem:[#allocation2 + $0xd8] sm:$0xff]
      %v2353 = vld [vmem:[#allocation2 + $0xe0] sm:$0xff]
      %v2354 = vld [vmem:[#allocation2 + $0xe8] sm:$0xff]
      %v2355 = vld [vmem:[#allocation2 + $0xf0] sm:$0xff]
      %v2356 = vld [vmem:[#allocation2 + $0xf8] sm:$0xff]
      %v2357 = vld [vmem:[#allocation2 + $0x100] sm:$0xff]
      %v2358 = vld [vmem:[#allocation2 + $0x108] sm:$0xff]
      %v2359 = vld [vmem:[#allocation2 + $0x110] sm:$0xff]
      %v2360 = vld [vmem:[#allocation2 + $0x118] sm:$0xff]
      %v2361 = vld [vmem:[#allocation2 + $0x120] sm:$0xff]
      %v2362 = vpack.c.bf16 %v2331, %v2330
      %v2363 = vpack.c.bf16 %v2333, %v2332
      %v2364 = vpack.c.bf16 %v2335, %v2334
      %v2365 = vpack.c.bf16 %v2337, %v2336
      %v2366 = vpack.c.bf16 %v2339, %v2338
      %v2367 = vpack.c.bf16 %v2341, %v2340
      %v2368 = vpack.c.bf16 %v2343, %v2342
      %v2369 = vpack.c.bf16 %v2345, %v2344
      %v2370 = vpack.c.bf16 %v2347, %v2346
      %v2371 = vpack.c.bf16 %v2349, %v2348
      %v2372 = vpack.c.bf16 %v2351, %v2350
      %v2373 = vpack.c.bf16 %v2353, %v2352
      %v2374 = vpack.c.bf16 %v2355, %v2354
      %v2375 = vpack.c.bf16 %v2357, %v2356
      %v2376 = vpack.c.bf16 %v2359, %v2358
      %v2377 = vpack.c.bf16 %v2361, %v2360
      %2394 = vrot.lane.b32.xlu0 %v2362, 4
      %v2395 = vpop.permute.xlu0 %2394
      %2396 = vrot.lane.b32.xlu0 %v2363, 4
      %v2397 = vpop.permute.xlu0 %2396
      %2398 = vrot.lane.b32.xlu0 %v2364, 4
      %v2399 = vpop.permute.xlu0 %2398
      %2400 = vrot.lane.b32.xlu0 %v2365, 4
      %v2401 = vpop.permute.xlu0 %2400
      %2402 = vrot.lane.b32.xlu0 %v2366, 4
      %v2403 = vpop.permute.xlu0 %2402
      %2404 = vrot.lane.b32.xlu0 %v2367, 4
      %v2405 = vpop.permute.xlu0 %2404
      %2406 = vrot.lane.b32.xlu0 %v2368, 4
      %v2407 = vpop.permute.xlu0 %2406
      %2408 = vrot.lane.b32.xlu0 %v2369, 4
      %v2409 = vpop.permute.xlu0 %2408
      %2410 = vrot.lane.b32.xlu0 %v2370, 4
      %v2411 = vpop.permute.xlu0 %2410
      %2412 = vrot.lane.b32.xlu0 %v2371, 4
      %v2413 = vpop.permute.xlu0 %2412
      %2414 = vrot.lane.b32.xlu0 %v2372, 4
      %v2415 = vpop.permute.xlu0 %2414
      %2416 = vrot.lane.b32.xlu0 %v2373, 4
      %v2417 = vpop.permute.xlu0 %2416
      %2418 = vrot.lane.b32.xlu0 %v2374, 4
      %v2419 = vpop.permute.xlu0 %2418
      %2420 = vrot.lane.b32.xlu0 %v2375, 4
      %v2421 = vpop.permute.xlu0 %2420
      %2422 = vrot.lane.b32.xlu0 %v2376, 4
      %v2423 = vpop.permute.xlu0 %2422
      %2424 = vrot.lane.b32.xlu0 %v2377, 4
      %v2425 = vpop.permute.xlu0 %2424
      %2442 = vst.msk [vmem:[#allocation3] sm:$0xff] %vm911, %v2395
      %2443 = vst.msk [vmem:[#allocation3 + $0x8] sm:$0xff] %vm911, %v2397
      %2444 = vst.msk [vmem:[#allocation3 + $0x10] sm:$0xff] %vm911, %v2399
      %2445 = vst.msk [vmem:[#allocation3 + $0x18] sm:$0xff] %vm911, %v2401
      %2446 = vst.msk [vmem:[#allocation3 + $0x20] sm:$0xff] %vm911, %v2403
      %2447 = vst.msk [vmem:[#allocation3 + $0x28] sm:$0xff] %vm911, %v2405
      %2448 = vst.msk [vmem:[#allocation3 + $0x30] sm:$0xff] %vm911, %v2407
      %2449 = vst.msk [vmem:[#allocation3 + $0x38] sm:$0xff] %vm911, %v2409
      %2450 = vst.msk [vmem:[#allocation3 + $0x40] sm:$0xff] %vm911, %v2411
      %2451 = vst.msk [vmem:[#allocation3 + $0x48] sm:$0xff] %vm911, %v2413
      %2452 = vst.msk [vmem:[#allocation3 + $0x50] sm:$0xff] %vm911, %v2415
      %2453 = vst.msk [vmem:[#allocation3 + $0x58] sm:$0xff] %vm911, %v2417
      %2454 = vst.msk [vmem:[#allocation3 + $0x60] sm:$0xff] %vm911, %v2419
      %2455 = vst.msk [vmem:[#allocation3 + $0x68] sm:$0xff] %vm911, %v2421
      %2456 = vst.msk [vmem:[#allocation3 + $0x70] sm:$0xff] %vm911, %v2423
      %2457 = vst.msk [vmem:[#allocation3 + $0x78] sm:$0xff] %vm911, %v2425
      %v2458 = vld [vmem:[#allocation2 + $0x29] sm:$0xff]
      %v2459 = vld [vmem:[#allocation2 + $0x31] sm:$0xff]
      %v2460 = vld [vmem:[#allocation2 + $0x39] sm:$0xff]
      %v2461 = vld [vmem:[#allocation2 + $0x41] sm:$0xff]
      %v2462 = vld [vmem:[#allocation2 + $0x49] sm:$0xff]
      %v2463 = vld [vmem:[#allocation2 + $0x51] sm:$0xff]
      %v2464 = vld [vmem:[#allocation2 + $0x59] sm:$0xff]
      %v2465 = vld [vmem:[#allocation2 + $0x61] sm:$0xff]
      %v2466 = vld [vmem:[#allocation2 + $0x69] sm:$0xff]
      %v2467 = vld [vmem:[#allocation2 + $0x71] sm:$0xff]
      %v2468 = vld [vmem:[#allocation2 + $0x79] sm:$0xff]
      %v2469 = vld [vmem:[#allocation2 + $0x81] sm:$0xff]
      %v2470 = vld [vmem:[#allocation2 + $0x89] sm:$0xff]
      %v2471 = vld [vmem:[#allocation2 + $0x91] sm:$0xff]
      %v2472 = vld [vmem:[#allocation2 + $0x99] sm:$0xff]
      %v2473 = vld [vmem:[#allocation2 + $0xa1] sm:$0xff]
      %v2474 = vld [vmem:[#allocation2 + $0xa9] sm:$0xff]
      %v2475 = vld [vmem:[#allocation2 + $0xb1] sm:$0xff]
      %v2476 = vld [vmem:[#allocation2 + $0xb9] sm:$0xff]
      %v2477 = vld [vmem:[#allocation2 + $0xc1] sm:$0xff]
      %v2478 = vld [vmem:[#allocation2 + $0xc9] sm:$0xff]
      %v2479 = vld [vmem:[#allocation2 + $0xd1] sm:$0xff]
      %v2480 = vld [vmem:[#allocation2 + $0xd9] sm:$0xff]
      %v2481 = vld [vmem:[#allocation2 + $0xe1] sm:$0xff]
      %v2482 = vld [vmem:[#allocation2 + $0xe9] sm:$0xff]
      %v2483 = vld [vmem:[#allocation2 + $0xf1] sm:$0xff]
      %v2484 = vld [vmem:[#allocation2 + $0xf9] sm:$0xff]
      %v2485 = vld [vmem:[#allocation2 + $0x101] sm:$0xff]
      %v2486 = vld [vmem:[#allocation2 + $0x109] sm:$0xff]
      %v2487 = vld [vmem:[#allocation2 + $0x111] sm:$0xff]
      %v2488 = vld [vmem:[#allocation2 + $0x119] sm:$0xff]
      %v2489 = vld [vmem:[#allocation2 + $0x121] sm:$0xff]
      %v2490 = vmul.f32 %v2458, %v963
      %v2491 = vmul.f32 %v2459, %v968
      %v2492 = vmul.f32 %v2460, %v973
      %v2493 = vmul.f32 %v2461, %v978
      %v2494 = vmul.f32 %v2462, %v983
      %v2495 = vmul.f32 %v2463, %v988
      %v2496 = vmul.f32 %v2464, %v993
      %v2497 = vmul.f32 %v2465, %v998
      %v2498 = vmul.f32 %v2466, %v1003
      %v2499 = vmul.f32 %v2467, %v1008
      %v2500 = vmul.f32 %v2468, %v1013
      %v2501 = vmul.f32 %v2469, %v1018
      %v2502 = vmul.f32 %v2470, %v1023
      %v2503 = vmul.f32 %v2471, %v1028
      %v2504 = vmul.f32 %v2472, %v1033
      %v2505 = vmul.f32 %v2473, %v1038
      %v2506 = vmul.f32 %v2474, %v1043
      %v2507 = vmul.f32 %v2475, %v1048
      %v2508 = vmul.f32 %v2476, %v1053
      %v2509 = vmul.f32 %v2477, %v1058
      %v2510 = vmul.f32 %v2478, %v1063
      %v2511 = vmul.f32 %v2479, %v1068
      %v2512 = vmul.f32 %v2480, %v1073
      %v2513 = vmul.f32 %v2481, %v1078
      %v2514 = vmul.f32 %v2482, %v1083
      %v2515 = vmul.f32 %v2483, %v1088
      %v2516 = vmul.f32 %v2484, %v1093
      %v2517 = vmul.f32 %v2485, %v1098
      %v2518 = vmul.f32 %v2486, %v1103
      %v2519 = vmul.f32 %v2487, %v1108
      %v2520 = vmul.f32 %v2488, %v1113
      %v2521 = vmul.f32 %v2489, %v1118
      %v2522 = vpack.c.bf16 %v2491, %v2490
      %v2523 = vpack.c.bf16 %v2493, %v2492
      %v2524 = vpack.c.bf16 %v2495, %v2494
      %v2525 = vpack.c.bf16 %v2497, %v2496
      %v2526 = vpack.c.bf16 %v2499, %v2498
      %v2527 = vpack.c.bf16 %v2501, %v2500
      %v2528 = vpack.c.bf16 %v2503, %v2502
      %v2529 = vpack.c.bf16 %v2505, %v2504
      %v2530 = vpack.c.bf16 %v2507, %v2506
      %v2531 = vpack.c.bf16 %v2509, %v2508
      %v2532 = vpack.c.bf16 %v2511, %v2510
      %v2533 = vpack.c.bf16 %v2513, %v2512
      %v2534 = vpack.c.bf16 %v2515, %v2514
      %v2535 = vpack.c.bf16 %v2517, %v2516
      %v2536 = vpack.c.bf16 %v2519, %v2518
      %v2537 = vpack.c.bf16 %v2521, %v2520
      %2554 = vrot.lane.b32.xlu0 %v2522, 8
      %v2555 = vpop.permute.xlu0 %2554
      %2556 = vrot.lane.b32.xlu0 %v2523, 8
      %v2557 = vpop.permute.xlu0 %2556
      %2558 = vrot.lane.b32.xlu0 %v2524, 8
      %v2559 = vpop.permute.xlu0 %2558
      %2560 = vrot.lane.b32.xlu0 %v2525, 8
      %v2561 = vpop.permute.xlu0 %2560
      %2562 = vrot.lane.b32.xlu0 %v2526, 8
      %v2563 = vpop.permute.xlu0 %2562
      %2564 = vrot.lane.b32.xlu0 %v2527, 8
      %v2565 = vpop.permute.xlu0 %2564
      %2566 = vrot.lane.b32.xlu0 %v2528, 8
      %v2567 = vpop.permute.xlu0 %2566
      %2568 = vrot.lane.b32.xlu0 %v2529, 8
      %v2569 = vpop.permute.xlu0 %2568
      %2570 = vrot.lane.b32.xlu0 %v2530, 8
      %v2571 = vpop.permute.xlu0 %2570
      %2572 = vrot.lane.b32.xlu0 %v2531, 8
      %v2573 = vpop.permute.xlu0 %2572
      %2574 = vrot.lane.b32.xlu0 %v2532, 8
      %v2575 = vpop.permute.xlu0 %2574
      %2576 = vrot.lane.b32.xlu0 %v2533, 8
      %v2577 = vpop.permute.xlu0 %2576
      %2578 = vrot.lane.b32.xlu0 %v2534, 8
      %v2579 = vpop.permute.xlu0 %2578
      %2580 = vrot.lane.b32.xlu0 %v2535, 8
      %v2581 = vpop.permute.xlu0 %2580
      %2582 = vrot.lane.b32.xlu0 %v2536, 8
      %v2583 = vpop.permute.xlu0 %2582
      %2584 = vrot.lane.b32.xlu0 %v2537, 8
      %v2585 = vpop.permute.xlu0 %2584
      %2602 = vst.msk [vmem:[#allocation3] sm:$0xff] %vm1232, %v2555
      %2603 = vst.msk [vmem:[#allocation3 + $0x8] sm:$0xff] %vm1232, %v2557
      %2604 = vst.msk [vmem:[#allocation3 + $0x10] sm:$0xff] %vm1232, %v2559
      %2605 = vst.msk [vmem:[#allocation3 + $0x18] sm:$0xff] %vm1232, %v2561
      %2606 = vst.msk [vmem:[#allocation3 + $0x20] sm:$0xff] %vm1232, %v2563
      %2607 = vst.msk [vmem:[#allocation3 + $0x28] sm:$0xff] %vm1232, %v2565
      %2608 = vst.msk [vmem:[#allocation3 + $0x30] sm:$0xff] %vm1232, %v2567
      %2609 = vst.msk [vmem:[#allocation3 + $0x38] sm:$0xff] %vm1232, %v2569
      %2610 = vst.msk [vmem:[#allocation3 + $0x40] sm:$0xff] %vm1232, %v2571
      %2611 = vst.msk [vmem:[#allocation3 + $0x48] sm:$0xff] %vm1232, %v2573
      %2612 = vst.msk [vmem:[#allocation3 + $0x50] sm:$0xff] %vm1232, %v2575
      %2613 = vst.msk [vmem:[#allocation3 + $0x58] sm:$0xff] %vm1232, %v2577
      %2614 = vst.msk [vmem:[#allocation3 + $0x60] sm:$0xff] %vm1232, %v2579
      %2615 = vst.msk [vmem:[#allocation3 + $0x68] sm:$0xff] %vm1232, %v2581
      %2616 = vst.msk [vmem:[#allocation3 + $0x70] sm:$0xff] %vm1232, %v2583
      %2617 = vst.msk [vmem:[#allocation3 + $0x78] sm:$0xff] %vm1232, %v2585
      %v2618 = vld [vmem:[#allocation3] sm:$0xff]
      %v2619 = vld [vmem:[#allocation3 + $0x8] sm:$0xff]
      %v2620 = vld [vmem:[#allocation3 + $0x10] sm:$0xff]
      %v2621 = vld [vmem:[#allocation3 + $0x18] sm:$0xff]
      %v2622 = vld [vmem:[#allocation3 + $0x20] sm:$0xff]
      %v2623 = vld [vmem:[#allocation3 + $0x28] sm:$0xff]
      %v2624 = vld [vmem:[#allocation3 + $0x30] sm:$0xff]
      %v2625 = vld [vmem:[#allocation3 + $0x38] sm:$0xff]
      %v2626 = vld [vmem:[#allocation3 + $0x40] sm:$0xff]
      %v2627 = vld [vmem:[#allocation3 + $0x48] sm:$0xff]
      %v2628 = vld [vmem:[#allocation3 + $0x50] sm:$0xff]
      %v2629 = vld [vmem:[#allocation3 + $0x58] sm:$0xff]
      %v2630 = vld [vmem:[#allocation3 + $0x60] sm:$0xff]
      %v2631 = vld [vmem:[#allocation3 + $0x68] sm:$0xff]
      %v2632 = vld [vmem:[#allocation3 + $0x70] sm:$0xff]
      %v2633 = vld [vmem:[#allocation3 + $0x78] sm:$0xff]
      %s2634 = scalar_lea.vmem %s3, 16
      %v2635 = vld [vmem:[%s2634] sm:$0xf]
      %v2636 = vld [vmem:[%s2634 + $0x4] sm:$0x3]
      %v2639 = vunpack.c.l.b16 %v2635
      %v2640 = vunpack.c.l.b16 %v2636
      %v2641 = vpack.c.b16 %v2640, %v2639
      %v2643 = vsel %vm1272, %v2618, 0
      %v2646 = vsel %vm1272, %v2619, 0
      %v2649 = vsel %vm1272, %v2620, 0
      %v2652 = vsel %vm1272, %v2621, 0
      %v2655 = vsel %vm1272, %v2622, 0
      %v2658 = vsel %vm1272, %v2623, 0
      %v2661 = vsel %vm1272, %v2624, 0
      %v2664 = vsel %vm1272, %v2625, 0
      %v2667 = vsel %vm1272, %v2626, 0
      %v2670 = vsel %vm1272, %v2627, 0
      %v2673 = vsel %vm1272, %v2628, 0
      %v2676 = vsel %vm1272, %v2629, 0
      %v2679 = vsel %vm1272, %v2630, 0
      %v2682 = vsel %vm1272, %v2631, 0
      %v2685 = vsel %vm1272, %v2632, 0
      %v2688 = vsel %vm1272, %v2633, 0
      %v2691 = vsel %vm1321, %v2641, 0
      %2693 = vmatprep.subr.bf16.mxu0 0
      %2694 = vmatpush1.bf16.msra.mxu0 %v2691
      %2695 = vmatprep.subr.bf16.mxu0 0
      %2696 = vmatpush1.bf16.msra.mxu0 0
      %2697 = vmatprep.subr.bf16.mxu0 0
      %2698 = vmatpush1.bf16.msra.mxu0 0
      %2699 = vmatprep.subr.bf16.mxu0 0
      %2700 = vmatpush1.bf16.msra.mxu0 0
      %2701 = vmatprep.subr.bf16.mxu0 0
      %2702 = vmatpush1.bf16.msra.mxu0 0
      %2703 = vmatprep.subr.bf16.mxu0 0
      %2704 = vmatpush1.bf16.msra.mxu0 0
      %2705 = vmatprep.subr.bf16.mxu0 0
      %2706 = vmatpush1.bf16.msra.mxu0 0
      %2707 = vmatprep.subr.bf16.mxu0 0
      %2708 = vmatpush1.bf16.msra.mxu0 0
      %2709 = vmatprep.subr.bf16.mxu0 0
      %2710 = vmatpush1.bf16.msra.mxu0 0
      %2711 = vmatprep.subr.bf16.mxu0 0
      %2712 = vmatpush1.bf16.msra.mxu0 0
      %2713 = vmatprep.subr.bf16.mxu0 0
      %2714 = vmatpush1.bf16.msra.mxu0 0
      %2715 = vmatprep.subr.bf16.mxu0 0
      %2716 = vmatpush1.bf16.msra.mxu0 0
      %2717 = vmatprep.subr.bf16.mxu0 0
      %2718 = vmatpush1.bf16.msra.mxu0 0
      %2719 = vmatprep.subr.bf16.mxu0 0
      %2720 = vmatpush1.bf16.msra.mxu0 0
      %2721 = vmatprep.subr.bf16.mxu0 0
      %2722 = vmatpush1.bf16.msra.mxu0 0
      %2723 = vmatprep.subr.bf16.mxu0 0
      %2724 = vmatpush1.bf16.msra.mxu0 0
      %2725 = vmatprep.mubr.bf16.mxu0 0
      %2726 = vmatmul.mubr.bf16.gmra.mrb[0].mxu0 %v2643
      %v2727 = vpop.f32.mrb[0].mxu0
      %v2728 = vadd.f32 0.0, %v2727
      %v2729 = vpop.f32.mrb[0].mxu0
      %v2730 = vpop.f32.mrb[0].mxu0
      %v2731 = vadd.f32 0.0, %v2730
      %v2732 = vpop.f32.mrb[0].mxu0
      %2733 = vmatprep.mubr.bf16.mxu0 0
      %2734 = vmatmul.mubr.bf16.gmra.mrb[0].mxu0 %v2646
      %v2735 = vpop.f32.mrb[0].mxu0
      %v2736 = vadd.f32 0.0, %v2735
      %v2737 = vpop.f32.mrb[0].mxu0
      %v2738 = vpop.f32.mrb[0].mxu0
      %v2739 = vadd.f32 0.0, %v2738
      %v2740 = vpop.f32.mrb[0].mxu0
      %2741 = vmatprep.mubr.bf16.mxu0 0
      %2742 = vmatmul.mubr.bf16.gmra.mrb[0].mxu0 %v2649
      %v2743 = vpop.f32.mrb[0].mxu0
      %v2744 = vadd.f32 0.0, %v2743
      %v2745 = vpop.f32.mrb[0].mxu0
      %v2746 = vpop.f32.mrb[0].mxu0
      %v2747 = vadd.f32 0.0, %v2746
      %v2748 = vpop.f32.mrb[0].mxu0
      %2749 = vmatprep.mubr.bf16.mxu0 0
      %2750 = vmatmul.mubr.bf16.gmra.mrb[0].mxu0 %v2652
      %v2751 = vpop.f32.mrb[0].mxu0
      %v2752 = vadd.f32 0.0, %v2751
      %v2753 = vpop.f32.mrb[0].mxu0
      %v2754 = vpop.f32.mrb[0].mxu0
      %v2755 = vadd.f32 0.0, %v2754
      %v2756 = vpop.f32.mrb[0].mxu0
      %2757 = vmatprep.mubr.bf16.mxu0 0
      %2758 = vmatmul.mubr.bf16.gmra.mrb[0].mxu0 %v2655
      %v2759 = vpop.f32.mrb[0].mxu0
      %v2760 = vadd.f32 0.0, %v2759
      %v2761 = vpop.f32.mrb[0].mxu0
      %v2762 = vpop.f32.mrb[0].mxu0
      %v2763 = vadd.f32 0.0, %v2762
      %v2764 = vpop.f32.mrb[0].mxu0
      %2765 = vmatprep.mubr.bf16.mxu0 0
      %2766 = vmatmul.mubr.bf16.gmra.mrb[0].mxu0 %v2658
      %v2767 = vpop.f32.mrb[0].mxu0
      %v2768 = vadd.f32 0.0, %v2767
      %v2769 = vpop.f32.mrb[0].mxu0
      %v2770 = vpop.f32.mrb[0].mxu0
      %v2771 = vadd.f32 0.0, %v2770
      %v2772 = vpop.f32.mrb[0].mxu0
      %2773 = vmatprep.mubr.bf16.mxu0 0
      %2774 = vmatmul.mubr.bf16.gmra.mrb[0].mxu0 %v2661
      %v2775 = vpop.f32.mrb[0].mxu0
      %v2776 = vadd.f32 0.0, %v2775
      %v2777 = vpop.f32.mrb[0].mxu0
      %v2778 = vpop.f32.mrb[0].mxu0
      %v2779 = vadd.f32 0.0, %v2778
      %v2780 = vpop.f32.mrb[0].mxu0
      %2781 = vmatprep.mubr.bf16.mxu0 0
      %2782 = vmatmul.mubr.bf16.gmra.mrb[0].mxu0 %v2664
      %v2783 = vpop.f32.mrb[0].mxu0
      %v2784 = vadd.f32 0.0, %v2783
      %v2785 = vpop.f32.mrb[0].mxu0
      %v2786 = vpop.f32.mrb[0].mxu0
      %v2787 = vadd.f32 0.0, %v2786
      %v2788 = vpop.f32.mrb[0].mxu0
      %2789 = vmatprep.mubr.bf16.mxu0 0
      %2790 = vmatmul.mubr.bf16.gmra.mrb[0].mxu0 %v2667
      %v2791 = vpop.f32.mrb[0].mxu0
      %v2792 = vadd.f32 0.0, %v2791
      %v2793 = vpop.f32.mrb[0].mxu0
      %v2794 = vpop.f32.mrb[0].mxu0
      %v2795 = vadd.f32 0.0, %v2794
      %v2796 = vpop.f32.mrb[0].mxu0
      %2797 = vmatprep.mubr.bf16.mxu0 0
      %2798 = vmatmul.mubr.bf16.gmra.mrb[0].mxu0 %v2670
      %v2799 = vpop.f32.mrb[0].mxu0
      %v2800 = vadd.f32 0.0, %v2799
      %v2801 = vpop.f32.mrb[0].mxu0
      %v2802 = vpop.f32.mrb[0].mxu0
      %v2803 = vadd.f32 0.0, %v2802
      %v2804 = vpop.f32.mrb[0].mxu0
      %2805 = vmatprep.mubr.bf16.mxu0 0
      %2806 = vmatmul.mubr.bf16.gmra.mrb[0].mxu0 %v2673
      %v2807 = vpop.f32.mrb[0].mxu0
      %v2808 = vadd.f32 0.0, %v2807
      %v2809 = vpop.f32.mrb[0].mxu0
      %v2810 = vpop.f32.mrb[0].mxu0
      %v2811 = vadd.f32 0.0, %v2810
      %v2812 = vpop.f32.mrb[0].mxu0
      %2813 = vmatprep.mubr.bf16.mxu0 0
      %2814 = vmatmul.mubr.bf16.gmra.mrb[0].mxu0 %v2676
      %v2815 = vpop.f32.mrb[0].mxu0
      %v2816 = vadd.f32 0.0, %v2815
      %v2817 = vpop.f32.mrb[0].mxu0
      %v2818 = vpop.f32.mrb[0].mxu0
      %v2819 = vadd.f32 0.0, %v2818
      %v2820 = vpop.f32.mrb[0].mxu0
      %2821 = vmatprep.mubr.bf16.mxu0 0
      %2822 = vmatmul.mubr.bf16.gmra.mrb[0].mxu0 %v2679
      %v2823 = vpop.f32.mrb[0].mxu0
      %v2824 = vadd.f32 0.0, %v2823
      %v2825 = vpop.f32.mrb[0].mxu0
      %v2826 = vpop.f32.mrb[0].mxu0
      %v2827 = vadd.f32 0.0, %v2826
      %v2828 = vpop.f32.mrb[0].mxu0
      %2829 = vmatprep.mubr.bf16.mxu0 0
      %2830 = vmatmul.mubr.bf16.gmra.mrb[0].mxu0 %v2682
      %v2831 = vpop.f32.mrb[0].mxu0
      %v2832 = vadd.f32 0.0, %v2831
      %v2833 = vpop.f32.mrb[0].mxu0
      %v2834 = vpop.f32.mrb[0].mxu0
      %v2835 = vadd.f32 0.0, %v2834
      %v2836 = vpop.f32.mrb[0].mxu0
      %2837 = vmatprep.mubr.bf16.mxu0 0
      %2838 = vmatmul.mubr.bf16.gmra.mrb[0].mxu0 %v2685
      %v2839 = vpop.f32.mrb[0].mxu0
      %v2840 = vadd.f32 0.0, %v2839
      %v2841 = vpop.f32.mrb[0].mxu0
      %v2842 = vpop.f32.mrb[0].mxu0
      %v2843 = vadd.f32 0.0, %v2842
      %v2844 = vpop.f32.mrb[0].mxu0
      %2845 = vmatprep.mubr.bf16.mxu0 0
      %2846 = vmatmul.mubr.bf16.gmra.mrb[0].mxu0 %v2688
      %v2847 = vpop.f32.mrb[0].mxu0
      %v2848 = vadd.f32 0.0, %v2847
      %v2849 = vpop.f32.mrb[0].mxu0
      %v2850 = vpop.f32.mrb[0].mxu0
      %v2851 = vadd.f32 0.0, %v2850
      %v2852 = vpop.f32.mrb[0].mxu0
      %2853 = vdwg.mxu0
      %v2854 = vld [vmem:[%s289] sm:$0xff]
      %v2855 = vld [vmem:[%s289 + $0x8] sm:$0xff]
      %v2856 = vld [vmem:[%s289 + $0x10] sm:$0xff]
      %v2857 = vld [vmem:[%s289 + $0x18] sm:$0xff]
      %v2858 = vld [vmem:[%s289 + $0x20] sm:$0xff]
      %v2859 = vld [vmem:[%s289 + $0x28] sm:$0xff]
      %v2860 = vld [vmem:[%s289 + $0x30] sm:$0xff]
      %v2861 = vld [vmem:[%s289 + $0x38] sm:$0xff]
      %v2862 = vld [vmem:[%s289 + $0x40] sm:$0xff]
      %v2863 = vld [vmem:[%s289 + $0x48] sm:$0xff]
      %v2864 = vld [vmem:[%s289 + $0x50] sm:$0xff]
      %v2865 = vld [vmem:[%s289 + $0x58] sm:$0xff]
      %v2866 = vld [vmem:[%s289 + $0x60] sm:$0xff]
      %v2867 = vld [vmem:[%s289 + $0x68] sm:$0xff]
      %v2868 = vld [vmem:[%s289 + $0x70] sm:$0xff]
      %v2869 = vld [vmem:[%s289 + $0x78] sm:$0xff]
      %v2870 = vld [vmem:[%s289 + $0x80] sm:$0xff]
      %v2871 = vld [vmem:[%s289 + $0x88] sm:$0xff]
      %v2872 = vld [vmem:[%s289 + $0x90] sm:$0xff]
      %v2873 = vld [vmem:[%s289 + $0x98] sm:$0xff]
      %v2874 = vld [vmem:[%s289 + $0xa0] sm:$0xff]
      %v2875 = vld [vmem:[%s289 + $0xa8] sm:$0xff]
      %v2876 = vld [vmem:[%s289 + $0xb0] sm:$0xff]
      %v2877 = vld [vmem:[%s289 + $0xb8] sm:$0xff]
      %v2878 = vld [vmem:[%s289 + $0xc0] sm:$0xff]
      %v2879 = vld [vmem:[%s289 + $0xc8] sm:$0xff]
      %v2880 = vld [vmem:[%s289 + $0xd0] sm:$0xff]
      %v2881 = vld [vmem:[%s289 + $0xd8] sm:$0xff]
      %v2882 = vld [vmem:[%s289 + $0xe0] sm:$0xff]
      %v2883 = vld [vmem:[%s289 + $0xe8] sm:$0xff]
      %v2884 = vld [vmem:[%s289 + $0xf0] sm:$0xff]
      %v2885 = vld [vmem:[%s289 + $0xf8] sm:$0xff]
      %v2886 = vadd.f32 %v2854, %v2728
      %v2887 = vadd.f32 %v2855, %v2731
      %v2888 = vadd.f32 %v2856, %v2736
      %v2889 = vadd.f32 %v2857, %v2739
      %v2890 = vadd.f32 %v2858, %v2744
      %v2891 = vadd.f32 %v2859, %v2747
      %v2892 = vadd.f32 %v2860, %v2752
      %v2893 = vadd.f32 %v2861, %v2755
      %v2894 = vadd.f32 %v2862, %v2760
      %v2895 = vadd.f32 %v2863, %v2763
      %v2896 = vadd.f32 %v2864, %v2768
      %v2897 = vadd.f32 %v2865, %v2771
      %v2898 = vadd.f32 %v2866, %v2776
      %v2899 = vadd.f32 %v2867, %v2779
      %v2900 = vadd.f32 %v2868, %v2784
      %v2901 = vadd.f32 %v2869, %v2787
      %v2902 = vadd.f32 %v2870, %v2792
      %v2903 = vadd.f32 %v2871, %v2795
      %v2904 = vadd.f32 %v2872, %v2800
      %v2905 = vadd.f32 %v2873, %v2803
      %v2906 = vadd.f32 %v2874, %v2808
      %v2907 = vadd.f32 %v2875, %v2811
      %v2908 = vadd.f32 %v2876, %v2816
      %v2909 = vadd.f32 %v2877, %v2819
      %v2910 = vadd.f32 %v2878, %v2824
      %v2911 = vadd.f32 %v2879, %v2827
      %v2912 = vadd.f32 %v2880, %v2832
      %v2913 = vadd.f32 %v2881, %v2835
      %v2914 = vadd.f32 %v2882, %v2840
      %v2915 = vadd.f32 %v2883, %v2843
      %v2916 = vadd.f32 %v2884, %v2848
      %v2917 = vadd.f32 %v2885, %v2851
      %2918 = vst.msk [vmem:[%s289] sm:$0xff] %vm297, %v2886
      %2919 = vst.msk [vmem:[%s289 + $0x8] sm:$0xff] %vm297, %v2887
      %2920 = vst.msk [vmem:[%s289 + $0x10] sm:$0xff] %vm297, %v2888
      %2921 = vst.msk [vmem:[%s289 + $0x18] sm:$0xff] %vm297, %v2889
      %2922 = vst.msk [vmem:[%s289 + $0x20] sm:$0xff] %vm297, %v2890
      %2923 = vst.msk [vmem:[%s289 + $0x28] sm:$0xff] %vm297, %v2891
      %2924 = vst.msk [vmem:[%s289 + $0x30] sm:$0xff] %vm297, %v2892
      %2925 = vst.msk [vmem:[%s289 + $0x38] sm:$0xff] %vm297, %v2893
      %2926 = vst.msk [vmem:[%s289 + $0x40] sm:$0xff] %vm297, %v2894
      %2927 = vst.msk [vmem:[%s289 + $0x48] sm:$0xff] %vm297, %v2895
      %2928 = vst.msk [vmem:[%s289 + $0x50] sm:$0xff] %vm297, %v2896
      %2929 = vst.msk [vmem:[%s289 + $0x58] sm:$0xff] %vm297, %v2897
      %2930 = vst.msk [vmem:[%s289 + $0x60] sm:$0xff] %vm297, %v2898
      %2931 = vst.msk [vmem:[%s289 + $0x68] sm:$0xff] %vm297, %v2899
      %2932 = vst.msk [vmem:[%s289 + $0x70] sm:$0xff] %vm297, %v2900
      %2933 = vst.msk [vmem:[%s289 + $0x78] sm:$0xff] %vm297, %v2901
      %2934 = vst.msk [vmem:[%s289 + $0x80] sm:$0xff] %vm297, %v2902
      %2935 = vst.msk [vmem:[%s289 + $0x88] sm:$0xff] %vm297, %v2903
      %2936 = vst.msk [vmem:[%s289 + $0x90] sm:$0xff] %vm297, %v2904
      %2937 = vst.msk [vmem:[%s289 + $0x98] sm:$0xff] %vm297, %v2905
      %2938 = vst.msk [vmem:[%s289 + $0xa0] sm:$0xff] %vm297, %v2906
      %2939 = vst.msk [vmem:[%s289 + $0xa8] sm:$0xff] %vm297, %v2907
      %2940 = vst.msk [vmem:[%s289 + $0xb0] sm:$0xff] %vm297, %v2908
      %2941 = vst.msk [vmem:[%s289 + $0xb8] sm:$0xff] %vm297, %v2909
      %2942 = vst.msk [vmem:[%s289 + $0xc0] sm:$0xff] %vm297, %v2910
      %2943 = vst.msk [vmem:[%s289 + $0xc8] sm:$0xff] %vm297, %v2911
      %2944 = vst.msk [vmem:[%s289 + $0xd0] sm:$0xff] %vm297, %v2912
      %2945 = vst.msk [vmem:[%s289 + $0xd8] sm:$0xff] %vm297, %v2913
      %2946 = vst.msk [vmem:[%s289 + $0xe0] sm:$0xff] %vm297, %v2914
      %2947 = vst.msk [vmem:[%s289 + $0xe8] sm:$0xff] %vm297, %v2915
      %2948 = vst.msk [vmem:[%s289 + $0xf0] sm:$0xff] %vm297, %v2916
      %2949 = vst.msk [vmem:[%s289 + $0xf8] sm:$0xff] %vm297, %v2917
      %v2950 = vld [vmem:[%s289] sm:$0xff]
      %v2951 = vld [vmem:[%s289 + $0x8] sm:$0xff]
      %v2952 = vld [vmem:[%s289 + $0x10] sm:$0xff]
      %v2953 = vld [vmem:[%s289 + $0x18] sm:$0xff]
      %v2954 = vld [vmem:[%s289 + $0x20] sm:$0xff]
      %v2955 = vld [vmem:[%s289 + $0x28] sm:$0xff]
      %v2956 = vld [vmem:[%s289 + $0x30] sm:$0xff]
      %v2957 = vld [vmem:[%s289 + $0x38] sm:$0xff]
      %v2958 = vld [vmem:[%s289 + $0x40] sm:$0xff]
      %v2959 = vld [vmem:[%s289 + $0x48] sm:$0xff]
      %v2960 = vld [vmem:[%s289 + $0x50] sm:$0xff]
      %v2961 = vld [vmem:[%s289 + $0x58] sm:$0xff]
      %v2962 = vld [vmem:[%s289 + $0x60] sm:$0xff]
      %v2963 = vld [vmem:[%s289 + $0x68] sm:$0xff]
      %v2964 = vld [vmem:[%s289 + $0x70] sm:$0xff]
      %v2965 = vld [vmem:[%s289 + $0x78] sm:$0xff]
      %v2966 = vld [vmem:[%s289 + $0x80] sm:$0xff]
      %v2967 = vld [vmem:[%s289 + $0x88] sm:$0xff]
      %v2968 = vld [vmem:[%s289 + $0x90] sm:$0xff]
      %v2969 = vld [vmem:[%s289 + $0x98] sm:$0xff]
      %v2970 = vld [vmem:[%s289 + $0xa0] sm:$0xff]
      %v2971 = vld [vmem:[%s289 + $0xa8] sm:$0xff]
      %v2972 = vld [vmem:[%s289 + $0xb0] sm:$0xff]
      %v2973 = vld [vmem:[%s289 + $0xb8] sm:$0xff]
      %v2974 = vld [vmem:[%s289 + $0xc0] sm:$0xff]
      %v2975 = vld [vmem:[%s289 + $0xc8] sm:$0xff]
      %v2976 = vld [vmem:[%s289 + $0xd0] sm:$0xff]
      %v2977 = vld [vmem:[%s289 + $0xd8] sm:$0xff]
      %v2978 = vld [vmem:[%s289 + $0xe0] sm:$0xff]
      %v2979 = vld [vmem:[%s289 + $0xe8] sm:$0xff]
      %v2980 = vld [vmem:[%s289 + $0xf0] sm:$0xff]
      %v2981 = vld [vmem:[%s289 + $0xf8] sm:$0xff]
      %v2982 = vsel %vm297, %v2950, 0.0
      %v2983 = vsel %vm297, %v2951, 0.0
      %v2984 = vadd.f32 %v2982, %v2983
      %v2985 = vsel %vm297, %v2952, 0.0
      %v2986 = vadd.f32 %v2984, %v2985
      %v2987 = vsel %vm297, %v2953, 0.0
      %v2988 = vadd.f32 %v2986, %v2987
      %v2989 = vsel %vm297, %v2954, 0.0
      %v2990 = vadd.f32 %v2988, %v2989
      %v2991 = vsel %vm297, %v2955, 0.0
      %v2992 = vadd.f32 %v2990, %v2991
      %v2993 = vsel %vm297, %v2956, 0.0
      %v2994 = vadd.f32 %v2992, %v2993
      %v2995 = vsel %vm297, %v2957, 0.0
      %v2996 = vadd.f32 %v2994, %v2995
      %v2997 = vsel %vm297, %v2958, 0.0
      %v2998 = vadd.f32 %v2996, %v2997
      %v2999 = vsel %vm297, %v2959, 0.0
      %v3000 = vadd.f32 %v2998, %v2999
      %v3001 = vsel %vm297, %v2960, 0.0
      %v3002 = vadd.f32 %v3000, %v3001
      %v3003 = vsel %vm297, %v2961, 0.0
      %v3004 = vadd.f32 %v3002, %v3003
      %v3005 = vsel %vm297, %v2962, 0.0
      %v3006 = vadd.f32 %v3004, %v3005
      %v3007 = vsel %vm297, %v2963, 0.0
      %v3008 = vadd.f32 %v3006, %v3007
      %v3009 = vsel %vm297, %v2964, 0.0
      %v3010 = vadd.f32 %v3008, %v3009
      %v3011 = vsel %vm297, %v2965, 0.0
      %v3012 = vadd.f32 %v3010, %v3011
      %v3013 = vsel %vm297, %v2966, 0.0
      %v3014 = vadd.f32 %v3012, %v3013
      %v3015 = vsel %vm297, %v2967, 0.0
      %v3016 = vadd.f32 %v3014, %v3015
      %v3017 = vsel %vm297, %v2968, 0.0
      %v3018 = vadd.f32 %v3016, %v3017
      %v3019 = vsel %vm297, %v2969, 0.0
      %v3020 = vadd.f32 %v3018, %v3019
      %v3021 = vsel %vm297, %v2970, 0.0
      %v3022 = vadd.f32 %v3020, %v3021
      %v3023 = vsel %vm297, %v2971, 0.0
      %v3024 = vadd.f32 %v3022, %v3023
      %v3025 = vsel %vm297, %v2972, 0.0
      %v3026 = vadd.f32 %v3024, %v3025
      %v3027 = vsel %vm297, %v2973, 0.0
      %v3028 = vadd.f32 %v3026, %v3027
      %v3029 = vsel %vm297, %v2974, 0.0
      %v3030 = vadd.f32 %v3028, %v3029
      %v3031 = vsel %vm297, %v2975, 0.0
      %v3032 = vadd.f32 %v3030, %v3031
      %v3033 = vsel %vm297, %v2976, 0.0
      %v3034 = vadd.f32 %v3032, %v3033
      %v3035 = vsel %vm297, %v2977, 0.0
      %v3036 = vadd.f32 %v3034, %v3035
      %v3037 = vsel %vm297, %v2978, 0.0
      %v3038 = vadd.f32 %v3036, %v3037
      %v3039 = vsel %vm297, %v2979, 0.0
      %v3040 = vadd.f32 %v3038, %v3039
      %v3041 = vsel %vm297, %v2980, 0.0
      %v3042 = vadd.f32 %v3040, %v3041
      %v3043 = vsel %vm297, %v2981, 0.0
      %v3044 = vadd.f32 %v3042, %v3043
      %v3045 = vrot.slane %v3044, 4
      %v3046 = vadd.f32 %v3044, %v3045
      %v3047 = vrot.slane %v3046, 2
      %v3048 = vadd.f32 %v3046, %v3047
      %v3049 = vrot.slane %v3048, 1
      %v3050 = vadd.f32 %v3048, %v3049
      %vm3051 = vcmask 24576
      %3052 = vst.msk [vmem:[%s292] sm:$0x1] %vm3051, %v3050
      %v3053 = vmul.f32 %v2950, %v2950
      %v3054 = vmul.f32 %v2951, %v2951
      %v3055 = vmul.f32 %v2952, %v2952
      %v3056 = vmul.f32 %v2953, %v2953
      %v3057 = vmul.f32 %v2954, %v2954
      %v3058 = vmul.f32 %v2955, %v2955
      %v3059 = vmul.f32 %v2956, %v2956
      %v3060 = vmul.f32 %v2957, %v2957
      %v3061 = vmul.f32 %v2958, %v2958
      %v3062 = vmul.f32 %v2959, %v2959
      %v3063 = vmul.f32 %v2960, %v2960
      %v3064 = vmul.f32 %v2961, %v2961
      %v3065 = vmul.f32 %v2962, %v2962
      %v3066 = vmul.f32 %v2963, %v2963
      %v3067 = vmul.f32 %v2964, %v2964
      %v3068 = vmul.f32 %v2965, %v2965
      %v3069 = vmul.f32 %v2966, %v2966
      %v3070 = vmul.f32 %v2967, %v2967
      %v3071 = vmul.f32 %v2968, %v2968
      %v3072 = vmul.f32 %v2969, %v2969
      %v3073 = vmul.f32 %v2970, %v2970
      %v3074 = vmul.f32 %v2971, %v2971
      %v3075 = vmul.f32 %v2972, %v2972
      %v3076 = vmul.f32 %v2973, %v2973
      %v3077 = vmul.f32 %v2974, %v2974
      %v3078 = vmul.f32 %v2975, %v2975
      %v3079 = vmul.f32 %v2976, %v2976
      %v3080 = vmul.f32 %v2977, %v2977
      %v3081 = vmul.f32 %v2978, %v2978
      %v3082 = vmul.f32 %v2979, %v2979
      %v3083 = vmul.f32 %v2980, %v2980
      %v3084 = vmul.f32 %v2981, %v2981
      %v3085 = vsel %vm297, %v3053, 0.0
      %v3086 = vsel %vm297, %v3054, 0.0
      %v3087 = vadd.f32 %v3085, %v3086
      %v3088 = vsel %vm297, %v3055, 0.0
      %v3089 = vadd.f32 %v3087, %v3088
      %v3090 = vsel %vm297, %v3056, 0.0
      %v3091 = vadd.f32 %v3089, %v3090
      %v3092 = vsel %vm297, %v3057, 0.0
      %v3093 = vadd.f32 %v3091, %v3092
      %v3094 = vsel %vm297, %v3058, 0.0
      %v3095 = vadd.f32 %v3093, %v3094
      %v3096 = vsel %vm297, %v3059, 0.0
      %v3097 = vadd.f32 %v3095, %v3096
      %v3098 = vsel %vm297, %v3060, 0.0
      %v3099 = vadd.f32 %v3097, %v3098
      %v3100 = vsel %vm297, %v3061, 0.0
      %v3101 = vadd.f32 %v3099, %v3100
      %v3102 = vsel %vm297, %v3062, 0.0
      %v3103 = vadd.f32 %v3101, %v3102
      %v3104 = vsel %vm297, %v3063, 0.0
      %v3105 = vadd.f32 %v3103, %v3104
      %v3106 = vsel %vm297, %v3064, 0.0
      %v3107 = vadd.f32 %v3105, %v3106
      %v3108 = vsel %vm297, %v3065, 0.0
      %v3109 = vadd.f32 %v3107, %v3108
      %v3110 = vsel %vm297, %v3066, 0.0
      %v3111 = vadd.f32 %v3109, %v3110
      %v3112 = vsel %vm297, %v3067, 0.0
      %v3113 = vadd.f32 %v3111, %v3112
      %v3114 = vsel %vm297, %v3068, 0.0
      %v3115 = vadd.f32 %v3113, %v3114
      %v3116 = vsel %vm297, %v3069, 0.0
      %v3117 = vadd.f32 %v3115, %v3116
      %v3118 = vsel %vm297, %v3070, 0.0
      %v3119 = vadd.f32 %v3117, %v3118
      %v3120 = vsel %vm297, %v3071, 0.0
      %v3121 = vadd.f32 %v3119, %v3120
      %v3122 = vsel %vm297, %v3072, 0.0
      %v3123 = vadd.f32 %v3121, %v3122
      %v3124 = vsel %vm297, %v3073, 0.0
      %v3125 = vadd.f32 %v3123, %v3124
      %v3126 = vsel %vm297, %v3074, 0.0
      %v3127 = vadd.f32 %v3125, %v3126
      %v3128 = vsel %vm297, %v3075, 0.0
      %v3129 = vadd.f32 %v3127, %v3128
      %v3130 = vsel %vm297, %v3076, 0.0
      %v3131 = vadd.f32 %v3129, %v3130
      %v3132 = vsel %vm297, %v3077, 0.0
      %v3133 = vadd.f32 %v3131, %v3132
      %v3134 = vsel %vm297, %v3078, 0.0
      %v3135 = vadd.f32 %v3133, %v3134
      %v3136 = vsel %vm297, %v3079, 0.0
      %v3137 = vadd.f32 %v3135, %v3136
      %v3138 = vsel %vm297, %v3080, 0.0
      %v3139 = vadd.f32 %v3137, %v3138
      %v3140 = vsel %vm297, %v3081, 0.0
      %v3141 = vadd.f32 %v3139, %v3140
      %v3142 = vsel %vm297, %v3082, 0.0
      %v3143 = vadd.f32 %v3141, %v3142
      %v3144 = vsel %vm297, %v3083, 0.0
      %v3145 = vadd.f32 %v3143, %v3144
      %v3146 = vsel %vm297, %v3084, 0.0
      %v3147 = vadd.f32 %v3145, %v3146
      %v3148 = vrot.slane %v3147, 4
      %v3149 = vadd.f32 %v3147, %v3148
      %v3150 = vrot.slane %v3149, 2
      %v3151 = vadd.f32 %v3149, %v3150
      %v3152 = vrot.slane %v3151, 1
      %v3153 = vadd.f32 %v3151, %v3152
      %3154 = vst.msk [vmem:[%s295] sm:$0x1] %vm3051, %v3153
      %p3155 = scmp.lt.s32.totalorder %s19, 1
      %s3156 = scalar_select %p3155, %s19, 1
      %s3157 = smul.addr %s3156, 32
      %s3158 = smul.addr %s3157, 8
      %s3159 = scalar_lea.vmem %s5, %s3158
      %p3160 = scmp.lt.s32.totalorder %s19, 1
      %s3161 = scalar_select %p3160, %s19, 1
      %s3162 = scalar_lea.vmem %s6, %s3161
      %p3163 = scmp.lt.s32.totalorder %s19, 1
      %s3164 = scalar_select %p3163, %s19, 1
      %s3165 = scalar_lea.vmem %s7, %s3164
      // Predicated region
      $region41: #{preact_bottleneck_forward.6} parent=39 // pred_check
        %p3166 = pneg %p147
      $region42: #{preact_bottleneck_forward.6} parent=39 // pred_check_branch
        %3168 = sbr.rel (%p3166) target = $region44
      $region43: #{preact_bottleneck_forward.6} parent=39 // pred_region
        _
      $region44: #{preact_bottleneck_forward.6} parent=39 // pred_fallthru
        _
      // Predicated region
      $region45: #{preact_bottleneck_forward.6} parent=39 // pred_check
        %p3169 = pneg %p173
      $region46: #{preact_bottleneck_forward.6} parent=39 // pred_check_branch
        %3171 = sbr.rel (%p3169) target = $region48
      $region47: #{preact_bottleneck_forward.6} parent=39 // pred_region
        _
      $region48: #{preact_bottleneck_forward.6} parent=39 // pred_fallthru
        _
      // Predicated region
      $region49: #{preact_bottleneck_forward.6} parent=39 // pred_check
        %p3172 = pneg %p199
      $region50: #{preact_bottleneck_forward.6} parent=39 // pred_check_branch
        %3174 = sbr.rel (%p3172) target = $region52
      $region51: #{preact_bottleneck_forward.6} parent=39 // pred_region
        _
      $region52: #{preact_bottleneck_forward.6} parent=39 // pred_fallthru
        _
    $region40: #{preact_bottleneck_forward.6} parent=5 // pred_fallthru
      _
    %p3175 = scmp.le.s32.totalorder 2, %s14
    // Predicated region
    $region53: #{preact_bottleneck_forward.6} parent=5 // pred_check
      %p3176 = pneg %p3175
    $region54: #{preact_bottleneck_forward.6} parent=5 // pred_check_branch
      %3178 = sbr.rel (%p3176) target = $region56
    $region55: #{preact_bottleneck_forward.6} parent=5 // pred_region
      %s3179 = ssub.s32 %s14, 2
      // Predicated region
      $region57: #{preact_bottleneck_forward.6} parent=55 // pred_check
        %p3180 = pneg %p153
      $region58: #{preact_bottleneck_forward.6} parent=55 // pred_check_branch
        %3182 = sbr.rel (%p3180) target = $region60
      $region59: #{preact_bottleneck_forward.6} parent=55 // pred_region
        %p3183 = scmp.lt.s32.totalorder %s20, 1
        %s3184 = scalar_select %p3183, %s20, 1
        %s3185 = smul.addr %s3184, 32
        %s3186 = smul.addr %s3185, 8
        %s3187 = scalar_lea.vmem %s5, %s3186
      $region60: #{preact_bottleneck_forward.6} parent=55 // pred_fallthru
        _
      // Predicated region
      $region61: #{preact_bottleneck_forward.6} parent=55 // pred_check
        %p3188 = pneg %p179
      $region62: #{preact_bottleneck_forward.6} parent=55 // pred_check_branch
        %3190 = sbr.rel (%p3188) target = $region64
      $region63: #{preact_bottleneck_forward.6} parent=55 // pred_region
        %p3191 = scmp.lt.s32.totalorder %s20, 1
        %s3192 = scalar_select %p3191, %s20, 1
        %s3193 = scalar_lea.vmem %s6, %s3192
      $region64: #{preact_bottleneck_forward.6} parent=55 // pred_fallthru
        _
      // Predicated region
      $region65: #{preact_bottleneck_forward.6} parent=55 // pred_check
        %p3194 = pneg %p205
      $region66: #{preact_bottleneck_forward.6} parent=55 // pred_check_branch
        %3196 = sbr.rel (%p3194) target = $region68
      $region67: #{preact_bottleneck_forward.6} parent=55 // pred_region
        %p3197 = scmp.lt.s32.totalorder %s20, 1
        %s3198 = scalar_select %p3197, %s20, 1
        %s3199 = scalar_lea.vmem %s7, %s3198
      $region68: #{preact_bottleneck_forward.6} parent=55 // pred_fallthru
        _
    $region56: #{preact_bottleneck_forward.6} parent=5 // pred_fallthru
      _
  $region6: #{preact_bottleneck_forward.6} parent=0 // loop_footer
    %s18 = sadd.s32 1, %s14
  $region7: #{preact_bottleneck_forward.6} parent=0 // loop_footer_branch
    %13 = sbr.rel target = $region3
  $region8: #{preact_bottleneck_forward.6} parent=0 // loop_exit
    _

</llo_original>
